<compile_context>
chip_gen: v7x
topology: tpu7x:2x2x1
jax: 0.10.0
libtpu: 0.0.40
codegen_flags: <defaults>
</compile_context>

<pallas_src>
import jax
import jax.numpy as jnp
from jax import lax
from jax.experimental import pallas as pl
from jax.experimental.pallas import tpu as pltpu


def _round_up(x, mult):
    return ((x + mult - 1) // mult) * mult


def _make_fp_kernel(n_layers, mxu_dtype, fold_w0):
    """Per (batch, n-tile) kernel: fused d2 -> 3-NN -> interp -> SharedMLP."""

    def kernel(*refs):
        un_ref, kt_ref, kf_ref, uf_ref = refs[:4]
        p = 4
        if fold_w0:
            w0a_ref = None
        else:
            w0a_ref = refs[p]
            p += 1
        w0b_ref = refs[p]
        b0_ref = refs[p + 1]
        p += 2
        layer_refs = refs[p:p + 2 * (n_layers - 1)]
        out_ref = refs[-1]

        un = un_ref[0]          # (TN, 8)  [x, y, z, |p|^2, 1, 0, 0, 0]      f32
        kt = kt_ref[0]          # (8, Mp)  [-2x; -2y; -2z; 1; |q|^2/sent.; 0;0;0]
        tn = un.shape[0]
        mp = kt.shape[1]

        # ---- squared distances: one fused MXU matmul (no (TN,Mp) VPU passes)
        d2 = jnp.dot(un, kt, preferred_element_type=jnp.float32)       # (TN, Mp)

        # ---- 3-NN + selection matrix in one loop. Each pass: one lane-min,
        # one first-argmin, one mask (reused), one d_work update, one sel write.
        col = lax.broadcasted_iota(jnp.int32, (tn, mp), 1)
        BIG = jnp.float32(1e34)
        d_work = d2
        sel = jnp.zeros((tn, mp), jnp.float32)
        norm = jnp.zeros((tn, 1), jnp.float32)
        dmin = None
        for _ in range(3):
            dmin = jnp.min(d_work, axis=1, keepdims=True)              # (TN, 1)
            first_idx = jnp.min(jnp.where(d_work == dmin, col, mp),
                                axis=1, keepdims=True)                 # (TN, 1)
            mask = col == first_idx                                    # (TN, Mp), reused
            d_work = jnp.where(mask, BIG, d_work)
            recip = 1.0 / (jnp.sqrt(jnp.maximum(dmin, 0.0)) + 1e-8)    # (TN, 1)
            sel = jnp.where(mask, recip, sel)                          # unnormalized
            norm = norm + recip
        # max(dist) < 1  <=>  largest (== last) squared distance < 1; apply the
        # valid/norm normalization to the matmul OUTPUT (row scalars), not sel.
        scale = (dmin < 1.0).astype(jnp.float32) / norm                # (TN, 1)

        # ---- interpolation (+ folded layer-0 interp branch) on the MXU
        sel_mx = sel.astype(mxu_dtype)
        if fold_w0:
            # kf_ref already holds  kf_cl @ W0[:C2]  (folded in the wrapper)
            x = jnp.dot(sel_mx, kf_ref[0], preferred_element_type=jnp.float32)
            x = x * scale
        else:
            interp = jnp.dot(sel_mx, kf_ref[0], preferred_element_type=jnp.float32)
            interp = interp * scale
            x = jnp.dot(interp.astype(mxu_dtype), w0a_ref[...],
                        preferred_element_type=jnp.float32)
        # layer-0 concat realized as the sum of the two branch matmuls
        x = x + jnp.dot(uf_ref[0], w0b_ref[...], preferred_element_type=jnp.float32)
        x = jnp.maximum(x + b0_ref[...], 0.0)

        # ---- remaining SharedMLP layers (1x1 conv + folded BN + ReLU)
        for li in range(n_layers - 1):
            w_ref = layer_refs[2 * li]
            b_ref = layer_refs[2 * li + 1]
            x = jnp.dot(x.astype(mxu_dtype), w_ref[...],
                        preferred_element_type=jnp.float32) + b_ref[...]
            x = jnp.maximum(x, 0.0)

        out_ref[0] = x.astype(out_ref.dtype)

    return kernel


# Lazily resolved: does this JAX build accept pipeline_mode=pl.Buffered(1)?
_SINGLE_BUFFER_OK = None


def msnet_fp_forward(unknown, known, unknow_feats, known_feats, weights, biases,
                     *, tile_n=None, mxu_dtype=jnp.bfloat16):
    """Pallas TPU implementation of MSNetFPModule.forward (eval-mode BN folded).

    unknown: (B, n, 3), known: (B, m, 3), unknow_feats: (B, C1, n),
    known_feats: (B, C2, m). weights[l] is the BN-folded (Cin, Cout) 1x1-conv
    weight, biases[l] the (1, Cout) folded bias. Returns (B, n, mlp[-1]) f32.
    """
    # TODO(synk): `known is None` / `unknow_feats is None` branches not implemented.
    global _SINGLE_BUFFER_OK
    f32 = jnp.float32
    B, n, _ = unknown.shape
    m = known.shape[1]
    C1 = unknow_feats.shape[1]
    C2 = known_feats.shape[1]
    n_layers = len(weights)
    assert weights[0].shape[0] == C1 + C2, "mlp[0] must equal C2 + C1"
    c_out = weights[-1].shape[1]

    # ---- lane-dense padding of channels AND m (sliced off / sentinel-masked).
    LANE = 128
    c1p = _round_up(C1, LANE)
    c2p = _round_up(C2, LANE)
    outs_p = [_round_up(w.shape[1], LANE) for w in weights]
    h0p = outs_p[0]
    c_out_p = outs_p[-1]
    m_pad = _round_up(m, LANE)
    h0 = weights[0].shape[1]
    fold_w0 = h0p <= c2p                      # fold W0[:C2] into kf only if it shrinks it
    kf_width = h0p if fold_w0 else c2p
    itemsize = jnp.dtype(mxu_dtype).itemsize

    unknown = unknown.astype(f32)
    known = known.astype(f32)

    # ---- source-side (per-batch resident) arrays -------------------------------
    known_p = jnp.pad(known, ((0, 0), (0, m_pad - m), (0, 0)))               # (B, Mp, 3)
    k_sq = jnp.sum(known_p * known_p, axis=-1, keepdims=True)                # (B, Mp, 1)
    src_valid = (jnp.arange(m_pad) < m)[None, :, None]
    k_sq = jnp.where(src_valid, k_sq, 1e30)        # sentinel: padded sources never selected
    kt_aug = jnp.concatenate(
        [-2.0 * known_p, jnp.ones_like(k_sq), k_sq,
         jnp.zeros((B, m_pad, 3), f32)], axis=-1)                            # (B, Mp, 8)
    kt_aug = jnp.transpose(kt_aug, (0, 2, 1)).astype(f32)                    # (B, 8, Mp)

    if fold_w0:
        # fold layer-0 interp branch into the source features (one XLA matmul / call)
        kf_in = jnp.einsum("bcm,ch->bmh", known_feats.astype(f32), weights[0][:C2],
                           precision=lax.Precision.HIGHEST)                  # (B, m, h0)
        kf_in = jnp.pad(kf_in, ((0, 0), (0, m_pad - m), (0, h0p - h0)))
    else:
        kf_in = jnp.transpose(known_feats.astype(f32), (0, 2, 1))            # (B, m, C2)
        kf_in = jnp.pad(kf_in, ((0, 0), (0, m_pad - m), (0, c2p - C2)))
    kf_in = kf_in.astype(mxu_dtype)                                          # (B, Mp, kfW)

    # ---- packed SharedMLP params (layer-0 split at the concat boundary) --------
    packed = []
    if not fold_w0:
        packed.append(jnp.pad(weights[0][:C2],
                              ((0, c2p - C2), (0, h0p - h0))).astype(mxu_dtype))
    packed.append(jnp.pad(weights[0][C2:],
                          ((0, c1p - C1), (0, h0p - h0))).astype(mxu_dtype))
    packed.append(jnp.pad(biases[0], ((0, 0), (0, h0p - h0))).astype(f32))
    for li in range(1, n_layers):
        w, bvec = weights[li], biases[li]
        cin_p, cout_p = outs_p[li - 1], outs_p[li]
        packed.append(jnp.pad(w, ((0, cin_p - w.shape[0]),
                                  (0, cout_p - w.shape[1]))).astype(mxu_dtype))
        packed.append(jnp.pad(bvec, ((0, 0),
                                     (0, cout_p - w.shape[1]))).astype(f32))
    packed_bytes = sum(int(p.size) * p.dtype.itemsize for p in packed)

    # ---- VMEM-aware tile_n selection -------------------------------------------
    try:
        vmem_cap = int(pltpu.get_tpu_info().vmem_capacity_bytes)
    except Exception:                                   # pragma: no cover
        vmem_cap = 64 * 1024 * 1024                     # v7x-safe fallback
    vmem_limit = int(min(vmem_cap * 3 // 4, 96 * 1024 * 1024))

    if tile_n is None:
        # Residents (invariant along the n-tile axis). Counted x2 in case this
        # JAX build ignores pipeline_mode=pl.Buffered(1) and double-buffers them.
        resident = 4 * 8 * m_pad + itemsize * m_pad * kf_width + packed_bytes
        budget = vmem_limit - 2 * resident - (2 << 20)
        h_max_p = max(outs_p)
        per_row = (4 * 5 * m_pad            # ~5 live 32-bit (TN, Mp) temporaries
                   + itemsize * m_pad       # sel cast for the MXU
                   + 2 * 4 * 8              # augmented-xyz block (double-buffered)
                   + 2 * itemsize * c1p     # query-feature block (double-buffered)
                   + 2 * 4 * c_out_p        # output block (double-buffered)
                   + 2 * 4 * h_max_p)       # live MLP activations
        cap = 512 if vmem_cap <= 64 * 1024 * 1024 else 2048   # v7x vs v5e/v6e
        tile_n = budget // max(per_row, 1)
        tile_n = max(128, min(int(tile_n), cap))
        tile_n = max(128, (tile_n // 128) * 128)
        # keep >= ~2 grid programs per TensorCore (v7x has 2 TCs) on small inputs
        tiles_needed = max(1, -(-4 // max(B, 1)))
        tile_n = min(tile_n, max(128, _round_up(-(-n // tiles_needed), 128)))
    else:
        tile_n = max(128, (int(tile_n) // 128) * 128)
    tile_n = min(tile_n, _round_up(n, 128))
    n_pad = _round_up(n, tile_n)

    # ---- query-side arrays (depend on n_pad) ------------------------------------
    u_sq = jnp.sum(unknown * unknown, axis=-1, keepdims=True)                 # (B, n, 1)
    un_aug = jnp.concatenate(
        [unknown, u_sq, jnp.ones_like(u_sq), jnp.zeros((B, n, 3), f32)], axis=-1)
    un_aug = jnp.pad(un_aug, ((0, 0), (0, n_pad - n), (0, 0))).astype(f32)    # (B, Np, 8)

    # TODO(synk): accept channel-last unknow_feats upstream to avoid this HBM
    # round-trip transpose (matters most on v5e's lower HBM bandwidth).
    uf_cl = jnp.transpose(unknow_feats.astype(f32), (0, 2, 1))
    uf_cl = jnp.pad(uf_cl, ((0, 0), (0, n_pad - n), (0, c1p - C1))).astype(mxu_dtype)

    # ---- pallas_call -------------------------------------------------------------
    has_buffered = hasattr(pl, "Buffered")

    def build_and_call(single_buffer):
        def inv_spec(shape, index_map):
            # n-tile-invariant / grid-invariant blocks: single-buffer them to
            # halve their VMEM footprint (no overlap is lost; they never change
            # block index along the inner axis).
            if single_buffer and has_buffered:
                return pl.BlockSpec(shape, index_map, pipeline_mode=pl.Buffered(1))
            return pl.BlockSpec(shape, index_map)

        in_specs = [
            pl.BlockSpec((1, tile_n, 8), lambda b, i: (b, i, 0)),         # query xyz (aug)
            inv_spec((1, 8, m_pad), lambda b, i: (b, 0, 0)),              # source xyz (aug)
            inv_spec((1, m_pad, kf_width), lambda b, i: (b, 0, 0)),       # kfW0 / kf
            pl.BlockSpec((1, tile_n, c1p), lambda b, i: (b, i, 0)),       # query feats
        ]
        for prm in packed:
            in_specs.append(inv_spec(prm.shape, lambda b, i: (0, 0)))

        return pl.pallas_call(
            _make_fp_kernel(n_layers, mxu_dtype, fold_w0),
            out_shape=jax.ShapeDtypeStruct((B, n_pad, c_out_p), jnp.float32),
            grid_spec=pltpu.PrefetchScalarGridSpec(
                num_scalar_prefetch=0,
                grid=(B, n_pad // tile_n),
                in_specs=in_specs,
                out_specs=pl.BlockSpec((1, tile_n, c_out_p), lambda b, i: (b, i, 0)),
            ),
            compiler_params=pltpu.CompilerParams(
                # Both axes independent -> both v7x TensorCores fed even at B<=2.
                dimension_semantics=("parallel", "parallel"),
                vmem_limit_bytes=vmem_limit,
            ),
        )(un_aug, kt_aug, kf_in, uf_cl, *packed)

    if _SINGLE_BUFFER_OK is None:
        try:
            out = build_and_call(True)
            _SINGLE_BUFFER_OK = True
        except Exception:
            _SINGLE_BUFFER_OK = False
            out = build_and_call(False)
    else:
        out = build_and_call(_SINGLE_BUFFER_OK)

    # TODO(synk): optionally emit bf16 / padded output to halve writeback when the
    # consumer tolerates it.
    return out[:, :n, :c_out]


def init_params(mlp, key):
    """Deterministic SharedMLP params: Conv2d(1x1, bias=False) + BatchNorm2d folded.

    BN is applied in eval mode (running_mean=0, running_var=1, deterministic
    gamma/beta) and folded into effective weight (Cin, Cout) and bias (1, Cout).
    """
    # TODO(synk): training-mode BatchNorm (batch statistics) not reproduced; eval fold only.
    weights, biases = [], []
    eps = 1e-5
    for i in range(len(mlp) - 1):
        cin, cout = mlp[i], mlp[i + 1]
        key, k1 = jax.random.split(key)
        w = jax.random.normal(k1, (cout, cin), jnp.float32) * 0.1
        gamma = 1.0 + 0.01 * jnp.arange(cout, dtype=jnp.float32)
        beta = 0.05 * jnp.arange(cout, dtype=jnp.float32)
        running_mean = jnp.zeros((cout,), jnp.float32)
        running_var = jnp.ones((cout,), jnp.float32)
        scale = gamma / jnp.sqrt(running_var + eps)
        bias = beta - running_mean * scale
        w_eff = (w * scale[:, None]).T                              # (Cin, Cout)
        weights.append(w_eff)
        biases.append(bias[None, :])                                # (1, Cout)
    return weights, biases


def reference_forward(unknown, known, unknow_feats, known_feats, weights, biases):
    """Pure-JAX reference with the same semantics (correctness check)."""
    d2 = jnp.sum((unknown[:, :, None, :] - known[:, None, :, :]) ** 2, axis=-1)
    neg, idx = lax.top_k(-d2, 3)
    dist = jnp.sqrt(jnp.maximum(-neg, 0.0))
    dist_recip = 1.0 / (dist + 1e-8)
    norm = jnp.sum(dist_recip, axis=-1, keepdims=True)
    weight = dist_recip / norm * (jnp.max(dist, axis=-1, keepdims=True) < 1.0)
    kf_cl = jnp.transpose(known_feats, (0, 2, 1))
    uf_cl = jnp.transpose(unknow_feats, (0, 2, 1))

    def interp_one(kf_b, idx_b, w_b):
        g = kf_b[idx_b]                       # (n, 3, C2)
        return jnp.sum(w_b[..., None] * g, axis=1)

    interp = jax.vmap(interp_one)(kf_cl, idx, weight)
    x = jnp.concatenate([interp, uf_cl], axis=-1)
    for w, b in zip(weights, biases):
        x = jnp.maximum(jnp.einsum("bnc,cd->bnd", x, w) + b[None], 0.0)
    return x


if __name__ == "__main__":
    key = jax.random.PRNGKey(0)
    B, n, m, C1, C2 = 2, 19, 8, 4, 6     # n not a multiple of 8/128 -> exercises padding
    k1, k2, k3, k4, kp, kp2 = jax.random.split(key, 6)
    # Coordinates in [0, 0.5]^3 so the 3rd-NN distance is always < 1 and the
    # `max(dist) < 1` gate cannot flip between kernel and reference numerics.
    unknown = 0.5 * jax.random.uniform(k1, (B, n, 3), jnp.float32)
    known = 0.5 * jax.random.uniform(k2, (B, m, 3), jnp.float32)
    unknow_feats = jax.random.normal(k3, (B, C1, n), jnp.float32)
    known_feats = jax.random.normal(k4, (B, C2, m), jnp.float32)

    # ---- Config 1: narrow first hidden layer -> folded-W0 path ----------------
    mlp = [C2 + C1, 16, 32]
    weights, biases = init_params(mlp, kp)
    ref = reference_forward(unknown, known, unknow_feats, known_feats, weights, biases)

    out = msnet_fp_forward(unknown, known, unknow_feats, known_feats, weights, biases,
                           mxu_dtype=jnp.float32)
    out = jax.block_until_ready(out)
    assert out.shape == (B, n, mlp[-1]), out.shape
    err = float(jnp.max(jnp.abs(out - ref)))
    assert jnp.allclose(out, ref, atol=3e-3, rtol=3e-3), err

    # default (bf16 MXU operands; f32 accumulate; distance/NN math stays f32)
    out_bf16 = msnet_fp_forward(unknown, known, unknow_feats, known_feats,
                                weights, biases)
    out_bf16 = jax.block_until_ready(out_bf16)
    assert out_bf16.shape == (B, n, mlp[-1]), out_bf16.shape
    err_bf16 = float(jnp.max(jnp.abs(out_bf16 - ref)))
    assert jnp.allclose(out_bf16, ref, atol=1e-1, rtol=1e-1), err_bf16

    # ---- Config 2: wide first hidden layer -> non-folded path -----------------
    mlp2 = [C2 + C1, 160, 24]
    weights2, biases2 = init_params(mlp2, kp2)
    ref2 = reference_forward(unknown, known, unknow_feats, known_feats, weights2, biases2)
    out2 = msnet_fp_forward(unknown, known, unknow_feats, known_feats, weights2, biases2,
                            mxu_dtype=jnp.float32)
    out2 = jax.block_until_ready(out2)
    assert out2.shape == (B, n, mlp2[-1]), out2.shape
    err2 = float(jnp.max(jnp.abs(out2 - ref2)))
    assert jnp.allclose(out2, ref2, atol=3e-3, rtol=3e-3), err2

    print("KERNEL_OK")
</pallas_src>

<mosaic_0001>
module attributes {stable_mosaic.version = 11 : i64} {
  func.func @kernel(%arg0: i32, %arg1: i32, %arg2: memref<1x128x8xf32, #tpu.memory_space<vmem>>, %arg3: memref<1x8x128xf32, #tpu.memory_space<vmem>>, %arg4: memref<1x128x128xf32, #tpu.memory_space<vmem>>, %arg5: memref<1x128x128xf32, #tpu.memory_space<vmem>>, %arg6: memref<128x128xf32, #tpu.memory_space<vmem>>, %arg7: memref<1x128xf32, #tpu.memory_space<vmem>>, %arg8: memref<128x128xf32, #tpu.memory_space<vmem>>, %arg9: memref<1x128xf32, #tpu.memory_space<vmem>>, %arg10: memref<1x128x128xf32, #tpu.memory_space<vmem>>) attributes {dimension_semantics = [#tpu.dimension_semantics<parallel>, #tpu.dimension_semantics<parallel>], iteration_bounds = array<i64: 2, 1>, scalar_prefetch = 0 : i64, scratch_operands = 0 : i64, tpu.core_type = #tpu.core_type<tc>, window_params = [{transform_indices = @transform_0, window_bounds = array<i64: 1, 128, 8>}, {pipeline_mode = #tpu.pipeline_mode<synchronous>, transform_indices = @transform_1, window_bounds = array<i64: 1, 8, 128>}, {pipeline_mode = #tpu.pipeline_mode<synchronous>, transform_indices = @transform_2, window_bounds = array<i64: 1, 128, 128>}, {transform_indices = @transform_3, window_bounds = array<i64: 1, 128, 128>}, {pipeline_mode = #tpu.pipeline_mode<synchronous>, transform_indices = @transform_4, window_bounds = array<i64: 128, 128>}, {pipeline_mode = #tpu.pipeline_mode<synchronous>, transform_indices = @transform_5, window_bounds = array<i64: 1, 128>}, {pipeline_mode = #tpu.pipeline_mode<synchronous>, transform_indices = @transform_6, window_bounds = array<i64: 128, 128>}, {pipeline_mode = #tpu.pipeline_mode<synchronous>, transform_indices = @transform_7, window_bounds = array<i64: 1, 128>}, {transform_indices = @transform_8, window_bounds = array<i64: 1, 128, 128>}]} {
    %c0 = arith.constant 0 : index
    %c0_0 = arith.constant 0 : index
    %c0_1 = arith.constant 0 : index
    %0 = vector.load %arg2[%c0, %c0_0, %c0_1] : memref<1x128x8xf32, #tpu.memory_space<vmem>>, vector<1x128x8xf32>
    %1 = vector.shape_cast %0 : vector<1x128x8xf32> to vector<128x8xf32>
    %c0_2 = arith.constant 0 : index
    %c0_3 = arith.constant 0 : index
    %c0_4 = arith.constant 0 : index
    %2 = vector.load %arg3[%c0_2, %c0_3, %c0_4] : memref<1x8x128xf32, #tpu.memory_space<vmem>>, vector<1x8x128xf32>
    %3 = vector.shape_cast %2 : vector<1x8x128xf32> to vector<8x128xf32>
    %cst = arith.constant dense<0.000000e+00> : vector<128x128xf32>
    %4 = tpu.matmul %1, %3, %cst {dimension_numbers = #tpu.dot_dimension_numbers<[1], [0], [0], [1], [0, 0, 1, 1], [], []>} : vector<128x8xf32>, vector<8x128xf32>, vector<128x128xf32> -> vector<128x128xf32>
    %5 = tpu.iota {dimensions = array<i32: 1>} : vector<128x128xi32>
    %cst_5 = arith.constant 0.000000e+00 : f32
    %6 = vector.broadcast %cst_5 : f32 to vector<128x128xf32>
    %cst_6 = arith.constant 0.000000e+00 : f32
    %7 = vector.broadcast %cst_6 : f32 to vector<128x1xf32>
    %cst_7 = arith.constant dense<0x7F800000> : vector<128xf32>
    %8 = vector.multi_reduction <minimumf>, %4, %cst_7 [1] : vector<128x128xf32> to vector<128xf32>
    %9 = vector.shape_cast %8 : vector<128xf32> to vector<128x1xf32>
    %10 = vector.broadcast %9 : vector<128x1xf32> to vector<128x128xf32>
    %11 = arith.cmpf oeq, %4, %10 : vector<128x128xf32>
    %c128_i32 = arith.constant 128 : i32
    %12 = vector.broadcast %c128_i32 : i32 to vector<128x128xi32>
    %13 = arith.select %11, %5, %12 : vector<128x128xi1>, vector<128x128xi32>
    %cst_8 = arith.constant dense<2147483647> : vector<128xi32>
    %14 = vector.multi_reduction <minsi>, %13, %cst_8 [1] : vector<128x128xi32> to vector<128xi32>
    %15 = vector.shape_cast %14 : vector<128xi32> to vector<128x1xi32>
    %16 = vector.broadcast %15 : vector<128x1xi32> to vector<128x128xi32>
    %17 = arith.cmpi eq, %5, %16 : vector<128x128xi32>
    %cst_9 = arith.constant 1.000000e+34 : f32
    %18 = vector.broadcast %cst_9 : f32 to vector<128x128xf32>
    %19 = arith.select %17, %18, %4 : vector<128x128xi1>, vector<128x128xf32>
    %cst_10 = arith.constant 0.000000e+00 : f32
    %20 = vector.broadcast %cst_10 : f32 to vector<128x1xf32>
    %21 = arith.maximumf %9, %20 : vector<128x1xf32>
    %22 = math.sqrt %21 : vector<128x1xf32>
    %cst_11 = arith.constant 9.99999993E-9 : f32
    %23 = vector.broadcast %cst_11 : f32 to vector<128x1xf32>
    %24 = arith.addf %22, %23 : vector<128x1xf32>
    %cst_12 = arith.constant 1.000000e+00 : f32
    %25 = vector.broadcast %cst_12 : f32 to vector<128x1xf32>
    %26 = arith.divf %25, %24 : vector<128x1xf32>
    %27 = vector.shape_cast %26 : vector<128x1xf32> to vector<128x1xf32>
    %28 = vector.broadcast %27 : vector<128x1xf32> to vector<128x128xf32>
    %29 = arith.select %17, %28, %6 : vector<128x128xi1>, vector<128x128xf32>
    %30 = arith.addf %7, %26 : vector<128x1xf32>
    %cst_13 = arith.constant dense<0x7F800000> : vector<128xf32>
    %31 = vector.multi_reduction <minimumf>, %19, %cst_13 [1] : vector<128x128xf32> to vector<128xf32>
    %32 = vector.shape_cast %31 : vector<128xf32> to vector<128x1xf32>
    %33 = vector.broadcast %32 : vector<128x1xf32> to vector<128x128xf32>
    %34 = arith.cmpf oeq, %19, %33 : vector<128x128xf32>
    %c128_i32_14 = arith.constant 128 : i32
    %35 = vector.broadcast %c128_i32_14 : i32 to vector<128x128xi32>
    %36 = arith.select %34, %5, %35 : vector<128x128xi1>, vector<128x128xi32>
    %cst_15 = arith.constant dense<2147483647> : vector<128xi32>
    %37 = vector.multi_reduction <minsi>, %36, %cst_15 [1] : vector<128x128xi32> to vector<128xi32>
    %38 = vector.shape_cast %37 : vector<128xi32> to vector<128x1xi32>
    %39 = vector.broadcast %38 : vector<128x1xi32> to vector<128x128xi32>
    %40 = arith.cmpi eq, %5, %39 : vector<128x128xi32>
    %cst_16 = arith.constant 1.000000e+34 : f32
    %41 = vector.broadcast %cst_16 : f32 to vector<128x128xf32>
    %42 = arith.select %40, %41, %19 : vector<128x128xi1>, vector<128x128xf32>
    %cst_17 = arith.constant 0.000000e+00 : f32
    %43 = vector.broadcast %cst_17 : f32 to vector<128x1xf32>
    %44 = arith.maximumf %32, %43 : vector<128x1xf32>
    %45 = math.sqrt %44 : vector<128x1xf32>
    %cst_18 = arith.constant 9.99999993E-9 : f32
    %46 = vector.broadcast %cst_18 : f32 to vector<128x1xf32>
    %47 = arith.addf %45, %46 : vector<128x1xf32>
    %cst_19 = arith.constant 1.000000e+00 : f32
    %48 = vector.broadcast %cst_19 : f32 to vector<128x1xf32>
    %49 = arith.divf %48, %47 : vector<128x1xf32>
    %50 = vector.shape_cast %49 : vector<128x1xf32> to vector<128x1xf32>
    %51 = vector.broadcast %50 : vector<128x1xf32> to vector<128x128xf32>
    %52 = arith.select %40, %51, %29 : vector<128x128xi1>, vector<128x128xf32>
    %53 = arith.addf %30, %49 : vector<128x1xf32>
    %cst_20 = arith.constant dense<0x7F800000> : vector<128xf32>
    %54 = vector.multi_reduction <minimumf>, %42, %cst_20 [1] : vector<128x128xf32> to vector<128xf32>
    %55 = vector.shape_cast %54 : vector<128xf32> to vector<128x1xf32>
    %56 = vector.broadcast %55 : vector<128x1xf32> to vector<128x128xf32>
    %57 = arith.cmpf oeq, %42, %56 : vector<128x128xf32>
    %c128_i32_21 = arith.constant 128 : i32
    %58 = vector.broadcast %c128_i32_21 : i32 to vector<128x128xi32>
    %59 = arith.select %57, %5, %58 : vector<128x128xi1>, vector<128x128xi32>
    %cst_22 = arith.constant dense<2147483647> : vector<128xi32>
    %60 = vector.multi_reduction <minsi>, %59, %cst_22 [1] : vector<128x128xi32> to vector<128xi32>
    %61 = vector.shape_cast %60 : vector<128xi32> to vector<128x1xi32>
    %62 = vector.broadcast %61 : vector<128x1xi32> to vector<128x128xi32>
    %63 = arith.cmpi eq, %5, %62 : vector<128x128xi32>
    %cst_23 = arith.constant 0.000000e+00 : f32
    %64 = vector.broadcast %cst_23 : f32 to vector<128x1xf32>
    %65 = arith.maximumf %55, %64 : vector<128x1xf32>
    %66 = math.sqrt %65 : vector<128x1xf32>
    %cst_24 = arith.constant 9.99999993E-9 : f32
    %67 = vector.broadcast %cst_24 : f32 to vector<128x1xf32>
    %68 = arith.addf %66, %67 : vector<128x1xf32>
    %cst_25 = arith.constant 1.000000e+00 : f32
    %69 = vector.broadcast %cst_25 : f32 to vector<128x1xf32>
    %70 = arith.divf %69, %68 : vector<128x1xf32>
    %71 = vector.shape_cast %70 : vector<128x1xf32> to vector<128x1xf32>
    %72 = vector.broadcast %71 : vector<128x1xf32> to vector<128x128xf32>
    %73 = arith.select %63, %72, %52 : vector<128x128xi1>, vector<128x128xf32>
    %74 = arith.addf %53, %70 : vector<128x1xf32>
    %cst_26 = arith.constant 1.000000e+00 : f32
    %75 = vector.broadcast %cst_26 : f32 to vector<128x1xf32>
    %76 = arith.cmpf olt, %55, %75 : vector<128x1xf32>
    %77 = arith.extui %76 : vector<128x1xi1> to vector<128x1xi32>
    %78 = arith.sitofp %77 : vector<128x1xi32> to vector<128x1xf32>
    %79 = arith.divf %78, %74 : vector<128x1xf32>
    %c0_27 = arith.constant 0 : index
    %c0_28 = arith.constant 0 : index
    %c0_29 = arith.constant 0 : index
    %80 = vector.load %arg4[%c0_27, %c0_28, %c0_29] : memref<1x128x128xf32, #tpu.memory_space<vmem>>, vector<1x128x128xf32>
    %81 = vector.shape_cast %80 : vector<1x128x128xf32> to vector<128x128xf32>
    %cst_30 = arith.constant dense<0.000000e+00> : vector<128x128xf32>
    %82 = tpu.matmul %73, %81, %cst_30 {dimension_numbers = #tpu.dot_dimension_numbers<[1], [0], [0], [1], [0, 0, 1, 1], [], []>} : vector<128x128xf32>, vector<128x128xf32>, vector<128x128xf32> -> vector<128x128xf32>
    %83 = vector.broadcast %79 : vector<128x1xf32> to vector<128x128xf32>
    %84 = arith.mulf %82, %83 : vector<128x128xf32>
    %c0_31 = arith.constant 0 : index
    %c0_32 = arith.constant 0 : index
    %c0_33 = arith.constant 0 : index
    %85 = vector.load %arg5[%c0_31, %c0_32, %c0_33] : memref<1x128x128xf32, #tpu.memory_space<vmem>>, vector<1x128x128xf32>
    %86 = vector.shape_cast %85 : vector<1x128x128xf32> to vector<128x128xf32>
    %c0_34 = arith.constant 0 : index
    %c0_35 = arith.constant 0 : index
    %87 = vector.load %arg6[%c0_34, %c0_35] : memref<128x128xf32, #tpu.memory_space<vmem>>, vector<128x128xf32>
    %cst_36 = arith.constant dense<0.000000e+00> : vector<128x128xf32>
    %88 = tpu.matmul %86, %87, %cst_36 {dimension_numbers = #tpu.dot_dimension_numbers<[1], [0], [0], [1], [0, 0, 1, 1], [], []>} : vector<128x128xf32>, vector<128x128xf32>, vector<128x128xf32> -> vector<128x128xf32>
    %89 = arith.addf %84, %88 : vector<128x128xf32>
    %c0_37 = arith.constant 0 : index
    %c0_38 = arith.constant 0 : index
    %90 = vector.load %arg7[%c0_37, %c0_38] : memref<1x128xf32, #tpu.memory_space<vmem>>, vector<1x128xf32>
    %91 = vector.broadcast %90 : vector<1x128xf32> to vector<128x128xf32>
    %92 = arith.addf %89, %91 : vector<128x128xf32>
    %cst_39 = arith.constant 0.000000e+00 : f32
    %93 = vector.broadcast %cst_39 : f32 to vector<128x128xf32>
    %94 = arith.maximumf %92, %93 : vector<128x128xf32>
    %c0_40 = arith.constant 0 : index
    %c0_41 = arith.constant 0 : index
    %95 = vector.load %arg8[%c0_40, %c0_41] : memref<128x128xf32, #tpu.memory_space<vmem>>, vector<128x128xf32>
    %cst_42 = arith.constant dense<0.000000e+00> : vector<128x128xf32>
    %96 = tpu.matmul %94, %95, %cst_42 {dimension_numbers = #tpu.dot_dimension_numbers<[1], [0], [0], [1], [0, 0, 1, 1], [], []>} : vector<128x128xf32>, vector<128x128xf32>, vector<128x128xf32> -> vector<128x128xf32>
    %c0_43 = arith.constant 0 : index
    %c0_44 = arith.constant 0 : index
    %97 = vector.load %arg9[%c0_43, %c0_44] : memref<1x128xf32, #tpu.memory_space<vmem>>, vector<1x128xf32>
    %98 = vector.broadcast %97 : vector<1x128xf32> to vector<128x128xf32>
    %99 = arith.addf %96, %98 : vector<128x128xf32>
    %cst_45 = arith.constant 0.000000e+00 : f32
    %100 = vector.broadcast %cst_45 : f32 to vector<128x128xf32>
    %101 = arith.maximumf %99, %100 : vector<128x128xf32>
    %c0_46 = arith.constant 0 : index
    %c0_47 = arith.constant 0 : index
    %c0_48 = arith.constant 0 : index
    %102 = vector.load %arg10[%c0_46, %c0_47, %c0_48] : memref<1x128x128xf32, #tpu.memory_space<vmem>>, vector<1x128x128xf32>
    %103 = vector.shape_cast %102 : vector<1x128x128xf32> to vector<128x128xf32>
    %104 = vector.shape_cast %101 : vector<128x128xf32> to vector<1x128x128xf32>
    tpu.vector_store %arg10[%c0_46, %c0_47, %c0_48], %104 {strides = array<i32>} : memref<1x128x128xf32, #tpu.memory_space<vmem>>, vector<1x128x128xf32>,
    return
  }
  func.func @transform_0(%arg0: i32, %arg1: i32) -> (i32, i32, i32) {
    %c0_i32 = arith.constant 0 : i32
    %c0_i32_0 = arith.constant 0 : i32
    return %arg0, %arg1, %c0_i32 : i32, i32, i32
  }
  func.func @transform_1(%arg0: i32, %arg1: i32) -> (i32, i32, i32) {
    %c0_i32 = arith.constant 0 : i32
    %c0_i32_0 = arith.constant 0 : i32
    %c0_i32_1 = arith.constant 0 : i32
    return %arg0, %c0_i32, %c0_i32_0 : i32, i32, i32
  }
  func.func @transform_2(%arg0: i32, %arg1: i32) -> (i32, i32, i32) {
    %c0_i32 = arith.constant 0 : i32
    %c0_i32_0 = arith.constant 0 : i32
    %c0_i32_1 = arith.constant 0 : i32
    return %arg0, %c0_i32, %c0_i32_0 : i32, i32, i32
  }
  func.func @transform_3(%arg0: i32, %arg1: i32) -> (i32, i32, i32) {
    %c0_i32 = arith.constant 0 : i32
    %c0_i32_0 = arith.constant 0 : i32
    return %arg0, %arg1, %c0_i32 : i32, i32, i32
  }
  func.func @transform_4(%arg0: i32, %arg1: i32) -> (i32, i32) {
    %c0_i32 = arith.constant 0 : i32
    %c0_i32_0 = arith.constant 0 : i32
    %c0_i32_1 = arith.constant 0 : i32
    return %c0_i32, %c0_i32_0 : i32, i32
  }
  func.func @transform_5(%arg0: i32, %arg1: i32) -> (i32, i32) {
    %c0_i32 = arith.constant 0 : i32
    %c0_i32_0 = arith.constant 0 : i32
    %c0_i32_1 = arith.constant 0 : i32
    return %c0_i32, %c0_i32_0 : i32, i32
  }
  func.func @transform_6(%arg0: i32, %arg1: i32) -> (i32, i32) {
    %c0_i32 = arith.constant 0 : i32
    %c0_i32_0 = arith.constant 0 : i32
    %c0_i32_1 = arith.constant 0 : i32
    return %c0_i32, %c0_i32_0 : i32, i32
  }
  func.func @transform_7(%arg0: i32, %arg1: i32) -> (i32, i32) {
    %c0_i32 = arith.constant 0 : i32
    %c0_i32_0 = arith.constant 0 : i32
    %c0_i32_1 = arith.constant 0 : i32
    return %c0_i32, %c0_i32_0 : i32, i32
  }
  func.func @transform_8(%arg0: i32, %arg1: i32) -> (i32, i32, i32) {
    %c0_i32 = arith.constant 0 : i32
    %c0_i32_0 = arith.constant 0 : i32
    return %arg0, %arg1, %c0_i32 : i32, i32, i32
  }
}

module attributes {stable_mosaic.version = 11 : i64} {
  func.func @kernel(%arg0: i32, %arg1: i32, %arg2: memref<1x128x8xf32, #tpu.memory_space<vmem>>, %arg3: memref<1x8x128xf32, #tpu.memory_space<vmem>>, %arg4: memref<1x128x128xf32, #tpu.memory_space<vmem>>, %arg5: memref<1x128x128xf32, #tpu.memory_space<vmem>>, %arg6: memref<128x128xf32, #tpu.memory_space<vmem>>, %arg7: memref<1x128xf32, #tpu.memory_space<vmem>>, %arg8: memref<128x128xf32, #tpu.memory_space<vmem>>, %arg9: memref<1x128xf32, #tpu.memory_space<vmem>>, %arg10: memref<1x128x128xf32, #tpu.memory_space<vmem>>) attributes {dimension_semantics = [#tpu.dimension_semantics<parallel>, #tpu.dimension_semantics<parallel>], iteration_bounds = array<i64: 2, 1>, scalar_prefetch = 0 : i64, scratch_operands = 0 : i64, tpu.core_type = #tpu.core_type<tc>, window_params = [{transform_indices = @transform_0, window_bounds = array<i64: 1, 128, 8>}, {transform_indices = @transform_1, window_bounds = array<i64: 1, 8, 128>}, {transform_indices = @transform_2, window_bounds = array<i64: 1, 128, 128>}, {transform_indices = @transform_3, window_bounds = array<i64: 1, 128, 128>}, {pipeline_mode = #tpu.pipeline_mode<synchronous>, transform_indices = @transform_4, window_bounds = array<i64: 128, 128>}, {pipeline_mode = #tpu.pipeline_mode<synchronous>, transform_indices = @transform_5, window_bounds = array<i64: 1, 128>}, {pipeline_mode = #tpu.pipeline_mode<synchronous>, transform_indices = @transform_6, window_bounds = array<i64: 128, 128>}, {pipeline_mode = #tpu.pipeline_mode<synchronous>, transform_indices = @transform_7, window_bounds = array<i64: 1, 128>}, {transform_indices = @transform_8, window_bounds = array<i64: 1, 128, 128>}]} {
    %c0 = arith.constant 0 : index
    %c0_0 = arith.constant 0 : index
    %c0_1 = arith.constant 0 : index
    %0 = vector.load %arg2[%c0, %c0_0, %c0_1] : memref<1x128x8xf32, #tpu.memory_space<vmem>>, vector<1x128x8xf32>
    %1 = vector.shape_cast %0 : vector<1x128x8xf32> to vector<128x8xf32>
    %c0_2 = arith.constant 0 : index
    %c0_3 = arith.constant 0 : index
    %c0_4 = arith.constant 0 : index
    %2 = vector.load %arg3[%c0_2, %c0_3, %c0_4] : memref<1x8x128xf32, #tpu.memory_space<vmem>>, vector<1x8x128xf32>
    %3 = vector.shape_cast %2 : vector<1x8x128xf32> to vector<8x128xf32>
    %cst = arith.constant dense<0.000000e+00> : vector<128x128xf32>
    %4 = tpu.matmul %1, %3, %cst {dimension_numbers = #tpu.dot_dimension_numbers<[1], [0], [0], [1], [0, 0, 1, 1], [], []>} : vector<128x8xf32>, vector<8x128xf32>, vector<128x128xf32> -> vector<128x128xf32>
    %5 = tpu.iota {dimensions = array<i32: 1>} : vector<128x128xi32>
    %cst_5 = arith.constant 0.000000e+00 : f32
    %6 = vector.broadcast %cst_5 : f32 to vector<128x128xf32>
    %cst_6 = arith.constant 0.000000e+00 : f32
    %7 = vector.broadcast %cst_6 : f32 to vector<128x1xf32>
    %cst_7 = arith.constant dense<0x7F800000> : vector<128xf32>
    %8 = vector.multi_reduction <minimumf>, %4, %cst_7 [1] : vector<128x128xf32> to vector<128xf32>
    %9 = vector.shape_cast %8 : vector<128xf32> to vector<128x1xf32>
    %10 = vector.broadcast %9 : vector<128x1xf32> to vector<128x128xf32>
    %11 = arith.cmpf oeq, %4, %10 : vector<128x128xf32>
    %c128_i32 = arith.constant 128 : i32
    %12 = vector.broadcast %c128_i32 : i32 to vector<128x128xi32>
    %13 = arith.select %11, %5, %12 : vector<128x128xi1>, vector<128x128xi32>
    %cst_8 = arith.constant dense<2147483647> : vector<128xi32>
    %14 = vector.multi_reduction <minsi>, %13, %cst_8 [1] : vector<128x128xi32> to vector<128xi32>
    %15 = vector.shape_cast %14 : vector<128xi32> to vector<128x1xi32>
    %16 = vector.broadcast %15 : vector<128x1xi32> to vector<128x128xi32>
    %17 = arith.cmpi eq, %5, %16 : vector<128x128xi32>
    %cst_9 = arith.constant 1.000000e+34 : f32
    %18 = vector.broadcast %cst_9 : f32 to vector<128x128xf32>
    %19 = arith.select %17, %18, %4 : vector<128x128xi1>, vector<128x128xf32>
    %cst_10 = arith.constant 0.000000e+00 : f32
    %20 = vector.broadcast %cst_10 : f32 to vector<128x1xf32>
    %21 = arith.maximumf %9, %20 : vector<128x1xf32>
    %22 = math.sqrt %21 : vector<128x1xf32>
    %cst_11 = arith.constant 9.99999993E-9 : f32
    %23 = vector.broadcast %cst_11 : f32 to vector<128x1xf32>
    %24 = arith.addf %22, %23 : vector<128x1xf32>
    %cst_12 = arith.constant 1.000000e+00 : f32
    %25 = vector.broadcast %cst_12 : f32 to vector<128x1xf32>
    %26 = arith.divf %25, %24 : vector<128x1xf32>
    %27 = vector.shape_cast %26 : vector<128x1xf32> to vector<128x1xf32>
    %28 = vector.broadcast %27 : vector<128x1xf32> to vector<128x128xf32>
    %29 = arith.select %17, %28, %6 : vector<128x128xi1>, vector<128x128xf32>
    %30 = arith.addf %7, %26 : vector<128x1xf32>
    %cst_13 = arith.constant dense<0x7F800000> : vector<128xf32>
    %31 = vector.multi_reduction <minimumf>, %19, %cst_13 [1] : vector<128x128xf32> to vector<128xf32>
    %32 = vector.shape_cast %31 : vector<128xf32> to vector<128x1xf32>
    %33 = vector.broadcast %32 : vector<128x1xf32> to vector<128x128xf32>
    %34 = arith.cmpf oeq, %19, %33 : vector<128x128xf32>
    %c128_i32_14 = arith.constant 128 : i32
    %35 = vector.broadcast %c128_i32_14 : i32 to vector<128x128xi32>
    %36 = arith.select %34, %5, %35 : vector<128x128xi1>, vector<128x128xi32>
    %cst_15 = arith.constant dense<2147483647> : vector<128xi32>
    %37 = vector.multi_reduction <minsi>, %36, %cst_15 [1] : vector<128x128xi32> to vector<128xi32>
    %38 = vector.shape_cast %37 : vector<128xi32> to vector<128x1xi32>
    %39 = vector.broadcast %38 : vector<128x1xi32> to vector<128x128xi32>
    %40 = arith.cmpi eq, %5, %39 : vector<128x128xi32>
    %cst_16 = arith.constant 1.000000e+34 : f32
    %41 = vector.broadcast %cst_16 : f32 to vector<128x128xf32>
    %42 = arith.select %40, %41, %19 : vector<128x128xi1>, vector<128x128xf32>
    %cst_17 = arith.constant 0.000000e+00 : f32
    %43 = vector.broadcast %cst_17 : f32 to vector<128x1xf32>
    %44 = arith.maximumf %32, %43 : vector<128x1xf32>
    %45 = math.sqrt %44 : vector<128x1xf32>
    %cst_18 = arith.constant 9.99999993E-9 : f32
    %46 = vector.broadcast %cst_18 : f32 to vector<128x1xf32>
    %47 = arith.addf %45, %46 : vector<128x1xf32>
    %cst_19 = arith.constant 1.000000e+00 : f32
    %48 = vector.broadcast %cst_19 : f32 to vector<128x1xf32>
    %49 = arith.divf %48, %47 : vector<128x1xf32>
    %50 = vector.shape_cast %49 : vector<128x1xf32> to vector<128x1xf32>
    %51 = vector.broadcast %50 : vector<128x1xf32> to vector<128x128xf32>
    %52 = arith.select %40, %51, %29 : vector<128x128xi1>, vector<128x128xf32>
    %53 = arith.addf %30, %49 : vector<128x1xf32>
    %cst_20 = arith.constant dense<0x7F800000> : vector<128xf32>
    %54 = vector.multi_reduction <minimumf>, %42, %cst_20 [1] : vector<128x128xf32> to vector<128xf32>
    %55 = vector.shape_cast %54 : vector<128xf32> to vector<128x1xf32>
    %56 = vector.broadcast %55 : vector<128x1xf32> to vector<128x128xf32>
    %57 = arith.cmpf oeq, %42, %56 : vector<128x128xf32>
    %c128_i32_21 = arith.constant 128 : i32
    %58 = vector.broadcast %c128_i32_21 : i32 to vector<128x128xi32>
    %59 = arith.select %57, %5, %58 : vector<128x128xi1>, vector<128x128xi32>
    %cst_22 = arith.constant dense<2147483647> : vector<128xi32>
    %60 = vector.multi_reduction <minsi>, %59, %cst_22 [1] : vector<128x128xi32> to vector<128xi32>
    %61 = vector.shape_cast %60 : vector<128xi32> to vector<128x1xi32>
    %62 = vector.broadcast %61 : vector<128x1xi32> to vector<128x128xi32>
    %63 = arith.cmpi eq, %5, %62 : vector<128x128xi32>
    %cst_23 = arith.constant 0.000000e+00 : f32
    %64 = vector.broadcast %cst_23 : f32 to vector<128x1xf32>
    %65 = arith.maximumf %55, %64 : vector<128x1xf32>
    %66 = math.sqrt %65 : vector<128x1xf32>
    %cst_24 = arith.constant 9.99999993E-9 : f32
    %67 = vector.broadcast %cst_24 : f32 to vector<128x1xf32>
    %68 = arith.addf %66, %67 : vector<128x1xf32>
    %cst_25 = arith.constant 1.000000e+00 : f32
    %69 = vector.broadcast %cst_25 : f32 to vector<128x1xf32>
    %70 = arith.divf %69, %68 : vector<128x1xf32>
    %71 = vector.shape_cast %70 : vector<128x1xf32> to vector<128x1xf32>
    %72 = vector.broadcast %71 : vector<128x1xf32> to vector<128x128xf32>
    %73 = arith.select %63, %72, %52 : vector<128x128xi1>, vector<128x128xf32>
    %74 = arith.addf %53, %70 : vector<128x1xf32>
    %cst_26 = arith.constant 1.000000e+00 : f32
    %75 = vector.broadcast %cst_26 : f32 to vector<128x1xf32>
    %76 = arith.cmpf olt, %55, %75 : vector<128x1xf32>
    %77 = arith.extui %76 : vector<128x1xi1> to vector<128x1xi32>
    %78 = arith.sitofp %77 : vector<128x1xi32> to vector<128x1xf32>
    %79 = arith.divf %78, %74 : vector<128x1xf32>
    %c0_27 = arith.constant 0 : index
    %c0_28 = arith.constant 0 : index
    %c0_29 = arith.constant 0 : index
    %80 = vector.load %arg4[%c0_27, %c0_28, %c0_29] : memref<1x128x128xf32, #tpu.memory_space<vmem>>, vector<1x128x128xf32>
    %81 = vector.shape_cast %80 : vector<1x128x128xf32> to vector<128x128xf32>
    %cst_30 = arith.constant dense<0.000000e+00> : vector<128x128xf32>
    %82 = tpu.matmul %73, %81, %cst_30 {dimension_numbers = #tpu.dot_dimension_numbers<[1], [0], [0], [1], [0, 0, 1, 1], [], []>} : vector<128x128xf32>, vector<128x128xf32>, vector<128x128xf32> -> vector<128x128xf32>
    %83 = vector.broadcast %79 : vector<128x1xf32> to vector<128x128xf32>
    %84 = arith.mulf %82, %83 : vector<128x128xf32>
    %c0_31 = arith.constant 0 : index
    %c0_32 = arith.constant 0 : index
    %c0_33 = arith.constant 0 : index
    %85 = vector.load %arg5[%c0_31, %c0_32, %c0_33] : memref<1x128x128xf32, #tpu.memory_space<vmem>>, vector<1x128x128xf32>
    %86 = vector.shape_cast %85 : vector<1x128x128xf32> to vector<128x128xf32>
    %c0_34 = arith.constant 0 : index
    %c0_35 = arith.constant 0 : index
    %87 = vector.load %arg6[%c0_34, %c0_35] : memref<128x128xf32, #tpu.memory_space<vmem>>, vector<128x128xf32>
    %cst_36 = arith.constant dense<0.000000e+00> : vector<128x128xf32>
    %88 = tpu.matmul %86, %87, %cst_36 {dimension_numbers = #tpu.dot_dimension_numbers<[1], [0], [0], [1], [0, 0, 1, 1], [], []>} : vector<128x128xf32>, vector<128x128xf32>, vector<128x128xf32> -> vector<128x128xf32>
    %89 = arith.addf %84, %88 : vector<128x128xf32>
    %c0_37 = arith.constant 0 : index
    %c0_38 = arith.constant 0 : index
    %90 = vector.load %arg7[%c0_37, %c0_38] : memref<1x128xf32, #tpu.memory_space<vmem>>, vector<1x128xf32>
    %91 = vector.broadcast %90 : vector<1x128xf32> to vector<128x128xf32>
    %92 = arith.addf %89, %91 : vector<128x128xf32>
    %cst_39 = arith.constant 0.000000e+00 : f32
    %93 = vector.broadcast %cst_39 : f32 to vector<128x128xf32>
    %94 = arith.maximumf %92, %93 : vector<128x128xf32>
    %c0_40 = arith.constant 0 : index
    %c0_41 = arith.constant 0 : index
    %95 = vector.load %arg8[%c0_40, %c0_41] : memref<128x128xf32, #tpu.memory_space<vmem>>, vector<128x128xf32>
    %cst_42 = arith.constant dense<0.000000e+00> : vector<128x128xf32>
    %96 = tpu.matmul %94, %95, %cst_42 {dimension_numbers = #tpu.dot_dimension_numbers<[1], [0], [0], [1], [0, 0, 1, 1], [], []>} : vector<128x128xf32>, vector<128x128xf32>, vector<128x128xf32> -> vector<128x128xf32>
    %c0_43 = arith.constant 0 : index
    %c0_44 = arith.constant 0 : index
    %97 = vector.load %arg9[%c0_43, %c0_44] : memref<1x128xf32, #tpu.memory_space<vmem>>, vector<1x128xf32>
    %98 = vector.broadcast %97 : vector<1x128xf32> to vector<128x128xf32>
    %99 = arith.addf %96, %98 : vector<128x128xf32>
    %cst_45 = arith.constant 0.000000e+00 : f32
    %100 = vector.broadcast %cst_45 : f32 to vector<128x128xf32>
    %101 = arith.maximumf %99, %100 : vector<128x128xf32>
    %c0_46 = arith.constant 0 : index
    %c0_47 = arith.constant 0 : index
    %c0_48 = arith.constant 0 : index
    %102 = vector.load %arg10[%c0_46, %c0_47, %c0_48] : memref<1x128x128xf32, #tpu.memory_space<vmem>>, vector<1x128x128xf32>
    %103 = vector.shape_cast %102 : vector<1x128x128xf32> to vector<128x128xf32>
    %104 = vector.shape_cast %101 : vector<128x128xf32> to vector<1x128x128xf32>
    tpu.vector_store %arg10[%c0_46, %c0_47, %c0_48], %104 {strides = array<i32>} : memref<1x128x128xf32, #tpu.memory_space<vmem>>, vector<1x128x128xf32>,
    return
  }
  func.func @transform_0(%arg0: i32, %arg1: i32) -> (i32, i32, i32) {
    %c0_i32 = arith.constant 0 : i32
    %c0_i32_0 = arith.constant 0 : i32
    return %arg0, %arg1, %c0_i32 : i32, i32, i32
  }
  func.func @transform_1(%arg0: i32, %arg1: i32) -> (i32, i32, i32) {
    %c0_i32 = arith.constant 0 : i32
    %c0_i32_0 = arith.constant 0 : i32
    %c0_i32_1 = arith.constant 0 : i32
    return %arg0, %c0_i32, %c0_i32_0 : i32, i32, i32
  }
  func.func @transform_2(%arg0: i32, %arg1: i32) -> (i32, i32, i32) {
    %c0_i32 = arith.constant 0 : i32
    %c0_i32_0 = arith.constant 0 : i32
    %c0_i32_1 = arith.constant 0 : i32
    return %arg0, %c0_i32, %c0_i32_0 : i32, i32, i32
  }
  func.func @transform_3(%arg0: i32, %arg1: i32) -> (i32, i32, i32) {
    %c0_i32 = arith.constant 0 : i32
    %c0_i32_0 = arith.constant 0 : i32
    return %arg0, %arg1, %c0_i32 : i32, i32, i32
  }
  func.func @transform_4(%arg0: i32, %arg1: i32) -> (i32, i32) {
    %c0_i32 = arith.constant 0 : i32
    %c0_i32_0 = arith.constant 0 : i32
    %c0_i32_1 = arith.constant 0 : i32
    return %c0_i32, %c0_i32_0 : i32, i32
  }
  func.func @transform_5(%arg0: i32, %arg1: i32) -> (i32, i32) {
    %c0_i32 = arith.constant 0 : i32
    %c0_i32_0 = arith.constant 0 : i32
    %c0_i32_1 = arith.constant 0 : i32
    return %c0_i32, %c0_i32_0 : i32, i32
  }
  func.func @transform_6(%arg0: i32, %arg1: i32) -> (i32, i32) {
    %c0_i32 = arith.constant 0 : i32
    %c0_i32_0 = arith.constant 0 : i32
    %c0_i32_1 = arith.constant 0 : i32
    return %c0_i32, %c0_i32_0 : i32, i32
  }
  func.func @transform_7(%arg0: i32, %arg1: i32) -> (i32, i32) {
    %c0_i32 = arith.constant 0 : i32
    %c0_i32_0 = arith.constant 0 : i32
    %c0_i32_1 = arith.constant 0 : i32
    return %c0_i32, %c0_i32_0 : i32, i32
  }
  func.func @transform_8(%arg0: i32, %arg1: i32) -> (i32, i32, i32) {
    %c0_i32 = arith.constant 0 : i32
    %c0_i32_0 = arith.constant 0 : i32
    return %arg0, %arg1, %c0_i32 : i32, i32, i32
  }
}

</mosaic_0001>

<llo_original>
// kernel: tpu_custom_call.1
$region0: #{tpu_custom_call.1}
  #allocation0 [shape = 'u32[]', space=smem, size = 0x4, offset = 0x4, fixed_abs, tag = 'smem constant byte address 0x4 - core index']
  #allocation1 [shape = 'u32[144,128]{1,0:T(1,128)}', space=vmem, size = 0x12000, scoped, tag = 'internal scratch']
  %s0 = inlined_call_operand.vmem [shape: f32[2,128,8], index: 0, kind: input, shape index: {}]
  %s1 = inlined_call_operand.vmem [shape: f32[2,8,128], index: 1, kind: input, shape index: {}]
  %s2 = inlined_call_operand.vmem [shape: f32[2,128,128], index: 2, kind: input, shape index: {}]
  %s3 = inlined_call_operand.hbm [shape: f32[2,128,128], index: 3, kind: input, shape index: {}]
  %s4 = inlined_call_operand.hbm [shape: f32[128,128], index: 4, kind: input, shape index: {}]
  %s5 = inlined_call_operand.vmem [shape: f32[1,128], index: 5, kind: input, shape index: {}]
  %s6 = inlined_call_operand.hbm [shape: f32[128,128], index: 6, kind: input, shape index: {}]
  %s7 = inlined_call_operand.vmem [shape: f32[1,128], index: 7, kind: input, shape index: {}]
  %s8 = inlined_call_operand.hbm [shape: f32[2,128,128], index: 8, kind: output, shape index: {}]
  %s9 = sld [smem:[#allocation0]]
  $region77: #{tpu_custom_call.1} parent=0
    _
  %s11 = ssub.s32 1, %s9
  %s12 = scalar_select 0, %s11, %s9
  $region1: #{tpu_custom_call.1} parent=0
    #allocation2 [shape = 'u8[131072]{0}', space=vmem, size = 0x20000, scoped, tag = 'input window, operand 3']
    #allocation3 [shape = 's32[2]{0}', space=sflag, size = 0x8, scoped, tag = 'scoped memory for tpu_custom_call.1']
    #allocation4 [shape = 's32[2]{0}', space=sflag, size = 0x8, scoped, tag = 'scoped memory for tpu_custom_call.1']
    #allocation5 [shape = 'u8[65536]{0}', space=vmem, size = 0x10000, scoped, tag = 'input window, operand 4, single buffered']
    #allocation6 [shape = 's32[1]{0}', space=sflag, size = 0x4, scoped, tag = 'scoped memory for tpu_custom_call.1']
    #allocation7 [shape = 'u8[65536]{0}', space=vmem, size = 0x10000, scoped, tag = 'input window, operand 6, single buffered']
    #allocation8 [shape = 'u8[131072]{0}', space=vmem, size = 0x20000, scoped, tag = 'output window, operand 0']
    %13 = vsyncpa [#allocation3], 0
    %s14 = scalar_lea.sflag [#allocation3], 1
    %15 = vsyncpa %s14, 0
    %16 = vsyncpa [#allocation6], 0
    %17 = vsyncpa [#allocation4], 0
    %s18 = scalar_lea.sflag [#allocation4], 1
    %19 = vsyncpa %s18, 0
    loop: start=0, step=1, limit=4
    $region2: #{tpu_custom_call.1} parent=1 // loop_pre_header
      _
    $region3: #{tpu_custom_call.1} parent=1 // loop_header
      %s21 = sphi 0, %s25
      %p22 = scmp.ge.s32.totalorder %s21, 4
      %s28 = sphi 0, %s40
      %s29 = sphi 0, %s36
      %s30 = sphi 0, %s28
      %s31 = sphi 0, %s29
      %s32 = sphi 0, %s30
      %s33 = sphi 0, %s31
      %s45 = sphi 0, %s47
      %s48 = sphi 0, %s45
      %s49 = sphi 0, %s48
      %s65 = sphi 0, %s49
      %s71 = sphi 0, %s73
      %s74 = sphi 0, %s71
      %s75 = sphi 0, %s74
      %s91 = sphi 0, %s75
      %s97 = sphi 0, %s99
      %s100 = sphi 0, %s97
      %s101 = sphi 0, %s100
      %s117 = sphi 0, %s101
      %s125 = sphi 0, %s127
      %s128 = sphi 0, %s125
      %s129 = sphi 0, %s128
      %s145 = sphi 0, %s129
      %s149 = sphi 0, %s149
      %s151 = sphi 0, %s149
      %s152 = sphi 0, %s151
      %s166 = sphi 0, %s152
      %s170 = sphi 0, %s170
      %s172 = sphi 0, %s170
      %s173 = sphi 0, %s172
      %s187 = sphi 0, %s173
      %s191 = sphi 0, %s191
      %s193 = sphi 0, %s191
      %s194 = sphi 0, %s193
      %s208 = sphi 0, %s194
      %s212 = sphi 0, %s212
      %s214 = sphi 0, %s212
      %s215 = sphi 0, %s214
      %s229 = sphi 0, %s215
      %s237 = sphi 0, %s239
      %s240 = sphi 0, %s237
      %s241 = sphi 0, %s240
      %s257 = sphi 0, %s241
    $region4: #{tpu_custom_call.1} parent=1 // loop_header_branch
      %24 = sbr.rel (%p22) target = $region8
    $region5: #{tpu_custom_call.1} parent=1 // loop_body
      %s26 = ssub.s32 %s21, 1
      %s27 = ssub.s32 %s21, 2
      %s34 = sadd.s32 1, %s29
      %p35 = scmp.ge.s32.totalorder %s34, 1
      %s36 = scalar_select %p35, 0, %s34
      %s37 = sadd.s32 1, %s28
      %s38 = scalar_select %p35, %s37, %s28
      %p39 = scmp.ge.s32.totalorder %s38, 2
      %s40 = scalar_select %p39, 0, %s38
      %s41 = ssub.s32 %s28, %s40
      %s42 = ssub.s32 %s29, %s36
      %s43 = sor.u32 %s41, %s42
      %p44 = scmp.eq.s32.totalorder %s43, 0
      %s46 = sadd.s32 %s45, 1
      %s47 = scalar_select %p44, %s45, %s46
      %p50 = pneg %p44
      %p51 = scmp.eq.s32.totalorder %s21, 1
      %p52 = por %p50, %p51
      %p53 = scmp.ne.s32.totalorder %s45, %s48
      %p54 = scmp.eq.s32.totalorder %s21, 0
      %p55 = por %p53, %p54
      %p56 = scmp.ne.s32.totalorder %s45, %s48
      %p57 = scmp.eq.s32.totalorder %s26, 1
      %p58 = por %p56, %p57
      %p59 = scmp.ne.s32.totalorder %s48, %s49
      %p60 = scmp.eq.s32.totalorder %s26, 0
      %p61 = por %p59, %p60
      %p62 = scmp.ne.s32.totalorder %s48, %s49
      %p63 = scmp.eq.s32.totalorder %s27, 1
      %p64 = por %p62, %p63
      %p66 = scmp.ne.s32.totalorder %s49, %s65
      %p67 = scmp.eq.s32.totalorder %s27, 0
      %p68 = por %p66, %p67
      %s69 = ssub.s32 %s28, %s40
      %p70 = scmp.eq.s32.totalorder %s69, 0
      %s72 = sadd.s32 %s71, 1
      %s73 = scalar_select %p70, %s71, %s72
      %p76 = pneg %p70
      %p77 = scmp.eq.s32.totalorder %s21, 1
      %p78 = por %p76, %p77
      %p79 = scmp.ne.s32.totalorder %s71, %s74
      %p80 = scmp.eq.s32.totalorder %s21, 0
      %p81 = por %p79, %p80
      %p82 = scmp.ne.s32.totalorder %s71, %s74
      %p83 = scmp.eq.s32.totalorder %s26, 1
      %p84 = por %p82, %p83
      %p85 = scmp.ne.s32.totalorder %s74, %s75
      %p86 = scmp.eq.s32.totalorder %s26, 0
      %p87 = por %p85, %p86
      %p88 = scmp.ne.s32.totalorder %s74, %s75
      %p89 = scmp.eq.s32.totalorder %s27, 1
      %p90 = por %p88, %p89
      %p92 = scmp.ne.s32.totalorder %s75, %s91
      %p93 = scmp.eq.s32.totalorder %s27, 0
      %p94 = por %p92, %p93
      %s95 = ssub.s32 %s28, %s40
      %p96 = scmp.eq.s32.totalorder %s95, 0
      %s98 = sadd.s32 %s97, 1
      %s99 = scalar_select %p96, %s97, %s98
      %p102 = pneg %p96
      %p103 = scmp.eq.s32.totalorder %s21, 1
      %p104 = por %p102, %p103
      %p105 = scmp.ne.s32.totalorder %s97, %s100
      %p106 = scmp.eq.s32.totalorder %s21, 0
      %p107 = por %p105, %p106
      %p108 = scmp.ne.s32.totalorder %s97, %s100
      %p109 = scmp.eq.s32.totalorder %s26, 1
      %p110 = por %p108, %p109
      %p111 = scmp.ne.s32.totalorder %s100, %s101
      %p112 = scmp.eq.s32.totalorder %s26, 0
      %p113 = por %p111, %p112
      %p114 = scmp.ne.s32.totalorder %s100, %s101
      %p115 = scmp.eq.s32.totalorder %s27, 1
      %p116 = por %p114, %p115
      %p118 = scmp.ne.s32.totalorder %s101, %s117
      %p119 = scmp.eq.s32.totalorder %s27, 0
      %p120 = por %p118, %p119
      %s121 = ssub.s32 %s28, %s40
      %s122 = ssub.s32 %s29, %s36
      %s123 = sor.u32 %s121, %s122
      %p124 = scmp.eq.s32.totalorder %s123, 0
      %s126 = sadd.s32 %s125, 1
      %s127 = scalar_select %p124, %s125, %s126
      %p130 = pneg %p124
      %p131 = scmp.eq.s32.totalorder %s21, 1
      %p132 = por %p130, %p131
      %p133 = scmp.ne.s32.totalorder %s125, %s128
      %p134 = scmp.eq.s32.totalorder %s21, 0
      %p135 = por %p133, %p134
      %p136 = scmp.ne.s32.totalorder %s125, %s128
      %p137 = scmp.eq.s32.totalorder %s26, 1
      %p138 = por %p136, %p137
      %p139 = scmp.ne.s32.totalorder %s128, %s129
      %p140 = scmp.eq.s32.totalorder %s26, 0
      %p141 = por %p139, %p140
      %p142 = scmp.ne.s32.totalorder %s128, %s129
      %p143 = scmp.eq.s32.totalorder %s27, 1
      %p144 = por %p142, %p143
      %p146 = scmp.ne.s32.totalorder %s129, %s145
      %p147 = scmp.eq.s32.totalorder %s27, 0
      %p148 = por %p146, %p147
      %s150 = sadd.s32 %s149, 1
      %p153 = scmp.eq.s32.totalorder %s21, 1
      %p154 = scmp.ne.s32.totalorder %s149, %s151
      %p155 = scmp.eq.s32.totalorder %s21, 0
      %p156 = por %p154, %p155
      %p157 = scmp.ne.s32.totalorder %s149, %s151
      %p158 = scmp.eq.s32.totalorder %s26, 1
      %p159 = por %p157, %p158
      %p160 = scmp.ne.s32.totalorder %s151, %s152
      %p161 = scmp.eq.s32.totalorder %s26, 0
      %p162 = por %p160, %p161
      %p163 = scmp.ne.s32.totalorder %s151, %s152
      %p164 = scmp.eq.s32.totalorder %s27, 1
      %p165 = por %p163, %p164
      %p167 = scmp.ne.s32.totalorder %s152, %s166
      %p168 = scmp.eq.s32.totalorder %s27, 0
      %p169 = por %p167, %p168
      %s171 = sadd.s32 %s170, 1
      %p174 = scmp.eq.s32.totalorder %s21, 1
      %p175 = scmp.ne.s32.totalorder %s170, %s172
      %p176 = scmp.eq.s32.totalorder %s21, 0
      %p177 = por %p175, %p176
      %p178 = scmp.ne.s32.totalorder %s170, %s172
      %p179 = scmp.eq.s32.totalorder %s26, 1
      %p180 = por %p178, %p179
      %p181 = scmp.ne.s32.totalorder %s172, %s173
      %p182 = scmp.eq.s32.totalorder %s26, 0
      %p183 = por %p181, %p182
      %p184 = scmp.ne.s32.totalorder %s172, %s173
      %p185 = scmp.eq.s32.totalorder %s27, 1
      %p186 = por %p184, %p185
      %p188 = scmp.ne.s32.totalorder %s173, %s187
      %p189 = scmp.eq.s32.totalorder %s27, 0
      %p190 = por %p188, %p189
      %s192 = sadd.s32 %s191, 1
      %p195 = scmp.eq.s32.totalorder %s21, 1
      %p196 = scmp.ne.s32.totalorder %s191, %s193
      %p197 = scmp.eq.s32.totalorder %s21, 0
      %p198 = por %p196, %p197
      %p199 = scmp.ne.s32.totalorder %s191, %s193
      %p200 = scmp.eq.s32.totalorder %s26, 1
      %p201 = por %p199, %p200
      %p202 = scmp.ne.s32.totalorder %s193, %s194
      %p203 = scmp.eq.s32.totalorder %s26, 0
      %p204 = por %p202, %p203
      %p205 = scmp.ne.s32.totalorder %s193, %s194
      %p206 = scmp.eq.s32.totalorder %s27, 1
      %p207 = por %p205, %p206
      %p209 = scmp.ne.s32.totalorder %s194, %s208
      %p210 = scmp.eq.s32.totalorder %s27, 0
      %p211 = por %p209, %p210
      %s213 = sadd.s32 %s212, 1
      %p216 = scmp.eq.s32.totalorder %s21, 1
      %p217 = scmp.ne.s32.totalorder %s212, %s214
      %p218 = scmp.eq.s32.totalorder %s21, 0
      %p219 = por %p217, %p218
      %p220 = scmp.ne.s32.totalorder %s212, %s214
      %p221 = scmp.eq.s32.totalorder %s26, 1
      %p222 = por %p220, %p221
      %p223 = scmp.ne.s32.totalorder %s214, %s215
      %p224 = scmp.eq.s32.totalorder %s26, 0
      %p225 = por %p223, %p224
      %p226 = scmp.ne.s32.totalorder %s214, %s215
      %p227 = scmp.eq.s32.totalorder %s27, 1
      %p228 = por %p226, %p227
      %p230 = scmp.ne.s32.totalorder %s215, %s229
      %p231 = scmp.eq.s32.totalorder %s27, 0
      %p232 = por %p230, %p231
      %s233 = ssub.s32 %s28, %s40
      %s234 = ssub.s32 %s29, %s36
      %s235 = sor.u32 %s233, %s234
      %p236 = scmp.eq.s32.totalorder %s235, 0
      %s238 = sadd.s32 %s237, 1
      %s239 = scalar_select %p236, %s237, %s238
      %p242 = pneg %p236
      %p243 = scmp.eq.s32.totalorder %s21, 1
      %p244 = por %p242, %p243
      %p245 = scmp.ne.s32.totalorder %s237, %s240
      %p246 = scmp.eq.s32.totalorder %s21, 0
      %p247 = por %p245, %p246
      %p248 = scmp.ne.s32.totalorder %s237, %s240
      %p249 = scmp.eq.s32.totalorder %s26, 1
      %p250 = por %p248, %p249
      %p251 = scmp.ne.s32.totalorder %s240, %s241
      %p252 = scmp.eq.s32.totalorder %s26, 0
      %p253 = por %p251, %p252
      %p254 = scmp.ne.s32.totalorder %s240, %s241
      %p255 = scmp.eq.s32.totalorder %s27, 1
      %p256 = por %p254, %p255
      %p258 = scmp.ne.s32.totalorder %s241, %s257
      %p259 = scmp.eq.s32.totalorder %s27, 0
      %p260 = por %p258, %p259
      %p261 = scmp.le.s32.totalorder 1, %s21
      %p262 = scmp.lt.s32.totalorder %s21, 3
      %p263 = pnand %p261, %p262
      %p264 = pneg %p263
      // Predicated region
      $region9: #{tpu_custom_call.1} parent=5 // pred_check
        _
      $region10: #{tpu_custom_call.1} parent=5 // pred_check_branch
        %266 = sbr.rel (%p263) target = $region12
      $region11: #{tpu_custom_call.1} parent=5 // pred_region
        %s267 = ssub.s32 %s21, 1
        // Predicated region
        $region13: #{tpu_custom_call.1} parent=11 // pred_check
          %p268 = pneg %p87
        $region14: #{tpu_custom_call.1} parent=11 // pred_check_branch
          %270 = sbr.rel (%p268) target = $region16
        $region15: #{tpu_custom_call.1} parent=11 // pred_region
          %p271 = scmp.lt.s32.totalorder %s30, 1
          %s272 = scalar_select %p271, %s30, 1
          %s273 = smul.addr %s272, 8
          %s274 = scalar_lea.vmem %s1, %s273
        $region16: #{tpu_custom_call.1} parent=11 // pred_fallthru
          _
        // Predicated region
        $region17: #{tpu_custom_call.1} parent=11 // pred_check
          %p275 = pneg %p113
        $region18: #{tpu_custom_call.1} parent=11 // pred_check_branch
          %277 = sbr.rel (%p275) target = $region20
        $region19: #{tpu_custom_call.1} parent=11 // pred_region
          %p278 = scmp.lt.s32.totalorder %s30, 1
          %s279 = scalar_select %p278, %s30, 1
          %s280 = smul.addr %s279, 16
          %s281 = smul.addr %s280, 8
          %s282 = scalar_lea.vmem %s2, %s281
        $region20: #{tpu_custom_call.1} parent=11 // pred_fallthru
          _
        // Predicated region
        $region21: #{tpu_custom_call.1} parent=11 // pred_check
          %p283 = pneg %p162
        $region22: #{tpu_custom_call.1} parent=11 // pred_check_branch
          %285 = sbr.rel (%p283) target = $region24
        $region23: #{tpu_custom_call.1} parent=11 // pred_region
          %s287 = ssub.s32 2048, 2048
          %288 = vsyncadd [#allocation6], %s287
          %s289 = sshll.u32 [#allocation5], 4
          %s290 = int_to_ptr.vmem [resolvable:$true] %s289
          %295 = dma.hbm_to_vmem [thread:$0]  %s4, 2048, %s290, [#allocation6], 128, 128, 8
        $region24: #{tpu_custom_call.1} parent=11 // pred_fallthru
          _
        // Predicated region
        $region25: #{tpu_custom_call.1} parent=11 // pred_check
          %p296 = pneg %p183
        $region26: #{tpu_custom_call.1} parent=11 // pred_check_branch
          %298 = sbr.rel (%p296) target = $region28
        $region27: #{tpu_custom_call.1} parent=11 // pred_region
          _
        $region28: #{tpu_custom_call.1} parent=11 // pred_fallthru
          _
        // Predicated region
        $region29: #{tpu_custom_call.1} parent=11 // pred_check
          %p299 = pneg %p204
        $region30: #{tpu_custom_call.1} parent=11 // pred_check_branch
          %301 = sbr.rel (%p299) target = $region32
        $region31: #{tpu_custom_call.1} parent=11 // pred_region
          %s303 = ssub.s32 2048, 2048
          %304 = vsyncadd [#allocation6], %s303
          %s305 = sshll.u32 [#allocation7], 4
          %s306 = int_to_ptr.vmem [resolvable:$true] %s305
          %311 = dma.hbm_to_vmem [thread:$0]  %s6, 2048, %s306, [#allocation6], 128, 128, 8
        $region32: #{tpu_custom_call.1} parent=11 // pred_fallthru
          _
        // Predicated region
        $region33: #{tpu_custom_call.1} parent=11 // pred_check
          %p312 = pneg %p225
        $region34: #{tpu_custom_call.1} parent=11 // pred_check_branch
          %314 = sbr.rel (%p312) target = $region36
        $region35: #{tpu_custom_call.1} parent=11 // pred_region
          _
        $region36: #{tpu_custom_call.1} parent=11 // pred_fallthru
          _
      $region12: #{tpu_custom_call.1} parent=5 // pred_fallthru
        _
      %p315 = scmp.lt.s32.totalorder %s21, 2
      // Predicated region
      $region37: #{tpu_custom_call.1} parent=5 // pred_check
        %p316 = pneg %p315
      $region38: #{tpu_custom_call.1} parent=5 // pred_check_branch
        %318 = sbr.rel (%p316) target = $region40
      $region39: #{tpu_custom_call.1} parent=5 // pred_region
        // Predicated region
        $region41: #{tpu_custom_call.1} parent=39 // pred_check
          %p319 = pneg %p55
        $region42: #{tpu_custom_call.1} parent=39 // pred_check_branch
          %321 = sbr.rel (%p319) target = $region44
        $region43: #{tpu_custom_call.1} parent=39 // pred_region
          %s322 = smul.u32 16, %s29
          %p323 = scmp.lt.s32.totalorder %s28, 1
          %s324 = scalar_select %p323, %s28, 1
          %p325 = scmp.lt.s32.totalorder %s322, 15
          %s326 = scalar_select %p325, %s322, 15
          %s327 = smul.addr %s324, 16
          %s328 = sadd.s32 %s326, %s327
          %s329 = smul.addr %s328, 8
          %s330 = scalar_lea.vmem %s0, %s329
          %s331 = smul.u32 16, %s29
        $region44: #{tpu_custom_call.1} parent=39 // pred_fallthru
          _
        // Predicated region
        $region45: #{tpu_custom_call.1} parent=39 // pred_check
          %p332 = pneg %p135
        $region46: #{tpu_custom_call.1} parent=39 // pred_check_branch
          %334 = sbr.rel (%p332) target = $region48
        $region47: #{tpu_custom_call.1} parent=39 // pred_region
          %s335 = sand.u32 %s125, 1
          %s336 = scalar_lea.sflag [#allocation3], %s335
          %s337 = sand.u32 %s125, 1
          %s338 = smul.addr %s337, 128
          %s339 = scalar_lea.vmem [#allocation2], %s338
          %s340 = smul.u32 16, %s29
          %s342 = ssub.s32 2048, 2048
          %343 = vsyncadd %s336, %s342
          %s344 = smul.addr %s28, 16
          %s345 = sadd.s32 %s340, %s344
          %s346 = smul.addr %s345, 128
          %s347 = scalar_lea.hbm %s3, %s346
          %s348 = sshll.u32 %s339, 4
          %s349 = int_to_ptr.vmem [resolvable:$true] %s348
          %354 = dma.hbm_to_vmem [thread:$0]  %s347, 2048, %s349, %s336, 128, 128, 8
        $region48: #{tpu_custom_call.1} parent=39 // pred_fallthru
          _
      $region40: #{tpu_custom_call.1} parent=5 // pred_fallthru
        _
      %p355 = scmp.le.s32.totalorder 1, %s21
      %p356 = scmp.lt.s32.totalorder %s21, 3
      %p357 = pnand %p355, %p356
      %p358 = pneg %p357
      // Predicated region
      $region49: #{tpu_custom_call.1} parent=5 // pred_check
        _
      $region50: #{tpu_custom_call.1} parent=5 // pred_check_branch
        %360 = sbr.rel (%p357) target = $region52
      $region51: #{tpu_custom_call.1} parent=5 // pred_region
        %s361 = ssub.s32 %s21, 1
        %s362 = sand.u32 %s128, 1
        %s363 = scalar_lea.sflag [#allocation3], %s362
        %s364 = sand.u32 %s128, 1
        %s365 = smul.addr %s364, 128
        %s366 = scalar_lea.vmem [#allocation2], %s365
        // Predicated region
        $region53: #{tpu_custom_call.1} parent=51 // pred_check
          %p367 = pneg %p141
        $region54: #{tpu_custom_call.1} parent=51 // pred_check_branch
          %369 = sbr.rel (%p367) target = $region56
        $region55: #{tpu_custom_call.1} parent=51 // pred_region
          %370 = dma.done %s363, 2048
        $region56: #{tpu_custom_call.1} parent=51 // pred_fallthru
          _
        // Predicated region
        $region57: #{tpu_custom_call.1} parent=51 // pred_check
          %p371 = pneg %p162
        $region58: #{tpu_custom_call.1} parent=51 // pred_check_branch
          %373 = sbr.rel (%p371) target = $region60
        $region59: #{tpu_custom_call.1} parent=51 // pred_region
          %374 = dma.done [#allocation6], 2048
        $region60: #{tpu_custom_call.1} parent=51 // pred_fallthru
          _
        // Predicated region
        $region61: #{tpu_custom_call.1} parent=51 // pred_check
          %p375 = pneg %p204
        $region62: #{tpu_custom_call.1} parent=51 // pred_check_branch
          %377 = sbr.rel (%p375) target = $region64
        $region63: #{tpu_custom_call.1} parent=51 // pred_region
          %378 = dma.done [#allocation6], 2048
        $region64: #{tpu_custom_call.1} parent=51 // pred_fallthru
          _
        %s379 = smul.u32 16, %s31
        %p380 = scmp.lt.s32.totalorder %s30, 1
        %s381 = scalar_select %p380, %s30, 1
        %p382 = scmp.lt.s32.totalorder %s379, 15
        %s383 = scalar_select %p382, %s379, 15
        %s384 = smul.addr %s381, 16
        %s385 = sadd.s32 %s383, %s384
        %s386 = smul.addr %s385, 8
        %s387 = scalar_lea.vmem %s0, %s386
        %p388 = pneg %p61
        %p389 = pneg %p58
        %p390 = scmp.lt.s32.totalorder %s30, 1
        %s391 = scalar_select %p390, %s30, 1
        %s392 = smul.addr %s391, 8
        %s393 = scalar_lea.vmem %s1, %s392
        %p394 = pneg %p87
        %p395 = pneg %p84
        %p396 = scmp.lt.s32.totalorder %s30, 1
        %s397 = scalar_select %p396, %s30, 1
        %s398 = smul.addr %s397, 16
        %s399 = smul.addr %s398, 8
        %s400 = scalar_lea.vmem %s2, %s399
        %p401 = pneg %p113
        %p402 = pneg %p110
        %s403 = sand.u32 %s128, 1
        %s404 = scalar_lea.sflag [#allocation3], %s403
        %s405 = sand.u32 %s128, 1
        %s406 = smul.addr %s405, 128
        %s407 = scalar_lea.vmem [#allocation2], %s406
        %p408 = pneg %p141
        %p409 = pneg %p138
        %p410 = pneg %p162
        %p411 = pneg %p159
        %p412 = pneg %p183
        %p413 = pneg %p180
        %p414 = pneg %p204
        %p415 = pneg %p201
        %p416 = pneg %p225
        %p417 = pneg %p222
        %p418 = pneg %p253
        %p419 = pneg %p250
        %s420 = sand.u32 %s240, 1
        %s421 = scalar_lea.sflag [#allocation4], %s420
        %s422 = sand.u32 %s240, 1
        %s423 = smul.addr %s422, 128
        %s424 = scalar_lea.vmem [#allocation8], %s423
        %s425 = smul.u32 16, %s31
        %p426 = scmp.lt.s32.totalorder %s30, 1
        %s427 = scalar_select %p426, %s30, 1
        %p428 = scmp.lt.s32.totalorder %s425, 15
        %s429 = scalar_select %p428, %s425, 15
        %s430 = smul.addr %s427, 16
        %s431 = sadd.s32 %s429, %s430
        %s432 = smul.addr %s431, 8
        %s433 = scalar_lea.vmem %s0, %s432
        %s434 = smul.u32 16, %s31
        %p435 = scmp.lt.s32.totalorder %s30, 1
        %s436 = scalar_select %p435, %s30, 1
        %s437 = smul.addr %s436, 8
        %s438 = scalar_lea.vmem %s1, %s437
        %p439 = scmp.lt.s32.totalorder %s30, 1
        %s440 = scalar_select %p439, %s30, 1
        %s441 = smul.addr %s440, 16
        %s442 = smul.addr %s441, 8
        %s443 = scalar_lea.vmem %s2, %s442
        %s444 = smul.u32 16, %s31
        %s445 = smul.u32 16, %s31
        %v446 = vld [vmem:[%s433] sm:$0xff]
        %v447 = vld [vmem:[%s433 + $0x8] sm:$0xff]
        %v448 = vld [vmem:[%s433 + $0x10] sm:$0xff]
        %v449 = vld [vmem:[%s433 + $0x18] sm:$0xff]
        %v450 = vld [vmem:[%s433 + $0x20] sm:$0xff]
        %v451 = vld [vmem:[%s433 + $0x28] sm:$0xff]
        %v452 = vld [vmem:[%s433 + $0x30] sm:$0xff]
        %v453 = vld [vmem:[%s433 + $0x38] sm:$0xff]
        %v454 = vld [vmem:[%s433 + $0x40] sm:$0xff]
        %v455 = vld [vmem:[%s433 + $0x48] sm:$0xff]
        %v456 = vld [vmem:[%s433 + $0x50] sm:$0xff]
        %v457 = vld [vmem:[%s433 + $0x58] sm:$0xff]
        %v458 = vld [vmem:[%s433 + $0x60] sm:$0xff]
        %v459 = vld [vmem:[%s433 + $0x68] sm:$0xff]
        %v460 = vld [vmem:[%s433 + $0x70] sm:$0xff]
        %v461 = vld [vmem:[%s433 + $0x78] sm:$0xff]
        %v462 = vld [vmem:[%s438] sm:$0xff]
        %vm463 = vcmask 64512
        %v465 = vsel %vm463, %v446, 0
        %v468 = vsel %vm463, %v447, 0
        %v471 = vsel %vm463, %v448, 0
        %v474 = vsel %vm463, %v449, 0
        %v477 = vsel %vm463, %v450, 0
        %v480 = vsel %vm463, %v451, 0
        %v483 = vsel %vm463, %v452, 0
        %v486 = vsel %vm463, %v453, 0
        %v489 = vsel %vm463, %v454, 0
        %v492 = vsel %vm463, %v455, 0
        %v495 = vsel %vm463, %v456, 0
        %v498 = vsel %vm463, %v457, 0
        %v501 = vsel %vm463, %v458, 0
        %v504 = vsel %vm463, %v459, 0
        %v507 = vsel %vm463, %v460, 0
        %v510 = vsel %vm463, %v461, 0
        %512 = vmatprep.subr.mxu0 0.0
        %513 = vmatpush1.msra.mxu0 %v462
        %514 = vmatprep.subr.mxu0 0.0
        %515 = vmatpush1.msra.mxu0 0.0
        %516 = vmatprep.subr.mxu0 0.0
        %517 = vmatpush1.msra.mxu0 0.0
        %518 = vmatprep.subr.mxu0 0.0
        %519 = vmatpush1.msra.mxu0 0.0
        %520 = vmatprep.subr.mxu0 0.0
        %521 = vmatpush1.msra.mxu0 0.0
        %522 = vmatprep.subr.mxu0 0.0
        %523 = vmatpush1.msra.mxu0 0.0
        %524 = vmatprep.subr.mxu0 0.0
        %525 = vmatpush1.msra.mxu0 0.0
        %526 = vmatprep.subr.mxu0 0.0
        %527 = vmatpush1.msra.mxu0 0.0
        %528 = vmatprep.subr.mxu0 0.0
        %529 = vmatpush1.msra.mxu0 0.0
        %530 = vmatprep.subr.mxu0 0.0
        %531 = vmatpush1.msra.mxu0 0.0
        %532 = vmatprep.subr.mxu0 0.0
        %533 = vmatpush1.msra.mxu0 0.0
        %534 = vmatprep.subr.mxu0 0.0
        %535 = vmatpush1.msra.mxu0 0.0
        %536 = vmatprep.subr.mxu0 0.0
        %537 = vmatpush1.msra.mxu0 0.0
        %538 = vmatprep.subr.mxu0 0.0
        %539 = vmatpush1.msra.mxu0 0.0
        %540 = vmatprep.subr.mxu0 0.0
        %541 = vmatpush1.msra.mxu0 0.0
        %542 = vmatprep.subr.mxu0 0.0
        %543 = vmatpush1.msra.mxu0 0.0
        %544 = vmatprep.subr.mxu0 0.0
        %545 = vmatpush1.msra.mxu0 0.0
        %546 = vmatprep.subr.mxu0 0.0
        %547 = vmatpush1.msra.mxu0 0.0
        %548 = vmatprep.subr.mxu0 0.0
        %549 = vmatpush1.msra.mxu0 0.0
        %550 = vmatprep.subr.mxu0 0.0
        %551 = vmatpush1.msra.mxu0 0.0
        %552 = vmatprep.subr.mxu0 0.0
        %553 = vmatpush1.msra.mxu0 0.0
        %554 = vmatprep.subr.mxu0 0.0
        %555 = vmatpush1.msra.mxu0 0.0
        %556 = vmatprep.subr.mxu0 0.0
        %557 = vmatpush1.msra.mxu0 0.0
        %558 = vmatprep.subr.mxu0 0.0
        %559 = vmatpush1.msra.mxu0 0.0
        %560 = vmatprep.subr.mxu0 0.0
        %561 = vmatpush1.msra.mxu0 0.0
        %562 = vmatprep.subr.mxu0 0.0
        %563 = vmatpush1.msra.mxu0 0.0
        %564 = vmatprep.subr.mxu0 0.0
        %565 = vmatpush1.msra.mxu0 0.0
        %566 = vmatprep.subr.mxu0 0.0
        %567 = vmatpush1.msra.mxu0 0.0
        %568 = vmatprep.subr.mxu0 0.0
        %569 = vmatpush1.msra.mxu0 0.0
        %570 = vmatprep.subr.mxu0 0.0
        %571 = vmatpush1.msra.mxu0 0.0
        %572 = vmatprep.subr.mxu0 0.0
        %573 = vmatpush1.msra.mxu0 0.0
        %574 = vmatprep.subr.mxu0 0.0
        %575 = vmatpush1.msra.mxu0 0.0
        %576 = vmatprep.mubr.f32.mxu0 0.0
        %577 = vmatmul.mubr.f32.gmra.mrb[0].mxu0 %v465
        %v578 = vpop.f32.mrb[0].mxu0
        %v579 = vadd.f32 0.0, %v578
        %v580 = vpop.f32.mrb[0].mxu0
        %581 = vmatprep.mubr.f32.mxu0 0.0
        %582 = vmatmul.mubr.f32.gmra.mrb[0].mxu0 %v468
        %v583 = vpop.f32.mrb[0].mxu0
        %v584 = vadd.f32 0.0, %v583
        %v585 = vpop.f32.mrb[0].mxu0
        %586 = vmatprep.mubr.f32.mxu0 0.0
        %587 = vmatmul.mubr.f32.gmra.mrb[0].mxu0 %v471
        %v588 = vpop.f32.mrb[0].mxu0
        %v589 = vadd.f32 0.0, %v588
        %v590 = vpop.f32.mrb[0].mxu0
        %591 = vmatprep.mubr.f32.mxu0 0.0
        %592 = vmatmul.mubr.f32.gmra.mrb[0].mxu0 %v474
        %v593 = vpop.f32.mrb[0].mxu0
        %v594 = vadd.f32 0.0, %v593
        %v595 = vpop.f32.mrb[0].mxu0
        %596 = vmatprep.mubr.f32.mxu0 0.0
        %597 = vmatmul.mubr.f32.gmra.mrb[0].mxu0 %v477
        %v598 = vpop.f32.mrb[0].mxu0
        %v599 = vadd.f32 0.0, %v598
        %v600 = vpop.f32.mrb[0].mxu0
        %601 = vmatprep.mubr.f32.mxu0 0.0
        %602 = vmatmul.mubr.f32.gmra.mrb[0].mxu0 %v480
        %v603 = vpop.f32.mrb[0].mxu0
        %v604 = vadd.f32 0.0, %v603
        %v605 = vpop.f32.mrb[0].mxu0
        %606 = vmatprep.mubr.f32.mxu0 0.0
        %607 = vmatmul.mubr.f32.gmra.mrb[0].mxu0 %v483
        %v608 = vpop.f32.mrb[0].mxu0
        %v609 = vadd.f32 0.0, %v608
        %v610 = vpop.f32.mrb[0].mxu0
        %611 = vmatprep.mubr.f32.mxu0 0.0
        %612 = vmatmul.mubr.f32.gmra.mrb[0].mxu0 %v486
        %v613 = vpop.f32.mrb[0].mxu0
        %v614 = vadd.f32 0.0, %v613
        %v615 = vpop.f32.mrb[0].mxu0
        %616 = vmatprep.mubr.f32.mxu0 0.0
        %617 = vmatmul.mubr.f32.gmra.mrb[0].mxu0 %v489
        %v618 = vpop.f32.mrb[0].mxu0
        %v619 = vadd.f32 0.0, %v618
        %v620 = vpop.f32.mrb[0].mxu0
        %621 = vmatprep.mubr.f32.mxu0 0.0
        %622 = vmatmul.mubr.f32.gmra.mrb[0].mxu0 %v492
        %v623 = vpop.f32.mrb[0].mxu0
        %v624 = vadd.f32 0.0, %v623
        %v625 = vpop.f32.mrb[0].mxu0
        %626 = vmatprep.mubr.f32.mxu0 0.0
        %627 = vmatmul.mubr.f32.gmra.mrb[0].mxu0 %v495
        %v628 = vpop.f32.mrb[0].mxu0
        %v629 = vadd.f32 0.0, %v628
        %v630 = vpop.f32.mrb[0].mxu0
        %631 = vmatprep.mubr.f32.mxu0 0.0
        %632 = vmatmul.mubr.f32.gmra.mrb[0].mxu0 %v498
        %v633 = vpop.f32.mrb[0].mxu0
        %v634 = vadd.f32 0.0, %v633
        %v635 = vpop.f32.mrb[0].mxu0
        %636 = vmatprep.mubr.f32.mxu0 0.0
        %637 = vmatmul.mubr.f32.gmra.mrb[0].mxu0 %v501
        %v638 = vpop.f32.mrb[0].mxu0
        %v639 = vadd.f32 0.0, %v638
        %v640 = vpop.f32.mrb[0].mxu0
        %641 = vmatprep.mubr.f32.mxu0 0.0
        %642 = vmatmul.mubr.f32.gmra.mrb[0].mxu0 %v504
        %v643 = vpop.f32.mrb[0].mxu0
        %v644 = vadd.f32 0.0, %v643
        %v645 = vpop.f32.mrb[0].mxu0
        %646 = vmatprep.mubr.f32.mxu0 0.0
        %647 = vmatmul.mubr.f32.gmra.mrb[0].mxu0 %v507
        %v648 = vpop.f32.mrb[0].mxu0
        %v649 = vadd.f32 0.0, %v648
        %v650 = vpop.f32.mrb[0].mxu0
        %651 = vmatprep.mubr.f32.mxu0 0.0
        %652 = vmatmul.mubr.f32.gmra.mrb[0].mxu0 %v510
        %v653 = vpop.f32.mrb[0].mxu0
        %v654 = vadd.f32 0.0, %v653
        %v655 = vpop.f32.mrb[0].mxu0
        %656 = vdwg.mxu0
        %v657 = vlaneseq
        %v658 = vand.u32 %v657, 127
        %659 = vmin.xlane.f32.xlu0 %v579
        %v660 = vpop.xlane.xlu0 %659
        %661 = vmin.xlane.f32.xlu0 %v584
        %v662 = vpop.xlane.xlu0 %661
        %663 = vmin.xlane.f32.xlu0 %v589
        %v664 = vpop.xlane.xlu0 %663
        %665 = vmin.xlane.f32.xlu0 %v594
        %v666 = vpop.xlane.xlu0 %665
        %667 = vmin.xlane.f32.xlu0 %v599
        %v668 = vpop.xlane.xlu0 %667
        %669 = vmin.xlane.f32.xlu0 %v604
        %v670 = vpop.xlane.xlu0 %669
        %671 = vmin.xlane.f32.xlu0 %v609
        %v672 = vpop.xlane.xlu0 %671
        %673 = vmin.xlane.f32.xlu0 %v614
        %v674 = vpop.xlane.xlu0 %673
        %675 = vmin.xlane.f32.xlu0 %v619
        %v676 = vpop.xlane.xlu0 %675
        %677 = vmin.xlane.f32.xlu0 %v624
        %v678 = vpop.xlane.xlu0 %677
        %679 = vmin.xlane.f32.xlu0 %v629
        %v680 = vpop.xlane.xlu0 %679
        %681 = vmin.xlane.f32.xlu0 %v634
        %v682 = vpop.xlane.xlu0 %681
        %683 = vmin.xlane.f32.xlu0 %v639
        %v684 = vpop.xlane.xlu0 %683
        %685 = vmin.xlane.f32.xlu0 %v644
        %v686 = vpop.xlane.xlu0 %685
        %687 = vmin.xlane.f32.xlu0 %v649
        %v688 = vpop.xlane.xlu0 %687
        %689 = vmin.xlane.f32.xlu0 %v654
        %v690 = vpop.xlane.xlu0 %689
        %vm691 = vcmp.eq.f32.partialorder %v579, %v660
        %vm692 = vcmp.eq.f32.partialorder %v584, %v662
        %vm693 = vcmp.eq.f32.partialorder %v589, %v664
        %vm694 = vcmp.eq.f32.partialorder %v594, %v666
        %vm695 = vcmp.eq.f32.partialorder %v599, %v668
        %vm696 = vcmp.eq.f32.partialorder %v604, %v670
        %vm697 = vcmp.eq.f32.partialorder %v609, %v672
        %vm698 = vcmp.eq.f32.partialorder %v614, %v674
        %vm699 = vcmp.eq.f32.partialorder %v619, %v676
        %vm700 = vcmp.eq.f32.partialorder %v624, %v678
        %vm701 = vcmp.eq.f32.partialorder %v629, %v680
        %vm702 = vcmp.eq.f32.partialorder %v634, %v682
        %vm703 = vcmp.eq.f32.partialorder %v639, %v684
        %vm704 = vcmp.eq.f32.partialorder %v644, %v686
        %vm705 = vcmp.eq.f32.partialorder %v649, %v688
        %vm706 = vcmp.eq.f32.partialorder %v654, %v690
        %v707 = vsel %vm691, %v658, 128
        %v708 = vsel %vm692, %v658, 128
        %v709 = vsel %vm693, %v658, 128
        %v710 = vsel %vm694, %v658, 128
        %v711 = vsel %vm695, %v658, 128
        %v712 = vsel %vm696, %v658, 128
        %v713 = vsel %vm697, %v658, 128
        %v714 = vsel %vm698, %v658, 128
        %v715 = vsel %vm699, %v658, 128
        %v716 = vsel %vm700, %v658, 128
        %v717 = vsel %vm701, %v658, 128
        %v718 = vsel %vm702, %v658, 128
        %v719 = vsel %vm703, %v658, 128
        %v720 = vsel %vm704, %v658, 128
        %v721 = vsel %vm705, %v658, 128
        %v722 = vsel %vm706, %v658, 128
        %v723 = vand.u32 %v707, 65535
        %v724 = vshra.s32 %v707, 16
        %v725 = vcvt.s32.f32 %v723
        %v726 = vcvt.s32.f32 %v724
        %727 = vmin.xlane.f32.xlu0 %v726
        %v728 = vpop.xlane.xlu0 %727
        %vm729 = vcmp.eq.f32.partialorder %v726, %v728
        %v730 = vsel %vm729, %v725, inf
        %731 = vmin.xlane.f32.xlu0 %v730
        %v732 = vpop.xlane.xlu0 %731
        %v733 = vcvt.f32.s32 %v732
        %v734 = vcvt.f32.s32 %v728
        %v735 = vshll.u32 %v734, 16
        %v736 = vadd.s32 %v735, %v733
        %v737 = vand.u32 %v708, 65535
        %v738 = vshra.s32 %v708, 16
        %v739 = vcvt.s32.f32 %v737
        %v740 = vcvt.s32.f32 %v738
        %741 = vmin.xlane.f32.xlu0 %v740
        %v742 = vpop.xlane.xlu0 %741
        %vm743 = vcmp.eq.f32.partialorder %v740, %v742
        %v744 = vsel %vm743, %v739, inf
        %745 = vmin.xlane.f32.xlu0 %v744
        %v746 = vpop.xlane.xlu0 %745
        %v747 = vcvt.f32.s32 %v746
        %v748 = vcvt.f32.s32 %v742
        %v749 = vshll.u32 %v748, 16
        %v750 = vadd.s32 %v749, %v747
        %v751 = vand.u32 %v709, 65535
        %v752 = vshra.s32 %v709, 16
        %v753 = vcvt.s32.f32 %v751
        %v754 = vcvt.s32.f32 %v752
        %755 = vmin.xlane.f32.xlu0 %v754
        %v756 = vpop.xlane.xlu0 %755
        %vm757 = vcmp.eq.f32.partialorder %v754, %v756
        %v758 = vsel %vm757, %v753, inf
        %759 = vmin.xlane.f32.xlu0 %v758
        %v760 = vpop.xlane.xlu0 %759
        %v761 = vcvt.f32.s32 %v760
        %v762 = vcvt.f32.s32 %v756
        %v763 = vshll.u32 %v762, 16
        %v764 = vadd.s32 %v763, %v761
        %v765 = vand.u32 %v710, 65535
        %v766 = vshra.s32 %v710, 16
        %v767 = vcvt.s32.f32 %v765
        %v768 = vcvt.s32.f32 %v766
        %769 = vmin.xlane.f32.xlu0 %v768
        %v770 = vpop.xlane.xlu0 %769
        %vm771 = vcmp.eq.f32.partialorder %v768, %v770
        %v772 = vsel %vm771, %v767, inf
        %773 = vmin.xlane.f32.xlu0 %v772
        %v774 = vpop.xlane.xlu0 %773
        %v775 = vcvt.f32.s32 %v774
        %v776 = vcvt.f32.s32 %v770
        %v777 = vshll.u32 %v776, 16
        %v778 = vadd.s32 %v777, %v775
        %v779 = vand.u32 %v711, 65535
        %v780 = vshra.s32 %v711, 16
        %v781 = vcvt.s32.f32 %v779
        %v782 = vcvt.s32.f32 %v780
        %783 = vmin.xlane.f32.xlu0 %v782
        %v784 = vpop.xlane.xlu0 %783
        %vm785 = vcmp.eq.f32.partialorder %v782, %v784
        %v786 = vsel %vm785, %v781, inf
        %787 = vmin.xlane.f32.xlu0 %v786
        %v788 = vpop.xlane.xlu0 %787
        %v789 = vcvt.f32.s32 %v788
        %v790 = vcvt.f32.s32 %v784
        %v791 = vshll.u32 %v790, 16
        %v792 = vadd.s32 %v791, %v789
        %v793 = vand.u32 %v712, 65535
        %v794 = vshra.s32 %v712, 16
        %v795 = vcvt.s32.f32 %v793
        %v796 = vcvt.s32.f32 %v794
        %797 = vmin.xlane.f32.xlu0 %v796
        %v798 = vpop.xlane.xlu0 %797
        %vm799 = vcmp.eq.f32.partialorder %v796, %v798
        %v800 = vsel %vm799, %v795, inf
        %801 = vmin.xlane.f32.xlu0 %v800
        %v802 = vpop.xlane.xlu0 %801
        %v803 = vcvt.f32.s32 %v802
        %v804 = vcvt.f32.s32 %v798
        %v805 = vshll.u32 %v804, 16
        %v806 = vadd.s32 %v805, %v803
        %v807 = vand.u32 %v713, 65535
        %v808 = vshra.s32 %v713, 16
        %v809 = vcvt.s32.f32 %v807
        %v810 = vcvt.s32.f32 %v808
        %811 = vmin.xlane.f32.xlu0 %v810
        %v812 = vpop.xlane.xlu0 %811
        %vm813 = vcmp.eq.f32.partialorder %v810, %v812
        %v814 = vsel %vm813, %v809, inf
        %815 = vmin.xlane.f32.xlu0 %v814
        %v816 = vpop.xlane.xlu0 %815
        %v817 = vcvt.f32.s32 %v816
        %v818 = vcvt.f32.s32 %v812
        %v819 = vshll.u32 %v818, 16
        %v820 = vadd.s32 %v819, %v817
        %v821 = vand.u32 %v714, 65535
        %v822 = vshra.s32 %v714, 16
        %v823 = vcvt.s32.f32 %v821
        %v824 = vcvt.s32.f32 %v822
        %825 = vmin.xlane.f32.xlu0 %v824
        %v826 = vpop.xlane.xlu0 %825
        %vm827 = vcmp.eq.f32.partialorder %v824, %v826
        %v828 = vsel %vm827, %v823, inf
        %829 = vmin.xlane.f32.xlu0 %v828
        %v830 = vpop.xlane.xlu0 %829
        %v831 = vcvt.f32.s32 %v830
        %v832 = vcvt.f32.s32 %v826
        %v833 = vshll.u32 %v832, 16
        %v834 = vadd.s32 %v833, %v831
        %v835 = vand.u32 %v715, 65535
        %v836 = vshra.s32 %v715, 16
        %v837 = vcvt.s32.f32 %v835
        %v838 = vcvt.s32.f32 %v836
        %839 = vmin.xlane.f32.xlu0 %v838
        %v840 = vpop.xlane.xlu0 %839
        %vm841 = vcmp.eq.f32.partialorder %v838, %v840
        %v842 = vsel %vm841, %v837, inf
        %843 = vmin.xlane.f32.xlu0 %v842
        %v844 = vpop.xlane.xlu0 %843
        %v845 = vcvt.f32.s32 %v844
        %v846 = vcvt.f32.s32 %v840
        %v847 = vshll.u32 %v846, 16
        %v848 = vadd.s32 %v847, %v845
        %v849 = vand.u32 %v716, 65535
        %v850 = vshra.s32 %v716, 16
        %v851 = vcvt.s32.f32 %v849
        %v852 = vcvt.s32.f32 %v850
        %853 = vmin.xlane.f32.xlu0 %v852
        %v854 = vpop.xlane.xlu0 %853
        %vm855 = vcmp.eq.f32.partialorder %v852, %v854
        %v856 = vsel %vm855, %v851, inf
        %857 = vmin.xlane.f32.xlu0 %v856
        %v858 = vpop.xlane.xlu0 %857
        %v859 = vcvt.f32.s32 %v858
        %v860 = vcvt.f32.s32 %v854
        %v861 = vshll.u32 %v860, 16
        %v862 = vadd.s32 %v861, %v859
        %v863 = vand.u32 %v717, 65535
        %v864 = vshra.s32 %v717, 16
        %v865 = vcvt.s32.f32 %v863
        %v866 = vcvt.s32.f32 %v864
        %867 = vmin.xlane.f32.xlu0 %v866
        %v868 = vpop.xlane.xlu0 %867
        %vm869 = vcmp.eq.f32.partialorder %v866, %v868
        %v870 = vsel %vm869, %v865, inf
        %871 = vmin.xlane.f32.xlu0 %v870
        %v872 = vpop.xlane.xlu0 %871
        %v873 = vcvt.f32.s32 %v872
        %v874 = vcvt.f32.s32 %v868
        %v875 = vshll.u32 %v874, 16
        %v876 = vadd.s32 %v875, %v873
        %v877 = vand.u32 %v718, 65535
        %v878 = vshra.s32 %v718, 16
        %v879 = vcvt.s32.f32 %v877
        %v880 = vcvt.s32.f32 %v878
        %881 = vmin.xlane.f32.xlu0 %v880
        %v882 = vpop.xlane.xlu0 %881
        %vm883 = vcmp.eq.f32.partialorder %v880, %v882
        %v884 = vsel %vm883, %v879, inf
        %885 = vmin.xlane.f32.xlu0 %v884
        %v886 = vpop.xlane.xlu0 %885
        %v887 = vcvt.f32.s32 %v886
        %v888 = vcvt.f32.s32 %v882
        %v889 = vshll.u32 %v888, 16
        %v890 = vadd.s32 %v889, %v887
        %v891 = vand.u32 %v719, 65535
        %v892 = vshra.s32 %v719, 16
        %v893 = vcvt.s32.f32 %v891
        %v894 = vcvt.s32.f32 %v892
        %895 = vmin.xlane.f32.xlu0 %v894
        %v896 = vpop.xlane.xlu0 %895
        %vm897 = vcmp.eq.f32.partialorder %v894, %v896
        %v898 = vsel %vm897, %v893, inf
        %899 = vmin.xlane.f32.xlu0 %v898
        %v900 = vpop.xlane.xlu0 %899
        %v901 = vcvt.f32.s32 %v900
        %v902 = vcvt.f32.s32 %v896
        %v903 = vshll.u32 %v902, 16
        %v904 = vadd.s32 %v903, %v901
        %v905 = vand.u32 %v720, 65535
        %v906 = vshra.s32 %v720, 16
        %v907 = vcvt.s32.f32 %v905
        %v908 = vcvt.s32.f32 %v906
        %909 = vmin.xlane.f32.xlu0 %v908
        %v910 = vpop.xlane.xlu0 %909
        %vm911 = vcmp.eq.f32.partialorder %v908, %v910
        %v912 = vsel %vm911, %v907, inf
        %913 = vmin.xlane.f32.xlu0 %v912
        %v914 = vpop.xlane.xlu0 %913
        %v915 = vcvt.f32.s32 %v914
        %v916 = vcvt.f32.s32 %v910
        %v917 = vshll.u32 %v916, 16
        %v918 = vadd.s32 %v917, %v915
        %v919 = vand.u32 %v721, 65535
        %v920 = vshra.s32 %v721, 16
        %v921 = vcvt.s32.f32 %v919
        %v922 = vcvt.s32.f32 %v920
        %923 = vmin.xlane.f32.xlu0 %v922
        %v924 = vpop.xlane.xlu0 %923
        %vm925 = vcmp.eq.f32.partialorder %v922, %v924
        %v926 = vsel %vm925, %v921, inf
        %927 = vmin.xlane.f32.xlu0 %v926
        %v928 = vpop.xlane.xlu0 %927
        %v929 = vcvt.f32.s32 %v928
        %v930 = vcvt.f32.s32 %v924
        %v931 = vshll.u32 %v930, 16
        %v932 = vadd.s32 %v931, %v929
        %v933 = vand.u32 %v722, 65535
        %v934 = vshra.s32 %v722, 16
        %v935 = vcvt.s32.f32 %v933
        %v936 = vcvt.s32.f32 %v934
        %937 = vmin.xlane.f32.xlu0 %v936
        %v938 = vpop.xlane.xlu0 %937
        %vm939 = vcmp.eq.f32.partialorder %v936, %v938
        %v940 = vsel %vm939, %v935, inf
        %941 = vmin.xlane.f32.xlu0 %v940
        %v942 = vpop.xlane.xlu0 %941
        %v943 = vcvt.f32.s32 %v942
        %v944 = vcvt.f32.s32 %v938
        %v945 = vshll.u32 %v944, 16
        %v946 = vadd.s32 %v945, %v943
        %vm947 = vcmp.eq.s32.totalorder %v658, %v736
        %vm948 = vcmp.eq.s32.totalorder %v658, %v750
        %vm949 = vcmp.eq.s32.totalorder %v658, %v764
        %vm950 = vcmp.eq.s32.totalorder %v658, %v778
        %vm951 = vcmp.eq.s32.totalorder %v658, %v792
        %vm952 = vcmp.eq.s32.totalorder %v658, %v806
        %vm953 = vcmp.eq.s32.totalorder %v658, %v820
        %vm954 = vcmp.eq.s32.totalorder %v658, %v834
        %vm955 = vcmp.eq.s32.totalorder %v658, %v848
        %vm956 = vcmp.eq.s32.totalorder %v658, %v862
        %vm957 = vcmp.eq.s32.totalorder %v658, %v876
        %vm958 = vcmp.eq.s32.totalorder %v658, %v890
        %vm959 = vcmp.eq.s32.totalorder %v658, %v904
        %vm960 = vcmp.eq.s32.totalorder %v658, %v918
        %vm961 = vcmp.eq.s32.totalorder %v658, %v932
        %vm962 = vcmp.eq.s32.totalorder %v658, %v946
        %v963 = vsel %vm947, 1e+34, %v579
        %v964 = vsel %vm948, 1e+34, %v584
        %v965 = vsel %vm949, 1e+34, %v589
        %v966 = vsel %vm950, 1e+34, %v594
        %v967 = vsel %vm951, 1e+34, %v599
        %v968 = vsel %vm952, 1e+34, %v604
        %v969 = vsel %vm953, 1e+34, %v609
        %v970 = vsel %vm954, 1e+34, %v614
        %v971 = vsel %vm955, 1e+34, %v619
        %v972 = vsel %vm956, 1e+34, %v624
        %v973 = vsel %vm957, 1e+34, %v629
        %v974 = vsel %vm958, 1e+34, %v634
        %v975 = vsel %vm959, 1e+34, %v639
        %v976 = vsel %vm960, 1e+34, %v644
        %v977 = vsel %vm961, 1e+34, %v649
        %v978 = vsel %vm962, 1e+34, %v654
        %v979 = vmax.f32 %v660, 0.0
        %v980 = vmax.f32 %v662, 0.0
        %v981 = vmax.f32 %v664, 0.0
        %v982 = vmax.f32 %v666, 0.0
        %v983 = vmax.f32 %v668, 0.0
        %v984 = vmax.f32 %v670, 0.0
        %v985 = vmax.f32 %v672, 0.0
        %v986 = vmax.f32 %v674, 0.0
        %v987 = vmax.f32 %v676, 0.0
        %v988 = vmax.f32 %v678, 0.0
        %v989 = vmax.f32 %v680, 0.0
        %v990 = vmax.f32 %v682, 0.0
        %v991 = vmax.f32 %v684, 0.0
        %v992 = vmax.f32 %v686, 0.0
        %v993 = vmax.f32 %v688, 0.0
        %v994 = vmax.f32 %v690, 0.0
        %v995 = vrsqrt.pop %v979
        %v996 = vmul.f32 %v979, %v995
        %vm997 = vcmp.eq.f32.partialorder %v979, inf
        %v998 = vsel %vm997, %v979, %v996
        %vm999 = vcmp.eq.f32.partialorder %v979, 0.0
        %v1000 = vand.u32 %v979, 2147483648
        %v1001 = vsel %vm999, %v1000, %v998
        %v1002 = vrsqrt.pop %v980
        %v1003 = vmul.f32 %v980, %v1002
        %vm1004 = vcmp.eq.f32.partialorder %v980, inf
        %v1005 = vsel %vm1004, %v980, %v1003
        %vm1006 = vcmp.eq.f32.partialorder %v980, 0.0
        %v1007 = vand.u32 %v980, 2147483648
        %v1008 = vsel %vm1006, %v1007, %v1005
        %v1009 = vrsqrt.pop %v981
        %v1010 = vmul.f32 %v981, %v1009
        %vm1011 = vcmp.eq.f32.partialorder %v981, inf
        %v1012 = vsel %vm1011, %v981, %v1010
        %vm1013 = vcmp.eq.f32.partialorder %v981, 0.0
        %v1014 = vand.u32 %v981, 2147483648
        %v1015 = vsel %vm1013, %v1014, %v1012
        %v1016 = vrsqrt.pop %v982
        %v1017 = vmul.f32 %v982, %v1016
        %vm1018 = vcmp.eq.f32.partialorder %v982, inf
        %v1019 = vsel %vm1018, %v982, %v1017
        %vm1020 = vcmp.eq.f32.partialorder %v982, 0.0
        %v1021 = vand.u32 %v982, 2147483648
        %v1022 = vsel %vm1020, %v1021, %v1019
        %v1023 = vrsqrt.pop %v983
        %v1024 = vmul.f32 %v983, %v1023
        %vm1025 = vcmp.eq.f32.partialorder %v983, inf
        %v1026 = vsel %vm1025, %v983, %v1024
        %vm1027 = vcmp.eq.f32.partialorder %v983, 0.0
        %v1028 = vand.u32 %v983, 2147483648
        %v1029 = vsel %vm1027, %v1028, %v1026
        %v1030 = vrsqrt.pop %v984
        %v1031 = vmul.f32 %v984, %v1030
        %vm1032 = vcmp.eq.f32.partialorder %v984, inf
        %v1033 = vsel %vm1032, %v984, %v1031
        %vm1034 = vcmp.eq.f32.partialorder %v984, 0.0
        %v1035 = vand.u32 %v984, 2147483648
        %v1036 = vsel %vm1034, %v1035, %v1033
        %v1037 = vrsqrt.pop %v985
        %v1038 = vmul.f32 %v985, %v1037
        %vm1039 = vcmp.eq.f32.partialorder %v985, inf
        %v1040 = vsel %vm1039, %v985, %v1038
        %vm1041 = vcmp.eq.f32.partialorder %v985, 0.0
        %v1042 = vand.u32 %v985, 2147483648
        %v1043 = vsel %vm1041, %v1042, %v1040
        %v1044 = vrsqrt.pop %v986
        %v1045 = vmul.f32 %v986, %v1044
        %vm1046 = vcmp.eq.f32.partialorder %v986, inf
        %v1047 = vsel %vm1046, %v986, %v1045
        %vm1048 = vcmp.eq.f32.partialorder %v986, 0.0
        %v1049 = vand.u32 %v986, 2147483648
        %v1050 = vsel %vm1048, %v1049, %v1047
        %v1051 = vrsqrt.pop %v987
        %v1052 = vmul.f32 %v987, %v1051
        %vm1053 = vcmp.eq.f32.partialorder %v987, inf
        %v1054 = vsel %vm1053, %v987, %v1052
        %vm1055 = vcmp.eq.f32.partialorder %v987, 0.0
        %v1056 = vand.u32 %v987, 2147483648
        %v1057 = vsel %vm1055, %v1056, %v1054
        %v1058 = vrsqrt.pop %v988
        %v1059 = vmul.f32 %v988, %v1058
        %vm1060 = vcmp.eq.f32.partialorder %v988, inf
        %v1061 = vsel %vm1060, %v988, %v1059
        %vm1062 = vcmp.eq.f32.partialorder %v988, 0.0
        %v1063 = vand.u32 %v988, 2147483648
        %v1064 = vsel %vm1062, %v1063, %v1061
        %v1065 = vrsqrt.pop %v989
        %v1066 = vmul.f32 %v989, %v1065
        %vm1067 = vcmp.eq.f32.partialorder %v989, inf
        %v1068 = vsel %vm1067, %v989, %v1066
        %vm1069 = vcmp.eq.f32.partialorder %v989, 0.0
        %v1070 = vand.u32 %v989, 2147483648
        %v1071 = vsel %vm1069, %v1070, %v1068
        %v1072 = vrsqrt.pop %v990
        %v1073 = vmul.f32 %v990, %v1072
        %vm1074 = vcmp.eq.f32.partialorder %v990, inf
        %v1075 = vsel %vm1074, %v990, %v1073
        %vm1076 = vcmp.eq.f32.partialorder %v990, 0.0
        %v1077 = vand.u32 %v990, 2147483648
        %v1078 = vsel %vm1076, %v1077, %v1075
        %v1079 = vrsqrt.pop %v991
        %v1080 = vmul.f32 %v991, %v1079
        %vm1081 = vcmp.eq.f32.partialorder %v991, inf
        %v1082 = vsel %vm1081, %v991, %v1080
        %vm1083 = vcmp.eq.f32.partialorder %v991, 0.0
        %v1084 = vand.u32 %v991, 2147483648
        %v1085 = vsel %vm1083, %v1084, %v1082
        %v1086 = vrsqrt.pop %v992
        %v1087 = vmul.f32 %v992, %v1086
        %vm1088 = vcmp.eq.f32.partialorder %v992, inf
        %v1089 = vsel %vm1088, %v992, %v1087
        %vm1090 = vcmp.eq.f32.partialorder %v992, 0.0
        %v1091 = vand.u32 %v992, 2147483648
        %v1092 = vsel %vm1090, %v1091, %v1089
        %v1093 = vrsqrt.pop %v993
        %v1094 = vmul.f32 %v993, %v1093
        %vm1095 = vcmp.eq.f32.partialorder %v993, inf
        %v1096 = vsel %vm1095, %v993, %v1094
        %vm1097 = vcmp.eq.f32.partialorder %v993, 0.0
        %v1098 = vand.u32 %v993, 2147483648
        %v1099 = vsel %vm1097, %v1098, %v1096
        %v1100 = vrsqrt.pop %v994
        %v1101 = vmul.f32 %v994, %v1100
        %vm1102 = vcmp.eq.f32.partialorder %v994, inf
        %v1103 = vsel %vm1102, %v994, %v1101
        %vm1104 = vcmp.eq.f32.partialorder %v994, 0.0
        %v1105 = vand.u32 %v994, 2147483648
        %v1106 = vsel %vm1104, %v1105, %v1103
        %v1107 = vadd.f32 %v1001, 1e-08
        %v1108 = vadd.f32 %v1008, 1e-08
        %v1109 = vadd.f32 %v1015, 1e-08
        %v1110 = vadd.f32 %v1022, 1e-08
        %v1111 = vadd.f32 %v1029, 1e-08
        %v1112 = vadd.f32 %v1036, 1e-08
        %v1113 = vadd.f32 %v1043, 1e-08
        %v1114 = vadd.f32 %v1050, 1e-08
        %v1115 = vadd.f32 %v1057, 1e-08
        %v1116 = vadd.f32 %v1064, 1e-08
        %v1117 = vadd.f32 %v1071, 1e-08
        %v1118 = vadd.f32 %v1078, 1e-08
        %v1119 = vadd.f32 %v1085, 1e-08
        %v1120 = vadd.f32 %v1092, 1e-08
        %v1121 = vadd.f32 %v1099, 1e-08
        %v1122 = vadd.f32 %v1106, 1e-08
        %v1123 = vrcp.pop %v1107
        %v1124 = vmul.f32 1.0, %v1123
        %v1125 = vrcp.pop %v1108
        %v1126 = vmul.f32 1.0, %v1125
        %v1127 = vrcp.pop %v1109
        %v1128 = vmul.f32 1.0, %v1127
        %v1129 = vrcp.pop %v1110
        %v1130 = vmul.f32 1.0, %v1129
        %v1131 = vrcp.pop %v1111
        %v1132 = vmul.f32 1.0, %v1131
        %v1133 = vrcp.pop %v1112
        %v1134 = vmul.f32 1.0, %v1133
        %v1135 = vrcp.pop %v1113
        %v1136 = vmul.f32 1.0, %v1135
        %v1137 = vrcp.pop %v1114
        %v1138 = vmul.f32 1.0, %v1137
        %v1139 = vrcp.pop %v1115
        %v1140 = vmul.f32 1.0, %v1139
        %v1141 = vrcp.pop %v1116
        %v1142 = vmul.f32 1.0, %v1141
        %v1143 = vrcp.pop %v1117
        %v1144 = vmul.f32 1.0, %v1143
        %v1145 = vrcp.pop %v1118
        %v1146 = vmul.f32 1.0, %v1145
        %v1147 = vrcp.pop %v1119
        %v1148 = vmul.f32 1.0, %v1147
        %v1149 = vrcp.pop %v1120
        %v1150 = vmul.f32 1.0, %v1149
        %v1151 = vrcp.pop %v1121
        %v1152 = vmul.f32 1.0, %v1151
        %v1153 = vrcp.pop %v1122
        %v1154 = vmul.f32 1.0, %v1153
        %v1155 = vsel %vm947, %v1124, 0.0
        %v1156 = vsel %vm948, %v1126, 0.0
        %v1157 = vsel %vm949, %v1128, 0.0
        %v1158 = vsel %vm950, %v1130, 0.0
        %v1159 = vsel %vm951, %v1132, 0.0
        %v1160 = vsel %vm952, %v1134, 0.0
        %v1161 = vsel %vm953, %v1136, 0.0
        %v1162 = vsel %vm954, %v1138, 0.0
        %v1163 = vsel %vm955, %v1140, 0.0
        %v1164 = vsel %vm956, %v1142, 0.0
        %v1165 = vsel %vm957, %v1144, 0.0
        %v1166 = vsel %vm958, %v1146, 0.0
        %v1167 = vsel %vm959, %v1148, 0.0
        %v1168 = vsel %vm960, %v1150, 0.0
        %v1169 = vsel %vm961, %v1152, 0.0
        %v1170 = vsel %vm962, %v1154, 0.0
        %v1171 = vadd.f32 %v1124, 0.0
        %v1172 = vadd.f32 %v1126, 0.0
        %v1173 = vadd.f32 %v1128, 0.0
        %v1174 = vadd.f32 %v1130, 0.0
        %v1175 = vadd.f32 %v1132, 0.0
        %v1176 = vadd.f32 %v1134, 0.0
        %v1177 = vadd.f32 %v1136, 0.0
        %v1178 = vadd.f32 %v1138, 0.0
        %v1179 = vadd.f32 %v1140, 0.0
        %v1180 = vadd.f32 %v1142, 0.0
        %v1181 = vadd.f32 %v1144, 0.0
        %v1182 = vadd.f32 %v1146, 0.0
        %v1183 = vadd.f32 %v1148, 0.0
        %v1184 = vadd.f32 %v1150, 0.0
        %v1185 = vadd.f32 %v1152, 0.0
        %v1186 = vadd.f32 %v1154, 0.0
        %1187 = vmin.xlane.f32.xlu0 %v963
        %v1188 = vpop.xlane.xlu0 %1187
        %1189 = vmin.xlane.f32.xlu0 %v964
        %v1190 = vpop.xlane.xlu0 %1189
        %1191 = vmin.xlane.f32.xlu0 %v965
        %v1192 = vpop.xlane.xlu0 %1191
        %1193 = vmin.xlane.f32.xlu0 %v966
        %v1194 = vpop.xlane.xlu0 %1193
        %1195 = vmin.xlane.f32.xlu0 %v967
        %v1196 = vpop.xlane.xlu0 %1195
        %1197 = vmin.xlane.f32.xlu0 %v968
        %v1198 = vpop.xlane.xlu0 %1197
        %1199 = vmin.xlane.f32.xlu0 %v969
        %v1200 = vpop.xlane.xlu0 %1199
        %1201 = vmin.xlane.f32.xlu0 %v970
        %v1202 = vpop.xlane.xlu0 %1201
        %1203 = vmin.xlane.f32.xlu0 %v971
        %v1204 = vpop.xlane.xlu0 %1203
        %1205 = vmin.xlane.f32.xlu0 %v972
        %v1206 = vpop.xlane.xlu0 %1205
        %1207 = vmin.xlane.f32.xlu0 %v973
        %v1208 = vpop.xlane.xlu0 %1207
        %1209 = vmin.xlane.f32.xlu0 %v974
        %v1210 = vpop.xlane.xlu0 %1209
        %1211 = vmin.xlane.f32.xlu0 %v975
        %v1212 = vpop.xlane.xlu0 %1211
        %1213 = vmin.xlane.f32.xlu0 %v976
        %v1214 = vpop.xlane.xlu0 %1213
        %1215 = vmin.xlane.f32.xlu0 %v977
        %v1216 = vpop.xlane.xlu0 %1215
        %1217 = vmin.xlane.f32.xlu0 %v978
        %v1218 = vpop.xlane.xlu0 %1217
        %vm1219 = vcmp.eq.f32.partialorder %v963, %v1188
        %vm1220 = vcmp.eq.f32.partialorder %v964, %v1190
        %vm1221 = vcmp.eq.f32.partialorder %v965, %v1192
        %vm1222 = vcmp.eq.f32.partialorder %v966, %v1194
        %vm1223 = vcmp.eq.f32.partialorder %v967, %v1196
        %vm1224 = vcmp.eq.f32.partialorder %v968, %v1198
        %vm1225 = vcmp.eq.f32.partialorder %v969, %v1200
        %vm1226 = vcmp.eq.f32.partialorder %v970, %v1202
        %vm1227 = vcmp.eq.f32.partialorder %v971, %v1204
        %vm1228 = vcmp.eq.f32.partialorder %v972, %v1206
        %vm1229 = vcmp.eq.f32.partialorder %v973, %v1208
        %vm1230 = vcmp.eq.f32.partialorder %v974, %v1210
        %vm1231 = vcmp.eq.f32.partialorder %v975, %v1212
        %vm1232 = vcmp.eq.f32.partialorder %v976, %v1214
        %vm1233 = vcmp.eq.f32.partialorder %v977, %v1216
        %vm1234 = vcmp.eq.f32.partialorder %v978, %v1218
        %v1235 = vsel %vm1219, %v658, 128
        %v1236 = vsel %vm1220, %v658, 128
        %v1237 = vsel %vm1221, %v658, 128
        %v1238 = vsel %vm1222, %v658, 128
        %v1239 = vsel %vm1223, %v658, 128
        %v1240 = vsel %vm1224, %v658, 128
        %v1241 = vsel %vm1225, %v658, 128
        %v1242 = vsel %vm1226, %v658, 128
        %v1243 = vsel %vm1227, %v658, 128
        %v1244 = vsel %vm1228, %v658, 128
        %v1245 = vsel %vm1229, %v658, 128
        %v1246 = vsel %vm1230, %v658, 128
        %v1247 = vsel %vm1231, %v658, 128
        %v1248 = vsel %vm1232, %v658, 128
        %v1249 = vsel %vm1233, %v658, 128
        %v1250 = vsel %vm1234, %v658, 128
        %v1251 = vand.u32 %v1235, 65535
        %v1252 = vshra.s32 %v1235, 16
        %v1253 = vcvt.s32.f32 %v1251
        %v1254 = vcvt.s32.f32 %v1252
        %1255 = vmin.xlane.f32.xlu0 %v1254
        %v1256 = vpop.xlane.xlu0 %1255
        %vm1257 = vcmp.eq.f32.partialorder %v1254, %v1256
        %v1258 = vsel %vm1257, %v1253, inf
        %1259 = vmin.xlane.f32.xlu0 %v1258
        %v1260 = vpop.xlane.xlu0 %1259
        %v1261 = vcvt.f32.s32 %v1260
        %v1262 = vcvt.f32.s32 %v1256
        %v1263 = vshll.u32 %v1262, 16
        %v1264 = vadd.s32 %v1263, %v1261
        %v1265 = vand.u32 %v1236, 65535
        %v1266 = vshra.s32 %v1236, 16
        %v1267 = vcvt.s32.f32 %v1265
        %v1268 = vcvt.s32.f32 %v1266
        %1269 = vmin.xlane.f32.xlu0 %v1268
        %v1270 = vpop.xlane.xlu0 %1269
        %vm1271 = vcmp.eq.f32.partialorder %v1268, %v1270
        %v1272 = vsel %vm1271, %v1267, inf
        %1273 = vmin.xlane.f32.xlu0 %v1272
        %v1274 = vpop.xlane.xlu0 %1273
        %v1275 = vcvt.f32.s32 %v1274
        %v1276 = vcvt.f32.s32 %v1270
        %v1277 = vshll.u32 %v1276, 16
        %v1278 = vadd.s32 %v1277, %v1275
        %v1279 = vand.u32 %v1237, 65535
        %v1280 = vshra.s32 %v1237, 16
        %v1281 = vcvt.s32.f32 %v1279
        %v1282 = vcvt.s32.f32 %v1280
        %1283 = vmin.xlane.f32.xlu0 %v1282
        %v1284 = vpop.xlane.xlu0 %1283
        %vm1285 = vcmp.eq.f32.partialorder %v1282, %v1284
        %v1286 = vsel %vm1285, %v1281, inf
        %1287 = vmin.xlane.f32.xlu0 %v1286
        %v1288 = vpop.xlane.xlu0 %1287
        %v1289 = vcvt.f32.s32 %v1288
        %v1290 = vcvt.f32.s32 %v1284
        %v1291 = vshll.u32 %v1290, 16
        %v1292 = vadd.s32 %v1291, %v1289
        %v1293 = vand.u32 %v1238, 65535
        %v1294 = vshra.s32 %v1238, 16
        %v1295 = vcvt.s32.f32 %v1293
        %v1296 = vcvt.s32.f32 %v1294
        %1297 = vmin.xlane.f32.xlu0 %v1296
        %v1298 = vpop.xlane.xlu0 %1297
        %vm1299 = vcmp.eq.f32.partialorder %v1296, %v1298
        %v1300 = vsel %vm1299, %v1295, inf
        %1301 = vmin.xlane.f32.xlu0 %v1300
        %v1302 = vpop.xlane.xlu0 %1301
        %v1303 = vcvt.f32.s32 %v1302
        %v1304 = vcvt.f32.s32 %v1298
        %v1305 = vshll.u32 %v1304, 16
        %v1306 = vadd.s32 %v1305, %v1303
        %v1307 = vand.u32 %v1239, 65535
        %v1308 = vshra.s32 %v1239, 16
        %v1309 = vcvt.s32.f32 %v1307
        %v1310 = vcvt.s32.f32 %v1308
        %1311 = vmin.xlane.f32.xlu0 %v1310
        %v1312 = vpop.xlane.xlu0 %1311
        %vm1313 = vcmp.eq.f32.partialorder %v1310, %v1312
        %v1314 = vsel %vm1313, %v1309, inf
        %1315 = vmin.xlane.f32.xlu0 %v1314
        %v1316 = vpop.xlane.xlu0 %1315
        %v1317 = vcvt.f32.s32 %v1316
        %v1318 = vcvt.f32.s32 %v1312
        %v1319 = vshll.u32 %v1318, 16
        %v1320 = vadd.s32 %v1319, %v1317
        %v1321 = vand.u32 %v1240, 65535
        %v1322 = vshra.s32 %v1240, 16
        %v1323 = vcvt.s32.f32 %v1321
        %v1324 = vcvt.s32.f32 %v1322
        %1325 = vmin.xlane.f32.xlu0 %v1324
        %v1326 = vpop.xlane.xlu0 %1325
        %vm1327 = vcmp.eq.f32.partialorder %v1324, %v1326
        %v1328 = vsel %vm1327, %v1323, inf
        %1329 = vmin.xlane.f32.xlu0 %v1328
        %v1330 = vpop.xlane.xlu0 %1329
        %v1331 = vcvt.f32.s32 %v1330
        %v1332 = vcvt.f32.s32 %v1326
        %v1333 = vshll.u32 %v1332, 16
        %v1334 = vadd.s32 %v1333, %v1331
        %v1335 = vand.u32 %v1241, 65535
        %v1336 = vshra.s32 %v1241, 16
        %v1337 = vcvt.s32.f32 %v1335
        %v1338 = vcvt.s32.f32 %v1336
        %1339 = vmin.xlane.f32.xlu0 %v1338
        %v1340 = vpop.xlane.xlu0 %1339
        %vm1341 = vcmp.eq.f32.partialorder %v1338, %v1340
        %v1342 = vsel %vm1341, %v1337, inf
        %1343 = vmin.xlane.f32.xlu0 %v1342
        %v1344 = vpop.xlane.xlu0 %1343
        %v1345 = vcvt.f32.s32 %v1344
        %v1346 = vcvt.f32.s32 %v1340
        %v1347 = vshll.u32 %v1346, 16
        %v1348 = vadd.s32 %v1347, %v1345
        %v1349 = vand.u32 %v1242, 65535
        %v1350 = vshra.s32 %v1242, 16
        %v1351 = vcvt.s32.f32 %v1349
        %v1352 = vcvt.s32.f32 %v1350
        %1353 = vmin.xlane.f32.xlu0 %v1352
        %v1354 = vpop.xlane.xlu0 %1353
        %vm1355 = vcmp.eq.f32.partialorder %v1352, %v1354
        %v1356 = vsel %vm1355, %v1351, inf
        %1357 = vmin.xlane.f32.xlu0 %v1356
        %v1358 = vpop.xlane.xlu0 %1357
        %v1359 = vcvt.f32.s32 %v1358
        %v1360 = vcvt.f32.s32 %v1354
        %v1361 = vshll.u32 %v1360, 16
        %v1362 = vadd.s32 %v1361, %v1359
        %v1363 = vand.u32 %v1243, 65535
        %v1364 = vshra.s32 %v1243, 16
        %v1365 = vcvt.s32.f32 %v1363
        %v1366 = vcvt.s32.f32 %v1364
        %1367 = vmin.xlane.f32.xlu0 %v1366
        %v1368 = vpop.xlane.xlu0 %1367
        %vm1369 = vcmp.eq.f32.partialorder %v1366, %v1368
        %v1370 = vsel %vm1369, %v1365, inf
        %1371 = vmin.xlane.f32.xlu0 %v1370
        %v1372 = vpop.xlane.xlu0 %1371
        %v1373 = vcvt.f32.s32 %v1372
        %v1374 = vcvt.f32.s32 %v1368
        %v1375 = vshll.u32 %v1374, 16
        %v1376 = vadd.s32 %v1375, %v1373
        %v1377 = vand.u32 %v1244, 65535
        %v1378 = vshra.s32 %v1244, 16
        %v1379 = vcvt.s32.f32 %v1377
        %v1380 = vcvt.s32.f32 %v1378
        %1381 = vmin.xlane.f32.xlu0 %v1380
        %v1382 = vpop.xlane.xlu0 %1381
        %vm1383 = vcmp.eq.f32.partialorder %v1380, %v1382
        %v1384 = vsel %vm1383, %v1379, inf
        %1385 = vmin.xlane.f32.xlu0 %v1384
        %v1386 = vpop.xlane.xlu0 %1385
        %v1387 = vcvt.f32.s32 %v1386
        %v1388 = vcvt.f32.s32 %v1382
        %v1389 = vshll.u32 %v1388, 16
        %v1390 = vadd.s32 %v1389, %v1387
        %v1391 = vand.u32 %v1245, 65535
        %v1392 = vshra.s32 %v1245, 16
        %v1393 = vcvt.s32.f32 %v1391
        %v1394 = vcvt.s32.f32 %v1392
        %1395 = vmin.xlane.f32.xlu0 %v1394
        %v1396 = vpop.xlane.xlu0 %1395
        %vm1397 = vcmp.eq.f32.partialorder %v1394, %v1396
        %v1398 = vsel %vm1397, %v1393, inf
        %1399 = vmin.xlane.f32.xlu0 %v1398
        %v1400 = vpop.xlane.xlu0 %1399
        %v1401 = vcvt.f32.s32 %v1400
        %v1402 = vcvt.f32.s32 %v1396
        %v1403 = vshll.u32 %v1402, 16
        %v1404 = vadd.s32 %v1403, %v1401
        %v1405 = vand.u32 %v1246, 65535
        %v1406 = vshra.s32 %v1246, 16
        %v1407 = vcvt.s32.f32 %v1405
        %v1408 = vcvt.s32.f32 %v1406
        %1409 = vmin.xlane.f32.xlu0 %v1408
        %v1410 = vpop.xlane.xlu0 %1409
        %vm1411 = vcmp.eq.f32.partialorder %v1408, %v1410
        %v1412 = vsel %vm1411, %v1407, inf
        %1413 = vmin.xlane.f32.xlu0 %v1412
        %v1414 = vpop.xlane.xlu0 %1413
        %v1415 = vcvt.f32.s32 %v1414
        %v1416 = vcvt.f32.s32 %v1410
        %v1417 = vshll.u32 %v1416, 16
        %v1418 = vadd.s32 %v1417, %v1415
        %v1419 = vand.u32 %v1247, 65535
        %v1420 = vshra.s32 %v1247, 16
        %v1421 = vcvt.s32.f32 %v1419
        %v1422 = vcvt.s32.f32 %v1420
        %1423 = vmin.xlane.f32.xlu0 %v1422
        %v1424 = vpop.xlane.xlu0 %1423
        %vm1425 = vcmp.eq.f32.partialorder %v1422, %v1424
        %v1426 = vsel %vm1425, %v1421, inf
        %1427 = vmin.xlane.f32.xlu0 %v1426
        %v1428 = vpop.xlane.xlu0 %1427
        %v1429 = vcvt.f32.s32 %v1428
        %v1430 = vcvt.f32.s32 %v1424
        %v1431 = vshll.u32 %v1430, 16
        %v1432 = vadd.s32 %v1431, %v1429
        %v1433 = vand.u32 %v1248, 65535
        %v1434 = vshra.s32 %v1248, 16
        %v1435 = vcvt.s32.f32 %v1433
        %v1436 = vcvt.s32.f32 %v1434
        %1437 = vmin.xlane.f32.xlu0 %v1436
        %v1438 = vpop.xlane.xlu0 %1437
        %vm1439 = vcmp.eq.f32.partialorder %v1436, %v1438
        %v1440 = vsel %vm1439, %v1435, inf
        %1441 = vmin.xlane.f32.xlu0 %v1440
        %v1442 = vpop.xlane.xlu0 %1441
        %v1443 = vcvt.f32.s32 %v1442
        %v1444 = vcvt.f32.s32 %v1438
        %v1445 = vshll.u32 %v1444, 16
        %v1446 = vadd.s32 %v1445, %v1443
        %v1447 = vand.u32 %v1249, 65535
        %v1448 = vshra.s32 %v1249, 16
        %v1449 = vcvt.s32.f32 %v1447
        %v1450 = vcvt.s32.f32 %v1448
        %1451 = vmin.xlane.f32.xlu0 %v1450
        %v1452 = vpop.xlane.xlu0 %1451
        %vm1453 = vcmp.eq.f32.partialorder %v1450, %v1452
        %v1454 = vsel %vm1453, %v1449, inf
        %1455 = vmin.xlane.f32.xlu0 %v1454
        %v1456 = vpop.xlane.xlu0 %1455
        %v1457 = vcvt.f32.s32 %v1456
        %v1458 = vcvt.f32.s32 %v1452
        %v1459 = vshll.u32 %v1458, 16
        %v1460 = vadd.s32 %v1459, %v1457
        %v1461 = vand.u32 %v1250, 65535
        %v1462 = vshra.s32 %v1250, 16
        %v1463 = vcvt.s32.f32 %v1461
        %v1464 = vcvt.s32.f32 %v1462
        %1465 = vmin.xlane.f32.xlu0 %v1464
        %v1466 = vpop.xlane.xlu0 %1465
        %vm1467 = vcmp.eq.f32.partialorder %v1464, %v1466
        %v1468 = vsel %vm1467, %v1463, inf
        %1469 = vmin.xlane.f32.xlu0 %v1468
        %v1470 = vpop.xlane.xlu0 %1469
        %v1471 = vcvt.f32.s32 %v1470
        %v1472 = vcvt.f32.s32 %v1466
        %v1473 = vshll.u32 %v1472, 16
        %v1474 = vadd.s32 %v1473, %v1471
        %vm1475 = vcmp.eq.s32.totalorder %v658, %v1264
        %vm1476 = vcmp.eq.s32.totalorder %v658, %v1278
        %vm1477 = vcmp.eq.s32.totalorder %v658, %v1292
        %vm1478 = vcmp.eq.s32.totalorder %v658, %v1306
        %vm1479 = vcmp.eq.s32.totalorder %v658, %v1320
        %vm1480 = vcmp.eq.s32.totalorder %v658, %v1334
        %vm1481 = vcmp.eq.s32.totalorder %v658, %v1348
        %vm1482 = vcmp.eq.s32.totalorder %v658, %v1362
        %vm1483 = vcmp.eq.s32.totalorder %v658, %v1376
        %vm1484 = vcmp.eq.s32.totalorder %v658, %v1390
        %vm1485 = vcmp.eq.s32.totalorder %v658, %v1404
        %vm1486 = vcmp.eq.s32.totalorder %v658, %v1418
        %vm1487 = vcmp.eq.s32.totalorder %v658, %v1432
        %vm1488 = vcmp.eq.s32.totalorder %v658, %v1446
        %vm1489 = vcmp.eq.s32.totalorder %v658, %v1460
        %vm1490 = vcmp.eq.s32.totalorder %v658, %v1474
        %v1491 = vsel %vm1475, 1e+34, %v963
        %v1492 = vsel %vm1476, 1e+34, %v964
        %v1493 = vsel %vm1477, 1e+34, %v965
        %v1494 = vsel %vm1478, 1e+34, %v966
        %v1495 = vsel %vm1479, 1e+34, %v967
        %v1496 = vsel %vm1480, 1e+34, %v968
        %v1497 = vsel %vm1481, 1e+34, %v969
        %v1498 = vsel %vm1482, 1e+34, %v970
        %v1499 = vsel %vm1483, 1e+34, %v971
        %v1500 = vsel %vm1484, 1e+34, %v972
        %v1501 = vsel %vm1485, 1e+34, %v973
        %v1502 = vsel %vm1486, 1e+34, %v974
        %v1503 = vsel %vm1487, 1e+34, %v975
        %v1504 = vsel %vm1488, 1e+34, %v976
        %v1505 = vsel %vm1489, 1e+34, %v977
        %v1506 = vsel %vm1490, 1e+34, %v978
        %v1507 = vmax.f32 %v1188, 0.0
        %v1508 = vmax.f32 %v1190, 0.0
        %v1509 = vmax.f32 %v1192, 0.0
        %v1510 = vmax.f32 %v1194, 0.0
        %v1511 = vmax.f32 %v1196, 0.0
        %v1512 = vmax.f32 %v1198, 0.0
        %v1513 = vmax.f32 %v1200, 0.0
        %v1514 = vmax.f32 %v1202, 0.0
        %v1515 = vmax.f32 %v1204, 0.0
        %v1516 = vmax.f32 %v1206, 0.0
        %v1517 = vmax.f32 %v1208, 0.0
        %v1518 = vmax.f32 %v1210, 0.0
        %v1519 = vmax.f32 %v1212, 0.0
        %v1520 = vmax.f32 %v1214, 0.0
        %v1521 = vmax.f32 %v1216, 0.0
        %v1522 = vmax.f32 %v1218, 0.0
        %v1523 = vrsqrt.pop %v1507
        %v1524 = vmul.f32 %v1507, %v1523
        %vm1525 = vcmp.eq.f32.partialorder %v1507, inf
        %v1526 = vsel %vm1525, %v1507, %v1524
        %vm1527 = vcmp.eq.f32.partialorder %v1507, 0.0
        %v1528 = vand.u32 %v1507, 2147483648
        %v1529 = vsel %vm1527, %v1528, %v1526
        %v1530 = vrsqrt.pop %v1508
        %v1531 = vmul.f32 %v1508, %v1530
        %vm1532 = vcmp.eq.f32.partialorder %v1508, inf
        %v1533 = vsel %vm1532, %v1508, %v1531
        %vm1534 = vcmp.eq.f32.partialorder %v1508, 0.0
        %v1535 = vand.u32 %v1508, 2147483648
        %v1536 = vsel %vm1534, %v1535, %v1533
        %v1537 = vrsqrt.pop %v1509
        %v1538 = vmul.f32 %v1509, %v1537
        %vm1539 = vcmp.eq.f32.partialorder %v1509, inf
        %v1540 = vsel %vm1539, %v1509, %v1538
        %vm1541 = vcmp.eq.f32.partialorder %v1509, 0.0
        %v1542 = vand.u32 %v1509, 2147483648
        %v1543 = vsel %vm1541, %v1542, %v1540
        %v1544 = vrsqrt.pop %v1510
        %v1545 = vmul.f32 %v1510, %v1544
        %vm1546 = vcmp.eq.f32.partialorder %v1510, inf
        %v1547 = vsel %vm1546, %v1510, %v1545
        %vm1548 = vcmp.eq.f32.partialorder %v1510, 0.0
        %v1549 = vand.u32 %v1510, 2147483648
        %v1550 = vsel %vm1548, %v1549, %v1547
        %v1551 = vrsqrt.pop %v1511
        %v1552 = vmul.f32 %v1511, %v1551
        %vm1553 = vcmp.eq.f32.partialorder %v1511, inf
        %v1554 = vsel %vm1553, %v1511, %v1552
        %vm1555 = vcmp.eq.f32.partialorder %v1511, 0.0
        %v1556 = vand.u32 %v1511, 2147483648
        %v1557 = vsel %vm1555, %v1556, %v1554
        %v1558 = vrsqrt.pop %v1512
        %v1559 = vmul.f32 %v1512, %v1558
        %vm1560 = vcmp.eq.f32.partialorder %v1512, inf
        %v1561 = vsel %vm1560, %v1512, %v1559
        %vm1562 = vcmp.eq.f32.partialorder %v1512, 0.0
        %v1563 = vand.u32 %v1512, 2147483648
        %v1564 = vsel %vm1562, %v1563, %v1561
        %v1565 = vrsqrt.pop %v1513
        %v1566 = vmul.f32 %v1513, %v1565
        %vm1567 = vcmp.eq.f32.partialorder %v1513, inf
        %v1568 = vsel %vm1567, %v1513, %v1566
        %vm1569 = vcmp.eq.f32.partialorder %v1513, 0.0
        %v1570 = vand.u32 %v1513, 2147483648
        %v1571 = vsel %vm1569, %v1570, %v1568
        %v1572 = vrsqrt.pop %v1514
        %v1573 = vmul.f32 %v1514, %v1572
        %vm1574 = vcmp.eq.f32.partialorder %v1514, inf
        %v1575 = vsel %vm1574, %v1514, %v1573
        %vm1576 = vcmp.eq.f32.partialorder %v1514, 0.0
        %v1577 = vand.u32 %v1514, 2147483648
        %v1578 = vsel %vm1576, %v1577, %v1575
        %v1579 = vrsqrt.pop %v1515
        %v1580 = vmul.f32 %v1515, %v1579
        %vm1581 = vcmp.eq.f32.partialorder %v1515, inf
        %v1582 = vsel %vm1581, %v1515, %v1580
        %vm1583 = vcmp.eq.f32.partialorder %v1515, 0.0
        %v1584 = vand.u32 %v1515, 2147483648
        %v1585 = vsel %vm1583, %v1584, %v1582
        %v1586 = vrsqrt.pop %v1516
        %v1587 = vmul.f32 %v1516, %v1586
        %vm1588 = vcmp.eq.f32.partialorder %v1516, inf
        %v1589 = vsel %vm1588, %v1516, %v1587
        %vm1590 = vcmp.eq.f32.partialorder %v1516, 0.0
        %v1591 = vand.u32 %v1516, 2147483648
        %v1592 = vsel %vm1590, %v1591, %v1589
        %v1593 = vrsqrt.pop %v1517
        %v1594 = vmul.f32 %v1517, %v1593
        %vm1595 = vcmp.eq.f32.partialorder %v1517, inf
        %v1596 = vsel %vm1595, %v1517, %v1594
        %vm1597 = vcmp.eq.f32.partialorder %v1517, 0.0
        %v1598 = vand.u32 %v1517, 2147483648
        %v1599 = vsel %vm1597, %v1598, %v1596
        %v1600 = vrsqrt.pop %v1518
        %v1601 = vmul.f32 %v1518, %v1600
        %vm1602 = vcmp.eq.f32.partialorder %v1518, inf
        %v1603 = vsel %vm1602, %v1518, %v1601
        %vm1604 = vcmp.eq.f32.partialorder %v1518, 0.0
        %v1605 = vand.u32 %v1518, 2147483648
        %v1606 = vsel %vm1604, %v1605, %v1603
        %v1607 = vrsqrt.pop %v1519
        %v1608 = vmul.f32 %v1519, %v1607
        %vm1609 = vcmp.eq.f32.partialorder %v1519, inf
        %v1610 = vsel %vm1609, %v1519, %v1608
        %vm1611 = vcmp.eq.f32.partialorder %v1519, 0.0
        %v1612 = vand.u32 %v1519, 2147483648
        %v1613 = vsel %vm1611, %v1612, %v1610
        %v1614 = vrsqrt.pop %v1520
        %v1615 = vmul.f32 %v1520, %v1614
        %vm1616 = vcmp.eq.f32.partialorder %v1520, inf
        %v1617 = vsel %vm1616, %v1520, %v1615
        %vm1618 = vcmp.eq.f32.partialorder %v1520, 0.0
        %v1619 = vand.u32 %v1520, 2147483648
        %v1620 = vsel %vm1618, %v1619, %v1617
        %v1621 = vrsqrt.pop %v1521
        %v1622 = vmul.f32 %v1521, %v1621
        %vm1623 = vcmp.eq.f32.partialorder %v1521, inf
        %v1624 = vsel %vm1623, %v1521, %v1622
        %vm1625 = vcmp.eq.f32.partialorder %v1521, 0.0
        %v1626 = vand.u32 %v1521, 2147483648
        %v1627 = vsel %vm1625, %v1626, %v1624
        %v1628 = vrsqrt.pop %v1522
        %v1629 = vmul.f32 %v1522, %v1628
        %vm1630 = vcmp.eq.f32.partialorder %v1522, inf
        %v1631 = vsel %vm1630, %v1522, %v1629
        %vm1632 = vcmp.eq.f32.partialorder %v1522, 0.0
        %v1633 = vand.u32 %v1522, 2147483648
        %v1634 = vsel %vm1632, %v1633, %v1631
        %v1635 = vadd.f32 %v1529, 1e-08
        %v1636 = vadd.f32 %v1536, 1e-08
        %v1637 = vadd.f32 %v1543, 1e-08
        %v1638 = vadd.f32 %v1550, 1e-08
        %v1639 = vadd.f32 %v1557, 1e-08
        %v1640 = vadd.f32 %v1564, 1e-08
        %v1641 = vadd.f32 %v1571, 1e-08
        %v1642 = vadd.f32 %v1578, 1e-08
        %v1643 = vadd.f32 %v1585, 1e-08
        %v1644 = vadd.f32 %v1592, 1e-08
        %v1645 = vadd.f32 %v1599, 1e-08
        %v1646 = vadd.f32 %v1606, 1e-08
        %v1647 = vadd.f32 %v1613, 1e-08
        %v1648 = vadd.f32 %v1620, 1e-08
        %v1649 = vadd.f32 %v1627, 1e-08
        %v1650 = vadd.f32 %v1634, 1e-08
        %v1651 = vrcp.pop %v1635
        %v1652 = vmul.f32 1.0, %v1651
        %v1653 = vrcp.pop %v1636
        %v1654 = vmul.f32 1.0, %v1653
        %v1655 = vrcp.pop %v1637
        %v1656 = vmul.f32 1.0, %v1655
        %v1657 = vrcp.pop %v1638
        %v1658 = vmul.f32 1.0, %v1657
        %v1659 = vrcp.pop %v1639
        %v1660 = vmul.f32 1.0, %v1659
        %v1661 = vrcp.pop %v1640
        %v1662 = vmul.f32 1.0, %v1661
        %v1663 = vrcp.pop %v1641
        %v1664 = vmul.f32 1.0, %v1663
        %v1665 = vrcp.pop %v1642
        %v1666 = vmul.f32 1.0, %v1665
        %v1667 = vrcp.pop %v1643
        %v1668 = vmul.f32 1.0, %v1667
        %v1669 = vrcp.pop %v1644
        %v1670 = vmul.f32 1.0, %v1669
        %v1671 = vrcp.pop %v1645
        %v1672 = vmul.f32 1.0, %v1671
        %v1673 = vrcp.pop %v1646
        %v1674 = vmul.f32 1.0, %v1673
        %v1675 = vrcp.pop %v1647
        %v1676 = vmul.f32 1.0, %v1675
        %v1677 = vrcp.pop %v1648
        %v1678 = vmul.f32 1.0, %v1677
        %v1679 = vrcp.pop %v1649
        %v1680 = vmul.f32 1.0, %v1679
        %v1681 = vrcp.pop %v1650
        %v1682 = vmul.f32 1.0, %v1681
        %v1683 = vsel %vm1475, %v1652, %v1155
        %v1684 = vsel %vm1476, %v1654, %v1156
        %v1685 = vsel %vm1477, %v1656, %v1157
        %v1686 = vsel %vm1478, %v1658, %v1158
        %v1687 = vsel %vm1479, %v1660, %v1159
        %v1688 = vsel %vm1480, %v1662, %v1160
        %v1689 = vsel %vm1481, %v1664, %v1161
        %v1690 = vsel %vm1482, %v1666, %v1162
        %v1691 = vsel %vm1483, %v1668, %v1163
        %v1692 = vsel %vm1484, %v1670, %v1164
        %v1693 = vsel %vm1485, %v1672, %v1165
        %v1694 = vsel %vm1486, %v1674, %v1166
        %v1695 = vsel %vm1487, %v1676, %v1167
        %v1696 = vsel %vm1488, %v1678, %v1168
        %v1697 = vsel %vm1489, %v1680, %v1169
        %v1698 = vsel %vm1490, %v1682, %v1170
        %v1699 = vadd.f32 %v1171, %v1652
        %v1700 = vadd.f32 %v1172, %v1654
        %v1701 = vadd.f32 %v1173, %v1656
        %v1702 = vadd.f32 %v1174, %v1658
        %v1703 = vadd.f32 %v1175, %v1660
        %v1704 = vadd.f32 %v1176, %v1662
        %v1705 = vadd.f32 %v1177, %v1664
        %v1706 = vadd.f32 %v1178, %v1666
        %v1707 = vadd.f32 %v1179, %v1668
        %v1708 = vadd.f32 %v1180, %v1670
        %v1709 = vadd.f32 %v1181, %v1672
        %v1710 = vadd.f32 %v1182, %v1674
        %v1711 = vadd.f32 %v1183, %v1676
        %v1712 = vadd.f32 %v1184, %v1678
        %v1713 = vadd.f32 %v1185, %v1680
        %v1714 = vadd.f32 %v1186, %v1682
        %1715 = vmin.xlane.f32.xlu0 %v1491
        %v1716 = vpop.xlane.xlu0 %1715
        %1717 = vmin.xlane.f32.xlu0 %v1492
        %v1718 = vpop.xlane.xlu0 %1717
        %1719 = vmin.xlane.f32.xlu0 %v1493
        %v1720 = vpop.xlane.xlu0 %1719
        %1721 = vmin.xlane.f32.xlu0 %v1494
        %v1722 = vpop.xlane.xlu0 %1721
        %1723 = vmin.xlane.f32.xlu0 %v1495
        %v1724 = vpop.xlane.xlu0 %1723
        %1725 = vmin.xlane.f32.xlu0 %v1496
        %v1726 = vpop.xlane.xlu0 %1725
        %1727 = vmin.xlane.f32.xlu0 %v1497
        %v1728 = vpop.xlane.xlu0 %1727
        %1729 = vmin.xlane.f32.xlu0 %v1498
        %v1730 = vpop.xlane.xlu0 %1729
        %1731 = vmin.xlane.f32.xlu0 %v1499
        %v1732 = vpop.xlane.xlu0 %1731
        %1733 = vmin.xlane.f32.xlu0 %v1500
        %v1734 = vpop.xlane.xlu0 %1733
        %1735 = vmin.xlane.f32.xlu0 %v1501
        %v1736 = vpop.xlane.xlu0 %1735
        %1737 = vmin.xlane.f32.xlu0 %v1502
        %v1738 = vpop.xlane.xlu0 %1737
        %1739 = vmin.xlane.f32.xlu0 %v1503
        %v1740 = vpop.xlane.xlu0 %1739
        %1741 = vmin.xlane.f32.xlu0 %v1504
        %v1742 = vpop.xlane.xlu0 %1741
        %1743 = vmin.xlane.f32.xlu0 %v1505
        %v1744 = vpop.xlane.xlu0 %1743
        %1745 = vmin.xlane.f32.xlu0 %v1506
        %v1746 = vpop.xlane.xlu0 %1745
        %vm1747 = vcmp.eq.f32.partialorder %v1491, %v1716
        %vm1748 = vcmp.eq.f32.partialorder %v1492, %v1718
        %vm1749 = vcmp.eq.f32.partialorder %v1493, %v1720
        %vm1750 = vcmp.eq.f32.partialorder %v1494, %v1722
        %vm1751 = vcmp.eq.f32.partialorder %v1495, %v1724
        %vm1752 = vcmp.eq.f32.partialorder %v1496, %v1726
        %vm1753 = vcmp.eq.f32.partialorder %v1497, %v1728
        %vm1754 = vcmp.eq.f32.partialorder %v1498, %v1730
        %vm1755 = vcmp.eq.f32.partialorder %v1499, %v1732
        %vm1756 = vcmp.eq.f32.partialorder %v1500, %v1734
        %vm1757 = vcmp.eq.f32.partialorder %v1501, %v1736
        %vm1758 = vcmp.eq.f32.partialorder %v1502, %v1738
        %vm1759 = vcmp.eq.f32.partialorder %v1503, %v1740
        %vm1760 = vcmp.eq.f32.partialorder %v1504, %v1742
        %vm1761 = vcmp.eq.f32.partialorder %v1505, %v1744
        %vm1762 = vcmp.eq.f32.partialorder %v1506, %v1746
        %v1763 = vsel %vm1747, %v658, 128
        %v1764 = vsel %vm1748, %v658, 128
        %v1765 = vsel %vm1749, %v658, 128
        %v1766 = vsel %vm1750, %v658, 128
        %v1767 = vsel %vm1751, %v658, 128
        %v1768 = vsel %vm1752, %v658, 128
        %v1769 = vsel %vm1753, %v658, 128
        %v1770 = vsel %vm1754, %v658, 128
        %v1771 = vsel %vm1755, %v658, 128
        %v1772 = vsel %vm1756, %v658, 128
        %v1773 = vsel %vm1757, %v658, 128
        %v1774 = vsel %vm1758, %v658, 128
        %v1775 = vsel %vm1759, %v658, 128
        %v1776 = vsel %vm1760, %v658, 128
        %v1777 = vsel %vm1761, %v658, 128
        %v1778 = vsel %vm1762, %v658, 128
        %v1779 = vand.u32 %v1763, 65535
        %v1780 = vshra.s32 %v1763, 16
        %v1781 = vcvt.s32.f32 %v1779
        %v1782 = vcvt.s32.f32 %v1780
        %1783 = vmin.xlane.f32.xlu0 %v1782
        %v1784 = vpop.xlane.xlu0 %1783
        %vm1785 = vcmp.eq.f32.partialorder %v1782, %v1784
        %v1786 = vsel %vm1785, %v1781, inf
        %1787 = vmin.xlane.f32.xlu0 %v1786
        %v1788 = vpop.xlane.xlu0 %1787
        %v1789 = vcvt.f32.s32 %v1788
        %v1790 = vcvt.f32.s32 %v1784
        %v1791 = vshll.u32 %v1790, 16
        %v1792 = vadd.s32 %v1791, %v1789
        %v1793 = vand.u32 %v1764, 65535
        %v1794 = vshra.s32 %v1764, 16
        %v1795 = vcvt.s32.f32 %v1793
        %v1796 = vcvt.s32.f32 %v1794
        %1797 = vmin.xlane.f32.xlu0 %v1796
        %v1798 = vpop.xlane.xlu0 %1797
        %vm1799 = vcmp.eq.f32.partialorder %v1796, %v1798
        %v1800 = vsel %vm1799, %v1795, inf
        %1801 = vmin.xlane.f32.xlu0 %v1800
        %v1802 = vpop.xlane.xlu0 %1801
        %v1803 = vcvt.f32.s32 %v1802
        %v1804 = vcvt.f32.s32 %v1798
        %v1805 = vshll.u32 %v1804, 16
        %v1806 = vadd.s32 %v1805, %v1803
        %v1807 = vand.u32 %v1765, 65535
        %v1808 = vshra.s32 %v1765, 16
        %v1809 = vcvt.s32.f32 %v1807
        %v1810 = vcvt.s32.f32 %v1808
        %1811 = vmin.xlane.f32.xlu0 %v1810
        %v1812 = vpop.xlane.xlu0 %1811
        %vm1813 = vcmp.eq.f32.partialorder %v1810, %v1812
        %v1814 = vsel %vm1813, %v1809, inf
        %1815 = vmin.xlane.f32.xlu0 %v1814
        %v1816 = vpop.xlane.xlu0 %1815
        %v1817 = vcvt.f32.s32 %v1816
        %v1818 = vcvt.f32.s32 %v1812
        %v1819 = vshll.u32 %v1818, 16
        %v1820 = vadd.s32 %v1819, %v1817
        %v1821 = vand.u32 %v1766, 65535
        %v1822 = vshra.s32 %v1766, 16
        %v1823 = vcvt.s32.f32 %v1821
        %v1824 = vcvt.s32.f32 %v1822
        %1825 = vmin.xlane.f32.xlu0 %v1824
        %v1826 = vpop.xlane.xlu0 %1825
        %vm1827 = vcmp.eq.f32.partialorder %v1824, %v1826
        %v1828 = vsel %vm1827, %v1823, inf
        %1829 = vmin.xlane.f32.xlu0 %v1828
        %v1830 = vpop.xlane.xlu0 %1829
        %v1831 = vcvt.f32.s32 %v1830
        %v1832 = vcvt.f32.s32 %v1826
        %v1833 = vshll.u32 %v1832, 16
        %v1834 = vadd.s32 %v1833, %v1831
        %v1835 = vand.u32 %v1767, 65535
        %v1836 = vshra.s32 %v1767, 16
        %v1837 = vcvt.s32.f32 %v1835
        %v1838 = vcvt.s32.f32 %v1836
        %1839 = vmin.xlane.f32.xlu0 %v1838
        %v1840 = vpop.xlane.xlu0 %1839
        %vm1841 = vcmp.eq.f32.partialorder %v1838, %v1840
        %v1842 = vsel %vm1841, %v1837, inf
        %1843 = vmin.xlane.f32.xlu0 %v1842
        %v1844 = vpop.xlane.xlu0 %1843
        %v1845 = vcvt.f32.s32 %v1844
        %v1846 = vcvt.f32.s32 %v1840
        %v1847 = vshll.u32 %v1846, 16
        %v1848 = vadd.s32 %v1847, %v1845
        %v1849 = vand.u32 %v1768, 65535
        %v1850 = vshra.s32 %v1768, 16
        %v1851 = vcvt.s32.f32 %v1849
        %v1852 = vcvt.s32.f32 %v1850
        %1853 = vmin.xlane.f32.xlu0 %v1852
        %v1854 = vpop.xlane.xlu0 %1853
        %vm1855 = vcmp.eq.f32.partialorder %v1852, %v1854
        %v1856 = vsel %vm1855, %v1851, inf
        %1857 = vmin.xlane.f32.xlu0 %v1856
        %v1858 = vpop.xlane.xlu0 %1857
        %v1859 = vcvt.f32.s32 %v1858
        %v1860 = vcvt.f32.s32 %v1854
        %v1861 = vshll.u32 %v1860, 16
        %v1862 = vadd.s32 %v1861, %v1859
        %v1863 = vand.u32 %v1769, 65535
        %v1864 = vshra.s32 %v1769, 16
        %v1865 = vcvt.s32.f32 %v1863
        %v1866 = vcvt.s32.f32 %v1864
        %1867 = vmin.xlane.f32.xlu0 %v1866
        %v1868 = vpop.xlane.xlu0 %1867
        %vm1869 = vcmp.eq.f32.partialorder %v1866, %v1868
        %v1870 = vsel %vm1869, %v1865, inf
        %1871 = vmin.xlane.f32.xlu0 %v1870
        %v1872 = vpop.xlane.xlu0 %1871
        %v1873 = vcvt.f32.s32 %v1872
        %v1874 = vcvt.f32.s32 %v1868
        %v1875 = vshll.u32 %v1874, 16
        %v1876 = vadd.s32 %v1875, %v1873
        %v1877 = vand.u32 %v1770, 65535
        %v1878 = vshra.s32 %v1770, 16
        %v1879 = vcvt.s32.f32 %v1877
        %v1880 = vcvt.s32.f32 %v1878
        %1881 = vmin.xlane.f32.xlu0 %v1880
        %v1882 = vpop.xlane.xlu0 %1881
        %vm1883 = vcmp.eq.f32.partialorder %v1880, %v1882
        %v1884 = vsel %vm1883, %v1879, inf
        %1885 = vmin.xlane.f32.xlu0 %v1884
        %v1886 = vpop.xlane.xlu0 %1885
        %v1887 = vcvt.f32.s32 %v1886
        %v1888 = vcvt.f32.s32 %v1882
        %v1889 = vshll.u32 %v1888, 16
        %v1890 = vadd.s32 %v1889, %v1887
        %v1891 = vand.u32 %v1771, 65535
        %v1892 = vshra.s32 %v1771, 16
        %v1893 = vcvt.s32.f32 %v1891
        %v1894 = vcvt.s32.f32 %v1892
        %1895 = vmin.xlane.f32.xlu0 %v1894
        %v1896 = vpop.xlane.xlu0 %1895
        %vm1897 = vcmp.eq.f32.partialorder %v1894, %v1896
        %v1898 = vsel %vm1897, %v1893, inf
        %1899 = vmin.xlane.f32.xlu0 %v1898
        %v1900 = vpop.xlane.xlu0 %1899
        %v1901 = vcvt.f32.s32 %v1900
        %v1902 = vcvt.f32.s32 %v1896
        %v1903 = vshll.u32 %v1902, 16
        %v1904 = vadd.s32 %v1903, %v1901
        %v1905 = vand.u32 %v1772, 65535
        %v1906 = vshra.s32 %v1772, 16
        %v1907 = vcvt.s32.f32 %v1905
        %v1908 = vcvt.s32.f32 %v1906
        %1909 = vmin.xlane.f32.xlu0 %v1908
        %v1910 = vpop.xlane.xlu0 %1909
        %vm1911 = vcmp.eq.f32.partialorder %v1908, %v1910
        %v1912 = vsel %vm1911, %v1907, inf
        %1913 = vmin.xlane.f32.xlu0 %v1912
        %v1914 = vpop.xlane.xlu0 %1913
        %v1915 = vcvt.f32.s32 %v1914
        %v1916 = vcvt.f32.s32 %v1910
        %v1917 = vshll.u32 %v1916, 16
        %v1918 = vadd.s32 %v1917, %v1915
        %v1919 = vand.u32 %v1773, 65535
        %v1920 = vshra.s32 %v1773, 16
        %v1921 = vcvt.s32.f32 %v1919
        %v1922 = vcvt.s32.f32 %v1920
        %1923 = vmin.xlane.f32.xlu0 %v1922
        %v1924 = vpop.xlane.xlu0 %1923
        %vm1925 = vcmp.eq.f32.partialorder %v1922, %v1924
        %v1926 = vsel %vm1925, %v1921, inf
        %1927 = vmin.xlane.f32.xlu0 %v1926
        %v1928 = vpop.xlane.xlu0 %1927
        %v1929 = vcvt.f32.s32 %v1928
        %v1930 = vcvt.f32.s32 %v1924
        %v1931 = vshll.u32 %v1930, 16
        %v1932 = vadd.s32 %v1931, %v1929
        %v1933 = vand.u32 %v1774, 65535
        %v1934 = vshra.s32 %v1774, 16
        %v1935 = vcvt.s32.f32 %v1933
        %v1936 = vcvt.s32.f32 %v1934
        %1937 = vmin.xlane.f32.xlu0 %v1936
        %v1938 = vpop.xlane.xlu0 %1937
        %vm1939 = vcmp.eq.f32.partialorder %v1936, %v1938
        %v1940 = vsel %vm1939, %v1935, inf
        %1941 = vmin.xlane.f32.xlu0 %v1940
        %v1942 = vpop.xlane.xlu0 %1941
        %v1943 = vcvt.f32.s32 %v1942
        %v1944 = vcvt.f32.s32 %v1938
        %v1945 = vshll.u32 %v1944, 16
        %v1946 = vadd.s32 %v1945, %v1943
        %v1947 = vand.u32 %v1775, 65535
        %v1948 = vshra.s32 %v1775, 16
        %v1949 = vcvt.s32.f32 %v1947
        %v1950 = vcvt.s32.f32 %v1948
        %1951 = vmin.xlane.f32.xlu0 %v1950
        %v1952 = vpop.xlane.xlu0 %1951
        %vm1953 = vcmp.eq.f32.partialorder %v1950, %v1952
        %v1954 = vsel %vm1953, %v1949, inf
        %1955 = vmin.xlane.f32.xlu0 %v1954
        %v1956 = vpop.xlane.xlu0 %1955
        %v1957 = vcvt.f32.s32 %v1956
        %v1958 = vcvt.f32.s32 %v1952
        %v1959 = vshll.u32 %v1958, 16
        %v1960 = vadd.s32 %v1959, %v1957
        %v1961 = vand.u32 %v1776, 65535
        %v1962 = vshra.s32 %v1776, 16
        %v1963 = vcvt.s32.f32 %v1961
        %v1964 = vcvt.s32.f32 %v1962
        %1965 = vmin.xlane.f32.xlu0 %v1964
        %v1966 = vpop.xlane.xlu0 %1965
        %vm1967 = vcmp.eq.f32.partialorder %v1964, %v1966
        %v1968 = vsel %vm1967, %v1963, inf
        %1969 = vmin.xlane.f32.xlu0 %v1968
        %v1970 = vpop.xlane.xlu0 %1969
        %v1971 = vcvt.f32.s32 %v1970
        %v1972 = vcvt.f32.s32 %v1966
        %v1973 = vshll.u32 %v1972, 16
        %v1974 = vadd.s32 %v1973, %v1971
        %v1975 = vand.u32 %v1777, 65535
        %v1976 = vshra.s32 %v1777, 16
        %v1977 = vcvt.s32.f32 %v1975
        %v1978 = vcvt.s32.f32 %v1976
        %1979 = vmin.xlane.f32.xlu0 %v1978
        %v1980 = vpop.xlane.xlu0 %1979
        %vm1981 = vcmp.eq.f32.partialorder %v1978, %v1980
        %v1982 = vsel %vm1981, %v1977, inf
        %1983 = vmin.xlane.f32.xlu0 %v1982
        %v1984 = vpop.xlane.xlu0 %1983
        %v1985 = vcvt.f32.s32 %v1984
        %v1986 = vcvt.f32.s32 %v1980
        %v1987 = vshll.u32 %v1986, 16
        %v1988 = vadd.s32 %v1987, %v1985
        %v1989 = vand.u32 %v1778, 65535
        %v1990 = vshra.s32 %v1778, 16
        %v1991 = vcvt.s32.f32 %v1989
        %v1992 = vcvt.s32.f32 %v1990
        %1993 = vmin.xlane.f32.xlu0 %v1992
        %v1994 = vpop.xlane.xlu0 %1993
        %vm1995 = vcmp.eq.f32.partialorder %v1992, %v1994
        %v1996 = vsel %vm1995, %v1991, inf
        %1997 = vmin.xlane.f32.xlu0 %v1996
        %v1998 = vpop.xlane.xlu0 %1997
        %v1999 = vcvt.f32.s32 %v1998
        %v2000 = vcvt.f32.s32 %v1994
        %v2001 = vshll.u32 %v2000, 16
        %v2002 = vadd.s32 %v2001, %v1999
        %vm2003 = vcmp.eq.s32.totalorder %v658, %v1792
        %vm2004 = vcmp.eq.s32.totalorder %v658, %v1806
        %vm2005 = vcmp.eq.s32.totalorder %v658, %v1820
        %vm2006 = vcmp.eq.s32.totalorder %v658, %v1834
        %vm2007 = vcmp.eq.s32.totalorder %v658, %v1848
        %vm2008 = vcmp.eq.s32.totalorder %v658, %v1862
        %vm2009 = vcmp.eq.s32.totalorder %v658, %v1876
        %vm2010 = vcmp.eq.s32.totalorder %v658, %v1890
        %vm2011 = vcmp.eq.s32.totalorder %v658, %v1904
        %vm2012 = vcmp.eq.s32.totalorder %v658, %v1918
        %vm2013 = vcmp.eq.s32.totalorder %v658, %v1932
        %vm2014 = vcmp.eq.s32.totalorder %v658, %v1946
        %vm2015 = vcmp.eq.s32.totalorder %v658, %v1960
        %vm2016 = vcmp.eq.s32.totalorder %v658, %v1974
        %vm2017 = vcmp.eq.s32.totalorder %v658, %v1988
        %vm2018 = vcmp.eq.s32.totalorder %v658, %v2002
        %v2019 = vmax.f32 %v1716, 0.0
        %v2020 = vmax.f32 %v1718, 0.0
        %v2021 = vmax.f32 %v1720, 0.0
        %v2022 = vmax.f32 %v1722, 0.0
        %v2023 = vmax.f32 %v1724, 0.0
        %v2024 = vmax.f32 %v1726, 0.0
        %v2025 = vmax.f32 %v1728, 0.0
        %v2026 = vmax.f32 %v1730, 0.0
        %v2027 = vmax.f32 %v1732, 0.0
        %v2028 = vmax.f32 %v1734, 0.0
        %v2029 = vmax.f32 %v1736, 0.0
        %v2030 = vmax.f32 %v1738, 0.0
        %v2031 = vmax.f32 %v1740, 0.0
        %v2032 = vmax.f32 %v1742, 0.0
        %v2033 = vmax.f32 %v1744, 0.0
        %v2034 = vmax.f32 %v1746, 0.0
        %v2035 = vrsqrt.pop %v2019
        %v2036 = vmul.f32 %v2019, %v2035
        %vm2037 = vcmp.eq.f32.partialorder %v2019, inf
        %v2038 = vsel %vm2037, %v2019, %v2036
        %vm2039 = vcmp.eq.f32.partialorder %v2019, 0.0
        %v2040 = vand.u32 %v2019, 2147483648
        %v2041 = vsel %vm2039, %v2040, %v2038
        %v2042 = vrsqrt.pop %v2020
        %v2043 = vmul.f32 %v2020, %v2042
        %vm2044 = vcmp.eq.f32.partialorder %v2020, inf
        %v2045 = vsel %vm2044, %v2020, %v2043
        %vm2046 = vcmp.eq.f32.partialorder %v2020, 0.0
        %v2047 = vand.u32 %v2020, 2147483648
        %v2048 = vsel %vm2046, %v2047, %v2045
        %v2049 = vrsqrt.pop %v2021
        %v2050 = vmul.f32 %v2021, %v2049
        %vm2051 = vcmp.eq.f32.partialorder %v2021, inf
        %v2052 = vsel %vm2051, %v2021, %v2050
        %vm2053 = vcmp.eq.f32.partialorder %v2021, 0.0
        %v2054 = vand.u32 %v2021, 2147483648
        %v2055 = vsel %vm2053, %v2054, %v2052
        %v2056 = vrsqrt.pop %v2022
        %v2057 = vmul.f32 %v2022, %v2056
        %vm2058 = vcmp.eq.f32.partialorder %v2022, inf
        %v2059 = vsel %vm2058, %v2022, %v2057
        %vm2060 = vcmp.eq.f32.partialorder %v2022, 0.0
        %v2061 = vand.u32 %v2022, 2147483648
        %v2062 = vsel %vm2060, %v2061, %v2059
        %v2063 = vrsqrt.pop %v2023
        %v2064 = vmul.f32 %v2023, %v2063
        %vm2065 = vcmp.eq.f32.partialorder %v2023, inf
        %v2066 = vsel %vm2065, %v2023, %v2064
        %vm2067 = vcmp.eq.f32.partialorder %v2023, 0.0
        %v2068 = vand.u32 %v2023, 2147483648
        %v2069 = vsel %vm2067, %v2068, %v2066
        %v2070 = vrsqrt.pop %v2024
        %v2071 = vmul.f32 %v2024, %v2070
        %vm2072 = vcmp.eq.f32.partialorder %v2024, inf
        %v2073 = vsel %vm2072, %v2024, %v2071
        %vm2074 = vcmp.eq.f32.partialorder %v2024, 0.0
        %v2075 = vand.u32 %v2024, 2147483648
        %v2076 = vsel %vm2074, %v2075, %v2073
        %v2077 = vrsqrt.pop %v2025
        %v2078 = vmul.f32 %v2025, %v2077
        %vm2079 = vcmp.eq.f32.partialorder %v2025, inf
        %v2080 = vsel %vm2079, %v2025, %v2078
        %vm2081 = vcmp.eq.f32.partialorder %v2025, 0.0
        %v2082 = vand.u32 %v2025, 2147483648
        %v2083 = vsel %vm2081, %v2082, %v2080
        %v2084 = vrsqrt.pop %v2026
        %v2085 = vmul.f32 %v2026, %v2084
        %vm2086 = vcmp.eq.f32.partialorder %v2026, inf
        %v2087 = vsel %vm2086, %v2026, %v2085
        %vm2088 = vcmp.eq.f32.partialorder %v2026, 0.0
        %v2089 = vand.u32 %v2026, 2147483648
        %v2090 = vsel %vm2088, %v2089, %v2087
        %v2091 = vrsqrt.pop %v2027
        %v2092 = vmul.f32 %v2027, %v2091
        %vm2093 = vcmp.eq.f32.partialorder %v2027, inf
        %v2094 = vsel %vm2093, %v2027, %v2092
        %vm2095 = vcmp.eq.f32.partialorder %v2027, 0.0
        %v2096 = vand.u32 %v2027, 2147483648
        %v2097 = vsel %vm2095, %v2096, %v2094
        %v2098 = vrsqrt.pop %v2028
        %v2099 = vmul.f32 %v2028, %v2098
        %vm2100 = vcmp.eq.f32.partialorder %v2028, inf
        %v2101 = vsel %vm2100, %v2028, %v2099
        %vm2102 = vcmp.eq.f32.partialorder %v2028, 0.0
        %v2103 = vand.u32 %v2028, 2147483648
        %v2104 = vsel %vm2102, %v2103, %v2101
        %v2105 = vrsqrt.pop %v2029
        %v2106 = vmul.f32 %v2029, %v2105
        %vm2107 = vcmp.eq.f32.partialorder %v2029, inf
        %v2108 = vsel %vm2107, %v2029, %v2106
        %vm2109 = vcmp.eq.f32.partialorder %v2029, 0.0
        %v2110 = vand.u32 %v2029, 2147483648
        %v2111 = vsel %vm2109, %v2110, %v2108
        %v2112 = vrsqrt.pop %v2030
        %v2113 = vmul.f32 %v2030, %v2112
        %vm2114 = vcmp.eq.f32.partialorder %v2030, inf
        %v2115 = vsel %vm2114, %v2030, %v2113
        %vm2116 = vcmp.eq.f32.partialorder %v2030, 0.0
        %v2117 = vand.u32 %v2030, 2147483648
        %v2118 = vsel %vm2116, %v2117, %v2115
        %v2119 = vrsqrt.pop %v2031
        %v2120 = vmul.f32 %v2031, %v2119
        %vm2121 = vcmp.eq.f32.partialorder %v2031, inf
        %v2122 = vsel %vm2121, %v2031, %v2120
        %vm2123 = vcmp.eq.f32.partialorder %v2031, 0.0
        %v2124 = vand.u32 %v2031, 2147483648
        %v2125 = vsel %vm2123, %v2124, %v2122
        %v2126 = vrsqrt.pop %v2032
        %v2127 = vmul.f32 %v2032, %v2126
        %vm2128 = vcmp.eq.f32.partialorder %v2032, inf
        %v2129 = vsel %vm2128, %v2032, %v2127
        %vm2130 = vcmp.eq.f32.partialorder %v2032, 0.0
        %v2131 = vand.u32 %v2032, 2147483648
        %v2132 = vsel %vm2130, %v2131, %v2129
        %v2133 = vrsqrt.pop %v2033
        %v2134 = vmul.f32 %v2033, %v2133
        %vm2135 = vcmp.eq.f32.partialorder %v2033, inf
        %v2136 = vsel %vm2135, %v2033, %v2134
        %vm2137 = vcmp.eq.f32.partialorder %v2033, 0.0
        %v2138 = vand.u32 %v2033, 2147483648
        %v2139 = vsel %vm2137, %v2138, %v2136
        %v2140 = vrsqrt.pop %v2034
        %v2141 = vmul.f32 %v2034, %v2140
        %vm2142 = vcmp.eq.f32.partialorder %v2034, inf
        %v2143 = vsel %vm2142, %v2034, %v2141
        %vm2144 = vcmp.eq.f32.partialorder %v2034, 0.0
        %v2145 = vand.u32 %v2034, 2147483648
        %v2146 = vsel %vm2144, %v2145, %v2143
        %v2147 = vadd.f32 %v2041, 1e-08
        %v2148 = vadd.f32 %v2048, 1e-08
        %v2149 = vadd.f32 %v2055, 1e-08
        %v2150 = vadd.f32 %v2062, 1e-08
        %v2151 = vadd.f32 %v2069, 1e-08
        %v2152 = vadd.f32 %v2076, 1e-08
        %v2153 = vadd.f32 %v2083, 1e-08
        %v2154 = vadd.f32 %v2090, 1e-08
        %v2155 = vadd.f32 %v2097, 1e-08
        %v2156 = vadd.f32 %v2104, 1e-08
        %v2157 = vadd.f32 %v2111, 1e-08
        %v2158 = vadd.f32 %v2118, 1e-08
        %v2159 = vadd.f32 %v2125, 1e-08
        %v2160 = vadd.f32 %v2132, 1e-08
        %v2161 = vadd.f32 %v2139, 1e-08
        %v2162 = vadd.f32 %v2146, 1e-08
        %v2163 = vrcp.pop %v2147
        %v2164 = vmul.f32 1.0, %v2163
        %v2165 = vrcp.pop %v2148
        %v2166 = vmul.f32 1.0, %v2165
        %v2167 = vrcp.pop %v2149
        %v2168 = vmul.f32 1.0, %v2167
        %v2169 = vrcp.pop %v2150
        %v2170 = vmul.f32 1.0, %v2169
        %v2171 = vrcp.pop %v2151
        %v2172 = vmul.f32 1.0, %v2171
        %v2173 = vrcp.pop %v2152
        %v2174 = vmul.f32 1.0, %v2173
        %v2175 = vrcp.pop %v2153
        %v2176 = vmul.f32 1.0, %v2175
        %v2177 = vrcp.pop %v2154
        %v2178 = vmul.f32 1.0, %v2177
        %v2179 = vrcp.pop %v2155
        %v2180 = vmul.f32 1.0, %v2179
        %v2181 = vrcp.pop %v2156
        %v2182 = vmul.f32 1.0, %v2181
        %v2183 = vrcp.pop %v2157
        %v2184 = vmul.f32 1.0, %v2183
        %v2185 = vrcp.pop %v2158
        %v2186 = vmul.f32 1.0, %v2185
        %v2187 = vrcp.pop %v2159
        %v2188 = vmul.f32 1.0, %v2187
        %v2189 = vrcp.pop %v2160
        %v2190 = vmul.f32 1.0, %v2189
        %v2191 = vrcp.pop %v2161
        %v2192 = vmul.f32 1.0, %v2191
        %v2193 = vrcp.pop %v2162
        %v2194 = vmul.f32 1.0, %v2193
        %v2195 = vsel %vm2003, %v2164, %v1683
        %v2196 = vsel %vm2004, %v2166, %v1684
        %v2197 = vsel %vm2005, %v2168, %v1685
        %v2198 = vsel %vm2006, %v2170, %v1686
        %v2199 = vsel %vm2007, %v2172, %v1687
        %v2200 = vsel %vm2008, %v2174, %v1688
        %v2201 = vsel %vm2009, %v2176, %v1689
        %v2202 = vsel %vm2010, %v2178, %v1690
        %v2203 = vsel %vm2011, %v2180, %v1691
        %v2204 = vsel %vm2012, %v2182, %v1692
        %v2205 = vsel %vm2013, %v2184, %v1693
        %v2206 = vsel %vm2014, %v2186, %v1694
        %v2207 = vsel %vm2015, %v2188, %v1695
        %v2208 = vsel %vm2016, %v2190, %v1696
        %v2209 = vsel %vm2017, %v2192, %v1697
        %v2210 = vsel %vm2018, %v2194, %v1698
        %v2211 = vadd.f32 %v1699, %v2164
        %v2212 = vadd.f32 %v1700, %v2166
        %v2213 = vadd.f32 %v1701, %v2168
        %v2214 = vadd.f32 %v1702, %v2170
        %v2215 = vadd.f32 %v1703, %v2172
        %v2216 = vadd.f32 %v1704, %v2174
        %v2217 = vadd.f32 %v1705, %v2176
        %v2218 = vadd.f32 %v1706, %v2178
        %v2219 = vadd.f32 %v1707, %v2180
        %v2220 = vadd.f32 %v1708, %v2182
        %v2221 = vadd.f32 %v1709, %v2184
        %v2222 = vadd.f32 %v1710, %v2186
        %v2223 = vadd.f32 %v1711, %v2188
        %v2224 = vadd.f32 %v1712, %v2190
        %v2225 = vadd.f32 %v1713, %v2192
        %v2226 = vadd.f32 %v1714, %v2194
        %vm2227 = vcmp.lt.f32.partialorder %v1716, 1.0
        %vm2228 = vcmp.lt.f32.partialorder %v1718, 1.0
        %vm2229 = vcmp.lt.f32.partialorder %v1720, 1.0
        %vm2230 = vcmp.lt.f32.partialorder %v1722, 1.0
        %vm2231 = vcmp.lt.f32.partialorder %v1724, 1.0
        %vm2232 = vcmp.lt.f32.partialorder %v1726, 1.0
        %vm2233 = vcmp.lt.f32.partialorder %v1728, 1.0
        %vm2234 = vcmp.lt.f32.partialorder %v1730, 1.0
        %vm2235 = vcmp.lt.f32.partialorder %v1732, 1.0
        %vm2236 = vcmp.lt.f32.partialorder %v1734, 1.0
        %vm2237 = vcmp.lt.f32.partialorder %v1736, 1.0
        %vm2238 = vcmp.lt.f32.partialorder %v1738, 1.0
        %vm2239 = vcmp.lt.f32.partialorder %v1740, 1.0
        %vm2240 = vcmp.lt.f32.partialorder %v1742, 1.0
        %vm2241 = vcmp.lt.f32.partialorder %v1744, 1.0
        %vm2242 = vcmp.lt.f32.partialorder %v1746, 1.0
        %v2243 = vsel %vm2227, 1, 0
        %v2244 = vsel %vm2228, 1, 0
        %v2245 = vsel %vm2229, 1, 0
        %v2246 = vsel %vm2230, 1, 0
        %v2247 = vsel %vm2231, 1, 0
        %v2248 = vsel %vm2232, 1, 0
        %v2249 = vsel %vm2233, 1, 0
        %v2250 = vsel %vm2234, 1, 0
        %v2251 = vsel %vm2235, 1, 0
        %v2252 = vsel %vm2236, 1, 0
        %v2253 = vsel %vm2237, 1, 0
        %v2254 = vsel %vm2238, 1, 0
        %v2255 = vsel %vm2239, 1, 0
        %v2256 = vsel %vm2240, 1, 0
        %v2257 = vsel %vm2241, 1, 0
        %v2258 = vsel %vm2242, 1, 0
        %v2259 = vcvt.s32.f32 %v2243
        %v2260 = vcvt.s32.f32 %v2244
        %v2261 = vcvt.s32.f32 %v2245
        %v2262 = vcvt.s32.f32 %v2246
        %v2263 = vcvt.s32.f32 %v2247
        %v2264 = vcvt.s32.f32 %v2248
        %v2265 = vcvt.s32.f32 %v2249
        %v2266 = vcvt.s32.f32 %v2250
        %v2267 = vcvt.s32.f32 %v2251
        %v2268 = vcvt.s32.f32 %v2252
        %v2269 = vcvt.s32.f32 %v2253
        %v2270 = vcvt.s32.f32 %v2254
        %v2271 = vcvt.s32.f32 %v2255
        %v2272 = vcvt.s32.f32 %v2256
        %v2273 = vcvt.s32.f32 %v2257
        %v2274 = vcvt.s32.f32 %v2258
        %v2275 = vrcp.pop %v2211
        %v2276 = vmul.f32 %v2259, %v2275
        %v2277 = vrcp.pop %v2212
        %v2278 = vmul.f32 %v2260, %v2277
        %v2279 = vrcp.pop %v2213
        %v2280 = vmul.f32 %v2261, %v2279
        %v2281 = vrcp.pop %v2214
        %v2282 = vmul.f32 %v2262, %v2281
        %v2283 = vrcp.pop %v2215
        %v2284 = vmul.f32 %v2263, %v2283
        %v2285 = vrcp.pop %v2216
        %v2286 = vmul.f32 %v2264, %v2285
        %v2287 = vrcp.pop %v2217
        %v2288 = vmul.f32 %v2265, %v2287
        %v2289 = vrcp.pop %v2218
        %v2290 = vmul.f32 %v2266, %v2289
        %v2291 = vrcp.pop %v2219
        %v2292 = vmul.f32 %v2267, %v2291
        %v2293 = vrcp.pop %v2220
        %v2294 = vmul.f32 %v2268, %v2293
        %v2295 = vrcp.pop %v2221
        %v2296 = vmul.f32 %v2269, %v2295
        %v2297 = vrcp.pop %v2222
        %v2298 = vmul.f32 %v2270, %v2297
        %v2299 = vrcp.pop %v2223
        %v2300 = vmul.f32 %v2271, %v2299
        %v2301 = vrcp.pop %v2224
        %v2302 = vmul.f32 %v2272, %v2301
        %v2303 = vrcp.pop %v2225
        %v2304 = vmul.f32 %v2273, %v2303
        %v2305 = vrcp.pop %v2226
        %v2306 = vmul.f32 %v2274, %v2305
        %v2307 = vld [vmem:[%s443] sm:$0xff]
        %v2308 = vld [vmem:[%s443 + $0x8] sm:$0xff]
        %v2309 = vld [vmem:[%s443 + $0x10] sm:$0xff]
        %v2310 = vld [vmem:[%s443 + $0x18] sm:$0xff]
        %v2311 = vld [vmem:[%s443 + $0x20] sm:$0xff]
        %v2312 = vld [vmem:[%s443 + $0x28] sm:$0xff]
        %v2313 = vld [vmem:[%s443 + $0x30] sm:$0xff]
        %v2314 = vld [vmem:[%s443 + $0x38] sm:$0xff]
        %v2315 = vld [vmem:[%s443 + $0x40] sm:$0xff]
        %v2316 = vld [vmem:[%s443 + $0x48] sm:$0xff]
        %v2317 = vld [vmem:[%s443 + $0x50] sm:$0xff]
        %v2318 = vld [vmem:[%s443 + $0x58] sm:$0xff]
        %v2319 = vld [vmem:[%s443 + $0x60] sm:$0xff]
        %v2320 = vld [vmem:[%s443 + $0x68] sm:$0xff]
        %v2321 = vld [vmem:[%s443 + $0x70] sm:$0xff]
        %v2322 = vld [vmem:[%s443 + $0x78] sm:$0xff]
        %2323 = vmatprep.subr.mxu0 0.0
        %2324 = vmatpush1.msra.mxu0 %v2307
        %2325 = vmatprep.subr.mxu0 0.0
        %2326 = vmatpush1.msra.mxu0 %v2308
        %2327 = vmatprep.subr.mxu0 0.0
        %2328 = vmatpush1.msra.mxu0 %v2309
        %2329 = vmatprep.subr.mxu0 0.0
        %2330 = vmatpush1.msra.mxu0 %v2310
        %2331 = vmatprep.subr.mxu0 0.0
        %2332 = vmatpush1.msra.mxu0 %v2311
        %2333 = vmatprep.subr.mxu0 0.0
        %2334 = vmatpush1.msra.mxu0 %v2312
        %2335 = vmatprep.subr.mxu0 0.0
        %2336 = vmatpush1.msra.mxu0 %v2313
        %2337 = vmatprep.subr.mxu0 0.0
        %2338 = vmatpush1.msra.mxu0 %v2314
        %2339 = vmatprep.subr.mxu0 0.0
        %2340 = vmatpush1.msra.mxu0 %v2315
        %2341 = vmatprep.subr.mxu0 0.0
        %2342 = vmatpush1.msra.mxu0 %v2316
        %2343 = vmatprep.subr.mxu0 0.0
        %2344 = vmatpush1.msra.mxu0 %v2317
        %2345 = vmatprep.subr.mxu0 0.0
        %2346 = vmatpush1.msra.mxu0 %v2318
        %2347 = vmatprep.subr.mxu0 0.0
        %2348 = vmatpush1.msra.mxu0 %v2319
        %2349 = vmatprep.subr.mxu0 0.0
        %2350 = vmatpush1.msra.mxu0 %v2320
        %2351 = vmatprep.subr.mxu0 0.0
        %2352 = vmatpush1.msra.mxu0 %v2321
        %2353 = vmatprep.subr.mxu0 0.0
        %2354 = vmatpush1.msra.mxu0 %v2322
        %2355 = vmatprep.subr.mxu0 0.0
        %2356 = vmatpush1.msra.mxu0 0.0
        %2357 = vmatprep.subr.mxu0 0.0
        %2358 = vmatpush1.msra.mxu0 0.0
        %2359 = vmatprep.subr.mxu0 0.0
        %2360 = vmatpush1.msra.mxu0 0.0
        %2361 = vmatprep.subr.mxu0 0.0
        %2362 = vmatpush1.msra.mxu0 0.0
        %2363 = vmatprep.subr.mxu0 0.0
        %2364 = vmatpush1.msra.mxu0 0.0
        %2365 = vmatprep.subr.mxu0 0.0
        %2366 = vmatpush1.msra.mxu0 0.0
        %2367 = vmatprep.subr.mxu0 0.0
        %2368 = vmatpush1.msra.mxu0 0.0
        %2369 = vmatprep.subr.mxu0 0.0
        %2370 = vmatpush1.msra.mxu0 0.0
        %2371 = vmatprep.subr.mxu0 0.0
        %2372 = vmatpush1.msra.mxu0 0.0
        %2373 = vmatprep.subr.mxu0 0.0
        %2374 = vmatpush1.msra.mxu0 0.0
        %2375 = vmatprep.subr.mxu0 0.0
        %2376 = vmatpush1.msra.mxu0 0.0
        %2377 = vmatprep.subr.mxu0 0.0
        %2378 = vmatpush1.msra.mxu0 0.0
        %2379 = vmatprep.subr.mxu0 0.0
        %2380 = vmatpush1.msra.mxu0 0.0
        %2381 = vmatprep.subr.mxu0 0.0
        %2382 = vmatpush1.msra.mxu0 0.0
        %2383 = vmatprep.subr.mxu0 0.0
        %2384 = vmatpush1.msra.mxu0 0.0
        %2385 = vmatprep.subr.mxu0 0.0
        %2386 = vmatpush1.msra.mxu0 0.0
        %2387 = vmatprep.mubr.f32.mxu0 0.0
        %2388 = vmatmul.mubr.f32.gmra.mrb[0].mxu0 %v2195
        %v2389 = vpop.f32.mrb[0].mxu0
        %v2390 = vadd.f32 0.0, %v2389
        %v2391 = vpop.f32.mrb[0].mxu0
        %2392 = vmatprep.mubr.f32.mxu0 0.0
        %2393 = vmatmul.mubr.f32.gmra.mrb[0].mxu0 %v2196
        %v2394 = vpop.f32.mrb[0].mxu0
        %v2395 = vadd.f32 0.0, %v2394
        %v2396 = vpop.f32.mrb[0].mxu0
        %2397 = vmatprep.mubr.f32.mxu0 0.0
        %2398 = vmatmul.mubr.f32.gmra.mrb[0].mxu0 %v2197
        %v2399 = vpop.f32.mrb[0].mxu0
        %v2400 = vadd.f32 0.0, %v2399
        %v2401 = vpop.f32.mrb[0].mxu0
        %2402 = vmatprep.mubr.f32.mxu0 0.0
        %2403 = vmatmul.mubr.f32.gmra.mrb[0].mxu0 %v2198
        %v2404 = vpop.f32.mrb[0].mxu0
        %v2405 = vadd.f32 0.0, %v2404
        %v2406 = vpop.f32.mrb[0].mxu0
        %2407 = vmatprep.mubr.f32.mxu0 0.0
        %2408 = vmatmul.mubr.f32.gmra.mrb[0].mxu0 %v2199
        %v2409 = vpop.f32.mrb[0].mxu0
        %v2410 = vadd.f32 0.0, %v2409
        %v2411 = vpop.f32.mrb[0].mxu0
        %2412 = vmatprep.mubr.f32.mxu0 0.0
        %2413 = vmatmul.mubr.f32.gmra.mrb[0].mxu0 %v2200
        %v2414 = vpop.f32.mrb[0].mxu0
        %v2415 = vadd.f32 0.0, %v2414
        %v2416 = vpop.f32.mrb[0].mxu0
        %2417 = vmatprep.mubr.f32.mxu0 0.0
        %2418 = vmatmul.mubr.f32.gmra.mrb[0].mxu0 %v2201
        %v2419 = vpop.f32.mrb[0].mxu0
        %v2420 = vadd.f32 0.0, %v2419
        %v2421 = vpop.f32.mrb[0].mxu0
        %2422 = vmatprep.mubr.f32.mxu0 0.0
        %2423 = vmatmul.mubr.f32.gmra.mrb[0].mxu0 %v2202
        %v2424 = vpop.f32.mrb[0].mxu0
        %v2425 = vadd.f32 0.0, %v2424
        %v2426 = vpop.f32.mrb[0].mxu0
        %2427 = vmatprep.mubr.f32.mxu0 0.0
        %2428 = vmatmul.mubr.f32.gmra.mrb[0].mxu0 %v2203
        %v2429 = vpop.f32.mrb[0].mxu0
        %v2430 = vadd.f32 0.0, %v2429
        %v2431 = vpop.f32.mrb[0].mxu0
        %2432 = vmatprep.mubr.f32.mxu0 0.0
        %2433 = vmatmul.mubr.f32.gmra.mrb[0].mxu0 %v2204
        %v2434 = vpop.f32.mrb[0].mxu0
        %v2435 = vadd.f32 0.0, %v2434
        %v2436 = vpop.f32.mrb[0].mxu0
        %2437 = vmatprep.mubr.f32.mxu0 0.0
        %2438 = vmatmul.mubr.f32.gmra.mrb[0].mxu0 %v2205
        %v2439 = vpop.f32.mrb[0].mxu0
        %v2440 = vadd.f32 0.0, %v2439
        %v2441 = vpop.f32.mrb[0].mxu0
        %2442 = vmatprep.mubr.f32.mxu0 0.0
        %2443 = vmatmul.mubr.f32.gmra.mrb[0].mxu0 %v2206
        %v2444 = vpop.f32.mrb[0].mxu0
        %v2445 = vadd.f32 0.0, %v2444
        %v2446 = vpop.f32.mrb[0].mxu0
        %2447 = vmatprep.mubr.f32.mxu0 0.0
        %2448 = vmatmul.mubr.f32.gmra.mrb[0].mxu0 %v2207
        %v2449 = vpop.f32.mrb[0].mxu0
        %v2450 = vadd.f32 0.0, %v2449
        %v2451 = vpop.f32.mrb[0].mxu0
        %2452 = vmatprep.mubr.f32.mxu0 0.0
        %2453 = vmatmul.mubr.f32.gmra.mrb[0].mxu0 %v2208
        %v2454 = vpop.f32.mrb[0].mxu0
        %v2455 = vadd.f32 0.0, %v2454
        %v2456 = vpop.f32.mrb[0].mxu0
        %2457 = vmatprep.mubr.f32.mxu0 0.0
        %2458 = vmatmul.mubr.f32.gmra.mrb[0].mxu0 %v2209
        %v2459 = vpop.f32.mrb[0].mxu0
        %v2460 = vadd.f32 0.0, %v2459
        %v2461 = vpop.f32.mrb[0].mxu0
        %2462 = vmatprep.mubr.f32.mxu0 0.0
        %2463 = vmatmul.mubr.f32.gmra.mrb[0].mxu0 %v2210
        %v2464 = vpop.f32.mrb[0].mxu0
        %v2465 = vadd.f32 0.0, %v2464
        %v2466 = vpop.f32.mrb[0].mxu0
        %2467 = vdwg.mxu0
        %v2468 = vmul.f32 %v2390, %v2276
        %v2469 = vmul.f32 %v2395, %v2278
        %v2470 = vmul.f32 %v2400, %v2280
        %v2471 = vmul.f32 %v2405, %v2282
        %v2472 = vmul.f32 %v2410, %v2284
        %v2473 = vmul.f32 %v2415, %v2286
        %v2474 = vmul.f32 %v2420, %v2288
        %v2475 = vmul.f32 %v2425, %v2290
        %v2476 = vmul.f32 %v2430, %v2292
        %v2477 = vmul.f32 %v2435, %v2294
        %v2478 = vmul.f32 %v2440, %v2296
        %v2479 = vmul.f32 %v2445, %v2298
        %v2480 = vmul.f32 %v2450, %v2300
        %v2481 = vmul.f32 %v2455, %v2302
        %v2482 = vmul.f32 %v2460, %v2304
        %v2483 = vmul.f32 %v2465, %v2306
        %v2484 = vld [vmem:[%s366] sm:$0xff]
        %v2485 = vld [vmem:[%s366 + $0x8] sm:$0xff]
        %v2486 = vld [vmem:[%s366 + $0x10] sm:$0xff]
        %v2487 = vld [vmem:[%s366 + $0x18] sm:$0xff]
        %v2488 = vld [vmem:[%s366 + $0x20] sm:$0xff]
        %v2489 = vld [vmem:[%s366 + $0x28] sm:$0xff]
        %v2490 = vld [vmem:[%s366 + $0x30] sm:$0xff]
        %v2491 = vld [vmem:[%s366 + $0x38] sm:$0xff]
        %v2492 = vld [vmem:[%s366 + $0x40] sm:$0xff]
        %v2493 = vld [vmem:[%s366 + $0x48] sm:$0xff]
        %v2494 = vld [vmem:[%s366 + $0x50] sm:$0xff]
        %v2495 = vld [vmem:[%s366 + $0x58] sm:$0xff]
        %v2496 = vld [vmem:[%s366 + $0x60] sm:$0xff]
        %v2497 = vld [vmem:[%s366 + $0x68] sm:$0xff]
        %v2498 = vld [vmem:[%s366 + $0x70] sm:$0xff]
        %v2499 = vld [vmem:[%s366 + $0x78] sm:$0xff]
        %v2500 = vld [vmem:[#allocation5] sm:$0xff]
        %v2501 = vld [vmem:[#allocation5 + $0x8] sm:$0xff]
        %v2502 = vld [vmem:[#allocation5 + $0x10] sm:$0xff]
        %v2503 = vld [vmem:[#allocation5 + $0x18] sm:$0xff]
        %v2504 = vld [vmem:[#allocation5 + $0x20] sm:$0xff]
        %v2505 = vld [vmem:[#allocation5 + $0x28] sm:$0xff]
        %v2506 = vld [vmem:[#allocation5 + $0x30] sm:$0xff]
        %v2507 = vld [vmem:[#allocation5 + $0x38] sm:$0xff]
        %v2508 = vld [vmem:[#allocation5 + $0x40] sm:$0xff]
        %v2509 = vld [vmem:[#allocation5 + $0x48] sm:$0xff]
        %v2510 = vld [vmem:[#allocation5 + $0x50] sm:$0xff]
        %v2511 = vld [vmem:[#allocation5 + $0x58] sm:$0xff]
        %v2512 = vld [vmem:[#allocation5 + $0x60] sm:$0xff]
        %v2513 = vld [vmem:[#allocation5 + $0x68] sm:$0xff]
        %v2514 = vld [vmem:[#allocation5 + $0x70] sm:$0xff]
        %v2515 = vld [vmem:[#allocation5 + $0x78] sm:$0xff]
        %2516 = vmatprep.subr.mxu0 0.0
        %2517 = vmatpush1.msra.mxu0 %v2500
        %2518 = vmatprep.subr.mxu0 0.0
        %2519 = vmatpush1.msra.mxu0 %v2501
        %2520 = vmatprep.subr.mxu0 0.0
        %2521 = vmatpush1.msra.mxu0 %v2502
        %2522 = vmatprep.subr.mxu0 0.0
        %2523 = vmatpush1.msra.mxu0 %v2503
        %2524 = vmatprep.subr.mxu0 0.0
        %2525 = vmatpush1.msra.mxu0 %v2504
        %2526 = vmatprep.subr.mxu0 0.0
        %2527 = vmatpush1.msra.mxu0 %v2505
        %2528 = vmatprep.subr.mxu0 0.0
        %2529 = vmatpush1.msra.mxu0 %v2506
        %2530 = vmatprep.subr.mxu0 0.0
        %2531 = vmatpush1.msra.mxu0 %v2507
        %2532 = vmatprep.subr.mxu0 0.0
        %2533 = vmatpush1.msra.mxu0 %v2508
        %2534 = vmatprep.subr.mxu0 0.0
        %2535 = vmatpush1.msra.mxu0 %v2509
        %2536 = vmatprep.subr.mxu0 0.0
        %2537 = vmatpush1.msra.mxu0 %v2510
        %2538 = vmatprep.subr.mxu0 0.0
        %2539 = vmatpush1.msra.mxu0 %v2511
        %2540 = vmatprep.subr.mxu0 0.0
        %2541 = vmatpush1.msra.mxu0 %v2512
        %2542 = vmatprep.subr.mxu0 0.0
        %2543 = vmatpush1.msra.mxu0 %v2513
        %2544 = vmatprep.subr.mxu0 0.0
        %2545 = vmatpush1.msra.mxu0 %v2514
        %2546 = vmatprep.subr.mxu0 0.0
        %2547 = vmatpush1.msra.mxu0 %v2515
        %2548 = vmatprep.subr.mxu0 0.0
        %2549 = vmatpush1.msra.mxu0 0.0
        %2550 = vmatprep.subr.mxu0 0.0
        %2551 = vmatpush1.msra.mxu0 0.0
        %2552 = vmatprep.subr.mxu0 0.0
        %2553 = vmatpush1.msra.mxu0 0.0
        %2554 = vmatprep.subr.mxu0 0.0
        %2555 = vmatpush1.msra.mxu0 0.0
        %2556 = vmatprep.subr.mxu0 0.0
        %2557 = vmatpush1.msra.mxu0 0.0
        %2558 = vmatprep.subr.mxu0 0.0
        %2559 = vmatpush1.msra.mxu0 0.0
        %2560 = vmatprep.subr.mxu0 0.0
        %2561 = vmatpush1.msra.mxu0 0.0
        %2562 = vmatprep.subr.mxu0 0.0
        %2563 = vmatpush1.msra.mxu0 0.0
        %2564 = vmatprep.subr.mxu0 0.0
        %2565 = vmatpush1.msra.mxu0 0.0
        %2566 = vmatprep.subr.mxu0 0.0
        %2567 = vmatpush1.msra.mxu0 0.0
        %2568 = vmatprep.subr.mxu0 0.0
        %2569 = vmatpush1.msra.mxu0 0.0
        %2570 = vmatprep.subr.mxu0 0.0
        %2571 = vmatpush1.msra.mxu0 0.0
        %2572 = vmatprep.subr.mxu0 0.0
        %2573 = vmatpush1.msra.mxu0 0.0
        %2574 = vmatprep.subr.mxu0 0.0
        %2575 = vmatpush1.msra.mxu0 0.0
        %2576 = vmatprep.subr.mxu0 0.0
        %2577 = vmatpush1.msra.mxu0 0.0
        %2578 = vmatprep.subr.mxu0 0.0
        %2579 = vmatpush1.msra.mxu0 0.0
        %2580 = vmatprep.mubr.f32.mxu0 0.0
        %2581 = vmatmul.mubr.f32.gmra.mrb[0].mxu0 %v2484
        %v2582 = vpop.f32.mrb[0].mxu0
        %v2583 = vadd.f32 0.0, %v2582
        %v2584 = vpop.f32.mrb[0].mxu0
        %2585 = vmatprep.mubr.f32.mxu0 0.0
        %2586 = vmatmul.mubr.f32.gmra.mrb[0].mxu0 %v2485
        %v2587 = vpop.f32.mrb[0].mxu0
        %v2588 = vadd.f32 0.0, %v2587
        %v2589 = vpop.f32.mrb[0].mxu0
        %2590 = vmatprep.mubr.f32.mxu0 0.0
        %2591 = vmatmul.mubr.f32.gmra.mrb[0].mxu0 %v2486
        %v2592 = vpop.f32.mrb[0].mxu0
        %v2593 = vadd.f32 0.0, %v2592
        %v2594 = vpop.f32.mrb[0].mxu0
        %2595 = vmatprep.mubr.f32.mxu0 0.0
        %2596 = vmatmul.mubr.f32.gmra.mrb[0].mxu0 %v2487
        %v2597 = vpop.f32.mrb[0].mxu0
        %v2598 = vadd.f32 0.0, %v2597
        %v2599 = vpop.f32.mrb[0].mxu0
        %2600 = vmatprep.mubr.f32.mxu0 0.0
        %2601 = vmatmul.mubr.f32.gmra.mrb[0].mxu0 %v2488
        %v2602 = vpop.f32.mrb[0].mxu0
        %v2603 = vadd.f32 0.0, %v2602
        %v2604 = vpop.f32.mrb[0].mxu0
        %2605 = vmatprep.mubr.f32.mxu0 0.0
        %2606 = vmatmul.mubr.f32.gmra.mrb[0].mxu0 %v2489
        %v2607 = vpop.f32.mrb[0].mxu0
        %v2608 = vadd.f32 0.0, %v2607
        %v2609 = vpop.f32.mrb[0].mxu0
        %2610 = vmatprep.mubr.f32.mxu0 0.0
        %2611 = vmatmul.mubr.f32.gmra.mrb[0].mxu0 %v2490
        %v2612 = vpop.f32.mrb[0].mxu0
        %v2613 = vadd.f32 0.0, %v2612
        %v2614 = vpop.f32.mrb[0].mxu0
        %2615 = vmatprep.mubr.f32.mxu0 0.0
        %2616 = vmatmul.mubr.f32.gmra.mrb[0].mxu0 %v2491
        %v2617 = vpop.f32.mrb[0].mxu0
        %v2618 = vadd.f32 0.0, %v2617
        %v2619 = vpop.f32.mrb[0].mxu0
        %2620 = vmatprep.mubr.f32.mxu0 0.0
        %2621 = vmatmul.mubr.f32.gmra.mrb[0].mxu0 %v2492
        %v2622 = vpop.f32.mrb[0].mxu0
        %v2623 = vadd.f32 0.0, %v2622
        %v2624 = vpop.f32.mrb[0].mxu0
        %2625 = vmatprep.mubr.f32.mxu0 0.0
        %2626 = vmatmul.mubr.f32.gmra.mrb[0].mxu0 %v2493
        %v2627 = vpop.f32.mrb[0].mxu0
        %v2628 = vadd.f32 0.0, %v2627
        %v2629 = vpop.f32.mrb[0].mxu0
        %2630 = vmatprep.mubr.f32.mxu0 0.0
        %2631 = vmatmul.mubr.f32.gmra.mrb[0].mxu0 %v2494
        %v2632 = vpop.f32.mrb[0].mxu0
        %v2633 = vadd.f32 0.0, %v2632
        %v2634 = vpop.f32.mrb[0].mxu0
        %2635 = vmatprep.mubr.f32.mxu0 0.0
        %2636 = vmatmul.mubr.f32.gmra.mrb[0].mxu0 %v2495
        %v2637 = vpop.f32.mrb[0].mxu0
        %v2638 = vadd.f32 0.0, %v2637
        %v2639 = vpop.f32.mrb[0].mxu0
        %2640 = vmatprep.mubr.f32.mxu0 0.0
        %2641 = vmatmul.mubr.f32.gmra.mrb[0].mxu0 %v2496
        %v2642 = vpop.f32.mrb[0].mxu0
        %v2643 = vadd.f32 0.0, %v2642
        %v2644 = vpop.f32.mrb[0].mxu0
        %2645 = vmatprep.mubr.f32.mxu0 0.0
        %2646 = vmatmul.mubr.f32.gmra.mrb[0].mxu0 %v2497
        %v2647 = vpop.f32.mrb[0].mxu0
        %v2648 = vadd.f32 0.0, %v2647
        %v2649 = vpop.f32.mrb[0].mxu0
        %2650 = vmatprep.mubr.f32.mxu0 0.0
        %2651 = vmatmul.mubr.f32.gmra.mrb[0].mxu0 %v2498
        %v2652 = vpop.f32.mrb[0].mxu0
        %v2653 = vadd.f32 0.0, %v2652
        %v2654 = vpop.f32.mrb[0].mxu0
        %2655 = vmatprep.mubr.f32.mxu0 0.0
        %2656 = vmatmul.mubr.f32.gmra.mrb[0].mxu0 %v2499
        %v2657 = vpop.f32.mrb[0].mxu0
        %v2658 = vadd.f32 0.0, %v2657
        %v2659 = vpop.f32.mrb[0].mxu0
        %2660 = vdwg.mxu0
        %v2661 = vadd.f32 %v2468, %v2583
        %v2662 = vadd.f32 %v2469, %v2588
        %v2663 = vadd.f32 %v2470, %v2593
        %v2664 = vadd.f32 %v2471, %v2598
        %v2665 = vadd.f32 %v2472, %v2603
        %v2666 = vadd.f32 %v2473, %v2608
        %v2667 = vadd.f32 %v2474, %v2613
        %v2668 = vadd.f32 %v2475, %v2618
        %v2669 = vadd.f32 %v2476, %v2623
        %v2670 = vadd.f32 %v2477, %v2628
        %v2671 = vadd.f32 %v2478, %v2633
        %v2672 = vadd.f32 %v2479, %v2638
        %v2673 = vadd.f32 %v2480, %v2643
        %v2674 = vadd.f32 %v2481, %v2648
        %v2675 = vadd.f32 %v2482, %v2653
        %v2676 = vadd.f32 %v2483, %v2658
        %v2677 = vld [vmem:[%s5] sm:$0x1]
        %v2679 = vlaneseq
        %v2680 = vshrl.u32 %v2679, 7
        %v2681 = vsub.s32 0, %v2680
        %v2682 = vrot.slane %v2677, %v2681
        %v2684 = vadd.f32 %v2661, %v2682
        %v2685 = vadd.f32 %v2662, %v2682
        %v2686 = vadd.f32 %v2663, %v2682
        %v2687 = vadd.f32 %v2664, %v2682
        %v2688 = vadd.f32 %v2665, %v2682
        %v2689 = vadd.f32 %v2666, %v2682
        %v2690 = vadd.f32 %v2667, %v2682
        %v2691 = vadd.f32 %v2668, %v2682
        %v2692 = vadd.f32 %v2669, %v2682
        %v2693 = vadd.f32 %v2670, %v2682
        %v2694 = vadd.f32 %v2671, %v2682
        %v2695 = vadd.f32 %v2672, %v2682
        %v2696 = vadd.f32 %v2673, %v2682
        %v2697 = vadd.f32 %v2674, %v2682
        %v2698 = vadd.f32 %v2675, %v2682
        %v2699 = vadd.f32 %v2676, %v2682
        %v2700 = vmax.f32 %v2684, 0.0
        %v2701 = vmax.f32 %v2685, 0.0
        %v2702 = vmax.f32 %v2686, 0.0
        %v2703 = vmax.f32 %v2687, 0.0
        %v2704 = vmax.f32 %v2688, 0.0
        %v2705 = vmax.f32 %v2689, 0.0
        %v2706 = vmax.f32 %v2690, 0.0
        %v2707 = vmax.f32 %v2691, 0.0
        %v2708 = vmax.f32 %v2692, 0.0
        %v2709 = vmax.f32 %v2693, 0.0
        %v2710 = vmax.f32 %v2694, 0.0
        %v2711 = vmax.f32 %v2695, 0.0
        %v2712 = vmax.f32 %v2696, 0.0
        %v2713 = vmax.f32 %v2697, 0.0
        %v2714 = vmax.f32 %v2698, 0.0
        %v2715 = vmax.f32 %v2699, 0.0
        %v2716 = vld [vmem:[#allocation7] sm:$0xff]
        %v2717 = vld [vmem:[#allocation7 + $0x8] sm:$0xff]
        %v2718 = vld [vmem:[#allocation7 + $0x10] sm:$0xff]
        %v2719 = vld [vmem:[#allocation7 + $0x18] sm:$0xff]
        %v2720 = vld [vmem:[#allocation7 + $0x20] sm:$0xff]
        %v2721 = vld [vmem:[#allocation7 + $0x28] sm:$0xff]
        %v2722 = vld [vmem:[#allocation7 + $0x30] sm:$0xff]
        %v2723 = vld [vmem:[#allocation7 + $0x38] sm:$0xff]
        %v2724 = vld [vmem:[#allocation7 + $0x40] sm:$0xff]
        %v2725 = vld [vmem:[#allocation7 + $0x48] sm:$0xff]
        %v2726 = vld [vmem:[#allocation7 + $0x50] sm:$0xff]
        %v2727 = vld [vmem:[#allocation7 + $0x58] sm:$0xff]
        %v2728 = vld [vmem:[#allocation7 + $0x60] sm:$0xff]
        %v2729 = vld [vmem:[#allocation7 + $0x68] sm:$0xff]
        %v2730 = vld [vmem:[#allocation7 + $0x70] sm:$0xff]
        %v2731 = vld [vmem:[#allocation7 + $0x78] sm:$0xff]
        %v2732 = vld [vmem:[%s7] sm:$0x1]
        %v2734 = vlaneseq
        %v2735 = vshrl.u32 %v2734, 7
        %v2736 = vsub.s32 0, %v2735
        %v2737 = vrot.slane %v2732, %v2736
        %2739 = vmatprep.subr.mxu0 0.0
        %2740 = vmatpush1.msra.mxu0 %v2716
        %2741 = vmatprep.subr.mxu0 0.0
        %2742 = vmatpush1.msra.mxu0 %v2717
        %2743 = vmatprep.subr.mxu0 0.0
        %2744 = vmatpush1.msra.mxu0 %v2718
        %2745 = vmatprep.subr.mxu0 0.0
        %2746 = vmatpush1.msra.mxu0 %v2719
        %2747 = vmatprep.subr.mxu0 0.0
        %2748 = vmatpush1.msra.mxu0 %v2720
        %2749 = vmatprep.subr.mxu0 0.0
        %2750 = vmatpush1.msra.mxu0 %v2721
        %2751 = vmatprep.subr.mxu0 0.0
        %2752 = vmatpush1.msra.mxu0 %v2722
        %2753 = vmatprep.subr.mxu0 0.0
        %2754 = vmatpush1.msra.mxu0 %v2723
        %2755 = vmatprep.subr.mxu0 0.0
        %2756 = vmatpush1.msra.mxu0 %v2724
        %2757 = vmatprep.subr.mxu0 0.0
        %2758 = vmatpush1.msra.mxu0 %v2725
        %2759 = vmatprep.subr.mxu0 0.0
        %2760 = vmatpush1.msra.mxu0 %v2726
        %2761 = vmatprep.subr.mxu0 0.0
        %2762 = vmatpush1.msra.mxu0 %v2727
        %2763 = vmatprep.subr.mxu0 0.0
        %2764 = vmatpush1.msra.mxu0 %v2728
        %2765 = vmatprep.subr.mxu0 0.0
        %2766 = vmatpush1.msra.mxu0 %v2729
        %2767 = vmatprep.subr.mxu0 0.0
        %2768 = vmatpush1.msra.mxu0 %v2730
        %2769 = vmatprep.subr.mxu0 0.0
        %2770 = vmatpush1.msra.mxu0 %v2731
        %2771 = vmatprep.subr.mxu0 0.0
        %2772 = vmatpush1.msra.mxu0 0.0
        %2773 = vmatprep.subr.mxu0 0.0
        %2774 = vmatpush1.msra.mxu0 0.0
        %2775 = vmatprep.subr.mxu0 0.0
        %2776 = vmatpush1.msra.mxu0 0.0
        %2777 = vmatprep.subr.mxu0 0.0
        %2778 = vmatpush1.msra.mxu0 0.0
        %2779 = vmatprep.subr.mxu0 0.0
        %2780 = vmatpush1.msra.mxu0 0.0
        %2781 = vmatprep.subr.mxu0 0.0
        %2782 = vmatpush1.msra.mxu0 0.0
        %2783 = vmatprep.subr.mxu0 0.0
        %2784 = vmatpush1.msra.mxu0 0.0
        %2785 = vmatprep.subr.mxu0 0.0
        %2786 = vmatpush1.msra.mxu0 0.0
        %2787 = vmatprep.subr.mxu0 0.0
        %2788 = vmatpush1.msra.mxu0 0.0
        %2789 = vmatprep.subr.mxu0 0.0
        %2790 = vmatpush1.msra.mxu0 0.0
        %2791 = vmatprep.subr.mxu0 0.0
        %2792 = vmatpush1.msra.mxu0 0.0
        %2793 = vmatprep.subr.mxu0 0.0
        %2794 = vmatpush1.msra.mxu0 0.0
        %2795 = vmatprep.subr.mxu0 0.0
        %2796 = vmatpush1.msra.mxu0 0.0
        %2797 = vmatprep.subr.mxu0 0.0
        %2798 = vmatpush1.msra.mxu0 0.0
        %2799 = vmatprep.subr.mxu0 0.0
        %2800 = vmatpush1.msra.mxu0 0.0
        %2801 = vmatprep.subr.mxu0 0.0
        %2802 = vmatpush1.msra.mxu0 0.0
        %2803 = vmatprep.mubr.f32.mxu0 0.0
        %2804 = vmatmul.mubr.f32.gmra.mrb[0].mxu0 %v2700
        %v2805 = vpop.f32.mrb[0].mxu0
        %v2806 = vadd.f32 %v2737, %v2805
        %v2807 = vpop.f32.mrb[0].mxu0
        %2808 = vmatprep.mubr.f32.mxu0 0.0
        %2809 = vmatmul.mubr.f32.gmra.mrb[0].mxu0 %v2701
        %v2810 = vpop.f32.mrb[0].mxu0
        %v2811 = vadd.f32 %v2737, %v2810
        %v2812 = vpop.f32.mrb[0].mxu0
        %2813 = vmatprep.mubr.f32.mxu0 0.0
        %2814 = vmatmul.mubr.f32.gmra.mrb[0].mxu0 %v2702
        %v2815 = vpop.f32.mrb[0].mxu0
        %v2816 = vadd.f32 %v2737, %v2815
        %v2817 = vpop.f32.mrb[0].mxu0
        %2818 = vmatprep.mubr.f32.mxu0 0.0
        %2819 = vmatmul.mubr.f32.gmra.mrb[0].mxu0 %v2703
        %v2820 = vpop.f32.mrb[0].mxu0
        %v2821 = vadd.f32 %v2737, %v2820
        %v2822 = vpop.f32.mrb[0].mxu0
        %2823 = vmatprep.mubr.f32.mxu0 0.0
        %2824 = vmatmul.mubr.f32.gmra.mrb[0].mxu0 %v2704
        %v2825 = vpop.f32.mrb[0].mxu0
        %v2826 = vadd.f32 %v2737, %v2825
        %v2827 = vpop.f32.mrb[0].mxu0
        %2828 = vmatprep.mubr.f32.mxu0 0.0
        %2829 = vmatmul.mubr.f32.gmra.mrb[0].mxu0 %v2705
        %v2830 = vpop.f32.mrb[0].mxu0
        %v2831 = vadd.f32 %v2737, %v2830
        %v2832 = vpop.f32.mrb[0].mxu0
        %2833 = vmatprep.mubr.f32.mxu0 0.0
        %2834 = vmatmul.mubr.f32.gmra.mrb[0].mxu0 %v2706
        %v2835 = vpop.f32.mrb[0].mxu0
        %v2836 = vadd.f32 %v2737, %v2835
        %v2837 = vpop.f32.mrb[0].mxu0
        %2838 = vmatprep.mubr.f32.mxu0 0.0
        %2839 = vmatmul.mubr.f32.gmra.mrb[0].mxu0 %v2707
        %v2840 = vpop.f32.mrb[0].mxu0
        %v2841 = vadd.f32 %v2737, %v2840
        %v2842 = vpop.f32.mrb[0].mxu0
        %2843 = vmatprep.mubr.f32.mxu0 0.0
        %2844 = vmatmul.mubr.f32.gmra.mrb[0].mxu0 %v2708
        %v2845 = vpop.f32.mrb[0].mxu0
        %v2846 = vadd.f32 %v2737, %v2845
        %v2847 = vpop.f32.mrb[0].mxu0
        %2848 = vmatprep.mubr.f32.mxu0 0.0
        %2849 = vmatmul.mubr.f32.gmra.mrb[0].mxu0 %v2709
        %v2850 = vpop.f32.mrb[0].mxu0
        %v2851 = vadd.f32 %v2737, %v2850
        %v2852 = vpop.f32.mrb[0].mxu0
        %2853 = vmatprep.mubr.f32.mxu0 0.0
        %2854 = vmatmul.mubr.f32.gmra.mrb[0].mxu0 %v2710
        %v2855 = vpop.f32.mrb[0].mxu0
        %v2856 = vadd.f32 %v2737, %v2855
        %v2857 = vpop.f32.mrb[0].mxu0
        %2858 = vmatprep.mubr.f32.mxu0 0.0
        %2859 = vmatmul.mubr.f32.gmra.mrb[0].mxu0 %v2711
        %v2860 = vpop.f32.mrb[0].mxu0
        %v2861 = vadd.f32 %v2737, %v2860
        %v2862 = vpop.f32.mrb[0].mxu0
        %2863 = vmatprep.mubr.f32.mxu0 0.0
        %2864 = vmatmul.mubr.f32.gmra.mrb[0].mxu0 %v2712
        %v2865 = vpop.f32.mrb[0].mxu0
        %v2866 = vadd.f32 %v2737, %v2865
        %v2867 = vpop.f32.mrb[0].mxu0
        %2868 = vmatprep.mubr.f32.mxu0 0.0
        %2869 = vmatmul.mubr.f32.gmra.mrb[0].mxu0 %v2713
        %v2870 = vpop.f32.mrb[0].mxu0
        %v2871 = vadd.f32 %v2737, %v2870
        %v2872 = vpop.f32.mrb[0].mxu0
        %2873 = vmatprep.mubr.f32.mxu0 0.0
        %2874 = vmatmul.mubr.f32.gmra.mrb[0].mxu0 %v2714
        %v2875 = vpop.f32.mrb[0].mxu0
        %v2876 = vadd.f32 %v2737, %v2875
        %v2877 = vpop.f32.mrb[0].mxu0
        %2878 = vmatprep.mubr.f32.mxu0 0.0
        %2879 = vmatmul.mubr.f32.gmra.mrb[0].mxu0 %v2715
        %v2880 = vpop.f32.mrb[0].mxu0
        %v2881 = vadd.f32 %v2737, %v2880
        %v2882 = vpop.f32.mrb[0].mxu0
        %2883 = vdwg.mxu0
        %v2884 = vmax.f32 %v2806, 0.0
        %v2885 = vmax.f32 %v2811, 0.0
        %v2886 = vmax.f32 %v2816, 0.0
        %v2887 = vmax.f32 %v2821, 0.0
        %v2888 = vmax.f32 %v2826, 0.0
        %v2889 = vmax.f32 %v2831, 0.0
        %v2890 = vmax.f32 %v2836, 0.0
        %v2891 = vmax.f32 %v2841, 0.0
        %v2892 = vmax.f32 %v2846, 0.0
        %v2893 = vmax.f32 %v2851, 0.0
        %v2894 = vmax.f32 %v2856, 0.0
        %v2895 = vmax.f32 %v2861, 0.0
        %v2896 = vmax.f32 %v2866, 0.0
        %v2897 = vmax.f32 %v2871, 0.0
        %v2898 = vmax.f32 %v2876, 0.0
        %v2899 = vmax.f32 %v2881, 0.0
        %2900 = vst [vmem:[%s424] sm:$0xff] %v2884
        %2901 = vst [vmem:[%s424 + $0x8] sm:$0xff] %v2885
        %2902 = vst [vmem:[%s424 + $0x10] sm:$0xff] %v2886
        %2903 = vst [vmem:[%s424 + $0x18] sm:$0xff] %v2887
        %2904 = vst [vmem:[%s424 + $0x20] sm:$0xff] %v2888
        %2905 = vst [vmem:[%s424 + $0x28] sm:$0xff] %v2889
        %2906 = vst [vmem:[%s424 + $0x30] sm:$0xff] %v2890
        %2907 = vst [vmem:[%s424 + $0x38] sm:$0xff] %v2891
        %2908 = vst [vmem:[%s424 + $0x40] sm:$0xff] %v2892
        %2909 = vst [vmem:[%s424 + $0x48] sm:$0xff] %v2893
        %2910 = vst [vmem:[%s424 + $0x50] sm:$0xff] %v2894
        %2911 = vst [vmem:[%s424 + $0x58] sm:$0xff] %v2895
        %2912 = vst [vmem:[%s424 + $0x60] sm:$0xff] %v2896
        %2913 = vst [vmem:[%s424 + $0x68] sm:$0xff] %v2897
        %2914 = vst [vmem:[%s424 + $0x70] sm:$0xff] %v2898
        %2915 = vst [vmem:[%s424 + $0x78] sm:$0xff] %v2899
        %s2916 = sand.u32 %s240, 1
        %s2917 = scalar_lea.sflag [#allocation4], %s2916
        %s2918 = sand.u32 %s240, 1
        %s2919 = smul.addr %s2918, 128
        %s2920 = scalar_lea.vmem [#allocation8], %s2919
        // Predicated region
        $region65: #{tpu_custom_call.1} parent=51 // pred_check
          %p2921 = pneg %p250
        $region66: #{tpu_custom_call.1} parent=51 // pred_check_branch
          %2923 = sbr.rel (%p2921) target = $region68
        $region67: #{tpu_custom_call.1} parent=51 // pred_region
          %s2924 = smul.u32 16, %s31
          %s2926 = ssub.s32 2048, 2048
          %2927 = vsyncadd %s2917, %s2926
          %s2928 = smul.addr %s30, 16
          %s2929 = sadd.s32 %s2924, %s2928
          %s2930 = smul.addr %s2929, 128
          %s2931 = scalar_lea.hbm %s8, %s2930
          %s2932 = sshll.u32 %s2920, 4
          %s2933 = int_to_ptr.vmem [resolvable:$true] %s2932
          %2938 = dma.vmem_to_hbm [thread:$0]  %s2933, 2048, %s2931, %s2917, 128, 128, 8
        $region68: #{tpu_custom_call.1} parent=51 // pred_fallthru
          _
      $region52: #{tpu_custom_call.1} parent=5 // pred_fallthru
        _
      %p2939 = scmp.le.s32.totalorder 2, %s21
      // Predicated region
      $region69: #{tpu_custom_call.1} parent=5 // pred_check
        %p2940 = pneg %p2939
      $region70: #{tpu_custom_call.1} parent=5 // pred_check_branch
        %2942 = sbr.rel (%p2940) target = $region72
      $region71: #{tpu_custom_call.1} parent=5 // pred_region
        %s2943 = ssub.s32 %s21, 2
        // Predicated region
        $region73: #{tpu_custom_call.1} parent=71 // pred_check
          %p2944 = pneg %p256
        $region74: #{tpu_custom_call.1} parent=71 // pred_check_branch
          %2946 = sbr.rel (%p2944) target = $region76
        $region75: #{tpu_custom_call.1} parent=71 // pred_region
          %s2947 = sand.u32 %s241, 1
          %s2948 = scalar_lea.sflag [#allocation4], %s2947
          %s2949 = sand.u32 %s241, 1
          %s2950 = smul.addr %s2949, 128
          %s2951 = scalar_lea.vmem [#allocation8], %s2950
          %2952 = dma.done %s2948, 2048
        $region76: #{tpu_custom_call.1} parent=71 // pred_fallthru
          _
      $region72: #{tpu_custom_call.1} parent=5 // pred_fallthru
        _
    $region6: #{tpu_custom_call.1} parent=1 // loop_footer
      %s25 = sadd.s32 1, %s21
    $region7: #{tpu_custom_call.1} parent=1 // loop_footer_branch
      %20 = sbr.rel target = $region3
    $region8: #{tpu_custom_call.1} parent=1 // loop_exit
      _
    %2953 = vsyncpa [#allocation3], 1
    %s2954 = scalar_lea.sflag [#allocation3], 1
    %2955 = vsyncpa %s2954, 1
    %2956 = vsyncpa [#allocation6], 1
    %2957 = vsyncpa [#allocation4], 1
    %s2958 = scalar_lea.sflag [#allocation4], 1
    %2959 = vsyncpa %s2958, 1

// kernel: tpu_custom_call.1
$region0: #{tpu_custom_call.1}
  #allocation0 [shape = 'u32[]', space=smem, size = 0x4, offset = 0x4, fixed_abs, tag = 'smem constant byte address 0x4 - core index']
  #allocation1 [shape = 'u32[144,128]{1,0:T(1,128)}', space=vmem, size = 0x12000, scoped, tag = 'internal scratch']
  %s0 = inlined_call_operand.vmem [shape: f32[2,128,8], index: 0, kind: input, shape index: {}]
  %s1 = inlined_call_operand.vmem [shape: f32[2,8,128], index: 1, kind: input, shape index: {}]
  %s2 = inlined_call_operand.vmem [shape: f32[2,128,128], index: 2, kind: input, shape index: {}]
  %s3 = inlined_call_operand.hbm [shape: f32[2,128,128], index: 3, kind: input, shape index: {}]
  %s4 = inlined_call_operand.hbm [shape: f32[128,128], index: 4, kind: input, shape index: {}]
  %s5 = inlined_call_operand.vmem [shape: f32[1,128], index: 5, kind: input, shape index: {}]
  %s6 = inlined_call_operand.hbm [shape: f32[128,128], index: 6, kind: input, shape index: {}]
  %s7 = inlined_call_operand.vmem [shape: f32[1,128], index: 7, kind: input, shape index: {}]
  %s8 = inlined_call_operand.hbm [shape: f32[2,128,128], index: 8, kind: output, shape index: {}]
  %s9 = sld [smem:[#allocation0]]
  $region77: #{tpu_custom_call.1} parent=0
    _
  %s11 = ssub.s32 1, %s9
  %s12 = scalar_select 0, %s11, %s9
  $region1: #{tpu_custom_call.1} parent=0
    #allocation2 [shape = 'u8[131072]{0}', space=vmem, size = 0x20000, scoped, tag = 'input window, operand 3']
    #allocation3 [shape = 's32[2]{0}', space=sflag, size = 0x8, scoped, tag = 'scoped memory for tpu_custom_call.1']
    #allocation4 [shape = 's32[2]{0}', space=sflag, size = 0x8, scoped, tag = 'scoped memory for tpu_custom_call.1']
    #allocation5 [shape = 'u8[65536]{0}', space=vmem, size = 0x10000, scoped, tag = 'input window, operand 4, single buffered']
    #allocation6 [shape = 's32[1]{0}', space=sflag, size = 0x4, scoped, tag = 'scoped memory for tpu_custom_call.1']
    #allocation7 [shape = 'u8[65536]{0}', space=vmem, size = 0x10000, scoped, tag = 'input window, operand 6, single buffered']
    #allocation8 [shape = 'u8[131072]{0}', space=vmem, size = 0x20000, scoped, tag = 'output window, operand 0']
    %13 = vsyncpa [#allocation3], 0
    %s14 = scalar_lea.sflag [#allocation3], 1
    %15 = vsyncpa %s14, 0
    %16 = vsyncpa [#allocation6], 0
    %17 = vsyncpa [#allocation4], 0
    %s18 = scalar_lea.sflag [#allocation4], 1
    %19 = vsyncpa %s18, 0
    loop: start=0, step=1, limit=4
    $region2: #{tpu_custom_call.1} parent=1 // loop_pre_header
      _
    $region3: #{tpu_custom_call.1} parent=1 // loop_header
      %s21 = sphi 0, %s25
      %p22 = scmp.ge.s32.totalorder %s21, 4
      %s28 = sphi 0, %s40
      %s29 = sphi 0, %s36
      %s30 = sphi 0, %s28
      %s31 = sphi 0, %s29
      %s32 = sphi 0, %s30
      %s33 = sphi 0, %s31
      %s45 = sphi 0, %s47
      %s48 = sphi 0, %s45
      %s49 = sphi 0, %s48
      %s65 = sphi 0, %s49
      %s71 = sphi 0, %s73
      %s74 = sphi 0, %s71
      %s75 = sphi 0, %s74
      %s91 = sphi 0, %s75
      %s97 = sphi 0, %s99
      %s100 = sphi 0, %s97
      %s101 = sphi 0, %s100
      %s117 = sphi 0, %s101
      %s125 = sphi 0, %s127
      %s128 = sphi 0, %s125
      %s129 = sphi 0, %s128
      %s145 = sphi 0, %s129
      %s149 = sphi 0, %s149
      %s151 = sphi 0, %s149
      %s152 = sphi 0, %s151
      %s166 = sphi 0, %s152
      %s170 = sphi 0, %s170
      %s172 = sphi 0, %s170
      %s173 = sphi 0, %s172
      %s187 = sphi 0, %s173
      %s191 = sphi 0, %s191
      %s193 = sphi 0, %s191
      %s194 = sphi 0, %s193
      %s208 = sphi 0, %s194
      %s212 = sphi 0, %s212
      %s214 = sphi 0, %s212
      %s215 = sphi 0, %s214
      %s229 = sphi 0, %s215
      %s237 = sphi 0, %s239
      %s240 = sphi 0, %s237
      %s241 = sphi 0, %s240
      %s257 = sphi 0, %s241
    $region4: #{tpu_custom_call.1} parent=1 // loop_header_branch
      %24 = sbr.rel (%p22) target = $region8
    $region5: #{tpu_custom_call.1} parent=1 // loop_body
      %s26 = ssub.s32 %s21, 1
      %s27 = ssub.s32 %s21, 2
      %s34 = sadd.s32 1, %s29
      %p35 = scmp.ge.s32.totalorder %s34, 1
      %s36 = scalar_select %p35, 0, %s34
      %s37 = sadd.s32 1, %s28
      %s38 = scalar_select %p35, %s37, %s28
      %p39 = scmp.ge.s32.totalorder %s38, 2
      %s40 = scalar_select %p39, 0, %s38
      %s41 = ssub.s32 %s28, %s40
      %s42 = ssub.s32 %s29, %s36
      %s43 = sor.u32 %s41, %s42
      %p44 = scmp.eq.s32.totalorder %s43, 0
      %s46 = sadd.s32 %s45, 1
      %s47 = scalar_select %p44, %s45, %s46
      %p50 = pneg %p44
      %p51 = scmp.eq.s32.totalorder %s21, 1
      %p52 = por %p50, %p51
      %p53 = scmp.ne.s32.totalorder %s45, %s48
      %p54 = scmp.eq.s32.totalorder %s21, 0
      %p55 = por %p53, %p54
      %p56 = scmp.ne.s32.totalorder %s45, %s48
      %p57 = scmp.eq.s32.totalorder %s26, 1
      %p58 = por %p56, %p57
      %p59 = scmp.ne.s32.totalorder %s48, %s49
      %p60 = scmp.eq.s32.totalorder %s26, 0
      %p61 = por %p59, %p60
      %p62 = scmp.ne.s32.totalorder %s48, %s49
      %p63 = scmp.eq.s32.totalorder %s27, 1
      %p64 = por %p62, %p63
      %p66 = scmp.ne.s32.totalorder %s49, %s65
      %p67 = scmp.eq.s32.totalorder %s27, 0
      %p68 = por %p66, %p67
      %s69 = ssub.s32 %s28, %s40
      %p70 = scmp.eq.s32.totalorder %s69, 0
      %s72 = sadd.s32 %s71, 1
      %s73 = scalar_select %p70, %s71, %s72
      %p76 = pneg %p70
      %p77 = scmp.eq.s32.totalorder %s21, 1
      %p78 = por %p76, %p77
      %p79 = scmp.ne.s32.totalorder %s71, %s74
      %p80 = scmp.eq.s32.totalorder %s21, 0
      %p81 = por %p79, %p80
      %p82 = scmp.ne.s32.totalorder %s71, %s74
      %p83 = scmp.eq.s32.totalorder %s26, 1
      %p84 = por %p82, %p83
      %p85 = scmp.ne.s32.totalorder %s74, %s75
      %p86 = scmp.eq.s32.totalorder %s26, 0
      %p87 = por %p85, %p86
      %p88 = scmp.ne.s32.totalorder %s74, %s75
      %p89 = scmp.eq.s32.totalorder %s27, 1
      %p90 = por %p88, %p89
      %p92 = scmp.ne.s32.totalorder %s75, %s91
      %p93 = scmp.eq.s32.totalorder %s27, 0
      %p94 = por %p92, %p93
      %s95 = ssub.s32 %s28, %s40
      %p96 = scmp.eq.s32.totalorder %s95, 0
      %s98 = sadd.s32 %s97, 1
      %s99 = scalar_select %p96, %s97, %s98
      %p102 = pneg %p96
      %p103 = scmp.eq.s32.totalorder %s21, 1
      %p104 = por %p102, %p103
      %p105 = scmp.ne.s32.totalorder %s97, %s100
      %p106 = scmp.eq.s32.totalorder %s21, 0
      %p107 = por %p105, %p106
      %p108 = scmp.ne.s32.totalorder %s97, %s100
      %p109 = scmp.eq.s32.totalorder %s26, 1
      %p110 = por %p108, %p109
      %p111 = scmp.ne.s32.totalorder %s100, %s101
      %p112 = scmp.eq.s32.totalorder %s26, 0
      %p113 = por %p111, %p112
      %p114 = scmp.ne.s32.totalorder %s100, %s101
      %p115 = scmp.eq.s32.totalorder %s27, 1
      %p116 = por %p114, %p115
      %p118 = scmp.ne.s32.totalorder %s101, %s117
      %p119 = scmp.eq.s32.totalorder %s27, 0
      %p120 = por %p118, %p119
      %s121 = ssub.s32 %s28, %s40
      %s122 = ssub.s32 %s29, %s36
      %s123 = sor.u32 %s121, %s122
      %p124 = scmp.eq.s32.totalorder %s123, 0
      %s126 = sadd.s32 %s125, 1
      %s127 = scalar_select %p124, %s125, %s126
      %p130 = pneg %p124
      %p131 = scmp.eq.s32.totalorder %s21, 1
      %p132 = por %p130, %p131
      %p133 = scmp.ne.s32.totalorder %s125, %s128
      %p134 = scmp.eq.s32.totalorder %s21, 0
      %p135 = por %p133, %p134
      %p136 = scmp.ne.s32.totalorder %s125, %s128
      %p137 = scmp.eq.s32.totalorder %s26, 1
      %p138 = por %p136, %p137
      %p139 = scmp.ne.s32.totalorder %s128, %s129
      %p140 = scmp.eq.s32.totalorder %s26, 0
      %p141 = por %p139, %p140
      %p142 = scmp.ne.s32.totalorder %s128, %s129
      %p143 = scmp.eq.s32.totalorder %s27, 1
      %p144 = por %p142, %p143
      %p146 = scmp.ne.s32.totalorder %s129, %s145
      %p147 = scmp.eq.s32.totalorder %s27, 0
      %p148 = por %p146, %p147
      %s150 = sadd.s32 %s149, 1
      %p153 = scmp.eq.s32.totalorder %s21, 1
      %p154 = scmp.ne.s32.totalorder %s149, %s151
      %p155 = scmp.eq.s32.totalorder %s21, 0
      %p156 = por %p154, %p155
      %p157 = scmp.ne.s32.totalorder %s149, %s151
      %p158 = scmp.eq.s32.totalorder %s26, 1
      %p159 = por %p157, %p158
      %p160 = scmp.ne.s32.totalorder %s151, %s152
      %p161 = scmp.eq.s32.totalorder %s26, 0
      %p162 = por %p160, %p161
      %p163 = scmp.ne.s32.totalorder %s151, %s152
      %p164 = scmp.eq.s32.totalorder %s27, 1
      %p165 = por %p163, %p164
      %p167 = scmp.ne.s32.totalorder %s152, %s166
      %p168 = scmp.eq.s32.totalorder %s27, 0
      %p169 = por %p167, %p168
      %s171 = sadd.s32 %s170, 1
      %p174 = scmp.eq.s32.totalorder %s21, 1
      %p175 = scmp.ne.s32.totalorder %s170, %s172
      %p176 = scmp.eq.s32.totalorder %s21, 0
      %p177 = por %p175, %p176
      %p178 = scmp.ne.s32.totalorder %s170, %s172
      %p179 = scmp.eq.s32.totalorder %s26, 1
      %p180 = por %p178, %p179
      %p181 = scmp.ne.s32.totalorder %s172, %s173
      %p182 = scmp.eq.s32.totalorder %s26, 0
      %p183 = por %p181, %p182
      %p184 = scmp.ne.s32.totalorder %s172, %s173
      %p185 = scmp.eq.s32.totalorder %s27, 1
      %p186 = por %p184, %p185
      %p188 = scmp.ne.s32.totalorder %s173, %s187
      %p189 = scmp.eq.s32.totalorder %s27, 0
      %p190 = por %p188, %p189
      %s192 = sadd.s32 %s191, 1
      %p195 = scmp.eq.s32.totalorder %s21, 1
      %p196 = scmp.ne.s32.totalorder %s191, %s193
      %p197 = scmp.eq.s32.totalorder %s21, 0
      %p198 = por %p196, %p197
      %p199 = scmp.ne.s32.totalorder %s191, %s193
      %p200 = scmp.eq.s32.totalorder %s26, 1
      %p201 = por %p199, %p200
      %p202 = scmp.ne.s32.totalorder %s193, %s194
      %p203 = scmp.eq.s32.totalorder %s26, 0
      %p204 = por %p202, %p203
      %p205 = scmp.ne.s32.totalorder %s193, %s194
      %p206 = scmp.eq.s32.totalorder %s27, 1
      %p207 = por %p205, %p206
      %p209 = scmp.ne.s32.totalorder %s194, %s208
      %p210 = scmp.eq.s32.totalorder %s27, 0
      %p211 = por %p209, %p210
      %s213 = sadd.s32 %s212, 1
      %p216 = scmp.eq.s32.totalorder %s21, 1
      %p217 = scmp.ne.s32.totalorder %s212, %s214
      %p218 = scmp.eq.s32.totalorder %s21, 0
      %p219 = por %p217, %p218
      %p220 = scmp.ne.s32.totalorder %s212, %s214
      %p221 = scmp.eq.s32.totalorder %s26, 1
      %p222 = por %p220, %p221
      %p223 = scmp.ne.s32.totalorder %s214, %s215
      %p224 = scmp.eq.s32.totalorder %s26, 0
      %p225 = por %p223, %p224
      %p226 = scmp.ne.s32.totalorder %s214, %s215
      %p227 = scmp.eq.s32.totalorder %s27, 1
      %p228 = por %p226, %p227
      %p230 = scmp.ne.s32.totalorder %s215, %s229
      %p231 = scmp.eq.s32.totalorder %s27, 0
      %p232 = por %p230, %p231
      %s233 = ssub.s32 %s28, %s40
      %s234 = ssub.s32 %s29, %s36
      %s235 = sor.u32 %s233, %s234
      %p236 = scmp.eq.s32.totalorder %s235, 0
      %s238 = sadd.s32 %s237, 1
      %s239 = scalar_select %p236, %s237, %s238
      %p242 = pneg %p236
      %p243 = scmp.eq.s32.totalorder %s21, 1
      %p244 = por %p242, %p243
      %p245 = scmp.ne.s32.totalorder %s237, %s240
      %p246 = scmp.eq.s32.totalorder %s21, 0
      %p247 = por %p245, %p246
      %p248 = scmp.ne.s32.totalorder %s237, %s240
      %p249 = scmp.eq.s32.totalorder %s26, 1
      %p250 = por %p248, %p249
      %p251 = scmp.ne.s32.totalorder %s240, %s241
      %p252 = scmp.eq.s32.totalorder %s26, 0
      %p253 = por %p251, %p252
      %p254 = scmp.ne.s32.totalorder %s240, %s241
      %p255 = scmp.eq.s32.totalorder %s27, 1
      %p256 = por %p254, %p255
      %p258 = scmp.ne.s32.totalorder %s241, %s257
      %p259 = scmp.eq.s32.totalorder %s27, 0
      %p260 = por %p258, %p259
      %p261 = scmp.le.s32.totalorder 1, %s21
      %p262 = scmp.lt.s32.totalorder %s21, 3
      %p263 = pnand %p261, %p262
      %p264 = pneg %p263
      // Predicated region
      $region9: #{tpu_custom_call.1} parent=5 // pred_check
        _
      $region10: #{tpu_custom_call.1} parent=5 // pred_check_branch
        %266 = sbr.rel (%p263) target = $region12
      $region11: #{tpu_custom_call.1} parent=5 // pred_region
        %s267 = ssub.s32 %s21, 1
        // Predicated region
        $region13: #{tpu_custom_call.1} parent=11 // pred_check
          %p268 = pneg %p162
        $region14: #{tpu_custom_call.1} parent=11 // pred_check_branch
          %270 = sbr.rel (%p268) target = $region16
        $region15: #{tpu_custom_call.1} parent=11 // pred_region
          %s272 = ssub.s32 2048, 2048
          %273 = vsyncadd [#allocation6], %s272
          %s274 = sshll.u32 [#allocation5], 4
          %s275 = int_to_ptr.vmem [resolvable:$true] %s274
          %280 = dma.hbm_to_vmem [thread:$0]  %s4, 2048, %s275, [#allocation6], 128, 128, 8
        $region16: #{tpu_custom_call.1} parent=11 // pred_fallthru
          _
        // Predicated region
        $region17: #{tpu_custom_call.1} parent=11 // pred_check
          %p281 = pneg %p183
        $region18: #{tpu_custom_call.1} parent=11 // pred_check_branch
          %283 = sbr.rel (%p281) target = $region20
        $region19: #{tpu_custom_call.1} parent=11 // pred_region
          _
        $region20: #{tpu_custom_call.1} parent=11 // pred_fallthru
          _
        // Predicated region
        $region21: #{tpu_custom_call.1} parent=11 // pred_check
          %p284 = pneg %p204
        $region22: #{tpu_custom_call.1} parent=11 // pred_check_branch
          %286 = sbr.rel (%p284) target = $region24
        $region23: #{tpu_custom_call.1} parent=11 // pred_region
          %s288 = ssub.s32 2048, 2048
          %289 = vsyncadd [#allocation6], %s288
          %s290 = sshll.u32 [#allocation7], 4
          %s291 = int_to_ptr.vmem [resolvable:$true] %s290
          %296 = dma.hbm_to_vmem [thread:$0]  %s6, 2048, %s291, [#allocation6], 128, 128, 8
        $region24: #{tpu_custom_call.1} parent=11 // pred_fallthru
          _
        // Predicated region
        $region25: #{tpu_custom_call.1} parent=11 // pred_check
          %p297 = pneg %p225
        $region26: #{tpu_custom_call.1} parent=11 // pred_check_branch
          %299 = sbr.rel (%p297) target = $region28
        $region27: #{tpu_custom_call.1} parent=11 // pred_region
          _
        $region28: #{tpu_custom_call.1} parent=11 // pred_fallthru
          _
      $region12: #{tpu_custom_call.1} parent=5 // pred_fallthru
        _
      %p300 = scmp.lt.s32.totalorder %s21, 2
      // Predicated region
      $region29: #{tpu_custom_call.1} parent=5 // pred_check
        %p301 = pneg %p300
      $region30: #{tpu_custom_call.1} parent=5 // pred_check_branch
        %303 = sbr.rel (%p301) target = $region32
      $region31: #{tpu_custom_call.1} parent=5 // pred_region
        // Predicated region
        $region33: #{tpu_custom_call.1} parent=31 // pred_check
          %p304 = pneg %p55
        $region34: #{tpu_custom_call.1} parent=31 // pred_check_branch
          %306 = sbr.rel (%p304) target = $region36
        $region35: #{tpu_custom_call.1} parent=31 // pred_region
          %s307 = smul.u32 16, %s29
          %p308 = scmp.lt.s32.totalorder %s28, 1
          %s309 = scalar_select %p308, %s28, 1
          %p310 = scmp.lt.s32.totalorder %s307, 15
          %s311 = scalar_select %p310, %s307, 15
          %s312 = smul.addr %s309, 16
          %s313 = sadd.s32 %s311, %s312
          %s314 = smul.addr %s313, 8
          %s315 = scalar_lea.vmem %s0, %s314
          %s316 = smul.u32 16, %s29
        $region36: #{tpu_custom_call.1} parent=31 // pred_fallthru
          _
        // Predicated region
        $region37: #{tpu_custom_call.1} parent=31 // pred_check
          %p317 = pneg %p81
        $region38: #{tpu_custom_call.1} parent=31 // pred_check_branch
          %319 = sbr.rel (%p317) target = $region40
        $region39: #{tpu_custom_call.1} parent=31 // pred_region
          %p320 = scmp.lt.s32.totalorder %s28, 1
          %s321 = scalar_select %p320, %s28, 1
          %s322 = smul.addr %s321, 8
          %s323 = scalar_lea.vmem %s1, %s322
        $region40: #{tpu_custom_call.1} parent=31 // pred_fallthru
          _
        // Predicated region
        $region41: #{tpu_custom_call.1} parent=31 // pred_check
          %p324 = pneg %p107
        $region42: #{tpu_custom_call.1} parent=31 // pred_check_branch
          %326 = sbr.rel (%p324) target = $region44
        $region43: #{tpu_custom_call.1} parent=31 // pred_region
          %p327 = scmp.lt.s32.totalorder %s28, 1
          %s328 = scalar_select %p327, %s28, 1
          %s329 = smul.addr %s328, 16
          %s330 = smul.addr %s329, 8
          %s331 = scalar_lea.vmem %s2, %s330
        $region44: #{tpu_custom_call.1} parent=31 // pred_fallthru
          _
        // Predicated region
        $region45: #{tpu_custom_call.1} parent=31 // pred_check
          %p332 = pneg %p135
        $region46: #{tpu_custom_call.1} parent=31 // pred_check_branch
          %334 = sbr.rel (%p332) target = $region48
        $region47: #{tpu_custom_call.1} parent=31 // pred_region
          %s335 = sand.u32 %s125, 1
          %s336 = scalar_lea.sflag [#allocation3], %s335
          %s337 = sand.u32 %s125, 1
          %s338 = smul.addr %s337, 128
          %s339 = scalar_lea.vmem [#allocation2], %s338
          %s340 = smul.u32 16, %s29
          %s342 = ssub.s32 2048, 2048
          %343 = vsyncadd %s336, %s342
          %s344 = smul.addr %s28, 16
          %s345 = sadd.s32 %s340, %s344
          %s346 = smul.addr %s345, 128
          %s347 = scalar_lea.hbm %s3, %s346
          %s348 = sshll.u32 %s339, 4
          %s349 = int_to_ptr.vmem [resolvable:$true] %s348
          %354 = dma.hbm_to_vmem [thread:$0]  %s347, 2048, %s349, %s336, 128, 128, 8
        $region48: #{tpu_custom_call.1} parent=31 // pred_fallthru
          _
      $region32: #{tpu_custom_call.1} parent=5 // pred_fallthru
        _
      %p355 = scmp.le.s32.totalorder 1, %s21
      %p356 = scmp.lt.s32.totalorder %s21, 3
      %p357 = pnand %p355, %p356
      %p358 = pneg %p357
      // Predicated region
      $region49: #{tpu_custom_call.1} parent=5 // pred_check
        _
      $region50: #{tpu_custom_call.1} parent=5 // pred_check_branch
        %360 = sbr.rel (%p357) target = $region52
      $region51: #{tpu_custom_call.1} parent=5 // pred_region
        %s361 = ssub.s32 %s21, 1
        %s362 = sand.u32 %s128, 1
        %s363 = scalar_lea.sflag [#allocation3], %s362
        %s364 = sand.u32 %s128, 1
        %s365 = smul.addr %s364, 128
        %s366 = scalar_lea.vmem [#allocation2], %s365
        // Predicated region
        $region53: #{tpu_custom_call.1} parent=51 // pred_check
          %p367 = pneg %p141
        $region54: #{tpu_custom_call.1} parent=51 // pred_check_branch
          %369 = sbr.rel (%p367) target = $region56
        $region55: #{tpu_custom_call.1} parent=51 // pred_region
          %370 = dma.done %s363, 2048
        $region56: #{tpu_custom_call.1} parent=51 // pred_fallthru
          _
        // Predicated region
        $region57: #{tpu_custom_call.1} parent=51 // pred_check
          %p371 = pneg %p162
        $region58: #{tpu_custom_call.1} parent=51 // pred_check_branch
          %373 = sbr.rel (%p371) target = $region60
        $region59: #{tpu_custom_call.1} parent=51 // pred_region
          %374 = dma.done [#allocation6], 2048
        $region60: #{tpu_custom_call.1} parent=51 // pred_fallthru
          _
        // Predicated region
        $region61: #{tpu_custom_call.1} parent=51 // pred_check
          %p375 = pneg %p204
        $region62: #{tpu_custom_call.1} parent=51 // pred_check_branch
          %377 = sbr.rel (%p375) target = $region64
        $region63: #{tpu_custom_call.1} parent=51 // pred_region
          %378 = dma.done [#allocation6], 2048
        $region64: #{tpu_custom_call.1} parent=51 // pred_fallthru
          _
        %s379 = smul.u32 16, %s31
        %p380 = scmp.lt.s32.totalorder %s30, 1
        %s381 = scalar_select %p380, %s30, 1
        %p382 = scmp.lt.s32.totalorder %s379, 15
        %s383 = scalar_select %p382, %s379, 15
        %s384 = smul.addr %s381, 16
        %s385 = sadd.s32 %s383, %s384
        %s386 = smul.addr %s385, 8
        %s387 = scalar_lea.vmem %s0, %s386
        %p388 = pneg %p61
        %p389 = pneg %p58
        %p390 = scmp.lt.s32.totalorder %s30, 1
        %s391 = scalar_select %p390, %s30, 1
        %s392 = smul.addr %s391, 8
        %s393 = scalar_lea.vmem %s1, %s392
        %p394 = pneg %p87
        %p395 = pneg %p84
        %p396 = scmp.lt.s32.totalorder %s30, 1
        %s397 = scalar_select %p396, %s30, 1
        %s398 = smul.addr %s397, 16
        %s399 = smul.addr %s398, 8
        %s400 = scalar_lea.vmem %s2, %s399
        %p401 = pneg %p113
        %p402 = pneg %p110
        %s403 = sand.u32 %s128, 1
        %s404 = scalar_lea.sflag [#allocation3], %s403
        %s405 = sand.u32 %s128, 1
        %s406 = smul.addr %s405, 128
        %s407 = scalar_lea.vmem [#allocation2], %s406
        %p408 = pneg %p141
        %p409 = pneg %p138
        %p410 = pneg %p162
        %p411 = pneg %p159
        %p412 = pneg %p183
        %p413 = pneg %p180
        %p414 = pneg %p204
        %p415 = pneg %p201
        %p416 = pneg %p225
        %p417 = pneg %p222
        %p418 = pneg %p253
        %p419 = pneg %p250
        %s420 = sand.u32 %s240, 1
        %s421 = scalar_lea.sflag [#allocation4], %s420
        %s422 = sand.u32 %s240, 1
        %s423 = smul.addr %s422, 128
        %s424 = scalar_lea.vmem [#allocation8], %s423
        %s425 = smul.u32 16, %s31
        %p426 = scmp.lt.s32.totalorder %s30, 1
        %s427 = scalar_select %p426, %s30, 1
        %p428 = scmp.lt.s32.totalorder %s425, 15
        %s429 = scalar_select %p428, %s425, 15
        %s430 = smul.addr %s427, 16
        %s431 = sadd.s32 %s429, %s430
        %s432 = smul.addr %s431, 8
        %s433 = scalar_lea.vmem %s0, %s432
        %s434 = smul.u32 16, %s31
        %p435 = scmp.lt.s32.totalorder %s30, 1
        %s436 = scalar_select %p435, %s30, 1
        %s437 = smul.addr %s436, 8
        %s438 = scalar_lea.vmem %s1, %s437
        %p439 = scmp.lt.s32.totalorder %s30, 1
        %s440 = scalar_select %p439, %s30, 1
        %s441 = smul.addr %s440, 16
        %s442 = smul.addr %s441, 8
        %s443 = scalar_lea.vmem %s2, %s442
        %s444 = smul.u32 16, %s31
        %s445 = smul.u32 16, %s31
        %v446 = vld [vmem:[%s433] sm:$0xff]
        %v447 = vld [vmem:[%s433 + $0x8] sm:$0xff]
        %v448 = vld [vmem:[%s433 + $0x10] sm:$0xff]
        %v449 = vld [vmem:[%s433 + $0x18] sm:$0xff]
        %v450 = vld [vmem:[%s433 + $0x20] sm:$0xff]
        %v451 = vld [vmem:[%s433 + $0x28] sm:$0xff]
        %v452 = vld [vmem:[%s433 + $0x30] sm:$0xff]
        %v453 = vld [vmem:[%s433 + $0x38] sm:$0xff]
        %v454 = vld [vmem:[%s433 + $0x40] sm:$0xff]
        %v455 = vld [vmem:[%s433 + $0x48] sm:$0xff]
        %v456 = vld [vmem:[%s433 + $0x50] sm:$0xff]
        %v457 = vld [vmem:[%s433 + $0x58] sm:$0xff]
        %v458 = vld [vmem:[%s433 + $0x60] sm:$0xff]
        %v459 = vld [vmem:[%s433 + $0x68] sm:$0xff]
        %v460 = vld [vmem:[%s433 + $0x70] sm:$0xff]
        %v461 = vld [vmem:[%s433 + $0x78] sm:$0xff]
        %v462 = vld [vmem:[%s438] sm:$0xff]
        %vm463 = vcmask 64512
        %v465 = vsel %vm463, %v446, 0
        %v468 = vsel %vm463, %v447, 0
        %v471 = vsel %vm463, %v448, 0
        %v474 = vsel %vm463, %v449, 0
        %v477 = vsel %vm463, %v450, 0
        %v480 = vsel %vm463, %v451, 0
        %v483 = vsel %vm463, %v452, 0
        %v486 = vsel %vm463, %v453, 0
        %v489 = vsel %vm463, %v454, 0
        %v492 = vsel %vm463, %v455, 0
        %v495 = vsel %vm463, %v456, 0
        %v498 = vsel %vm463, %v457, 0
        %v501 = vsel %vm463, %v458, 0
        %v504 = vsel %vm463, %v459, 0
        %v507 = vsel %vm463, %v460, 0
        %v510 = vsel %vm463, %v461, 0
        %512 = vmatprep.subr.mxu0 0.0
        %513 = vmatpush1.msra.mxu0 %v462
        %514 = vmatprep.subr.mxu0 0.0
        %515 = vmatpush1.msra.mxu0 0.0
        %516 = vmatprep.subr.mxu0 0.0
        %517 = vmatpush1.msra.mxu0 0.0
        %518 = vmatprep.subr.mxu0 0.0
        %519 = vmatpush1.msra.mxu0 0.0
        %520 = vmatprep.subr.mxu0 0.0
        %521 = vmatpush1.msra.mxu0 0.0
        %522 = vmatprep.subr.mxu0 0.0
        %523 = vmatpush1.msra.mxu0 0.0
        %524 = vmatprep.subr.mxu0 0.0
        %525 = vmatpush1.msra.mxu0 0.0
        %526 = vmatprep.subr.mxu0 0.0
        %527 = vmatpush1.msra.mxu0 0.0
        %528 = vmatprep.subr.mxu0 0.0
        %529 = vmatpush1.msra.mxu0 0.0
        %530 = vmatprep.subr.mxu0 0.0
        %531 = vmatpush1.msra.mxu0 0.0
        %532 = vmatprep.subr.mxu0 0.0
        %533 = vmatpush1.msra.mxu0 0.0
        %534 = vmatprep.subr.mxu0 0.0
        %535 = vmatpush1.msra.mxu0 0.0
        %536 = vmatprep.subr.mxu0 0.0
        %537 = vmatpush1.msra.mxu0 0.0
        %538 = vmatprep.subr.mxu0 0.0
        %539 = vmatpush1.msra.mxu0 0.0
        %540 = vmatprep.subr.mxu0 0.0
        %541 = vmatpush1.msra.mxu0 0.0
        %542 = vmatprep.subr.mxu0 0.0
        %543 = vmatpush1.msra.mxu0 0.0
        %544 = vmatprep.subr.mxu0 0.0
        %545 = vmatpush1.msra.mxu0 0.0
        %546 = vmatprep.subr.mxu0 0.0
        %547 = vmatpush1.msra.mxu0 0.0
        %548 = vmatprep.subr.mxu0 0.0
        %549 = vmatpush1.msra.mxu0 0.0
        %550 = vmatprep.subr.mxu0 0.0
        %551 = vmatpush1.msra.mxu0 0.0
        %552 = vmatprep.subr.mxu0 0.0
        %553 = vmatpush1.msra.mxu0 0.0
        %554 = vmatprep.subr.mxu0 0.0
        %555 = vmatpush1.msra.mxu0 0.0
        %556 = vmatprep.subr.mxu0 0.0
        %557 = vmatpush1.msra.mxu0 0.0
        %558 = vmatprep.subr.mxu0 0.0
        %559 = vmatpush1.msra.mxu0 0.0
        %560 = vmatprep.subr.mxu0 0.0
        %561 = vmatpush1.msra.mxu0 0.0
        %562 = vmatprep.subr.mxu0 0.0
        %563 = vmatpush1.msra.mxu0 0.0
        %564 = vmatprep.subr.mxu0 0.0
        %565 = vmatpush1.msra.mxu0 0.0
        %566 = vmatprep.subr.mxu0 0.0
        %567 = vmatpush1.msra.mxu0 0.0
        %568 = vmatprep.subr.mxu0 0.0
        %569 = vmatpush1.msra.mxu0 0.0
        %570 = vmatprep.subr.mxu0 0.0
        %571 = vmatpush1.msra.mxu0 0.0
        %572 = vmatprep.subr.mxu0 0.0
        %573 = vmatpush1.msra.mxu0 0.0
        %574 = vmatprep.subr.mxu0 0.0
        %575 = vmatpush1.msra.mxu0 0.0
        %576 = vmatprep.mubr.f32.mxu0 0.0
        %577 = vmatmul.mubr.f32.gmra.mrb[0].mxu0 %v465
        %v578 = vpop.f32.mrb[0].mxu0
        %v579 = vadd.f32 0.0, %v578
        %v580 = vpop.f32.mrb[0].mxu0
        %581 = vmatprep.mubr.f32.mxu0 0.0
        %582 = vmatmul.mubr.f32.gmra.mrb[0].mxu0 %v468
        %v583 = vpop.f32.mrb[0].mxu0
        %v584 = vadd.f32 0.0, %v583
        %v585 = vpop.f32.mrb[0].mxu0
        %586 = vmatprep.mubr.f32.mxu0 0.0
        %587 = vmatmul.mubr.f32.gmra.mrb[0].mxu0 %v471
        %v588 = vpop.f32.mrb[0].mxu0
        %v589 = vadd.f32 0.0, %v588
        %v590 = vpop.f32.mrb[0].mxu0
        %591 = vmatprep.mubr.f32.mxu0 0.0
        %592 = vmatmul.mubr.f32.gmra.mrb[0].mxu0 %v474
        %v593 = vpop.f32.mrb[0].mxu0
        %v594 = vadd.f32 0.0, %v593
        %v595 = vpop.f32.mrb[0].mxu0
        %596 = vmatprep.mubr.f32.mxu0 0.0
        %597 = vmatmul.mubr.f32.gmra.mrb[0].mxu0 %v477
        %v598 = vpop.f32.mrb[0].mxu0
        %v599 = vadd.f32 0.0, %v598
        %v600 = vpop.f32.mrb[0].mxu0
        %601 = vmatprep.mubr.f32.mxu0 0.0
        %602 = vmatmul.mubr.f32.gmra.mrb[0].mxu0 %v480
        %v603 = vpop.f32.mrb[0].mxu0
        %v604 = vadd.f32 0.0, %v603
        %v605 = vpop.f32.mrb[0].mxu0
        %606 = vmatprep.mubr.f32.mxu0 0.0
        %607 = vmatmul.mubr.f32.gmra.mrb[0].mxu0 %v483
        %v608 = vpop.f32.mrb[0].mxu0
        %v609 = vadd.f32 0.0, %v608
        %v610 = vpop.f32.mrb[0].mxu0
        %611 = vmatprep.mubr.f32.mxu0 0.0
        %612 = vmatmul.mubr.f32.gmra.mrb[0].mxu0 %v486
        %v613 = vpop.f32.mrb[0].mxu0
        %v614 = vadd.f32 0.0, %v613
        %v615 = vpop.f32.mrb[0].mxu0
        %616 = vmatprep.mubr.f32.mxu0 0.0
        %617 = vmatmul.mubr.f32.gmra.mrb[0].mxu0 %v489
        %v618 = vpop.f32.mrb[0].mxu0
        %v619 = vadd.f32 0.0, %v618
        %v620 = vpop.f32.mrb[0].mxu0
        %621 = vmatprep.mubr.f32.mxu0 0.0
        %622 = vmatmul.mubr.f32.gmra.mrb[0].mxu0 %v492
        %v623 = vpop.f32.mrb[0].mxu0
        %v624 = vadd.f32 0.0, %v623
        %v625 = vpop.f32.mrb[0].mxu0
        %626 = vmatprep.mubr.f32.mxu0 0.0
        %627 = vmatmul.mubr.f32.gmra.mrb[0].mxu0 %v495
        %v628 = vpop.f32.mrb[0].mxu0
        %v629 = vadd.f32 0.0, %v628
        %v630 = vpop.f32.mrb[0].mxu0
        %631 = vmatprep.mubr.f32.mxu0 0.0
        %632 = vmatmul.mubr.f32.gmra.mrb[0].mxu0 %v498
        %v633 = vpop.f32.mrb[0].mxu0
        %v634 = vadd.f32 0.0, %v633
        %v635 = vpop.f32.mrb[0].mxu0
        %636 = vmatprep.mubr.f32.mxu0 0.0
        %637 = vmatmul.mubr.f32.gmra.mrb[0].mxu0 %v501
        %v638 = vpop.f32.mrb[0].mxu0
        %v639 = vadd.f32 0.0, %v638
        %v640 = vpop.f32.mrb[0].mxu0
        %641 = vmatprep.mubr.f32.mxu0 0.0
        %642 = vmatmul.mubr.f32.gmra.mrb[0].mxu0 %v504
        %v643 = vpop.f32.mrb[0].mxu0
        %v644 = vadd.f32 0.0, %v643
        %v645 = vpop.f32.mrb[0].mxu0
        %646 = vmatprep.mubr.f32.mxu0 0.0
        %647 = vmatmul.mubr.f32.gmra.mrb[0].mxu0 %v507
        %v648 = vpop.f32.mrb[0].mxu0
        %v649 = vadd.f32 0.0, %v648
        %v650 = vpop.f32.mrb[0].mxu0
        %651 = vmatprep.mubr.f32.mxu0 0.0
        %652 = vmatmul.mubr.f32.gmra.mrb[0].mxu0 %v510
        %v653 = vpop.f32.mrb[0].mxu0
        %v654 = vadd.f32 0.0, %v653
        %v655 = vpop.f32.mrb[0].mxu0
        %656 = vdwg.mxu0
        %v657 = vlaneseq
        %v658 = vand.u32 %v657, 127
        %659 = vmin.xlane.f32.xlu0 %v579
        %v660 = vpop.xlane.xlu0 %659
        %661 = vmin.xlane.f32.xlu0 %v584
        %v662 = vpop.xlane.xlu0 %661
        %663 = vmin.xlane.f32.xlu0 %v589
        %v664 = vpop.xlane.xlu0 %663
        %665 = vmin.xlane.f32.xlu0 %v594
        %v666 = vpop.xlane.xlu0 %665
        %667 = vmin.xlane.f32.xlu0 %v599
        %v668 = vpop.xlane.xlu0 %667
        %669 = vmin.xlane.f32.xlu0 %v604
        %v670 = vpop.xlane.xlu0 %669
        %671 = vmin.xlane.f32.xlu0 %v609
        %v672 = vpop.xlane.xlu0 %671
        %673 = vmin.xlane.f32.xlu0 %v614
        %v674 = vpop.xlane.xlu0 %673
        %675 = vmin.xlane.f32.xlu0 %v619
        %v676 = vpop.xlane.xlu0 %675
        %677 = vmin.xlane.f32.xlu0 %v624
        %v678 = vpop.xlane.xlu0 %677
        %679 = vmin.xlane.f32.xlu0 %v629
        %v680 = vpop.xlane.xlu0 %679
        %681 = vmin.xlane.f32.xlu0 %v634
        %v682 = vpop.xlane.xlu0 %681
        %683 = vmin.xlane.f32.xlu0 %v639
        %v684 = vpop.xlane.xlu0 %683
        %685 = vmin.xlane.f32.xlu0 %v644
        %v686 = vpop.xlane.xlu0 %685
        %687 = vmin.xlane.f32.xlu0 %v649
        %v688 = vpop.xlane.xlu0 %687
        %689 = vmin.xlane.f32.xlu0 %v654
        %v690 = vpop.xlane.xlu0 %689
        %vm691 = vcmp.eq.f32.partialorder %v579, %v660
        %vm692 = vcmp.eq.f32.partialorder %v584, %v662
        %vm693 = vcmp.eq.f32.partialorder %v589, %v664
        %vm694 = vcmp.eq.f32.partialorder %v594, %v666
        %vm695 = vcmp.eq.f32.partialorder %v599, %v668
        %vm696 = vcmp.eq.f32.partialorder %v604, %v670
        %vm697 = vcmp.eq.f32.partialorder %v609, %v672
        %vm698 = vcmp.eq.f32.partialorder %v614, %v674
        %vm699 = vcmp.eq.f32.partialorder %v619, %v676
        %vm700 = vcmp.eq.f32.partialorder %v624, %v678
        %vm701 = vcmp.eq.f32.partialorder %v629, %v680
        %vm702 = vcmp.eq.f32.partialorder %v634, %v682
        %vm703 = vcmp.eq.f32.partialorder %v639, %v684
        %vm704 = vcmp.eq.f32.partialorder %v644, %v686
        %vm705 = vcmp.eq.f32.partialorder %v649, %v688
        %vm706 = vcmp.eq.f32.partialorder %v654, %v690
        %v707 = vsel %vm691, %v658, 128
        %v708 = vsel %vm692, %v658, 128
        %v709 = vsel %vm693, %v658, 128
        %v710 = vsel %vm694, %v658, 128
        %v711 = vsel %vm695, %v658, 128
        %v712 = vsel %vm696, %v658, 128
        %v713 = vsel %vm697, %v658, 128
        %v714 = vsel %vm698, %v658, 128
        %v715 = vsel %vm699, %v658, 128
        %v716 = vsel %vm700, %v658, 128
        %v717 = vsel %vm701, %v658, 128
        %v718 = vsel %vm702, %v658, 128
        %v719 = vsel %vm703, %v658, 128
        %v720 = vsel %vm704, %v658, 128
        %v721 = vsel %vm705, %v658, 128
        %v722 = vsel %vm706, %v658, 128
        %v723 = vand.u32 %v707, 65535
        %v724 = vshra.s32 %v707, 16
        %v725 = vcvt.s32.f32 %v723
        %v726 = vcvt.s32.f32 %v724
        %727 = vmin.xlane.f32.xlu0 %v726
        %v728 = vpop.xlane.xlu0 %727
        %vm729 = vcmp.eq.f32.partialorder %v726, %v728
        %v730 = vsel %vm729, %v725, inf
        %731 = vmin.xlane.f32.xlu0 %v730
        %v732 = vpop.xlane.xlu0 %731
        %v733 = vcvt.f32.s32 %v732
        %v734 = vcvt.f32.s32 %v728
        %v735 = vshll.u32 %v734, 16
        %v736 = vadd.s32 %v735, %v733
        %v737 = vand.u32 %v708, 65535
        %v738 = vshra.s32 %v708, 16
        %v739 = vcvt.s32.f32 %v737
        %v740 = vcvt.s32.f32 %v738
        %741 = vmin.xlane.f32.xlu0 %v740
        %v742 = vpop.xlane.xlu0 %741
        %vm743 = vcmp.eq.f32.partialorder %v740, %v742
        %v744 = vsel %vm743, %v739, inf
        %745 = vmin.xlane.f32.xlu0 %v744
        %v746 = vpop.xlane.xlu0 %745
        %v747 = vcvt.f32.s32 %v746
        %v748 = vcvt.f32.s32 %v742
        %v749 = vshll.u32 %v748, 16
        %v750 = vadd.s32 %v749, %v747
        %v751 = vand.u32 %v709, 65535
        %v752 = vshra.s32 %v709, 16
        %v753 = vcvt.s32.f32 %v751
        %v754 = vcvt.s32.f32 %v752
        %755 = vmin.xlane.f32.xlu0 %v754
        %v756 = vpop.xlane.xlu0 %755
        %vm757 = vcmp.eq.f32.partialorder %v754, %v756
        %v758 = vsel %vm757, %v753, inf
        %759 = vmin.xlane.f32.xlu0 %v758
        %v760 = vpop.xlane.xlu0 %759
        %v761 = vcvt.f32.s32 %v760
        %v762 = vcvt.f32.s32 %v756
        %v763 = vshll.u32 %v762, 16
        %v764 = vadd.s32 %v763, %v761
        %v765 = vand.u32 %v710, 65535
        %v766 = vshra.s32 %v710, 16
        %v767 = vcvt.s32.f32 %v765
        %v768 = vcvt.s32.f32 %v766
        %769 = vmin.xlane.f32.xlu0 %v768
        %v770 = vpop.xlane.xlu0 %769
        %vm771 = vcmp.eq.f32.partialorder %v768, %v770
        %v772 = vsel %vm771, %v767, inf
        %773 = vmin.xlane.f32.xlu0 %v772
        %v774 = vpop.xlane.xlu0 %773
        %v775 = vcvt.f32.s32 %v774
        %v776 = vcvt.f32.s32 %v770
        %v777 = vshll.u32 %v776, 16
        %v778 = vadd.s32 %v777, %v775
        %v779 = vand.u32 %v711, 65535
        %v780 = vshra.s32 %v711, 16
        %v781 = vcvt.s32.f32 %v779
        %v782 = vcvt.s32.f32 %v780
        %783 = vmin.xlane.f32.xlu0 %v782
        %v784 = vpop.xlane.xlu0 %783
        %vm785 = vcmp.eq.f32.partialorder %v782, %v784
        %v786 = vsel %vm785, %v781, inf
        %787 = vmin.xlane.f32.xlu0 %v786
        %v788 = vpop.xlane.xlu0 %787
        %v789 = vcvt.f32.s32 %v788
        %v790 = vcvt.f32.s32 %v784
        %v791 = vshll.u32 %v790, 16
        %v792 = vadd.s32 %v791, %v789
        %v793 = vand.u32 %v712, 65535
        %v794 = vshra.s32 %v712, 16
        %v795 = vcvt.s32.f32 %v793
        %v796 = vcvt.s32.f32 %v794
        %797 = vmin.xlane.f32.xlu0 %v796
        %v798 = vpop.xlane.xlu0 %797
        %vm799 = vcmp.eq.f32.partialorder %v796, %v798
        %v800 = vsel %vm799, %v795, inf
        %801 = vmin.xlane.f32.xlu0 %v800
        %v802 = vpop.xlane.xlu0 %801
        %v803 = vcvt.f32.s32 %v802
        %v804 = vcvt.f32.s32 %v798
        %v805 = vshll.u32 %v804, 16
        %v806 = vadd.s32 %v805, %v803
        %v807 = vand.u32 %v713, 65535
        %v808 = vshra.s32 %v713, 16
        %v809 = vcvt.s32.f32 %v807
        %v810 = vcvt.s32.f32 %v808
        %811 = vmin.xlane.f32.xlu0 %v810
        %v812 = vpop.xlane.xlu0 %811
        %vm813 = vcmp.eq.f32.partialorder %v810, %v812
        %v814 = vsel %vm813, %v809, inf
        %815 = vmin.xlane.f32.xlu0 %v814
        %v816 = vpop.xlane.xlu0 %815
        %v817 = vcvt.f32.s32 %v816
        %v818 = vcvt.f32.s32 %v812
        %v819 = vshll.u32 %v818, 16
        %v820 = vadd.s32 %v819, %v817
        %v821 = vand.u32 %v714, 65535
        %v822 = vshra.s32 %v714, 16
        %v823 = vcvt.s32.f32 %v821
        %v824 = vcvt.s32.f32 %v822
        %825 = vmin.xlane.f32.xlu0 %v824
        %v826 = vpop.xlane.xlu0 %825
        %vm827 = vcmp.eq.f32.partialorder %v824, %v826
        %v828 = vsel %vm827, %v823, inf
        %829 = vmin.xlane.f32.xlu0 %v828
        %v830 = vpop.xlane.xlu0 %829
        %v831 = vcvt.f32.s32 %v830
        %v832 = vcvt.f32.s32 %v826
        %v833 = vshll.u32 %v832, 16
        %v834 = vadd.s32 %v833, %v831
        %v835 = vand.u32 %v715, 65535
        %v836 = vshra.s32 %v715, 16
        %v837 = vcvt.s32.f32 %v835
        %v838 = vcvt.s32.f32 %v836
        %839 = vmin.xlane.f32.xlu0 %v838
        %v840 = vpop.xlane.xlu0 %839
        %vm841 = vcmp.eq.f32.partialorder %v838, %v840
        %v842 = vsel %vm841, %v837, inf
        %843 = vmin.xlane.f32.xlu0 %v842
        %v844 = vpop.xlane.xlu0 %843
        %v845 = vcvt.f32.s32 %v844
        %v846 = vcvt.f32.s32 %v840
        %v847 = vshll.u32 %v846, 16
        %v848 = vadd.s32 %v847, %v845
        %v849 = vand.u32 %v716, 65535
        %v850 = vshra.s32 %v716, 16
        %v851 = vcvt.s32.f32 %v849
        %v852 = vcvt.s32.f32 %v850
        %853 = vmin.xlane.f32.xlu0 %v852
        %v854 = vpop.xlane.xlu0 %853
        %vm855 = vcmp.eq.f32.partialorder %v852, %v854
        %v856 = vsel %vm855, %v851, inf
        %857 = vmin.xlane.f32.xlu0 %v856
        %v858 = vpop.xlane.xlu0 %857
        %v859 = vcvt.f32.s32 %v858
        %v860 = vcvt.f32.s32 %v854
        %v861 = vshll.u32 %v860, 16
        %v862 = vadd.s32 %v861, %v859
        %v863 = vand.u32 %v717, 65535
        %v864 = vshra.s32 %v717, 16
        %v865 = vcvt.s32.f32 %v863
        %v866 = vcvt.s32.f32 %v864
        %867 = vmin.xlane.f32.xlu0 %v866
        %v868 = vpop.xlane.xlu0 %867
        %vm869 = vcmp.eq.f32.partialorder %v866, %v868
        %v870 = vsel %vm869, %v865, inf
        %871 = vmin.xlane.f32.xlu0 %v870
        %v872 = vpop.xlane.xlu0 %871
        %v873 = vcvt.f32.s32 %v872
        %v874 = vcvt.f32.s32 %v868
        %v875 = vshll.u32 %v874, 16
        %v876 = vadd.s32 %v875, %v873
        %v877 = vand.u32 %v718, 65535
        %v878 = vshra.s32 %v718, 16
        %v879 = vcvt.s32.f32 %v877
        %v880 = vcvt.s32.f32 %v878
        %881 = vmin.xlane.f32.xlu0 %v880
        %v882 = vpop.xlane.xlu0 %881
        %vm883 = vcmp.eq.f32.partialorder %v880, %v882
        %v884 = vsel %vm883, %v879, inf
        %885 = vmin.xlane.f32.xlu0 %v884
        %v886 = vpop.xlane.xlu0 %885
        %v887 = vcvt.f32.s32 %v886
        %v888 = vcvt.f32.s32 %v882
        %v889 = vshll.u32 %v888, 16
        %v890 = vadd.s32 %v889, %v887
        %v891 = vand.u32 %v719, 65535
        %v892 = vshra.s32 %v719, 16
        %v893 = vcvt.s32.f32 %v891
        %v894 = vcvt.s32.f32 %v892
        %895 = vmin.xlane.f32.xlu0 %v894
        %v896 = vpop.xlane.xlu0 %895
        %vm897 = vcmp.eq.f32.partialorder %v894, %v896
        %v898 = vsel %vm897, %v893, inf
        %899 = vmin.xlane.f32.xlu0 %v898
        %v900 = vpop.xlane.xlu0 %899
        %v901 = vcvt.f32.s32 %v900
        %v902 = vcvt.f32.s32 %v896
        %v903 = vshll.u32 %v902, 16
        %v904 = vadd.s32 %v903, %v901
        %v905 = vand.u32 %v720, 65535
        %v906 = vshra.s32 %v720, 16
        %v907 = vcvt.s32.f32 %v905
        %v908 = vcvt.s32.f32 %v906
        %909 = vmin.xlane.f32.xlu0 %v908
        %v910 = vpop.xlane.xlu0 %909
        %vm911 = vcmp.eq.f32.partialorder %v908, %v910
        %v912 = vsel %vm911, %v907, inf
        %913 = vmin.xlane.f32.xlu0 %v912
        %v914 = vpop.xlane.xlu0 %913
        %v915 = vcvt.f32.s32 %v914
        %v916 = vcvt.f32.s32 %v910
        %v917 = vshll.u32 %v916, 16
        %v918 = vadd.s32 %v917, %v915
        %v919 = vand.u32 %v721, 65535
        %v920 = vshra.s32 %v721, 16
        %v921 = vcvt.s32.f32 %v919
        %v922 = vcvt.s32.f32 %v920
        %923 = vmin.xlane.f32.xlu0 %v922
        %v924 = vpop.xlane.xlu0 %923
        %vm925 = vcmp.eq.f32.partialorder %v922, %v924
        %v926 = vsel %vm925, %v921, inf
        %927 = vmin.xlane.f32.xlu0 %v926
        %v928 = vpop.xlane.xlu0 %927
        %v929 = vcvt.f32.s32 %v928
        %v930 = vcvt.f32.s32 %v924
        %v931 = vshll.u32 %v930, 16
        %v932 = vadd.s32 %v931, %v929
        %v933 = vand.u32 %v722, 65535
        %v934 = vshra.s32 %v722, 16
        %v935 = vcvt.s32.f32 %v933
        %v936 = vcvt.s32.f32 %v934
        %937 = vmin.xlane.f32.xlu0 %v936
        %v938 = vpop.xlane.xlu0 %937
        %vm939 = vcmp.eq.f32.partialorder %v936, %v938
        %v940 = vsel %vm939, %v935, inf
        %941 = vmin.xlane.f32.xlu0 %v940
        %v942 = vpop.xlane.xlu0 %941
        %v943 = vcvt.f32.s32 %v942
        %v944 = vcvt.f32.s32 %v938
        %v945 = vshll.u32 %v944, 16
        %v946 = vadd.s32 %v945, %v943
        %vm947 = vcmp.eq.s32.totalorder %v658, %v736
        %vm948 = vcmp.eq.s32.totalorder %v658, %v750
        %vm949 = vcmp.eq.s32.totalorder %v658, %v764
        %vm950 = vcmp.eq.s32.totalorder %v658, %v778
        %vm951 = vcmp.eq.s32.totalorder %v658, %v792
        %vm952 = vcmp.eq.s32.totalorder %v658, %v806
        %vm953 = vcmp.eq.s32.totalorder %v658, %v820
        %vm954 = vcmp.eq.s32.totalorder %v658, %v834
        %vm955 = vcmp.eq.s32.totalorder %v658, %v848
        %vm956 = vcmp.eq.s32.totalorder %v658, %v862
        %vm957 = vcmp.eq.s32.totalorder %v658, %v876
        %vm958 = vcmp.eq.s32.totalorder %v658, %v890
        %vm959 = vcmp.eq.s32.totalorder %v658, %v904
        %vm960 = vcmp.eq.s32.totalorder %v658, %v918
        %vm961 = vcmp.eq.s32.totalorder %v658, %v932
        %vm962 = vcmp.eq.s32.totalorder %v658, %v946
        %v963 = vsel %vm947, 1e+34, %v579
        %v964 = vsel %vm948, 1e+34, %v584
        %v965 = vsel %vm949, 1e+34, %v589
        %v966 = vsel %vm950, 1e+34, %v594
        %v967 = vsel %vm951, 1e+34, %v599
        %v968 = vsel %vm952, 1e+34, %v604
        %v969 = vsel %vm953, 1e+34, %v609
        %v970 = vsel %vm954, 1e+34, %v614
        %v971 = vsel %vm955, 1e+34, %v619
        %v972 = vsel %vm956, 1e+34, %v624
        %v973 = vsel %vm957, 1e+34, %v629
        %v974 = vsel %vm958, 1e+34, %v634
        %v975 = vsel %vm959, 1e+34, %v639
        %v976 = vsel %vm960, 1e+34, %v644
        %v977 = vsel %vm961, 1e+34, %v649
        %v978 = vsel %vm962, 1e+34, %v654
        %v979 = vmax.f32 %v660, 0.0
        %v980 = vmax.f32 %v662, 0.0
        %v981 = vmax.f32 %v664, 0.0
        %v982 = vmax.f32 %v666, 0.0
        %v983 = vmax.f32 %v668, 0.0
        %v984 = vmax.f32 %v670, 0.0
        %v985 = vmax.f32 %v672, 0.0
        %v986 = vmax.f32 %v674, 0.0
        %v987 = vmax.f32 %v676, 0.0
        %v988 = vmax.f32 %v678, 0.0
        %v989 = vmax.f32 %v680, 0.0
        %v990 = vmax.f32 %v682, 0.0
        %v991 = vmax.f32 %v684, 0.0
        %v992 = vmax.f32 %v686, 0.0
        %v993 = vmax.f32 %v688, 0.0
        %v994 = vmax.f32 %v690, 0.0
        %v995 = vrsqrt.pop %v979
        %v996 = vmul.f32 %v979, %v995
        %vm997 = vcmp.eq.f32.partialorder %v979, inf
        %v998 = vsel %vm997, %v979, %v996
        %vm999 = vcmp.eq.f32.partialorder %v979, 0.0
        %v1000 = vand.u32 %v979, 2147483648
        %v1001 = vsel %vm999, %v1000, %v998
        %v1002 = vrsqrt.pop %v980
        %v1003 = vmul.f32 %v980, %v1002
        %vm1004 = vcmp.eq.f32.partialorder %v980, inf
        %v1005 = vsel %vm1004, %v980, %v1003
        %vm1006 = vcmp.eq.f32.partialorder %v980, 0.0
        %v1007 = vand.u32 %v980, 2147483648
        %v1008 = vsel %vm1006, %v1007, %v1005
        %v1009 = vrsqrt.pop %v981
        %v1010 = vmul.f32 %v981, %v1009
        %vm1011 = vcmp.eq.f32.partialorder %v981, inf
        %v1012 = vsel %vm1011, %v981, %v1010
        %vm1013 = vcmp.eq.f32.partialorder %v981, 0.0
        %v1014 = vand.u32 %v981, 2147483648
        %v1015 = vsel %vm1013, %v1014, %v1012
        %v1016 = vrsqrt.pop %v982
        %v1017 = vmul.f32 %v982, %v1016
        %vm1018 = vcmp.eq.f32.partialorder %v982, inf
        %v1019 = vsel %vm1018, %v982, %v1017
        %vm1020 = vcmp.eq.f32.partialorder %v982, 0.0
        %v1021 = vand.u32 %v982, 2147483648
        %v1022 = vsel %vm1020, %v1021, %v1019
        %v1023 = vrsqrt.pop %v983
        %v1024 = vmul.f32 %v983, %v1023
        %vm1025 = vcmp.eq.f32.partialorder %v983, inf
        %v1026 = vsel %vm1025, %v983, %v1024
        %vm1027 = vcmp.eq.f32.partialorder %v983, 0.0
        %v1028 = vand.u32 %v983, 2147483648
        %v1029 = vsel %vm1027, %v1028, %v1026
        %v1030 = vrsqrt.pop %v984
        %v1031 = vmul.f32 %v984, %v1030
        %vm1032 = vcmp.eq.f32.partialorder %v984, inf
        %v1033 = vsel %vm1032, %v984, %v1031
        %vm1034 = vcmp.eq.f32.partialorder %v984, 0.0
        %v1035 = vand.u32 %v984, 2147483648
        %v1036 = vsel %vm1034, %v1035, %v1033
        %v1037 = vrsqrt.pop %v985
        %v1038 = vmul.f32 %v985, %v1037
        %vm1039 = vcmp.eq.f32.partialorder %v985, inf
        %v1040 = vsel %vm1039, %v985, %v1038
        %vm1041 = vcmp.eq.f32.partialorder %v985, 0.0
        %v1042 = vand.u32 %v985, 2147483648
        %v1043 = vsel %vm1041, %v1042, %v1040
        %v1044 = vrsqrt.pop %v986
        %v1045 = vmul.f32 %v986, %v1044
        %vm1046 = vcmp.eq.f32.partialorder %v986, inf
        %v1047 = vsel %vm1046, %v986, %v1045
        %vm1048 = vcmp.eq.f32.partialorder %v986, 0.0
        %v1049 = vand.u32 %v986, 2147483648
        %v1050 = vsel %vm1048, %v1049, %v1047
        %v1051 = vrsqrt.pop %v987
        %v1052 = vmul.f32 %v987, %v1051
        %vm1053 = vcmp.eq.f32.partialorder %v987, inf
        %v1054 = vsel %vm1053, %v987, %v1052
        %vm1055 = vcmp.eq.f32.partialorder %v987, 0.0
        %v1056 = vand.u32 %v987, 2147483648
        %v1057 = vsel %vm1055, %v1056, %v1054
        %v1058 = vrsqrt.pop %v988
        %v1059 = vmul.f32 %v988, %v1058
        %vm1060 = vcmp.eq.f32.partialorder %v988, inf
        %v1061 = vsel %vm1060, %v988, %v1059
        %vm1062 = vcmp.eq.f32.partialorder %v988, 0.0
        %v1063 = vand.u32 %v988, 2147483648
        %v1064 = vsel %vm1062, %v1063, %v1061
        %v1065 = vrsqrt.pop %v989
        %v1066 = vmul.f32 %v989, %v1065
        %vm1067 = vcmp.eq.f32.partialorder %v989, inf
        %v1068 = vsel %vm1067, %v989, %v1066
        %vm1069 = vcmp.eq.f32.partialorder %v989, 0.0
        %v1070 = vand.u32 %v989, 2147483648
        %v1071 = vsel %vm1069, %v1070, %v1068
        %v1072 = vrsqrt.pop %v990
        %v1073 = vmul.f32 %v990, %v1072
        %vm1074 = vcmp.eq.f32.partialorder %v990, inf
        %v1075 = vsel %vm1074, %v990, %v1073
        %vm1076 = vcmp.eq.f32.partialorder %v990, 0.0
        %v1077 = vand.u32 %v990, 2147483648
        %v1078 = vsel %vm1076, %v1077, %v1075
        %v1079 = vrsqrt.pop %v991
        %v1080 = vmul.f32 %v991, %v1079
        %vm1081 = vcmp.eq.f32.partialorder %v991, inf
        %v1082 = vsel %vm1081, %v991, %v1080
        %vm1083 = vcmp.eq.f32.partialorder %v991, 0.0
        %v1084 = vand.u32 %v991, 2147483648
        %v1085 = vsel %vm1083, %v1084, %v1082
        %v1086 = vrsqrt.pop %v992
        %v1087 = vmul.f32 %v992, %v1086
        %vm1088 = vcmp.eq.f32.partialorder %v992, inf
        %v1089 = vsel %vm1088, %v992, %v1087
        %vm1090 = vcmp.eq.f32.partialorder %v992, 0.0
        %v1091 = vand.u32 %v992, 2147483648
        %v1092 = vsel %vm1090, %v1091, %v1089
        %v1093 = vrsqrt.pop %v993
        %v1094 = vmul.f32 %v993, %v1093
        %vm1095 = vcmp.eq.f32.partialorder %v993, inf
        %v1096 = vsel %vm1095, %v993, %v1094
        %vm1097 = vcmp.eq.f32.partialorder %v993, 0.0
        %v1098 = vand.u32 %v993, 2147483648
        %v1099 = vsel %vm1097, %v1098, %v1096
        %v1100 = vrsqrt.pop %v994
        %v1101 = vmul.f32 %v994, %v1100
        %vm1102 = vcmp.eq.f32.partialorder %v994, inf
        %v1103 = vsel %vm1102, %v994, %v1101
        %vm1104 = vcmp.eq.f32.partialorder %v994, 0.0
        %v1105 = vand.u32 %v994, 2147483648
        %v1106 = vsel %vm1104, %v1105, %v1103
        %v1107 = vadd.f32 %v1001, 1e-08
        %v1108 = vadd.f32 %v1008, 1e-08
        %v1109 = vadd.f32 %v1015, 1e-08
        %v1110 = vadd.f32 %v1022, 1e-08
        %v1111 = vadd.f32 %v1029, 1e-08
        %v1112 = vadd.f32 %v1036, 1e-08
        %v1113 = vadd.f32 %v1043, 1e-08
        %v1114 = vadd.f32 %v1050, 1e-08
        %v1115 = vadd.f32 %v1057, 1e-08
        %v1116 = vadd.f32 %v1064, 1e-08
        %v1117 = vadd.f32 %v1071, 1e-08
        %v1118 = vadd.f32 %v1078, 1e-08
        %v1119 = vadd.f32 %v1085, 1e-08
        %v1120 = vadd.f32 %v1092, 1e-08
        %v1121 = vadd.f32 %v1099, 1e-08
        %v1122 = vadd.f32 %v1106, 1e-08
        %v1123 = vrcp.pop %v1107
        %v1124 = vmul.f32 1.0, %v1123
        %v1125 = vrcp.pop %v1108
        %v1126 = vmul.f32 1.0, %v1125
        %v1127 = vrcp.pop %v1109
        %v1128 = vmul.f32 1.0, %v1127
        %v1129 = vrcp.pop %v1110
        %v1130 = vmul.f32 1.0, %v1129
        %v1131 = vrcp.pop %v1111
        %v1132 = vmul.f32 1.0, %v1131
        %v1133 = vrcp.pop %v1112
        %v1134 = vmul.f32 1.0, %v1133
        %v1135 = vrcp.pop %v1113
        %v1136 = vmul.f32 1.0, %v1135
        %v1137 = vrcp.pop %v1114
        %v1138 = vmul.f32 1.0, %v1137
        %v1139 = vrcp.pop %v1115
        %v1140 = vmul.f32 1.0, %v1139
        %v1141 = vrcp.pop %v1116
        %v1142 = vmul.f32 1.0, %v1141
        %v1143 = vrcp.pop %v1117
        %v1144 = vmul.f32 1.0, %v1143
        %v1145 = vrcp.pop %v1118
        %v1146 = vmul.f32 1.0, %v1145
        %v1147 = vrcp.pop %v1119
        %v1148 = vmul.f32 1.0, %v1147
        %v1149 = vrcp.pop %v1120
        %v1150 = vmul.f32 1.0, %v1149
        %v1151 = vrcp.pop %v1121
        %v1152 = vmul.f32 1.0, %v1151
        %v1153 = vrcp.pop %v1122
        %v1154 = vmul.f32 1.0, %v1153
        %v1155 = vsel %vm947, %v1124, 0.0
        %v1156 = vsel %vm948, %v1126, 0.0
        %v1157 = vsel %vm949, %v1128, 0.0
        %v1158 = vsel %vm950, %v1130, 0.0
        %v1159 = vsel %vm951, %v1132, 0.0
        %v1160 = vsel %vm952, %v1134, 0.0
        %v1161 = vsel %vm953, %v1136, 0.0
        %v1162 = vsel %vm954, %v1138, 0.0
        %v1163 = vsel %vm955, %v1140, 0.0
        %v1164 = vsel %vm956, %v1142, 0.0
        %v1165 = vsel %vm957, %v1144, 0.0
        %v1166 = vsel %vm958, %v1146, 0.0
        %v1167 = vsel %vm959, %v1148, 0.0
        %v1168 = vsel %vm960, %v1150, 0.0
        %v1169 = vsel %vm961, %v1152, 0.0
        %v1170 = vsel %vm962, %v1154, 0.0
        %v1171 = vadd.f32 %v1124, 0.0
        %v1172 = vadd.f32 %v1126, 0.0
        %v1173 = vadd.f32 %v1128, 0.0
        %v1174 = vadd.f32 %v1130, 0.0
        %v1175 = vadd.f32 %v1132, 0.0
        %v1176 = vadd.f32 %v1134, 0.0
        %v1177 = vadd.f32 %v1136, 0.0
        %v1178 = vadd.f32 %v1138, 0.0
        %v1179 = vadd.f32 %v1140, 0.0
        %v1180 = vadd.f32 %v1142, 0.0
        %v1181 = vadd.f32 %v1144, 0.0
        %v1182 = vadd.f32 %v1146, 0.0
        %v1183 = vadd.f32 %v1148, 0.0
        %v1184 = vadd.f32 %v1150, 0.0
        %v1185 = vadd.f32 %v1152, 0.0
        %v1186 = vadd.f32 %v1154, 0.0
        %1187 = vmin.xlane.f32.xlu0 %v963
        %v1188 = vpop.xlane.xlu0 %1187
        %1189 = vmin.xlane.f32.xlu0 %v964
        %v1190 = vpop.xlane.xlu0 %1189
        %1191 = vmin.xlane.f32.xlu0 %v965
        %v1192 = vpop.xlane.xlu0 %1191
        %1193 = vmin.xlane.f32.xlu0 %v966
        %v1194 = vpop.xlane.xlu0 %1193
        %1195 = vmin.xlane.f32.xlu0 %v967
        %v1196 = vpop.xlane.xlu0 %1195
        %1197 = vmin.xlane.f32.xlu0 %v968
        %v1198 = vpop.xlane.xlu0 %1197
        %1199 = vmin.xlane.f32.xlu0 %v969
        %v1200 = vpop.xlane.xlu0 %1199
        %1201 = vmin.xlane.f32.xlu0 %v970
        %v1202 = vpop.xlane.xlu0 %1201
        %1203 = vmin.xlane.f32.xlu0 %v971
        %v1204 = vpop.xlane.xlu0 %1203
        %1205 = vmin.xlane.f32.xlu0 %v972
        %v1206 = vpop.xlane.xlu0 %1205
        %1207 = vmin.xlane.f32.xlu0 %v973
        %v1208 = vpop.xlane.xlu0 %1207
        %1209 = vmin.xlane.f32.xlu0 %v974
        %v1210 = vpop.xlane.xlu0 %1209
        %1211 = vmin.xlane.f32.xlu0 %v975
        %v1212 = vpop.xlane.xlu0 %1211
        %1213 = vmin.xlane.f32.xlu0 %v976
        %v1214 = vpop.xlane.xlu0 %1213
        %1215 = vmin.xlane.f32.xlu0 %v977
        %v1216 = vpop.xlane.xlu0 %1215
        %1217 = vmin.xlane.f32.xlu0 %v978
        %v1218 = vpop.xlane.xlu0 %1217
        %vm1219 = vcmp.eq.f32.partialorder %v963, %v1188
        %vm1220 = vcmp.eq.f32.partialorder %v964, %v1190
        %vm1221 = vcmp.eq.f32.partialorder %v965, %v1192
        %vm1222 = vcmp.eq.f32.partialorder %v966, %v1194
        %vm1223 = vcmp.eq.f32.partialorder %v967, %v1196
        %vm1224 = vcmp.eq.f32.partialorder %v968, %v1198
        %vm1225 = vcmp.eq.f32.partialorder %v969, %v1200
        %vm1226 = vcmp.eq.f32.partialorder %v970, %v1202
        %vm1227 = vcmp.eq.f32.partialorder %v971, %v1204
        %vm1228 = vcmp.eq.f32.partialorder %v972, %v1206
        %vm1229 = vcmp.eq.f32.partialorder %v973, %v1208
        %vm1230 = vcmp.eq.f32.partialorder %v974, %v1210
        %vm1231 = vcmp.eq.f32.partialorder %v975, %v1212
        %vm1232 = vcmp.eq.f32.partialorder %v976, %v1214
        %vm1233 = vcmp.eq.f32.partialorder %v977, %v1216
        %vm1234 = vcmp.eq.f32.partialorder %v978, %v1218
        %v1235 = vsel %vm1219, %v658, 128
        %v1236 = vsel %vm1220, %v658, 128
        %v1237 = vsel %vm1221, %v658, 128
        %v1238 = vsel %vm1222, %v658, 128
        %v1239 = vsel %vm1223, %v658, 128
        %v1240 = vsel %vm1224, %v658, 128
        %v1241 = vsel %vm1225, %v658, 128
        %v1242 = vsel %vm1226, %v658, 128
        %v1243 = vsel %vm1227, %v658, 128
        %v1244 = vsel %vm1228, %v658, 128
        %v1245 = vsel %vm1229, %v658, 128
        %v1246 = vsel %vm1230, %v658, 128
        %v1247 = vsel %vm1231, %v658, 128
        %v1248 = vsel %vm1232, %v658, 128
        %v1249 = vsel %vm1233, %v658, 128
        %v1250 = vsel %vm1234, %v658, 128
        %v1251 = vand.u32 %v1235, 65535
        %v1252 = vshra.s32 %v1235, 16
        %v1253 = vcvt.s32.f32 %v1251
        %v1254 = vcvt.s32.f32 %v1252
        %1255 = vmin.xlane.f32.xlu0 %v1254
        %v1256 = vpop.xlane.xlu0 %1255
        %vm1257 = vcmp.eq.f32.partialorder %v1254, %v1256
        %v1258 = vsel %vm1257, %v1253, inf
        %1259 = vmin.xlane.f32.xlu0 %v1258
        %v1260 = vpop.xlane.xlu0 %1259
        %v1261 = vcvt.f32.s32 %v1260
        %v1262 = vcvt.f32.s32 %v1256
        %v1263 = vshll.u32 %v1262, 16
        %v1264 = vadd.s32 %v1263, %v1261
        %v1265 = vand.u32 %v1236, 65535
        %v1266 = vshra.s32 %v1236, 16
        %v1267 = vcvt.s32.f32 %v1265
        %v1268 = vcvt.s32.f32 %v1266
        %1269 = vmin.xlane.f32.xlu0 %v1268
        %v1270 = vpop.xlane.xlu0 %1269
        %vm1271 = vcmp.eq.f32.partialorder %v1268, %v1270
        %v1272 = vsel %vm1271, %v1267, inf
        %1273 = vmin.xlane.f32.xlu0 %v1272
        %v1274 = vpop.xlane.xlu0 %1273
        %v1275 = vcvt.f32.s32 %v1274
        %v1276 = vcvt.f32.s32 %v1270
        %v1277 = vshll.u32 %v1276, 16
        %v1278 = vadd.s32 %v1277, %v1275
        %v1279 = vand.u32 %v1237, 65535
        %v1280 = vshra.s32 %v1237, 16
        %v1281 = vcvt.s32.f32 %v1279
        %v1282 = vcvt.s32.f32 %v1280
        %1283 = vmin.xlane.f32.xlu0 %v1282
        %v1284 = vpop.xlane.xlu0 %1283
        %vm1285 = vcmp.eq.f32.partialorder %v1282, %v1284
        %v1286 = vsel %vm1285, %v1281, inf
        %1287 = vmin.xlane.f32.xlu0 %v1286
        %v1288 = vpop.xlane.xlu0 %1287
        %v1289 = vcvt.f32.s32 %v1288
        %v1290 = vcvt.f32.s32 %v1284
        %v1291 = vshll.u32 %v1290, 16
        %v1292 = vadd.s32 %v1291, %v1289
        %v1293 = vand.u32 %v1238, 65535
        %v1294 = vshra.s32 %v1238, 16
        %v1295 = vcvt.s32.f32 %v1293
        %v1296 = vcvt.s32.f32 %v1294
        %1297 = vmin.xlane.f32.xlu0 %v1296
        %v1298 = vpop.xlane.xlu0 %1297
        %vm1299 = vcmp.eq.f32.partialorder %v1296, %v1298
        %v1300 = vsel %vm1299, %v1295, inf
        %1301 = vmin.xlane.f32.xlu0 %v1300
        %v1302 = vpop.xlane.xlu0 %1301
        %v1303 = vcvt.f32.s32 %v1302
        %v1304 = vcvt.f32.s32 %v1298
        %v1305 = vshll.u32 %v1304, 16
        %v1306 = vadd.s32 %v1305, %v1303
        %v1307 = vand.u32 %v1239, 65535
        %v1308 = vshra.s32 %v1239, 16
        %v1309 = vcvt.s32.f32 %v1307
        %v1310 = vcvt.s32.f32 %v1308
        %1311 = vmin.xlane.f32.xlu0 %v1310
        %v1312 = vpop.xlane.xlu0 %1311
        %vm1313 = vcmp.eq.f32.partialorder %v1310, %v1312
        %v1314 = vsel %vm1313, %v1309, inf
        %1315 = vmin.xlane.f32.xlu0 %v1314
        %v1316 = vpop.xlane.xlu0 %1315
        %v1317 = vcvt.f32.s32 %v1316
        %v1318 = vcvt.f32.s32 %v1312
        %v1319 = vshll.u32 %v1318, 16
        %v1320 = vadd.s32 %v1319, %v1317
        %v1321 = vand.u32 %v1240, 65535
        %v1322 = vshra.s32 %v1240, 16
        %v1323 = vcvt.s32.f32 %v1321
        %v1324 = vcvt.s32.f32 %v1322
        %1325 = vmin.xlane.f32.xlu0 %v1324
        %v1326 = vpop.xlane.xlu0 %1325
        %vm1327 = vcmp.eq.f32.partialorder %v1324, %v1326
        %v1328 = vsel %vm1327, %v1323, inf
        %1329 = vmin.xlane.f32.xlu0 %v1328
        %v1330 = vpop.xlane.xlu0 %1329
        %v1331 = vcvt.f32.s32 %v1330
        %v1332 = vcvt.f32.s32 %v1326
        %v1333 = vshll.u32 %v1332, 16
        %v1334 = vadd.s32 %v1333, %v1331
        %v1335 = vand.u32 %v1241, 65535
        %v1336 = vshra.s32 %v1241, 16
        %v1337 = vcvt.s32.f32 %v1335
        %v1338 = vcvt.s32.f32 %v1336
        %1339 = vmin.xlane.f32.xlu0 %v1338
        %v1340 = vpop.xlane.xlu0 %1339
        %vm1341 = vcmp.eq.f32.partialorder %v1338, %v1340
        %v1342 = vsel %vm1341, %v1337, inf
        %1343 = vmin.xlane.f32.xlu0 %v1342
        %v1344 = vpop.xlane.xlu0 %1343
        %v1345 = vcvt.f32.s32 %v1344
        %v1346 = vcvt.f32.s32 %v1340
        %v1347 = vshll.u32 %v1346, 16
        %v1348 = vadd.s32 %v1347, %v1345
        %v1349 = vand.u32 %v1242, 65535
        %v1350 = vshra.s32 %v1242, 16
        %v1351 = vcvt.s32.f32 %v1349
        %v1352 = vcvt.s32.f32 %v1350
        %1353 = vmin.xlane.f32.xlu0 %v1352
        %v1354 = vpop.xlane.xlu0 %1353
        %vm1355 = vcmp.eq.f32.partialorder %v1352, %v1354
        %v1356 = vsel %vm1355, %v1351, inf
        %1357 = vmin.xlane.f32.xlu0 %v1356
        %v1358 = vpop.xlane.xlu0 %1357
        %v1359 = vcvt.f32.s32 %v1358
        %v1360 = vcvt.f32.s32 %v1354
        %v1361 = vshll.u32 %v1360, 16
        %v1362 = vadd.s32 %v1361, %v1359
        %v1363 = vand.u32 %v1243, 65535
        %v1364 = vshra.s32 %v1243, 16
        %v1365 = vcvt.s32.f32 %v1363
        %v1366 = vcvt.s32.f32 %v1364
        %1367 = vmin.xlane.f32.xlu0 %v1366
        %v1368 = vpop.xlane.xlu0 %1367
        %vm1369 = vcmp.eq.f32.partialorder %v1366, %v1368
        %v1370 = vsel %vm1369, %v1365, inf
        %1371 = vmin.xlane.f32.xlu0 %v1370
        %v1372 = vpop.xlane.xlu0 %1371
        %v1373 = vcvt.f32.s32 %v1372
        %v1374 = vcvt.f32.s32 %v1368
        %v1375 = vshll.u32 %v1374, 16
        %v1376 = vadd.s32 %v1375, %v1373
        %v1377 = vand.u32 %v1244, 65535
        %v1378 = vshra.s32 %v1244, 16
        %v1379 = vcvt.s32.f32 %v1377
        %v1380 = vcvt.s32.f32 %v1378
        %1381 = vmin.xlane.f32.xlu0 %v1380
        %v1382 = vpop.xlane.xlu0 %1381
        %vm1383 = vcmp.eq.f32.partialorder %v1380, %v1382
        %v1384 = vsel %vm1383, %v1379, inf
        %1385 = vmin.xlane.f32.xlu0 %v1384
        %v1386 = vpop.xlane.xlu0 %1385
        %v1387 = vcvt.f32.s32 %v1386
        %v1388 = vcvt.f32.s32 %v1382
        %v1389 = vshll.u32 %v1388, 16
        %v1390 = vadd.s32 %v1389, %v1387
        %v1391 = vand.u32 %v1245, 65535
        %v1392 = vshra.s32 %v1245, 16
        %v1393 = vcvt.s32.f32 %v1391
        %v1394 = vcvt.s32.f32 %v1392
        %1395 = vmin.xlane.f32.xlu0 %v1394
        %v1396 = vpop.xlane.xlu0 %1395
        %vm1397 = vcmp.eq.f32.partialorder %v1394, %v1396
        %v1398 = vsel %vm1397, %v1393, inf
        %1399 = vmin.xlane.f32.xlu0 %v1398
        %v1400 = vpop.xlane.xlu0 %1399
        %v1401 = vcvt.f32.s32 %v1400
        %v1402 = vcvt.f32.s32 %v1396
        %v1403 = vshll.u32 %v1402, 16
        %v1404 = vadd.s32 %v1403, %v1401
        %v1405 = vand.u32 %v1246, 65535
        %v1406 = vshra.s32 %v1246, 16
        %v1407 = vcvt.s32.f32 %v1405
        %v1408 = vcvt.s32.f32 %v1406
        %1409 = vmin.xlane.f32.xlu0 %v1408
        %v1410 = vpop.xlane.xlu0 %1409
        %vm1411 = vcmp.eq.f32.partialorder %v1408, %v1410
        %v1412 = vsel %vm1411, %v1407, inf
        %1413 = vmin.xlane.f32.xlu0 %v1412
        %v1414 = vpop.xlane.xlu0 %1413
        %v1415 = vcvt.f32.s32 %v1414
        %v1416 = vcvt.f32.s32 %v1410
        %v1417 = vshll.u32 %v1416, 16
        %v1418 = vadd.s32 %v1417, %v1415
        %v1419 = vand.u32 %v1247, 65535
        %v1420 = vshra.s32 %v1247, 16
        %v1421 = vcvt.s32.f32 %v1419
        %v1422 = vcvt.s32.f32 %v1420
        %1423 = vmin.xlane.f32.xlu0 %v1422
        %v1424 = vpop.xlane.xlu0 %1423
        %vm1425 = vcmp.eq.f32.partialorder %v1422, %v1424
        %v1426 = vsel %vm1425, %v1421, inf
        %1427 = vmin.xlane.f32.xlu0 %v1426
        %v1428 = vpop.xlane.xlu0 %1427
        %v1429 = vcvt.f32.s32 %v1428
        %v1430 = vcvt.f32.s32 %v1424
        %v1431 = vshll.u32 %v1430, 16
        %v1432 = vadd.s32 %v1431, %v1429
        %v1433 = vand.u32 %v1248, 65535
        %v1434 = vshra.s32 %v1248, 16
        %v1435 = vcvt.s32.f32 %v1433
        %v1436 = vcvt.s32.f32 %v1434
        %1437 = vmin.xlane.f32.xlu0 %v1436
        %v1438 = vpop.xlane.xlu0 %1437
        %vm1439 = vcmp.eq.f32.partialorder %v1436, %v1438
        %v1440 = vsel %vm1439, %v1435, inf
        %1441 = vmin.xlane.f32.xlu0 %v1440
        %v1442 = vpop.xlane.xlu0 %1441
        %v1443 = vcvt.f32.s32 %v1442
        %v1444 = vcvt.f32.s32 %v1438
        %v1445 = vshll.u32 %v1444, 16
        %v1446 = vadd.s32 %v1445, %v1443
        %v1447 = vand.u32 %v1249, 65535
        %v1448 = vshra.s32 %v1249, 16
        %v1449 = vcvt.s32.f32 %v1447
        %v1450 = vcvt.s32.f32 %v1448
        %1451 = vmin.xlane.f32.xlu0 %v1450
        %v1452 = vpop.xlane.xlu0 %1451
        %vm1453 = vcmp.eq.f32.partialorder %v1450, %v1452
        %v1454 = vsel %vm1453, %v1449, inf
        %1455 = vmin.xlane.f32.xlu0 %v1454
        %v1456 = vpop.xlane.xlu0 %1455
        %v1457 = vcvt.f32.s32 %v1456
        %v1458 = vcvt.f32.s32 %v1452
        %v1459 = vshll.u32 %v1458, 16
        %v1460 = vadd.s32 %v1459, %v1457
        %v1461 = vand.u32 %v1250, 65535
        %v1462 = vshra.s32 %v1250, 16
        %v1463 = vcvt.s32.f32 %v1461
        %v1464 = vcvt.s32.f32 %v1462
        %1465 = vmin.xlane.f32.xlu0 %v1464
        %v1466 = vpop.xlane.xlu0 %1465
        %vm1467 = vcmp.eq.f32.partialorder %v1464, %v1466
        %v1468 = vsel %vm1467, %v1463, inf
        %1469 = vmin.xlane.f32.xlu0 %v1468
        %v1470 = vpop.xlane.xlu0 %1469
        %v1471 = vcvt.f32.s32 %v1470
        %v1472 = vcvt.f32.s32 %v1466
        %v1473 = vshll.u32 %v1472, 16
        %v1474 = vadd.s32 %v1473, %v1471
        %vm1475 = vcmp.eq.s32.totalorder %v658, %v1264
        %vm1476 = vcmp.eq.s32.totalorder %v658, %v1278
        %vm1477 = vcmp.eq.s32.totalorder %v658, %v1292
        %vm1478 = vcmp.eq.s32.totalorder %v658, %v1306
        %vm1479 = vcmp.eq.s32.totalorder %v658, %v1320
        %vm1480 = vcmp.eq.s32.totalorder %v658, %v1334
        %vm1481 = vcmp.eq.s32.totalorder %v658, %v1348
        %vm1482 = vcmp.eq.s32.totalorder %v658, %v1362
        %vm1483 = vcmp.eq.s32.totalorder %v658, %v1376
        %vm1484 = vcmp.eq.s32.totalorder %v658, %v1390
        %vm1485 = vcmp.eq.s32.totalorder %v658, %v1404
        %vm1486 = vcmp.eq.s32.totalorder %v658, %v1418
        %vm1487 = vcmp.eq.s32.totalorder %v658, %v1432
        %vm1488 = vcmp.eq.s32.totalorder %v658, %v1446
        %vm1489 = vcmp.eq.s32.totalorder %v658, %v1460
        %vm1490 = vcmp.eq.s32.totalorder %v658, %v1474
        %v1491 = vsel %vm1475, 1e+34, %v963
        %v1492 = vsel %vm1476, 1e+34, %v964
        %v1493 = vsel %vm1477, 1e+34, %v965
        %v1494 = vsel %vm1478, 1e+34, %v966
        %v1495 = vsel %vm1479, 1e+34, %v967
        %v1496 = vsel %vm1480, 1e+34, %v968
        %v1497 = vsel %vm1481, 1e+34, %v969
        %v1498 = vsel %vm1482, 1e+34, %v970
        %v1499 = vsel %vm1483, 1e+34, %v971
        %v1500 = vsel %vm1484, 1e+34, %v972
        %v1501 = vsel %vm1485, 1e+34, %v973
        %v1502 = vsel %vm1486, 1e+34, %v974
        %v1503 = vsel %vm1487, 1e+34, %v975
        %v1504 = vsel %vm1488, 1e+34, %v976
        %v1505 = vsel %vm1489, 1e+34, %v977
        %v1506 = vsel %vm1490, 1e+34, %v978
        %v1507 = vmax.f32 %v1188, 0.0
        %v1508 = vmax.f32 %v1190, 0.0
        %v1509 = vmax.f32 %v1192, 0.0
        %v1510 = vmax.f32 %v1194, 0.0
        %v1511 = vmax.f32 %v1196, 0.0
        %v1512 = vmax.f32 %v1198, 0.0
        %v1513 = vmax.f32 %v1200, 0.0
        %v1514 = vmax.f32 %v1202, 0.0
        %v1515 = vmax.f32 %v1204, 0.0
        %v1516 = vmax.f32 %v1206, 0.0
        %v1517 = vmax.f32 %v1208, 0.0
        %v1518 = vmax.f32 %v1210, 0.0
        %v1519 = vmax.f32 %v1212, 0.0
        %v1520 = vmax.f32 %v1214, 0.0
        %v1521 = vmax.f32 %v1216, 0.0
        %v1522 = vmax.f32 %v1218, 0.0
        %v1523 = vrsqrt.pop %v1507
        %v1524 = vmul.f32 %v1507, %v1523
        %vm1525 = vcmp.eq.f32.partialorder %v1507, inf
        %v1526 = vsel %vm1525, %v1507, %v1524
        %vm1527 = vcmp.eq.f32.partialorder %v1507, 0.0
        %v1528 = vand.u32 %v1507, 2147483648
        %v1529 = vsel %vm1527, %v1528, %v1526
        %v1530 = vrsqrt.pop %v1508
        %v1531 = vmul.f32 %v1508, %v1530
        %vm1532 = vcmp.eq.f32.partialorder %v1508, inf
        %v1533 = vsel %vm1532, %v1508, %v1531
        %vm1534 = vcmp.eq.f32.partialorder %v1508, 0.0
        %v1535 = vand.u32 %v1508, 2147483648
        %v1536 = vsel %vm1534, %v1535, %v1533
        %v1537 = vrsqrt.pop %v1509
        %v1538 = vmul.f32 %v1509, %v1537
        %vm1539 = vcmp.eq.f32.partialorder %v1509, inf
        %v1540 = vsel %vm1539, %v1509, %v1538
        %vm1541 = vcmp.eq.f32.partialorder %v1509, 0.0
        %v1542 = vand.u32 %v1509, 2147483648
        %v1543 = vsel %vm1541, %v1542, %v1540
        %v1544 = vrsqrt.pop %v1510
        %v1545 = vmul.f32 %v1510, %v1544
        %vm1546 = vcmp.eq.f32.partialorder %v1510, inf
        %v1547 = vsel %vm1546, %v1510, %v1545
        %vm1548 = vcmp.eq.f32.partialorder %v1510, 0.0
        %v1549 = vand.u32 %v1510, 2147483648
        %v1550 = vsel %vm1548, %v1549, %v1547
        %v1551 = vrsqrt.pop %v1511
        %v1552 = vmul.f32 %v1511, %v1551
        %vm1553 = vcmp.eq.f32.partialorder %v1511, inf
        %v1554 = vsel %vm1553, %v1511, %v1552
        %vm1555 = vcmp.eq.f32.partialorder %v1511, 0.0
        %v1556 = vand.u32 %v1511, 2147483648
        %v1557 = vsel %vm1555, %v1556, %v1554
        %v1558 = vrsqrt.pop %v1512
        %v1559 = vmul.f32 %v1512, %v1558
        %vm1560 = vcmp.eq.f32.partialorder %v1512, inf
        %v1561 = vsel %vm1560, %v1512, %v1559
        %vm1562 = vcmp.eq.f32.partialorder %v1512, 0.0
        %v1563 = vand.u32 %v1512, 2147483648
        %v1564 = vsel %vm1562, %v1563, %v1561
        %v1565 = vrsqrt.pop %v1513
        %v1566 = vmul.f32 %v1513, %v1565
        %vm1567 = vcmp.eq.f32.partialorder %v1513, inf
        %v1568 = vsel %vm1567, %v1513, %v1566
        %vm1569 = vcmp.eq.f32.partialorder %v1513, 0.0
        %v1570 = vand.u32 %v1513, 2147483648
        %v1571 = vsel %vm1569, %v1570, %v1568
        %v1572 = vrsqrt.pop %v1514
        %v1573 = vmul.f32 %v1514, %v1572
        %vm1574 = vcmp.eq.f32.partialorder %v1514, inf
        %v1575 = vsel %vm1574, %v1514, %v1573
        %vm1576 = vcmp.eq.f32.partialorder %v1514, 0.0
        %v1577 = vand.u32 %v1514, 2147483648
        %v1578 = vsel %vm1576, %v1577, %v1575
        %v1579 = vrsqrt.pop %v1515
        %v1580 = vmul.f32 %v1515, %v1579
        %vm1581 = vcmp.eq.f32.partialorder %v1515, inf
        %v1582 = vsel %vm1581, %v1515, %v1580
        %vm1583 = vcmp.eq.f32.partialorder %v1515, 0.0
        %v1584 = vand.u32 %v1515, 2147483648
        %v1585 = vsel %vm1583, %v1584, %v1582
        %v1586 = vrsqrt.pop %v1516
        %v1587 = vmul.f32 %v1516, %v1586
        %vm1588 = vcmp.eq.f32.partialorder %v1516, inf
        %v1589 = vsel %vm1588, %v1516, %v1587
        %vm1590 = vcmp.eq.f32.partialorder %v1516, 0.0
        %v1591 = vand.u32 %v1516, 2147483648
        %v1592 = vsel %vm1590, %v1591, %v1589
        %v1593 = vrsqrt.pop %v1517
        %v1594 = vmul.f32 %v1517, %v1593
        %vm1595 = vcmp.eq.f32.partialorder %v1517, inf
        %v1596 = vsel %vm1595, %v1517, %v1594
        %vm1597 = vcmp.eq.f32.partialorder %v1517, 0.0
        %v1598 = vand.u32 %v1517, 2147483648
        %v1599 = vsel %vm1597, %v1598, %v1596
        %v1600 = vrsqrt.pop %v1518
        %v1601 = vmul.f32 %v1518, %v1600
        %vm1602 = vcmp.eq.f32.partialorder %v1518, inf
        %v1603 = vsel %vm1602, %v1518, %v1601
        %vm1604 = vcmp.eq.f32.partialorder %v1518, 0.0
        %v1605 = vand.u32 %v1518, 2147483648
        %v1606 = vsel %vm1604, %v1605, %v1603
        %v1607 = vrsqrt.pop %v1519
        %v1608 = vmul.f32 %v1519, %v1607
        %vm1609 = vcmp.eq.f32.partialorder %v1519, inf
        %v1610 = vsel %vm1609, %v1519, %v1608
        %vm1611 = vcmp.eq.f32.partialorder %v1519, 0.0
        %v1612 = vand.u32 %v1519, 2147483648
        %v1613 = vsel %vm1611, %v1612, %v1610
        %v1614 = vrsqrt.pop %v1520
        %v1615 = vmul.f32 %v1520, %v1614
        %vm1616 = vcmp.eq.f32.partialorder %v1520, inf
        %v1617 = vsel %vm1616, %v1520, %v1615
        %vm1618 = vcmp.eq.f32.partialorder %v1520, 0.0
        %v1619 = vand.u32 %v1520, 2147483648
        %v1620 = vsel %vm1618, %v1619, %v1617
        %v1621 = vrsqrt.pop %v1521
        %v1622 = vmul.f32 %v1521, %v1621
        %vm1623 = vcmp.eq.f32.partialorder %v1521, inf
        %v1624 = vsel %vm1623, %v1521, %v1622
        %vm1625 = vcmp.eq.f32.partialorder %v1521, 0.0
        %v1626 = vand.u32 %v1521, 2147483648
        %v1627 = vsel %vm1625, %v1626, %v1624
        %v1628 = vrsqrt.pop %v1522
        %v1629 = vmul.f32 %v1522, %v1628
        %vm1630 = vcmp.eq.f32.partialorder %v1522, inf
        %v1631 = vsel %vm1630, %v1522, %v1629
        %vm1632 = vcmp.eq.f32.partialorder %v1522, 0.0
        %v1633 = vand.u32 %v1522, 2147483648
        %v1634 = vsel %vm1632, %v1633, %v1631
        %v1635 = vadd.f32 %v1529, 1e-08
        %v1636 = vadd.f32 %v1536, 1e-08
        %v1637 = vadd.f32 %v1543, 1e-08
        %v1638 = vadd.f32 %v1550, 1e-08
        %v1639 = vadd.f32 %v1557, 1e-08
        %v1640 = vadd.f32 %v1564, 1e-08
        %v1641 = vadd.f32 %v1571, 1e-08
        %v1642 = vadd.f32 %v1578, 1e-08
        %v1643 = vadd.f32 %v1585, 1e-08
        %v1644 = vadd.f32 %v1592, 1e-08
        %v1645 = vadd.f32 %v1599, 1e-08
        %v1646 = vadd.f32 %v1606, 1e-08
        %v1647 = vadd.f32 %v1613, 1e-08
        %v1648 = vadd.f32 %v1620, 1e-08
        %v1649 = vadd.f32 %v1627, 1e-08
        %v1650 = vadd.f32 %v1634, 1e-08
        %v1651 = vrcp.pop %v1635
        %v1652 = vmul.f32 1.0, %v1651
        %v1653 = vrcp.pop %v1636
        %v1654 = vmul.f32 1.0, %v1653
        %v1655 = vrcp.pop %v1637
        %v1656 = vmul.f32 1.0, %v1655
        %v1657 = vrcp.pop %v1638
        %v1658 = vmul.f32 1.0, %v1657
        %v1659 = vrcp.pop %v1639
        %v1660 = vmul.f32 1.0, %v1659
        %v1661 = vrcp.pop %v1640
        %v1662 = vmul.f32 1.0, %v1661
        %v1663 = vrcp.pop %v1641
        %v1664 = vmul.f32 1.0, %v1663
        %v1665 = vrcp.pop %v1642
        %v1666 = vmul.f32 1.0, %v1665
        %v1667 = vrcp.pop %v1643
        %v1668 = vmul.f32 1.0, %v1667
        %v1669 = vrcp.pop %v1644
        %v1670 = vmul.f32 1.0, %v1669
        %v1671 = vrcp.pop %v1645
        %v1672 = vmul.f32 1.0, %v1671
        %v1673 = vrcp.pop %v1646
        %v1674 = vmul.f32 1.0, %v1673
        %v1675 = vrcp.pop %v1647
        %v1676 = vmul.f32 1.0, %v1675
        %v1677 = vrcp.pop %v1648
        %v1678 = vmul.f32 1.0, %v1677
        %v1679 = vrcp.pop %v1649
        %v1680 = vmul.f32 1.0, %v1679
        %v1681 = vrcp.pop %v1650
        %v1682 = vmul.f32 1.0, %v1681
        %v1683 = vsel %vm1475, %v1652, %v1155
        %v1684 = vsel %vm1476, %v1654, %v1156
        %v1685 = vsel %vm1477, %v1656, %v1157
        %v1686 = vsel %vm1478, %v1658, %v1158
        %v1687 = vsel %vm1479, %v1660, %v1159
        %v1688 = vsel %vm1480, %v1662, %v1160
        %v1689 = vsel %vm1481, %v1664, %v1161
        %v1690 = vsel %vm1482, %v1666, %v1162
        %v1691 = vsel %vm1483, %v1668, %v1163
        %v1692 = vsel %vm1484, %v1670, %v1164
        %v1693 = vsel %vm1485, %v1672, %v1165
        %v1694 = vsel %vm1486, %v1674, %v1166
        %v1695 = vsel %vm1487, %v1676, %v1167
        %v1696 = vsel %vm1488, %v1678, %v1168
        %v1697 = vsel %vm1489, %v1680, %v1169
        %v1698 = vsel %vm1490, %v1682, %v1170
        %v1699 = vadd.f32 %v1171, %v1652
        %v1700 = vadd.f32 %v1172, %v1654
        %v1701 = vadd.f32 %v1173, %v1656
        %v1702 = vadd.f32 %v1174, %v1658
        %v1703 = vadd.f32 %v1175, %v1660
        %v1704 = vadd.f32 %v1176, %v1662
        %v1705 = vadd.f32 %v1177, %v1664
        %v1706 = vadd.f32 %v1178, %v1666
        %v1707 = vadd.f32 %v1179, %v1668
        %v1708 = vadd.f32 %v1180, %v1670
        %v1709 = vadd.f32 %v1181, %v1672
        %v1710 = vadd.f32 %v1182, %v1674
        %v1711 = vadd.f32 %v1183, %v1676
        %v1712 = vadd.f32 %v1184, %v1678
        %v1713 = vadd.f32 %v1185, %v1680
        %v1714 = vadd.f32 %v1186, %v1682
        %1715 = vmin.xlane.f32.xlu0 %v1491
        %v1716 = vpop.xlane.xlu0 %1715
        %1717 = vmin.xlane.f32.xlu0 %v1492
        %v1718 = vpop.xlane.xlu0 %1717
        %1719 = vmin.xlane.f32.xlu0 %v1493
        %v1720 = vpop.xlane.xlu0 %1719
        %1721 = vmin.xlane.f32.xlu0 %v1494
        %v1722 = vpop.xlane.xlu0 %1721
        %1723 = vmin.xlane.f32.xlu0 %v1495
        %v1724 = vpop.xlane.xlu0 %1723
        %1725 = vmin.xlane.f32.xlu0 %v1496
        %v1726 = vpop.xlane.xlu0 %1725
        %1727 = vmin.xlane.f32.xlu0 %v1497
        %v1728 = vpop.xlane.xlu0 %1727
        %1729 = vmin.xlane.f32.xlu0 %v1498
        %v1730 = vpop.xlane.xlu0 %1729
        %1731 = vmin.xlane.f32.xlu0 %v1499
        %v1732 = vpop.xlane.xlu0 %1731
        %1733 = vmin.xlane.f32.xlu0 %v1500
        %v1734 = vpop.xlane.xlu0 %1733
        %1735 = vmin.xlane.f32.xlu0 %v1501
        %v1736 = vpop.xlane.xlu0 %1735
        %1737 = vmin.xlane.f32.xlu0 %v1502
        %v1738 = vpop.xlane.xlu0 %1737
        %1739 = vmin.xlane.f32.xlu0 %v1503
        %v1740 = vpop.xlane.xlu0 %1739
        %1741 = vmin.xlane.f32.xlu0 %v1504
        %v1742 = vpop.xlane.xlu0 %1741
        %1743 = vmin.xlane.f32.xlu0 %v1505
        %v1744 = vpop.xlane.xlu0 %1743
        %1745 = vmin.xlane.f32.xlu0 %v1506
        %v1746 = vpop.xlane.xlu0 %1745
        %vm1747 = vcmp.eq.f32.partialorder %v1491, %v1716
        %vm1748 = vcmp.eq.f32.partialorder %v1492, %v1718
        %vm1749 = vcmp.eq.f32.partialorder %v1493, %v1720
        %vm1750 = vcmp.eq.f32.partialorder %v1494, %v1722
        %vm1751 = vcmp.eq.f32.partialorder %v1495, %v1724
        %vm1752 = vcmp.eq.f32.partialorder %v1496, %v1726
        %vm1753 = vcmp.eq.f32.partialorder %v1497, %v1728
        %vm1754 = vcmp.eq.f32.partialorder %v1498, %v1730
        %vm1755 = vcmp.eq.f32.partialorder %v1499, %v1732
        %vm1756 = vcmp.eq.f32.partialorder %v1500, %v1734
        %vm1757 = vcmp.eq.f32.partialorder %v1501, %v1736
        %vm1758 = vcmp.eq.f32.partialorder %v1502, %v1738
        %vm1759 = vcmp.eq.f32.partialorder %v1503, %v1740
        %vm1760 = vcmp.eq.f32.partialorder %v1504, %v1742
        %vm1761 = vcmp.eq.f32.partialorder %v1505, %v1744
        %vm1762 = vcmp.eq.f32.partialorder %v1506, %v1746
        %v1763 = vsel %vm1747, %v658, 128
        %v1764 = vsel %vm1748, %v658, 128
        %v1765 = vsel %vm1749, %v658, 128
        %v1766 = vsel %vm1750, %v658, 128
        %v1767 = vsel %vm1751, %v658, 128
        %v1768 = vsel %vm1752, %v658, 128
        %v1769 = vsel %vm1753, %v658, 128
        %v1770 = vsel %vm1754, %v658, 128
        %v1771 = vsel %vm1755, %v658, 128
        %v1772 = vsel %vm1756, %v658, 128
        %v1773 = vsel %vm1757, %v658, 128
        %v1774 = vsel %vm1758, %v658, 128
        %v1775 = vsel %vm1759, %v658, 128
        %v1776 = vsel %vm1760, %v658, 128
        %v1777 = vsel %vm1761, %v658, 128
        %v1778 = vsel %vm1762, %v658, 128
        %v1779 = vand.u32 %v1763, 65535
        %v1780 = vshra.s32 %v1763, 16
        %v1781 = vcvt.s32.f32 %v1779
        %v1782 = vcvt.s32.f32 %v1780
        %1783 = vmin.xlane.f32.xlu0 %v1782
        %v1784 = vpop.xlane.xlu0 %1783
        %vm1785 = vcmp.eq.f32.partialorder %v1782, %v1784
        %v1786 = vsel %vm1785, %v1781, inf
        %1787 = vmin.xlane.f32.xlu0 %v1786
        %v1788 = vpop.xlane.xlu0 %1787
        %v1789 = vcvt.f32.s32 %v1788
        %v1790 = vcvt.f32.s32 %v1784
        %v1791 = vshll.u32 %v1790, 16
        %v1792 = vadd.s32 %v1791, %v1789
        %v1793 = vand.u32 %v1764, 65535
        %v1794 = vshra.s32 %v1764, 16
        %v1795 = vcvt.s32.f32 %v1793
        %v1796 = vcvt.s32.f32 %v1794
        %1797 = vmin.xlane.f32.xlu0 %v1796
        %v1798 = vpop.xlane.xlu0 %1797
        %vm1799 = vcmp.eq.f32.partialorder %v1796, %v1798
        %v1800 = vsel %vm1799, %v1795, inf
        %1801 = vmin.xlane.f32.xlu0 %v1800
        %v1802 = vpop.xlane.xlu0 %1801
        %v1803 = vcvt.f32.s32 %v1802
        %v1804 = vcvt.f32.s32 %v1798
        %v1805 = vshll.u32 %v1804, 16
        %v1806 = vadd.s32 %v1805, %v1803
        %v1807 = vand.u32 %v1765, 65535
        %v1808 = vshra.s32 %v1765, 16
        %v1809 = vcvt.s32.f32 %v1807
        %v1810 = vcvt.s32.f32 %v1808
        %1811 = vmin.xlane.f32.xlu0 %v1810
        %v1812 = vpop.xlane.xlu0 %1811
        %vm1813 = vcmp.eq.f32.partialorder %v1810, %v1812
        %v1814 = vsel %vm1813, %v1809, inf
        %1815 = vmin.xlane.f32.xlu0 %v1814
        %v1816 = vpop.xlane.xlu0 %1815
        %v1817 = vcvt.f32.s32 %v1816
        %v1818 = vcvt.f32.s32 %v1812
        %v1819 = vshll.u32 %v1818, 16
        %v1820 = vadd.s32 %v1819, %v1817
        %v1821 = vand.u32 %v1766, 65535
        %v1822 = vshra.s32 %v1766, 16
        %v1823 = vcvt.s32.f32 %v1821
        %v1824 = vcvt.s32.f32 %v1822
        %1825 = vmin.xlane.f32.xlu0 %v1824
        %v1826 = vpop.xlane.xlu0 %1825
        %vm1827 = vcmp.eq.f32.partialorder %v1824, %v1826
        %v1828 = vsel %vm1827, %v1823, inf
        %1829 = vmin.xlane.f32.xlu0 %v1828
        %v1830 = vpop.xlane.xlu0 %1829
        %v1831 = vcvt.f32.s32 %v1830
        %v1832 = vcvt.f32.s32 %v1826
        %v1833 = vshll.u32 %v1832, 16
        %v1834 = vadd.s32 %v1833, %v1831
        %v1835 = vand.u32 %v1767, 65535
        %v1836 = vshra.s32 %v1767, 16
        %v1837 = vcvt.s32.f32 %v1835
        %v1838 = vcvt.s32.f32 %v1836
        %1839 = vmin.xlane.f32.xlu0 %v1838
        %v1840 = vpop.xlane.xlu0 %1839
        %vm1841 = vcmp.eq.f32.partialorder %v1838, %v1840
        %v1842 = vsel %vm1841, %v1837, inf
        %1843 = vmin.xlane.f32.xlu0 %v1842
        %v1844 = vpop.xlane.xlu0 %1843
        %v1845 = vcvt.f32.s32 %v1844
        %v1846 = vcvt.f32.s32 %v1840
        %v1847 = vshll.u32 %v1846, 16
        %v1848 = vadd.s32 %v1847, %v1845
        %v1849 = vand.u32 %v1768, 65535
        %v1850 = vshra.s32 %v1768, 16
        %v1851 = vcvt.s32.f32 %v1849
        %v1852 = vcvt.s32.f32 %v1850
        %1853 = vmin.xlane.f32.xlu0 %v1852
        %v1854 = vpop.xlane.xlu0 %1853
        %vm1855 = vcmp.eq.f32.partialorder %v1852, %v1854
        %v1856 = vsel %vm1855, %v1851, inf
        %1857 = vmin.xlane.f32.xlu0 %v1856
        %v1858 = vpop.xlane.xlu0 %1857
        %v1859 = vcvt.f32.s32 %v1858
        %v1860 = vcvt.f32.s32 %v1854
        %v1861 = vshll.u32 %v1860, 16
        %v1862 = vadd.s32 %v1861, %v1859
        %v1863 = vand.u32 %v1769, 65535
        %v1864 = vshra.s32 %v1769, 16
        %v1865 = vcvt.s32.f32 %v1863
        %v1866 = vcvt.s32.f32 %v1864
        %1867 = vmin.xlane.f32.xlu0 %v1866
        %v1868 = vpop.xlane.xlu0 %1867
        %vm1869 = vcmp.eq.f32.partialorder %v1866, %v1868
        %v1870 = vsel %vm1869, %v1865, inf
        %1871 = vmin.xlane.f32.xlu0 %v1870
        %v1872 = vpop.xlane.xlu0 %1871
        %v1873 = vcvt.f32.s32 %v1872
        %v1874 = vcvt.f32.s32 %v1868
        %v1875 = vshll.u32 %v1874, 16
        %v1876 = vadd.s32 %v1875, %v1873
        %v1877 = vand.u32 %v1770, 65535
        %v1878 = vshra.s32 %v1770, 16
        %v1879 = vcvt.s32.f32 %v1877
        %v1880 = vcvt.s32.f32 %v1878
        %1881 = vmin.xlane.f32.xlu0 %v1880
        %v1882 = vpop.xlane.xlu0 %1881
        %vm1883 = vcmp.eq.f32.partialorder %v1880, %v1882
        %v1884 = vsel %vm1883, %v1879, inf
        %1885 = vmin.xlane.f32.xlu0 %v1884
        %v1886 = vpop.xlane.xlu0 %1885
        %v1887 = vcvt.f32.s32 %v1886
        %v1888 = vcvt.f32.s32 %v1882
        %v1889 = vshll.u32 %v1888, 16
        %v1890 = vadd.s32 %v1889, %v1887
        %v1891 = vand.u32 %v1771, 65535
        %v1892 = vshra.s32 %v1771, 16
        %v1893 = vcvt.s32.f32 %v1891
        %v1894 = vcvt.s32.f32 %v1892
        %1895 = vmin.xlane.f32.xlu0 %v1894
        %v1896 = vpop.xlane.xlu0 %1895
        %vm1897 = vcmp.eq.f32.partialorder %v1894, %v1896
        %v1898 = vsel %vm1897, %v1893, inf
        %1899 = vmin.xlane.f32.xlu0 %v1898
        %v1900 = vpop.xlane.xlu0 %1899
        %v1901 = vcvt.f32.s32 %v1900
        %v1902 = vcvt.f32.s32 %v1896
        %v1903 = vshll.u32 %v1902, 16
        %v1904 = vadd.s32 %v1903, %v1901
        %v1905 = vand.u32 %v1772, 65535
        %v1906 = vshra.s32 %v1772, 16
        %v1907 = vcvt.s32.f32 %v1905
        %v1908 = vcvt.s32.f32 %v1906
        %1909 = vmin.xlane.f32.xlu0 %v1908
        %v1910 = vpop.xlane.xlu0 %1909
        %vm1911 = vcmp.eq.f32.partialorder %v1908, %v1910
        %v1912 = vsel %vm1911, %v1907, inf
        %1913 = vmin.xlane.f32.xlu0 %v1912
        %v1914 = vpop.xlane.xlu0 %1913
        %v1915 = vcvt.f32.s32 %v1914
        %v1916 = vcvt.f32.s32 %v1910
        %v1917 = vshll.u32 %v1916, 16
        %v1918 = vadd.s32 %v1917, %v1915
        %v1919 = vand.u32 %v1773, 65535
        %v1920 = vshra.s32 %v1773, 16
        %v1921 = vcvt.s32.f32 %v1919
        %v1922 = vcvt.s32.f32 %v1920
        %1923 = vmin.xlane.f32.xlu0 %v1922
        %v1924 = vpop.xlane.xlu0 %1923
        %vm1925 = vcmp.eq.f32.partialorder %v1922, %v1924
        %v1926 = vsel %vm1925, %v1921, inf
        %1927 = vmin.xlane.f32.xlu0 %v1926
        %v1928 = vpop.xlane.xlu0 %1927
        %v1929 = vcvt.f32.s32 %v1928
        %v1930 = vcvt.f32.s32 %v1924
        %v1931 = vshll.u32 %v1930, 16
        %v1932 = vadd.s32 %v1931, %v1929
        %v1933 = vand.u32 %v1774, 65535
        %v1934 = vshra.s32 %v1774, 16
        %v1935 = vcvt.s32.f32 %v1933
        %v1936 = vcvt.s32.f32 %v1934
        %1937 = vmin.xlane.f32.xlu0 %v1936
        %v1938 = vpop.xlane.xlu0 %1937
        %vm1939 = vcmp.eq.f32.partialorder %v1936, %v1938
        %v1940 = vsel %vm1939, %v1935, inf
        %1941 = vmin.xlane.f32.xlu0 %v1940
        %v1942 = vpop.xlane.xlu0 %1941
        %v1943 = vcvt.f32.s32 %v1942
        %v1944 = vcvt.f32.s32 %v1938
        %v1945 = vshll.u32 %v1944, 16
        %v1946 = vadd.s32 %v1945, %v1943
        %v1947 = vand.u32 %v1775, 65535
        %v1948 = vshra.s32 %v1775, 16
        %v1949 = vcvt.s32.f32 %v1947
        %v1950 = vcvt.s32.f32 %v1948
        %1951 = vmin.xlane.f32.xlu0 %v1950
        %v1952 = vpop.xlane.xlu0 %1951
        %vm1953 = vcmp.eq.f32.partialorder %v1950, %v1952
        %v1954 = vsel %vm1953, %v1949, inf
        %1955 = vmin.xlane.f32.xlu0 %v1954
        %v1956 = vpop.xlane.xlu0 %1955
        %v1957 = vcvt.f32.s32 %v1956
        %v1958 = vcvt.f32.s32 %v1952
        %v1959 = vshll.u32 %v1958, 16
        %v1960 = vadd.s32 %v1959, %v1957
        %v1961 = vand.u32 %v1776, 65535
        %v1962 = vshra.s32 %v1776, 16
        %v1963 = vcvt.s32.f32 %v1961
        %v1964 = vcvt.s32.f32 %v1962
        %1965 = vmin.xlane.f32.xlu0 %v1964
        %v1966 = vpop.xlane.xlu0 %1965
        %vm1967 = vcmp.eq.f32.partialorder %v1964, %v1966
        %v1968 = vsel %vm1967, %v1963, inf
        %1969 = vmin.xlane.f32.xlu0 %v1968
        %v1970 = vpop.xlane.xlu0 %1969
        %v1971 = vcvt.f32.s32 %v1970
        %v1972 = vcvt.f32.s32 %v1966
        %v1973 = vshll.u32 %v1972, 16
        %v1974 = vadd.s32 %v1973, %v1971
        %v1975 = vand.u32 %v1777, 65535
        %v1976 = vshra.s32 %v1777, 16
        %v1977 = vcvt.s32.f32 %v1975
        %v1978 = vcvt.s32.f32 %v1976
        %1979 = vmin.xlane.f32.xlu0 %v1978
        %v1980 = vpop.xlane.xlu0 %1979
        %vm1981 = vcmp.eq.f32.partialorder %v1978, %v1980
        %v1982 = vsel %vm1981, %v1977, inf
        %1983 = vmin.xlane.f32.xlu0 %v1982
        %v1984 = vpop.xlane.xlu0 %1983
        %v1985 = vcvt.f32.s32 %v1984
        %v1986 = vcvt.f32.s32 %v1980
        %v1987 = vshll.u32 %v1986, 16
        %v1988 = vadd.s32 %v1987, %v1985
        %v1989 = vand.u32 %v1778, 65535
        %v1990 = vshra.s32 %v1778, 16
        %v1991 = vcvt.s32.f32 %v1989
        %v1992 = vcvt.s32.f32 %v1990
        %1993 = vmin.xlane.f32.xlu0 %v1992
        %v1994 = vpop.xlane.xlu0 %1993
        %vm1995 = vcmp.eq.f32.partialorder %v1992, %v1994
        %v1996 = vsel %vm1995, %v1991, inf
        %1997 = vmin.xlane.f32.xlu0 %v1996
        %v1998 = vpop.xlane.xlu0 %1997
        %v1999 = vcvt.f32.s32 %v1998
        %v2000 = vcvt.f32.s32 %v1994
        %v2001 = vshll.u32 %v2000, 16
        %v2002 = vadd.s32 %v2001, %v1999
        %vm2003 = vcmp.eq.s32.totalorder %v658, %v1792
        %vm2004 = vcmp.eq.s32.totalorder %v658, %v1806
        %vm2005 = vcmp.eq.s32.totalorder %v658, %v1820
        %vm2006 = vcmp.eq.s32.totalorder %v658, %v1834
        %vm2007 = vcmp.eq.s32.totalorder %v658, %v1848
        %vm2008 = vcmp.eq.s32.totalorder %v658, %v1862
        %vm2009 = vcmp.eq.s32.totalorder %v658, %v1876
        %vm2010 = vcmp.eq.s32.totalorder %v658, %v1890
        %vm2011 = vcmp.eq.s32.totalorder %v658, %v1904
        %vm2012 = vcmp.eq.s32.totalorder %v658, %v1918
        %vm2013 = vcmp.eq.s32.totalorder %v658, %v1932
        %vm2014 = vcmp.eq.s32.totalorder %v658, %v1946
        %vm2015 = vcmp.eq.s32.totalorder %v658, %v1960
        %vm2016 = vcmp.eq.s32.totalorder %v658, %v1974
        %vm2017 = vcmp.eq.s32.totalorder %v658, %v1988
        %vm2018 = vcmp.eq.s32.totalorder %v658, %v2002
        %v2019 = vmax.f32 %v1716, 0.0
        %v2020 = vmax.f32 %v1718, 0.0
        %v2021 = vmax.f32 %v1720, 0.0
        %v2022 = vmax.f32 %v1722, 0.0
        %v2023 = vmax.f32 %v1724, 0.0
        %v2024 = vmax.f32 %v1726, 0.0
        %v2025 = vmax.f32 %v1728, 0.0
        %v2026 = vmax.f32 %v1730, 0.0
        %v2027 = vmax.f32 %v1732, 0.0
        %v2028 = vmax.f32 %v1734, 0.0
        %v2029 = vmax.f32 %v1736, 0.0
        %v2030 = vmax.f32 %v1738, 0.0
        %v2031 = vmax.f32 %v1740, 0.0
        %v2032 = vmax.f32 %v1742, 0.0
        %v2033 = vmax.f32 %v1744, 0.0
        %v2034 = vmax.f32 %v1746, 0.0
        %v2035 = vrsqrt.pop %v2019
        %v2036 = vmul.f32 %v2019, %v2035
        %vm2037 = vcmp.eq.f32.partialorder %v2019, inf
        %v2038 = vsel %vm2037, %v2019, %v2036
        %vm2039 = vcmp.eq.f32.partialorder %v2019, 0.0
        %v2040 = vand.u32 %v2019, 2147483648
        %v2041 = vsel %vm2039, %v2040, %v2038
        %v2042 = vrsqrt.pop %v2020
        %v2043 = vmul.f32 %v2020, %v2042
        %vm2044 = vcmp.eq.f32.partialorder %v2020, inf
        %v2045 = vsel %vm2044, %v2020, %v2043
        %vm2046 = vcmp.eq.f32.partialorder %v2020, 0.0
        %v2047 = vand.u32 %v2020, 2147483648
        %v2048 = vsel %vm2046, %v2047, %v2045
        %v2049 = vrsqrt.pop %v2021
        %v2050 = vmul.f32 %v2021, %v2049
        %vm2051 = vcmp.eq.f32.partialorder %v2021, inf
        %v2052 = vsel %vm2051, %v2021, %v2050
        %vm2053 = vcmp.eq.f32.partialorder %v2021, 0.0
        %v2054 = vand.u32 %v2021, 2147483648
        %v2055 = vsel %vm2053, %v2054, %v2052
        %v2056 = vrsqrt.pop %v2022
        %v2057 = vmul.f32 %v2022, %v2056
        %vm2058 = vcmp.eq.f32.partialorder %v2022, inf
        %v2059 = vsel %vm2058, %v2022, %v2057
        %vm2060 = vcmp.eq.f32.partialorder %v2022, 0.0
        %v2061 = vand.u32 %v2022, 2147483648
        %v2062 = vsel %vm2060, %v2061, %v2059
        %v2063 = vrsqrt.pop %v2023
        %v2064 = vmul.f32 %v2023, %v2063
        %vm2065 = vcmp.eq.f32.partialorder %v2023, inf
        %v2066 = vsel %vm2065, %v2023, %v2064
        %vm2067 = vcmp.eq.f32.partialorder %v2023, 0.0
        %v2068 = vand.u32 %v2023, 2147483648
        %v2069 = vsel %vm2067, %v2068, %v2066
        %v2070 = vrsqrt.pop %v2024
        %v2071 = vmul.f32 %v2024, %v2070
        %vm2072 = vcmp.eq.f32.partialorder %v2024, inf
        %v2073 = vsel %vm2072, %v2024, %v2071
        %vm2074 = vcmp.eq.f32.partialorder %v2024, 0.0
        %v2075 = vand.u32 %v2024, 2147483648
        %v2076 = vsel %vm2074, %v2075, %v2073
        %v2077 = vrsqrt.pop %v2025
        %v2078 = vmul.f32 %v2025, %v2077
        %vm2079 = vcmp.eq.f32.partialorder %v2025, inf
        %v2080 = vsel %vm2079, %v2025, %v2078
        %vm2081 = vcmp.eq.f32.partialorder %v2025, 0.0
        %v2082 = vand.u32 %v2025, 2147483648
        %v2083 = vsel %vm2081, %v2082, %v2080
        %v2084 = vrsqrt.pop %v2026
        %v2085 = vmul.f32 %v2026, %v2084
        %vm2086 = vcmp.eq.f32.partialorder %v2026, inf
        %v2087 = vsel %vm2086, %v2026, %v2085
        %vm2088 = vcmp.eq.f32.partialorder %v2026, 0.0
        %v2089 = vand.u32 %v2026, 2147483648
        %v2090 = vsel %vm2088, %v2089, %v2087
        %v2091 = vrsqrt.pop %v2027
        %v2092 = vmul.f32 %v2027, %v2091
        %vm2093 = vcmp.eq.f32.partialorder %v2027, inf
        %v2094 = vsel %vm2093, %v2027, %v2092
        %vm2095 = vcmp.eq.f32.partialorder %v2027, 0.0
        %v2096 = vand.u32 %v2027, 2147483648
        %v2097 = vsel %vm2095, %v2096, %v2094
        %v2098 = vrsqrt.pop %v2028
        %v2099 = vmul.f32 %v2028, %v2098
        %vm2100 = vcmp.eq.f32.partialorder %v2028, inf
        %v2101 = vsel %vm2100, %v2028, %v2099
        %vm2102 = vcmp.eq.f32.partialorder %v2028, 0.0
        %v2103 = vand.u32 %v2028, 2147483648
        %v2104 = vsel %vm2102, %v2103, %v2101
        %v2105 = vrsqrt.pop %v2029
        %v2106 = vmul.f32 %v2029, %v2105
        %vm2107 = vcmp.eq.f32.partialorder %v2029, inf
        %v2108 = vsel %vm2107, %v2029, %v2106
        %vm2109 = vcmp.eq.f32.partialorder %v2029, 0.0
        %v2110 = vand.u32 %v2029, 2147483648
        %v2111 = vsel %vm2109, %v2110, %v2108
        %v2112 = vrsqrt.pop %v2030
        %v2113 = vmul.f32 %v2030, %v2112
        %vm2114 = vcmp.eq.f32.partialorder %v2030, inf
        %v2115 = vsel %vm2114, %v2030, %v2113
        %vm2116 = vcmp.eq.f32.partialorder %v2030, 0.0
        %v2117 = vand.u32 %v2030, 2147483648
        %v2118 = vsel %vm2116, %v2117, %v2115
        %v2119 = vrsqrt.pop %v2031
        %v2120 = vmul.f32 %v2031, %v2119
        %vm2121 = vcmp.eq.f32.partialorder %v2031, inf
        %v2122 = vsel %vm2121, %v2031, %v2120
        %vm2123 = vcmp.eq.f32.partialorder %v2031, 0.0
        %v2124 = vand.u32 %v2031, 2147483648
        %v2125 = vsel %vm2123, %v2124, %v2122
        %v2126 = vrsqrt.pop %v2032
        %v2127 = vmul.f32 %v2032, %v2126
        %vm2128 = vcmp.eq.f32.partialorder %v2032, inf
        %v2129 = vsel %vm2128, %v2032, %v2127
        %vm2130 = vcmp.eq.f32.partialorder %v2032, 0.0
        %v2131 = vand.u32 %v2032, 2147483648
        %v2132 = vsel %vm2130, %v2131, %v2129
        %v2133 = vrsqrt.pop %v2033
        %v2134 = vmul.f32 %v2033, %v2133
        %vm2135 = vcmp.eq.f32.partialorder %v2033, inf
        %v2136 = vsel %vm2135, %v2033, %v2134
        %vm2137 = vcmp.eq.f32.partialorder %v2033, 0.0
        %v2138 = vand.u32 %v2033, 2147483648
        %v2139 = vsel %vm2137, %v2138, %v2136
        %v2140 = vrsqrt.pop %v2034
        %v2141 = vmul.f32 %v2034, %v2140
        %vm2142 = vcmp.eq.f32.partialorder %v2034, inf
        %v2143 = vsel %vm2142, %v2034, %v2141
        %vm2144 = vcmp.eq.f32.partialorder %v2034, 0.0
        %v2145 = vand.u32 %v2034, 2147483648
        %v2146 = vsel %vm2144, %v2145, %v2143
        %v2147 = vadd.f32 %v2041, 1e-08
        %v2148 = vadd.f32 %v2048, 1e-08
        %v2149 = vadd.f32 %v2055, 1e-08
        %v2150 = vadd.f32 %v2062, 1e-08
        %v2151 = vadd.f32 %v2069, 1e-08
        %v2152 = vadd.f32 %v2076, 1e-08
        %v2153 = vadd.f32 %v2083, 1e-08
        %v2154 = vadd.f32 %v2090, 1e-08
        %v2155 = vadd.f32 %v2097, 1e-08
        %v2156 = vadd.f32 %v2104, 1e-08
        %v2157 = vadd.f32 %v2111, 1e-08
        %v2158 = vadd.f32 %v2118, 1e-08
        %v2159 = vadd.f32 %v2125, 1e-08
        %v2160 = vadd.f32 %v2132, 1e-08
        %v2161 = vadd.f32 %v2139, 1e-08
        %v2162 = vadd.f32 %v2146, 1e-08
        %v2163 = vrcp.pop %v2147
        %v2164 = vmul.f32 1.0, %v2163
        %v2165 = vrcp.pop %v2148
        %v2166 = vmul.f32 1.0, %v2165
        %v2167 = vrcp.pop %v2149
        %v2168 = vmul.f32 1.0, %v2167
        %v2169 = vrcp.pop %v2150
        %v2170 = vmul.f32 1.0, %v2169
        %v2171 = vrcp.pop %v2151
        %v2172 = vmul.f32 1.0, %v2171
        %v2173 = vrcp.pop %v2152
        %v2174 = vmul.f32 1.0, %v2173
        %v2175 = vrcp.pop %v2153
        %v2176 = vmul.f32 1.0, %v2175
        %v2177 = vrcp.pop %v2154
        %v2178 = vmul.f32 1.0, %v2177
        %v2179 = vrcp.pop %v2155
        %v2180 = vmul.f32 1.0, %v2179
        %v2181 = vrcp.pop %v2156
        %v2182 = vmul.f32 1.0, %v2181
        %v2183 = vrcp.pop %v2157
        %v2184 = vmul.f32 1.0, %v2183
        %v2185 = vrcp.pop %v2158
        %v2186 = vmul.f32 1.0, %v2185
        %v2187 = vrcp.pop %v2159
        %v2188 = vmul.f32 1.0, %v2187
        %v2189 = vrcp.pop %v2160
        %v2190 = vmul.f32 1.0, %v2189
        %v2191 = vrcp.pop %v2161
        %v2192 = vmul.f32 1.0, %v2191
        %v2193 = vrcp.pop %v2162
        %v2194 = vmul.f32 1.0, %v2193
        %v2195 = vsel %vm2003, %v2164, %v1683
        %v2196 = vsel %vm2004, %v2166, %v1684
        %v2197 = vsel %vm2005, %v2168, %v1685
        %v2198 = vsel %vm2006, %v2170, %v1686
        %v2199 = vsel %vm2007, %v2172, %v1687
        %v2200 = vsel %vm2008, %v2174, %v1688
        %v2201 = vsel %vm2009, %v2176, %v1689
        %v2202 = vsel %vm2010, %v2178, %v1690
        %v2203 = vsel %vm2011, %v2180, %v1691
        %v2204 = vsel %vm2012, %v2182, %v1692
        %v2205 = vsel %vm2013, %v2184, %v1693
        %v2206 = vsel %vm2014, %v2186, %v1694
        %v2207 = vsel %vm2015, %v2188, %v1695
        %v2208 = vsel %vm2016, %v2190, %v1696
        %v2209 = vsel %vm2017, %v2192, %v1697
        %v2210 = vsel %vm2018, %v2194, %v1698
        %v2211 = vadd.f32 %v1699, %v2164
        %v2212 = vadd.f32 %v1700, %v2166
        %v2213 = vadd.f32 %v1701, %v2168
        %v2214 = vadd.f32 %v1702, %v2170
        %v2215 = vadd.f32 %v1703, %v2172
        %v2216 = vadd.f32 %v1704, %v2174
        %v2217 = vadd.f32 %v1705, %v2176
        %v2218 = vadd.f32 %v1706, %v2178
        %v2219 = vadd.f32 %v1707, %v2180
        %v2220 = vadd.f32 %v1708, %v2182
        %v2221 = vadd.f32 %v1709, %v2184
        %v2222 = vadd.f32 %v1710, %v2186
        %v2223 = vadd.f32 %v1711, %v2188
        %v2224 = vadd.f32 %v1712, %v2190
        %v2225 = vadd.f32 %v1713, %v2192
        %v2226 = vadd.f32 %v1714, %v2194
        %vm2227 = vcmp.lt.f32.partialorder %v1716, 1.0
        %vm2228 = vcmp.lt.f32.partialorder %v1718, 1.0
        %vm2229 = vcmp.lt.f32.partialorder %v1720, 1.0
        %vm2230 = vcmp.lt.f32.partialorder %v1722, 1.0
        %vm2231 = vcmp.lt.f32.partialorder %v1724, 1.0
        %vm2232 = vcmp.lt.f32.partialorder %v1726, 1.0
        %vm2233 = vcmp.lt.f32.partialorder %v1728, 1.0
        %vm2234 = vcmp.lt.f32.partialorder %v1730, 1.0
        %vm2235 = vcmp.lt.f32.partialorder %v1732, 1.0
        %vm2236 = vcmp.lt.f32.partialorder %v1734, 1.0
        %vm2237 = vcmp.lt.f32.partialorder %v1736, 1.0
        %vm2238 = vcmp.lt.f32.partialorder %v1738, 1.0
        %vm2239 = vcmp.lt.f32.partialorder %v1740, 1.0
        %vm2240 = vcmp.lt.f32.partialorder %v1742, 1.0
        %vm2241 = vcmp.lt.f32.partialorder %v1744, 1.0
        %vm2242 = vcmp.lt.f32.partialorder %v1746, 1.0
        %v2243 = vsel %vm2227, 1, 0
        %v2244 = vsel %vm2228, 1, 0
        %v2245 = vsel %vm2229, 1, 0
        %v2246 = vsel %vm2230, 1, 0
        %v2247 = vsel %vm2231, 1, 0
        %v2248 = vsel %vm2232, 1, 0
        %v2249 = vsel %vm2233, 1, 0
        %v2250 = vsel %vm2234, 1, 0
        %v2251 = vsel %vm2235, 1, 0
        %v2252 = vsel %vm2236, 1, 0
        %v2253 = vsel %vm2237, 1, 0
        %v2254 = vsel %vm2238, 1, 0
        %v2255 = vsel %vm2239, 1, 0
        %v2256 = vsel %vm2240, 1, 0
        %v2257 = vsel %vm2241, 1, 0
        %v2258 = vsel %vm2242, 1, 0
        %v2259 = vcvt.s32.f32 %v2243
        %v2260 = vcvt.s32.f32 %v2244
        %v2261 = vcvt.s32.f32 %v2245
        %v2262 = vcvt.s32.f32 %v2246
        %v2263 = vcvt.s32.f32 %v2247
        %v2264 = vcvt.s32.f32 %v2248
        %v2265 = vcvt.s32.f32 %v2249
        %v2266 = vcvt.s32.f32 %v2250
        %v2267 = vcvt.s32.f32 %v2251
        %v2268 = vcvt.s32.f32 %v2252
        %v2269 = vcvt.s32.f32 %v2253
        %v2270 = vcvt.s32.f32 %v2254
        %v2271 = vcvt.s32.f32 %v2255
        %v2272 = vcvt.s32.f32 %v2256
        %v2273 = vcvt.s32.f32 %v2257
        %v2274 = vcvt.s32.f32 %v2258
        %v2275 = vrcp.pop %v2211
        %v2276 = vmul.f32 %v2259, %v2275
        %v2277 = vrcp.pop %v2212
        %v2278 = vmul.f32 %v2260, %v2277
        %v2279 = vrcp.pop %v2213
        %v2280 = vmul.f32 %v2261, %v2279
        %v2281 = vrcp.pop %v2214
        %v2282 = vmul.f32 %v2262, %v2281
        %v2283 = vrcp.pop %v2215
        %v2284 = vmul.f32 %v2263, %v2283
        %v2285 = vrcp.pop %v2216
        %v2286 = vmul.f32 %v2264, %v2285
        %v2287 = vrcp.pop %v2217
        %v2288 = vmul.f32 %v2265, %v2287
        %v2289 = vrcp.pop %v2218
        %v2290 = vmul.f32 %v2266, %v2289
        %v2291 = vrcp.pop %v2219
        %v2292 = vmul.f32 %v2267, %v2291
        %v2293 = vrcp.pop %v2220
        %v2294 = vmul.f32 %v2268, %v2293
        %v2295 = vrcp.pop %v2221
        %v2296 = vmul.f32 %v2269, %v2295
        %v2297 = vrcp.pop %v2222
        %v2298 = vmul.f32 %v2270, %v2297
        %v2299 = vrcp.pop %v2223
        %v2300 = vmul.f32 %v2271, %v2299
        %v2301 = vrcp.pop %v2224
        %v2302 = vmul.f32 %v2272, %v2301
        %v2303 = vrcp.pop %v2225
        %v2304 = vmul.f32 %v2273, %v2303
        %v2305 = vrcp.pop %v2226
        %v2306 = vmul.f32 %v2274, %v2305
        %v2307 = vld [vmem:[%s443] sm:$0xff]
        %v2308 = vld [vmem:[%s443 + $0x8] sm:$0xff]
        %v2309 = vld [vmem:[%s443 + $0x10] sm:$0xff]
        %v2310 = vld [vmem:[%s443 + $0x18] sm:$0xff]
        %v2311 = vld [vmem:[%s443 + $0x20] sm:$0xff]
        %v2312 = vld [vmem:[%s443 + $0x28] sm:$0xff]
        %v2313 = vld [vmem:[%s443 + $0x30] sm:$0xff]
        %v2314 = vld [vmem:[%s443 + $0x38] sm:$0xff]
        %v2315 = vld [vmem:[%s443 + $0x40] sm:$0xff]
        %v2316 = vld [vmem:[%s443 + $0x48] sm:$0xff]
        %v2317 = vld [vmem:[%s443 + $0x50] sm:$0xff]
        %v2318 = vld [vmem:[%s443 + $0x58] sm:$0xff]
        %v2319 = vld [vmem:[%s443 + $0x60] sm:$0xff]
        %v2320 = vld [vmem:[%s443 + $0x68] sm:$0xff]
        %v2321 = vld [vmem:[%s443 + $0x70] sm:$0xff]
        %v2322 = vld [vmem:[%s443 + $0x78] sm:$0xff]
        %2323 = vmatprep.subr.mxu0 0.0
        %2324 = vmatpush1.msra.mxu0 %v2307
        %2325 = vmatprep.subr.mxu0 0.0
        %2326 = vmatpush1.msra.mxu0 %v2308
        %2327 = vmatprep.subr.mxu0 0.0
        %2328 = vmatpush1.msra.mxu0 %v2309
        %2329 = vmatprep.subr.mxu0 0.0
        %2330 = vmatpush1.msra.mxu0 %v2310
        %2331 = vmatprep.subr.mxu0 0.0
        %2332 = vmatpush1.msra.mxu0 %v2311
        %2333 = vmatprep.subr.mxu0 0.0
        %2334 = vmatpush1.msra.mxu0 %v2312
        %2335 = vmatprep.subr.mxu0 0.0
        %2336 = vmatpush1.msra.mxu0 %v2313
        %2337 = vmatprep.subr.mxu0 0.0
        %2338 = vmatpush1.msra.mxu0 %v2314
        %2339 = vmatprep.subr.mxu0 0.0
        %2340 = vmatpush1.msra.mxu0 %v2315
        %2341 = vmatprep.subr.mxu0 0.0
        %2342 = vmatpush1.msra.mxu0 %v2316
        %2343 = vmatprep.subr.mxu0 0.0
        %2344 = vmatpush1.msra.mxu0 %v2317
        %2345 = vmatprep.subr.mxu0 0.0
        %2346 = vmatpush1.msra.mxu0 %v2318
        %2347 = vmatprep.subr.mxu0 0.0
        %2348 = vmatpush1.msra.mxu0 %v2319
        %2349 = vmatprep.subr.mxu0 0.0
        %2350 = vmatpush1.msra.mxu0 %v2320
        %2351 = vmatprep.subr.mxu0 0.0
        %2352 = vmatpush1.msra.mxu0 %v2321
        %2353 = vmatprep.subr.mxu0 0.0
        %2354 = vmatpush1.msra.mxu0 %v2322
        %2355 = vmatprep.subr.mxu0 0.0
        %2356 = vmatpush1.msra.mxu0 0.0
        %2357 = vmatprep.subr.mxu0 0.0
        %2358 = vmatpush1.msra.mxu0 0.0
        %2359 = vmatprep.subr.mxu0 0.0
        %2360 = vmatpush1.msra.mxu0 0.0
        %2361 = vmatprep.subr.mxu0 0.0
        %2362 = vmatpush1.msra.mxu0 0.0
        %2363 = vmatprep.subr.mxu0 0.0
        %2364 = vmatpush1.msra.mxu0 0.0
        %2365 = vmatprep.subr.mxu0 0.0
        %2366 = vmatpush1.msra.mxu0 0.0
        %2367 = vmatprep.subr.mxu0 0.0
        %2368 = vmatpush1.msra.mxu0 0.0
        %2369 = vmatprep.subr.mxu0 0.0
        %2370 = vmatpush1.msra.mxu0 0.0
        %2371 = vmatprep.subr.mxu0 0.0
        %2372 = vmatpush1.msra.mxu0 0.0
        %2373 = vmatprep.subr.mxu0 0.0
        %2374 = vmatpush1.msra.mxu0 0.0
        %2375 = vmatprep.subr.mxu0 0.0
        %2376 = vmatpush1.msra.mxu0 0.0
        %2377 = vmatprep.subr.mxu0 0.0
        %2378 = vmatpush1.msra.mxu0 0.0
        %2379 = vmatprep.subr.mxu0 0.0
        %2380 = vmatpush1.msra.mxu0 0.0
        %2381 = vmatprep.subr.mxu0 0.0
        %2382 = vmatpush1.msra.mxu0 0.0
        %2383 = vmatprep.subr.mxu0 0.0
        %2384 = vmatpush1.msra.mxu0 0.0
        %2385 = vmatprep.subr.mxu0 0.0
        %2386 = vmatpush1.msra.mxu0 0.0
        %2387 = vmatprep.mubr.f32.mxu0 0.0
        %2388 = vmatmul.mubr.f32.gmra.mrb[0].mxu0 %v2195
        %v2389 = vpop.f32.mrb[0].mxu0
        %v2390 = vadd.f32 0.0, %v2389
        %v2391 = vpop.f32.mrb[0].mxu0
        %2392 = vmatprep.mubr.f32.mxu0 0.0
        %2393 = vmatmul.mubr.f32.gmra.mrb[0].mxu0 %v2196
        %v2394 = vpop.f32.mrb[0].mxu0
        %v2395 = vadd.f32 0.0, %v2394
        %v2396 = vpop.f32.mrb[0].mxu0
        %2397 = vmatprep.mubr.f32.mxu0 0.0
        %2398 = vmatmul.mubr.f32.gmra.mrb[0].mxu0 %v2197
        %v2399 = vpop.f32.mrb[0].mxu0
        %v2400 = vadd.f32 0.0, %v2399
        %v2401 = vpop.f32.mrb[0].mxu0
        %2402 = vmatprep.mubr.f32.mxu0 0.0
        %2403 = vmatmul.mubr.f32.gmra.mrb[0].mxu0 %v2198
        %v2404 = vpop.f32.mrb[0].mxu0
        %v2405 = vadd.f32 0.0, %v2404
        %v2406 = vpop.f32.mrb[0].mxu0
        %2407 = vmatprep.mubr.f32.mxu0 0.0
        %2408 = vmatmul.mubr.f32.gmra.mrb[0].mxu0 %v2199
        %v2409 = vpop.f32.mrb[0].mxu0
        %v2410 = vadd.f32 0.0, %v2409
        %v2411 = vpop.f32.mrb[0].mxu0
        %2412 = vmatprep.mubr.f32.mxu0 0.0
        %2413 = vmatmul.mubr.f32.gmra.mrb[0].mxu0 %v2200
        %v2414 = vpop.f32.mrb[0].mxu0
        %v2415 = vadd.f32 0.0, %v2414
        %v2416 = vpop.f32.mrb[0].mxu0
        %2417 = vmatprep.mubr.f32.mxu0 0.0
        %2418 = vmatmul.mubr.f32.gmra.mrb[0].mxu0 %v2201
        %v2419 = vpop.f32.mrb[0].mxu0
        %v2420 = vadd.f32 0.0, %v2419
        %v2421 = vpop.f32.mrb[0].mxu0
        %2422 = vmatprep.mubr.f32.mxu0 0.0
        %2423 = vmatmul.mubr.f32.gmra.mrb[0].mxu0 %v2202
        %v2424 = vpop.f32.mrb[0].mxu0
        %v2425 = vadd.f32 0.0, %v2424
        %v2426 = vpop.f32.mrb[0].mxu0
        %2427 = vmatprep.mubr.f32.mxu0 0.0
        %2428 = vmatmul.mubr.f32.gmra.mrb[0].mxu0 %v2203
        %v2429 = vpop.f32.mrb[0].mxu0
        %v2430 = vadd.f32 0.0, %v2429
        %v2431 = vpop.f32.mrb[0].mxu0
        %2432 = vmatprep.mubr.f32.mxu0 0.0
        %2433 = vmatmul.mubr.f32.gmra.mrb[0].mxu0 %v2204
        %v2434 = vpop.f32.mrb[0].mxu0
        %v2435 = vadd.f32 0.0, %v2434
        %v2436 = vpop.f32.mrb[0].mxu0
        %2437 = vmatprep.mubr.f32.mxu0 0.0
        %2438 = vmatmul.mubr.f32.gmra.mrb[0].mxu0 %v2205
        %v2439 = vpop.f32.mrb[0].mxu0
        %v2440 = vadd.f32 0.0, %v2439
        %v2441 = vpop.f32.mrb[0].mxu0
        %2442 = vmatprep.mubr.f32.mxu0 0.0
        %2443 = vmatmul.mubr.f32.gmra.mrb[0].mxu0 %v2206
        %v2444 = vpop.f32.mrb[0].mxu0
        %v2445 = vadd.f32 0.0, %v2444
        %v2446 = vpop.f32.mrb[0].mxu0
        %2447 = vmatprep.mubr.f32.mxu0 0.0
        %2448 = vmatmul.mubr.f32.gmra.mrb[0].mxu0 %v2207
        %v2449 = vpop.f32.mrb[0].mxu0
        %v2450 = vadd.f32 0.0, %v2449
        %v2451 = vpop.f32.mrb[0].mxu0
        %2452 = vmatprep.mubr.f32.mxu0 0.0
        %2453 = vmatmul.mubr.f32.gmra.mrb[0].mxu0 %v2208
        %v2454 = vpop.f32.mrb[0].mxu0
        %v2455 = vadd.f32 0.0, %v2454
        %v2456 = vpop.f32.mrb[0].mxu0
        %2457 = vmatprep.mubr.f32.mxu0 0.0
        %2458 = vmatmul.mubr.f32.gmra.mrb[0].mxu0 %v2209
        %v2459 = vpop.f32.mrb[0].mxu0
        %v2460 = vadd.f32 0.0, %v2459
        %v2461 = vpop.f32.mrb[0].mxu0
        %2462 = vmatprep.mubr.f32.mxu0 0.0
        %2463 = vmatmul.mubr.f32.gmra.mrb[0].mxu0 %v2210
        %v2464 = vpop.f32.mrb[0].mxu0
        %v2465 = vadd.f32 0.0, %v2464
        %v2466 = vpop.f32.mrb[0].mxu0
        %2467 = vdwg.mxu0
        %v2468 = vmul.f32 %v2390, %v2276
        %v2469 = vmul.f32 %v2395, %v2278
        %v2470 = vmul.f32 %v2400, %v2280
        %v2471 = vmul.f32 %v2405, %v2282
        %v2472 = vmul.f32 %v2410, %v2284
        %v2473 = vmul.f32 %v2415, %v2286
        %v2474 = vmul.f32 %v2420, %v2288
        %v2475 = vmul.f32 %v2425, %v2290
        %v2476 = vmul.f32 %v2430, %v2292
        %v2477 = vmul.f32 %v2435, %v2294
        %v2478 = vmul.f32 %v2440, %v2296
        %v2479 = vmul.f32 %v2445, %v2298
        %v2480 = vmul.f32 %v2450, %v2300
        %v2481 = vmul.f32 %v2455, %v2302
        %v2482 = vmul.f32 %v2460, %v2304
        %v2483 = vmul.f32 %v2465, %v2306
        %v2484 = vld [vmem:[%s366] sm:$0xff]
        %v2485 = vld [vmem:[%s366 + $0x8] sm:$0xff]
        %v2486 = vld [vmem:[%s366 + $0x10] sm:$0xff]
        %v2487 = vld [vmem:[%s366 + $0x18] sm:$0xff]
        %v2488 = vld [vmem:[%s366 + $0x20] sm:$0xff]
        %v2489 = vld [vmem:[%s366 + $0x28] sm:$0xff]
        %v2490 = vld [vmem:[%s366 + $0x30] sm:$0xff]
        %v2491 = vld [vmem:[%s366 + $0x38] sm:$0xff]
        %v2492 = vld [vmem:[%s366 + $0x40] sm:$0xff]
        %v2493 = vld [vmem:[%s366 + $0x48] sm:$0xff]
        %v2494 = vld [vmem:[%s366 + $0x50] sm:$0xff]
        %v2495 = vld [vmem:[%s366 + $0x58] sm:$0xff]
        %v2496 = vld [vmem:[%s366 + $0x60] sm:$0xff]
        %v2497 = vld [vmem:[%s366 + $0x68] sm:$0xff]
        %v2498 = vld [vmem:[%s366 + $0x70] sm:$0xff]
        %v2499 = vld [vmem:[%s366 + $0x78] sm:$0xff]
        %v2500 = vld [vmem:[#allocation5] sm:$0xff]
        %v2501 = vld [vmem:[#allocation5 + $0x8] sm:$0xff]
        %v2502 = vld [vmem:[#allocation5 + $0x10] sm:$0xff]
        %v2503 = vld [vmem:[#allocation5 + $0x18] sm:$0xff]
        %v2504 = vld [vmem:[#allocation5 + $0x20] sm:$0xff]
        %v2505 = vld [vmem:[#allocation5 + $0x28] sm:$0xff]
        %v2506 = vld [vmem:[#allocation5 + $0x30] sm:$0xff]
        %v2507 = vld [vmem:[#allocation5 + $0x38] sm:$0xff]
        %v2508 = vld [vmem:[#allocation5 + $0x40] sm:$0xff]
        %v2509 = vld [vmem:[#allocation5 + $0x48] sm:$0xff]
        %v2510 = vld [vmem:[#allocation5 + $0x50] sm:$0xff]
        %v2511 = vld [vmem:[#allocation5 + $0x58] sm:$0xff]
        %v2512 = vld [vmem:[#allocation5 + $0x60] sm:$0xff]
        %v2513 = vld [vmem:[#allocation5 + $0x68] sm:$0xff]
        %v2514 = vld [vmem:[#allocation5 + $0x70] sm:$0xff]
        %v2515 = vld [vmem:[#allocation5 + $0x78] sm:$0xff]
        %2516 = vmatprep.subr.mxu0 0.0
        %2517 = vmatpush1.msra.mxu0 %v2500
        %2518 = vmatprep.subr.mxu0 0.0
        %2519 = vmatpush1.msra.mxu0 %v2501
        %2520 = vmatprep.subr.mxu0 0.0
        %2521 = vmatpush1.msra.mxu0 %v2502
        %2522 = vmatprep.subr.mxu0 0.0
        %2523 = vmatpush1.msra.mxu0 %v2503
        %2524 = vmatprep.subr.mxu0 0.0
        %2525 = vmatpush1.msra.mxu0 %v2504
        %2526 = vmatprep.subr.mxu0 0.0
        %2527 = vmatpush1.msra.mxu0 %v2505
        %2528 = vmatprep.subr.mxu0 0.0
        %2529 = vmatpush1.msra.mxu0 %v2506
        %2530 = vmatprep.subr.mxu0 0.0
        %2531 = vmatpush1.msra.mxu0 %v2507
        %2532 = vmatprep.subr.mxu0 0.0
        %2533 = vmatpush1.msra.mxu0 %v2508
        %2534 = vmatprep.subr.mxu0 0.0
        %2535 = vmatpush1.msra.mxu0 %v2509
        %2536 = vmatprep.subr.mxu0 0.0
        %2537 = vmatpush1.msra.mxu0 %v2510
        %2538 = vmatprep.subr.mxu0 0.0
        %2539 = vmatpush1.msra.mxu0 %v2511
        %2540 = vmatprep.subr.mxu0 0.0
        %2541 = vmatpush1.msra.mxu0 %v2512
        %2542 = vmatprep.subr.mxu0 0.0
        %2543 = vmatpush1.msra.mxu0 %v2513
        %2544 = vmatprep.subr.mxu0 0.0
        %2545 = vmatpush1.msra.mxu0 %v2514
        %2546 = vmatprep.subr.mxu0 0.0
        %2547 = vmatpush1.msra.mxu0 %v2515
        %2548 = vmatprep.subr.mxu0 0.0
        %2549 = vmatpush1.msra.mxu0 0.0
        %2550 = vmatprep.subr.mxu0 0.0
        %2551 = vmatpush1.msra.mxu0 0.0
        %2552 = vmatprep.subr.mxu0 0.0
        %2553 = vmatpush1.msra.mxu0 0.0
        %2554 = vmatprep.subr.mxu0 0.0
        %2555 = vmatpush1.msra.mxu0 0.0
        %2556 = vmatprep.subr.mxu0 0.0
        %2557 = vmatpush1.msra.mxu0 0.0
        %2558 = vmatprep.subr.mxu0 0.0
        %2559 = vmatpush1.msra.mxu0 0.0
        %2560 = vmatprep.subr.mxu0 0.0
        %2561 = vmatpush1.msra.mxu0 0.0
        %2562 = vmatprep.subr.mxu0 0.0
        %2563 = vmatpush1.msra.mxu0 0.0
        %2564 = vmatprep.subr.mxu0 0.0
        %2565 = vmatpush1.msra.mxu0 0.0
        %2566 = vmatprep.subr.mxu0 0.0
        %2567 = vmatpush1.msra.mxu0 0.0
        %2568 = vmatprep.subr.mxu0 0.0
        %2569 = vmatpush1.msra.mxu0 0.0
        %2570 = vmatprep.subr.mxu0 0.0
        %2571 = vmatpush1.msra.mxu0 0.0
        %2572 = vmatprep.subr.mxu0 0.0
        %2573 = vmatpush1.msra.mxu0 0.0
        %2574 = vmatprep.subr.mxu0 0.0
        %2575 = vmatpush1.msra.mxu0 0.0
        %2576 = vmatprep.subr.mxu0 0.0
        %2577 = vmatpush1.msra.mxu0 0.0
        %2578 = vmatprep.subr.mxu0 0.0
        %2579 = vmatpush1.msra.mxu0 0.0
        %2580 = vmatprep.mubr.f32.mxu0 0.0
        %2581 = vmatmul.mubr.f32.gmra.mrb[0].mxu0 %v2484
        %v2582 = vpop.f32.mrb[0].mxu0
        %v2583 = vadd.f32 0.0, %v2582
        %v2584 = vpop.f32.mrb[0].mxu0
        %2585 = vmatprep.mubr.f32.mxu0 0.0
        %2586 = vmatmul.mubr.f32.gmra.mrb[0].mxu0 %v2485
        %v2587 = vpop.f32.mrb[0].mxu0
        %v2588 = vadd.f32 0.0, %v2587
        %v2589 = vpop.f32.mrb[0].mxu0
        %2590 = vmatprep.mubr.f32.mxu0 0.0
        %2591 = vmatmul.mubr.f32.gmra.mrb[0].mxu0 %v2486
        %v2592 = vpop.f32.mrb[0].mxu0
        %v2593 = vadd.f32 0.0, %v2592
        %v2594 = vpop.f32.mrb[0].mxu0
        %2595 = vmatprep.mubr.f32.mxu0 0.0
        %2596 = vmatmul.mubr.f32.gmra.mrb[0].mxu0 %v2487
        %v2597 = vpop.f32.mrb[0].mxu0
        %v2598 = vadd.f32 0.0, %v2597
        %v2599 = vpop.f32.mrb[0].mxu0
        %2600 = vmatprep.mubr.f32.mxu0 0.0
        %2601 = vmatmul.mubr.f32.gmra.mrb[0].mxu0 %v2488
        %v2602 = vpop.f32.mrb[0].mxu0
        %v2603 = vadd.f32 0.0, %v2602
        %v2604 = vpop.f32.mrb[0].mxu0
        %2605 = vmatprep.mubr.f32.mxu0 0.0
        %2606 = vmatmul.mubr.f32.gmra.mrb[0].mxu0 %v2489
        %v2607 = vpop.f32.mrb[0].mxu0
        %v2608 = vadd.f32 0.0, %v2607
        %v2609 = vpop.f32.mrb[0].mxu0
        %2610 = vmatprep.mubr.f32.mxu0 0.0
        %2611 = vmatmul.mubr.f32.gmra.mrb[0].mxu0 %v2490
        %v2612 = vpop.f32.mrb[0].mxu0
        %v2613 = vadd.f32 0.0, %v2612
        %v2614 = vpop.f32.mrb[0].mxu0
        %2615 = vmatprep.mubr.f32.mxu0 0.0
        %2616 = vmatmul.mubr.f32.gmra.mrb[0].mxu0 %v2491
        %v2617 = vpop.f32.mrb[0].mxu0
        %v2618 = vadd.f32 0.0, %v2617
        %v2619 = vpop.f32.mrb[0].mxu0
        %2620 = vmatprep.mubr.f32.mxu0 0.0
        %2621 = vmatmul.mubr.f32.gmra.mrb[0].mxu0 %v2492
        %v2622 = vpop.f32.mrb[0].mxu0
        %v2623 = vadd.f32 0.0, %v2622
        %v2624 = vpop.f32.mrb[0].mxu0
        %2625 = vmatprep.mubr.f32.mxu0 0.0
        %2626 = vmatmul.mubr.f32.gmra.mrb[0].mxu0 %v2493
        %v2627 = vpop.f32.mrb[0].mxu0
        %v2628 = vadd.f32 0.0, %v2627
        %v2629 = vpop.f32.mrb[0].mxu0
        %2630 = vmatprep.mubr.f32.mxu0 0.0
        %2631 = vmatmul.mubr.f32.gmra.mrb[0].mxu0 %v2494
        %v2632 = vpop.f32.mrb[0].mxu0
        %v2633 = vadd.f32 0.0, %v2632
        %v2634 = vpop.f32.mrb[0].mxu0
        %2635 = vmatprep.mubr.f32.mxu0 0.0
        %2636 = vmatmul.mubr.f32.gmra.mrb[0].mxu0 %v2495
        %v2637 = vpop.f32.mrb[0].mxu0
        %v2638 = vadd.f32 0.0, %v2637
        %v2639 = vpop.f32.mrb[0].mxu0
        %2640 = vmatprep.mubr.f32.mxu0 0.0
        %2641 = vmatmul.mubr.f32.gmra.mrb[0].mxu0 %v2496
        %v2642 = vpop.f32.mrb[0].mxu0
        %v2643 = vadd.f32 0.0, %v2642
        %v2644 = vpop.f32.mrb[0].mxu0
        %2645 = vmatprep.mubr.f32.mxu0 0.0
        %2646 = vmatmul.mubr.f32.gmra.mrb[0].mxu0 %v2497
        %v2647 = vpop.f32.mrb[0].mxu0
        %v2648 = vadd.f32 0.0, %v2647
        %v2649 = vpop.f32.mrb[0].mxu0
        %2650 = vmatprep.mubr.f32.mxu0 0.0
        %2651 = vmatmul.mubr.f32.gmra.mrb[0].mxu0 %v2498
        %v2652 = vpop.f32.mrb[0].mxu0
        %v2653 = vadd.f32 0.0, %v2652
        %v2654 = vpop.f32.mrb[0].mxu0
        %2655 = vmatprep.mubr.f32.mxu0 0.0
        %2656 = vmatmul.mubr.f32.gmra.mrb[0].mxu0 %v2499
        %v2657 = vpop.f32.mrb[0].mxu0
        %v2658 = vadd.f32 0.0, %v2657
        %v2659 = vpop.f32.mrb[0].mxu0
        %2660 = vdwg.mxu0
        %v2661 = vadd.f32 %v2468, %v2583
        %v2662 = vadd.f32 %v2469, %v2588
        %v2663 = vadd.f32 %v2470, %v2593
        %v2664 = vadd.f32 %v2471, %v2598
        %v2665 = vadd.f32 %v2472, %v2603
        %v2666 = vadd.f32 %v2473, %v2608
        %v2667 = vadd.f32 %v2474, %v2613
        %v2668 = vadd.f32 %v2475, %v2618
        %v2669 = vadd.f32 %v2476, %v2623
        %v2670 = vadd.f32 %v2477, %v2628
        %v2671 = vadd.f32 %v2478, %v2633
        %v2672 = vadd.f32 %v2479, %v2638
        %v2673 = vadd.f32 %v2480, %v2643
        %v2674 = vadd.f32 %v2481, %v2648
        %v2675 = vadd.f32 %v2482, %v2653
        %v2676 = vadd.f32 %v2483, %v2658
        %v2677 = vld [vmem:[%s5] sm:$0x1]
        %v2679 = vlaneseq
        %v2680 = vshrl.u32 %v2679, 7
        %v2681 = vsub.s32 0, %v2680
        %v2682 = vrot.slane %v2677, %v2681
        %v2684 = vadd.f32 %v2661, %v2682
        %v2685 = vadd.f32 %v2662, %v2682
        %v2686 = vadd.f32 %v2663, %v2682
        %v2687 = vadd.f32 %v2664, %v2682
        %v2688 = vadd.f32 %v2665, %v2682
        %v2689 = vadd.f32 %v2666, %v2682
        %v2690 = vadd.f32 %v2667, %v2682
        %v2691 = vadd.f32 %v2668, %v2682
        %v2692 = vadd.f32 %v2669, %v2682
        %v2693 = vadd.f32 %v2670, %v2682
        %v2694 = vadd.f32 %v2671, %v2682
        %v2695 = vadd.f32 %v2672, %v2682
        %v2696 = vadd.f32 %v2673, %v2682
        %v2697 = vadd.f32 %v2674, %v2682
        %v2698 = vadd.f32 %v2675, %v2682
        %v2699 = vadd.f32 %v2676, %v2682
        %v2700 = vmax.f32 %v2684, 0.0
        %v2701 = vmax.f32 %v2685, 0.0
        %v2702 = vmax.f32 %v2686, 0.0
        %v2703 = vmax.f32 %v2687, 0.0
        %v2704 = vmax.f32 %v2688, 0.0
        %v2705 = vmax.f32 %v2689, 0.0
        %v2706 = vmax.f32 %v2690, 0.0
        %v2707 = vmax.f32 %v2691, 0.0
        %v2708 = vmax.f32 %v2692, 0.0
        %v2709 = vmax.f32 %v2693, 0.0
        %v2710 = vmax.f32 %v2694, 0.0
        %v2711 = vmax.f32 %v2695, 0.0
        %v2712 = vmax.f32 %v2696, 0.0
        %v2713 = vmax.f32 %v2697, 0.0
        %v2714 = vmax.f32 %v2698, 0.0
        %v2715 = vmax.f32 %v2699, 0.0
        %v2716 = vld [vmem:[#allocation7] sm:$0xff]
        %v2717 = vld [vmem:[#allocation7 + $0x8] sm:$0xff]
        %v2718 = vld [vmem:[#allocation7 + $0x10] sm:$0xff]
        %v2719 = vld [vmem:[#allocation7 + $0x18] sm:$0xff]
        %v2720 = vld [vmem:[#allocation7 + $0x20] sm:$0xff]
        %v2721 = vld [vmem:[#allocation7 + $0x28] sm:$0xff]
        %v2722 = vld [vmem:[#allocation7 + $0x30] sm:$0xff]
        %v2723 = vld [vmem:[#allocation7 + $0x38] sm:$0xff]
        %v2724 = vld [vmem:[#allocation7 + $0x40] sm:$0xff]
        %v2725 = vld [vmem:[#allocation7 + $0x48] sm:$0xff]
        %v2726 = vld [vmem:[#allocation7 + $0x50] sm:$0xff]
        %v2727 = vld [vmem:[#allocation7 + $0x58] sm:$0xff]
        %v2728 = vld [vmem:[#allocation7 + $0x60] sm:$0xff]
        %v2729 = vld [vmem:[#allocation7 + $0x68] sm:$0xff]
        %v2730 = vld [vmem:[#allocation7 + $0x70] sm:$0xff]
        %v2731 = vld [vmem:[#allocation7 + $0x78] sm:$0xff]
        %v2732 = vld [vmem:[%s7] sm:$0x1]
        %v2734 = vlaneseq
        %v2735 = vshrl.u32 %v2734, 7
        %v2736 = vsub.s32 0, %v2735
        %v2737 = vrot.slane %v2732, %v2736
        %2739 = vmatprep.subr.mxu0 0.0
        %2740 = vmatpush1.msra.mxu0 %v2716
        %2741 = vmatprep.subr.mxu0 0.0
        %2742 = vmatpush1.msra.mxu0 %v2717
        %2743 = vmatprep.subr.mxu0 0.0
        %2744 = vmatpush1.msra.mxu0 %v2718
        %2745 = vmatprep.subr.mxu0 0.0
        %2746 = vmatpush1.msra.mxu0 %v2719
        %2747 = vmatprep.subr.mxu0 0.0
        %2748 = vmatpush1.msra.mxu0 %v2720
        %2749 = vmatprep.subr.mxu0 0.0
        %2750 = vmatpush1.msra.mxu0 %v2721
        %2751 = vmatprep.subr.mxu0 0.0
        %2752 = vmatpush1.msra.mxu0 %v2722
        %2753 = vmatprep.subr.mxu0 0.0
        %2754 = vmatpush1.msra.mxu0 %v2723
        %2755 = vmatprep.subr.mxu0 0.0
        %2756 = vmatpush1.msra.mxu0 %v2724
        %2757 = vmatprep.subr.mxu0 0.0
        %2758 = vmatpush1.msra.mxu0 %v2725
        %2759 = vmatprep.subr.mxu0 0.0
        %2760 = vmatpush1.msra.mxu0 %v2726
        %2761 = vmatprep.subr.mxu0 0.0
        %2762 = vmatpush1.msra.mxu0 %v2727
        %2763 = vmatprep.subr.mxu0 0.0
        %2764 = vmatpush1.msra.mxu0 %v2728
        %2765 = vmatprep.subr.mxu0 0.0
        %2766 = vmatpush1.msra.mxu0 %v2729
        %2767 = vmatprep.subr.mxu0 0.0
        %2768 = vmatpush1.msra.mxu0 %v2730
        %2769 = vmatprep.subr.mxu0 0.0
        %2770 = vmatpush1.msra.mxu0 %v2731
        %2771 = vmatprep.subr.mxu0 0.0
        %2772 = vmatpush1.msra.mxu0 0.0
        %2773 = vmatprep.subr.mxu0 0.0
        %2774 = vmatpush1.msra.mxu0 0.0
        %2775 = vmatprep.subr.mxu0 0.0
        %2776 = vmatpush1.msra.mxu0 0.0
        %2777 = vmatprep.subr.mxu0 0.0
        %2778 = vmatpush1.msra.mxu0 0.0
        %2779 = vmatprep.subr.mxu0 0.0
        %2780 = vmatpush1.msra.mxu0 0.0
        %2781 = vmatprep.subr.mxu0 0.0
        %2782 = vmatpush1.msra.mxu0 0.0
        %2783 = vmatprep.subr.mxu0 0.0
        %2784 = vmatpush1.msra.mxu0 0.0
        %2785 = vmatprep.subr.mxu0 0.0
        %2786 = vmatpush1.msra.mxu0 0.0
        %2787 = vmatprep.subr.mxu0 0.0
        %2788 = vmatpush1.msra.mxu0 0.0
        %2789 = vmatprep.subr.mxu0 0.0
        %2790 = vmatpush1.msra.mxu0 0.0
        %2791 = vmatprep.subr.mxu0 0.0
        %2792 = vmatpush1.msra.mxu0 0.0
        %2793 = vmatprep.subr.mxu0 0.0
        %2794 = vmatpush1.msra.mxu0 0.0
        %2795 = vmatprep.subr.mxu0 0.0
        %2796 = vmatpush1.msra.mxu0 0.0
        %2797 = vmatprep.subr.mxu0 0.0
        %2798 = vmatpush1.msra.mxu0 0.0
        %2799 = vmatprep.subr.mxu0 0.0
        %2800 = vmatpush1.msra.mxu0 0.0
        %2801 = vmatprep.subr.mxu0 0.0
        %2802 = vmatpush1.msra.mxu0 0.0
        %2803 = vmatprep.mubr.f32.mxu0 0.0
        %2804 = vmatmul.mubr.f32.gmra.mrb[0].mxu0 %v2700
        %v2805 = vpop.f32.mrb[0].mxu0
        %v2806 = vadd.f32 %v2737, %v2805
        %v2807 = vpop.f32.mrb[0].mxu0
        %2808 = vmatprep.mubr.f32.mxu0 0.0
        %2809 = vmatmul.mubr.f32.gmra.mrb[0].mxu0 %v2701
        %v2810 = vpop.f32.mrb[0].mxu0
        %v2811 = vadd.f32 %v2737, %v2810
        %v2812 = vpop.f32.mrb[0].mxu0
        %2813 = vmatprep.mubr.f32.mxu0 0.0
        %2814 = vmatmul.mubr.f32.gmra.mrb[0].mxu0 %v2702
        %v2815 = vpop.f32.mrb[0].mxu0
        %v2816 = vadd.f32 %v2737, %v2815
        %v2817 = vpop.f32.mrb[0].mxu0
        %2818 = vmatprep.mubr.f32.mxu0 0.0
        %2819 = vmatmul.mubr.f32.gmra.mrb[0].mxu0 %v2703
        %v2820 = vpop.f32.mrb[0].mxu0
        %v2821 = vadd.f32 %v2737, %v2820
        %v2822 = vpop.f32.mrb[0].mxu0
        %2823 = vmatprep.mubr.f32.mxu0 0.0
        %2824 = vmatmul.mubr.f32.gmra.mrb[0].mxu0 %v2704
        %v2825 = vpop.f32.mrb[0].mxu0
        %v2826 = vadd.f32 %v2737, %v2825
        %v2827 = vpop.f32.mrb[0].mxu0
        %2828 = vmatprep.mubr.f32.mxu0 0.0
        %2829 = vmatmul.mubr.f32.gmra.mrb[0].mxu0 %v2705
        %v2830 = vpop.f32.mrb[0].mxu0
        %v2831 = vadd.f32 %v2737, %v2830
        %v2832 = vpop.f32.mrb[0].mxu0
        %2833 = vmatprep.mubr.f32.mxu0 0.0
        %2834 = vmatmul.mubr.f32.gmra.mrb[0].mxu0 %v2706
        %v2835 = vpop.f32.mrb[0].mxu0
        %v2836 = vadd.f32 %v2737, %v2835
        %v2837 = vpop.f32.mrb[0].mxu0
        %2838 = vmatprep.mubr.f32.mxu0 0.0
        %2839 = vmatmul.mubr.f32.gmra.mrb[0].mxu0 %v2707
        %v2840 = vpop.f32.mrb[0].mxu0
        %v2841 = vadd.f32 %v2737, %v2840
        %v2842 = vpop.f32.mrb[0].mxu0
        %2843 = vmatprep.mubr.f32.mxu0 0.0
        %2844 = vmatmul.mubr.f32.gmra.mrb[0].mxu0 %v2708
        %v2845 = vpop.f32.mrb[0].mxu0
        %v2846 = vadd.f32 %v2737, %v2845
        %v2847 = vpop.f32.mrb[0].mxu0
        %2848 = vmatprep.mubr.f32.mxu0 0.0
        %2849 = vmatmul.mubr.f32.gmra.mrb[0].mxu0 %v2709
        %v2850 = vpop.f32.mrb[0].mxu0
        %v2851 = vadd.f32 %v2737, %v2850
        %v2852 = vpop.f32.mrb[0].mxu0
        %2853 = vmatprep.mubr.f32.mxu0 0.0
        %2854 = vmatmul.mubr.f32.gmra.mrb[0].mxu0 %v2710
        %v2855 = vpop.f32.mrb[0].mxu0
        %v2856 = vadd.f32 %v2737, %v2855
        %v2857 = vpop.f32.mrb[0].mxu0
        %2858 = vmatprep.mubr.f32.mxu0 0.0
        %2859 = vmatmul.mubr.f32.gmra.mrb[0].mxu0 %v2711
        %v2860 = vpop.f32.mrb[0].mxu0
        %v2861 = vadd.f32 %v2737, %v2860
        %v2862 = vpop.f32.mrb[0].mxu0
        %2863 = vmatprep.mubr.f32.mxu0 0.0
        %2864 = vmatmul.mubr.f32.gmra.mrb[0].mxu0 %v2712
        %v2865 = vpop.f32.mrb[0].mxu0
        %v2866 = vadd.f32 %v2737, %v2865
        %v2867 = vpop.f32.mrb[0].mxu0
        %2868 = vmatprep.mubr.f32.mxu0 0.0
        %2869 = vmatmul.mubr.f32.gmra.mrb[0].mxu0 %v2713
        %v2870 = vpop.f32.mrb[0].mxu0
        %v2871 = vadd.f32 %v2737, %v2870
        %v2872 = vpop.f32.mrb[0].mxu0
        %2873 = vmatprep.mubr.f32.mxu0 0.0
        %2874 = vmatmul.mubr.f32.gmra.mrb[0].mxu0 %v2714
        %v2875 = vpop.f32.mrb[0].mxu0
        %v2876 = vadd.f32 %v2737, %v2875
        %v2877 = vpop.f32.mrb[0].mxu0
        %2878 = vmatprep.mubr.f32.mxu0 0.0
        %2879 = vmatmul.mubr.f32.gmra.mrb[0].mxu0 %v2715
        %v2880 = vpop.f32.mrb[0].mxu0
        %v2881 = vadd.f32 %v2737, %v2880
        %v2882 = vpop.f32.mrb[0].mxu0
        %2883 = vdwg.mxu0
        %v2884 = vmax.f32 %v2806, 0.0
        %v2885 = vmax.f32 %v2811, 0.0
        %v2886 = vmax.f32 %v2816, 0.0
        %v2887 = vmax.f32 %v2821, 0.0
        %v2888 = vmax.f32 %v2826, 0.0
        %v2889 = vmax.f32 %v2831, 0.0
        %v2890 = vmax.f32 %v2836, 0.0
        %v2891 = vmax.f32 %v2841, 0.0
        %v2892 = vmax.f32 %v2846, 0.0
        %v2893 = vmax.f32 %v2851, 0.0
        %v2894 = vmax.f32 %v2856, 0.0
        %v2895 = vmax.f32 %v2861, 0.0
        %v2896 = vmax.f32 %v2866, 0.0
        %v2897 = vmax.f32 %v2871, 0.0
        %v2898 = vmax.f32 %v2876, 0.0
        %v2899 = vmax.f32 %v2881, 0.0
        %2900 = vst [vmem:[%s424] sm:$0xff] %v2884
        %2901 = vst [vmem:[%s424 + $0x8] sm:$0xff] %v2885
        %2902 = vst [vmem:[%s424 + $0x10] sm:$0xff] %v2886
        %2903 = vst [vmem:[%s424 + $0x18] sm:$0xff] %v2887
        %2904 = vst [vmem:[%s424 + $0x20] sm:$0xff] %v2888
        %2905 = vst [vmem:[%s424 + $0x28] sm:$0xff] %v2889
        %2906 = vst [vmem:[%s424 + $0x30] sm:$0xff] %v2890
        %2907 = vst [vmem:[%s424 + $0x38] sm:$0xff] %v2891
        %2908 = vst [vmem:[%s424 + $0x40] sm:$0xff] %v2892
        %2909 = vst [vmem:[%s424 + $0x48] sm:$0xff] %v2893
        %2910 = vst [vmem:[%s424 + $0x50] sm:$0xff] %v2894
        %2911 = vst [vmem:[%s424 + $0x58] sm:$0xff] %v2895
        %2912 = vst [vmem:[%s424 + $0x60] sm:$0xff] %v2896
        %2913 = vst [vmem:[%s424 + $0x68] sm:$0xff] %v2897
        %2914 = vst [vmem:[%s424 + $0x70] sm:$0xff] %v2898
        %2915 = vst [vmem:[%s424 + $0x78] sm:$0xff] %v2899
        %s2916 = sand.u32 %s240, 1
        %s2917 = scalar_lea.sflag [#allocation4], %s2916
        %s2918 = sand.u32 %s240, 1
        %s2919 = smul.addr %s2918, 128
        %s2920 = scalar_lea.vmem [#allocation8], %s2919
        // Predicated region
        $region65: #{tpu_custom_call.1} parent=51 // pred_check
          %p2921 = pneg %p250
        $region66: #{tpu_custom_call.1} parent=51 // pred_check_branch
          %2923 = sbr.rel (%p2921) target = $region68
        $region67: #{tpu_custom_call.1} parent=51 // pred_region
          %s2924 = smul.u32 16, %s31
          %s2926 = ssub.s32 2048, 2048
          %2927 = vsyncadd %s2917, %s2926
          %s2928 = smul.addr %s30, 16
          %s2929 = sadd.s32 %s2924, %s2928
          %s2930 = smul.addr %s2929, 128
          %s2931 = scalar_lea.hbm %s8, %s2930
          %s2932 = sshll.u32 %s2920, 4
          %s2933 = int_to_ptr.vmem [resolvable:$true] %s2932
          %2938 = dma.vmem_to_hbm [thread:$0]  %s2933, 2048, %s2931, %s2917, 128, 128, 8
        $region68: #{tpu_custom_call.1} parent=51 // pred_fallthru
          _
      $region52: #{tpu_custom_call.1} parent=5 // pred_fallthru
        _
      %p2939 = scmp.le.s32.totalorder 2, %s21
      // Predicated region
      $region69: #{tpu_custom_call.1} parent=5 // pred_check
        %p2940 = pneg %p2939
      $region70: #{tpu_custom_call.1} parent=5 // pred_check_branch
        %2942 = sbr.rel (%p2940) target = $region72
      $region71: #{tpu_custom_call.1} parent=5 // pred_region
        %s2943 = ssub.s32 %s21, 2
        // Predicated region
        $region73: #{tpu_custom_call.1} parent=71 // pred_check
          %p2944 = pneg %p256
        $region74: #{tpu_custom_call.1} parent=71 // pred_check_branch
          %2946 = sbr.rel (%p2944) target = $region76
        $region75: #{tpu_custom_call.1} parent=71 // pred_region
          %s2947 = sand.u32 %s241, 1
          %s2948 = scalar_lea.sflag [#allocation4], %s2947
          %s2949 = sand.u32 %s241, 1
          %s2950 = smul.addr %s2949, 128
          %s2951 = scalar_lea.vmem [#allocation8], %s2950
          %2952 = dma.done %s2948, 2048
        $region76: #{tpu_custom_call.1} parent=71 // pred_fallthru
          _
      $region72: #{tpu_custom_call.1} parent=5 // pred_fallthru
        _
    $region6: #{tpu_custom_call.1} parent=1 // loop_footer
      %s25 = sadd.s32 1, %s21
    $region7: #{tpu_custom_call.1} parent=1 // loop_footer_branch
      %20 = sbr.rel target = $region3
    $region8: #{tpu_custom_call.1} parent=1 // loop_exit
      _
    %2953 = vsyncpa [#allocation3], 1
    %s2954 = scalar_lea.sflag [#allocation3], 1
    %2955 = vsyncpa %s2954, 1
    %2956 = vsyncpa [#allocation6], 1
    %2957 = vsyncpa [#allocation4], 1
    %s2958 = scalar_lea.sflag [#allocation4], 1
    %2959 = vsyncpa %s2958, 1

</llo_original>
